<compile_context>
chip_gen: v6e
topology: v6e:2x2x1
jax: 0.10.0
libtpu: 0.0.40
codegen_flags: <defaults>
</compile_context>

<pallas_src>
import functools
import math

import jax
import jax.numpy as jnp
from jax import lax
from jax.experimental import pallas as pl
from jax.experimental.pallas import tpu as pltpu

EPS = 1e-6
NEG_INF = -1e30
VMEM_LIMIT = 64 * 1024 * 1024


def _pick_tile(dim, candidates):
    """Largest candidate tile that evenly divides `dim`, else the full dim."""
    for c in candidates:
        if c <= dim and dim % c == 0:
            return c
    return dim


# --------------------------- LayerNorm + modulate ---------------------------

def _ln_modulate_kernel(x_ref, scale_ref, shift_ref, o_ref, *, eps):
    x = x_ref[...].astype(jnp.float32)                       # (1, ts, D)
    mean = jnp.mean(x, axis=-1, keepdims=True)
    var = jnp.mean(jnp.square(x - mean), axis=-1, keepdims=True)
    xn = (x - mean) * lax.rsqrt(var + eps)
    o_ref[...] = xn * (1.0 + scale_ref[...]) + shift_ref[...]


def ln_modulate(x, scale, shift, eps=EPS):
    B, S, D = x.shape
    ts = _pick_tile(S, (1024, 512, 256, 128, 64, 32, 16, 8))
    return pl.pallas_call(
        functools.partial(_ln_modulate_kernel, eps=eps),
        out_shape=jax.ShapeDtypeStruct((B, S, D), jnp.float32),
        grid=(B, S // ts),
        in_specs=[
            pl.BlockSpec((1, ts, D), lambda b, s: (b, s, 0)),
            pl.BlockSpec((1, 1, D), lambda b, s: (b, 0, 0)),
            pl.BlockSpec((1, 1, D), lambda b, s: (b, 0, 0)),
        ],
        out_specs=pl.BlockSpec((1, ts, D), lambda b, s: (b, s, 0)),
        compiler_params=pltpu.CompilerParams(
            dimension_semantics=("parallel", "parallel")),
    )(x, scale, shift)


# --------------------------------- RMSNorm ----------------------------------

def _rmsnorm_kernel(x_ref, w_ref, o_ref, *, eps):
    x = x_ref[...].astype(jnp.float32)                       # (tm, D)
    var = jnp.mean(jnp.square(x), axis=-1, keepdims=True)
    o_ref[...] = x * lax.rsqrt(var + eps) * w_ref[...]


def rmsnorm(x2d, w, eps=EPS):
    M, D = x2d.shape
    tm = _pick_tile(M, (1024, 512, 256, 128, 64, 32, 16, 8))
    return pl.pallas_call(
        functools.partial(_rmsnorm_kernel, eps=eps),
        out_shape=jax.ShapeDtypeStruct((M, D), jnp.float32),
        grid=(M // tm,),
        in_specs=[
            pl.BlockSpec((tm, D), lambda i: (i, 0)),
            pl.BlockSpec((1, D), lambda i: (0, 0)),
        ],
        out_specs=pl.BlockSpec((tm, D), lambda i: (i, 0)),
        compiler_params=pltpu.CompilerParams(
            dimension_semantics=("parallel",)),
    )(x2d, w.reshape(1, D))


# ----------------------------- Tiled bf16 matmul -----------------------------

def _linear_kernel(x_ref, w_ref, b_ref, o_ref, acc_ref, *, act):
    @pl.when(pl.program_id(2) == 0)
    def _init():
        acc_ref[...] = jnp.zeros_like(acc_ref)

    acc_ref[...] += jnp.dot(x_ref[...], w_ref[...],
                            preferred_element_type=jnp.float32)

    @pl.when(pl.program_id(2) == pl.num_programs(2) - 1)
    def _finalize():
        y = acc_ref[...] + b_ref[...]
        if act == "gelu_tanh":
            c = math.sqrt(2.0 / math.pi)
            y = 0.5 * y * (1.0 + jnp.tanh(c * (y + 0.044715 * y * y * y)))
        o_ref[...] = y.astype(o_ref.dtype)


def linear(x2d, w, b, act=None, out_dtype=jnp.float32):
    M, K = x2d.shape
    _, N = w.shape
    tm = _pick_tile(M, (256, 128, 64, 32, 16, 8))
    tn = _pick_tile(N, (512, 256, 128))
    tk = _pick_tile(K, (512, 256, 128))
    xb = x2d.astype(jnp.bfloat16)
    wb = w.astype(jnp.bfloat16)
    bias = b.reshape(1, N).astype(jnp.float32)
    return pl.pallas_call(
        functools.partial(_linear_kernel, act=act),
        out_shape=jax.ShapeDtypeStruct((M, N), out_dtype),
        grid=(M // tm, N // tn, K // tk),
        in_specs=[
            pl.BlockSpec((tm, tk), lambda i, j, k: (i, k)),
            pl.BlockSpec((tk, tn), lambda i, j, k: (k, j)),
            pl.BlockSpec((1, tn), lambda i, j, k: (0, j)),
        ],
        out_specs=pl.BlockSpec((tm, tn), lambda i, j, k: (i, j)),
        scratch_shapes=[pltpu.VMEM((tm, tn), jnp.float32)],
        compiler_params=pltpu.CompilerParams(
            dimension_semantics=("parallel", "parallel", "arbitrary"),
            vmem_limit_bytes=VMEM_LIMIT),
    )(xb, wb, bias)


# --------------------------- Flash attention core ----------------------------

def _flash_attn_kernel(q_ref, k_ref, v_ref, o_ref, m_sc, l_sc, acc_sc, *, scale):
    ki = pl.program_id(3)

    @pl.when(ki == 0)
    def _init():
        m_sc[...] = jnp.full_like(m_sc, NEG_INF)
        l_sc[...] = jnp.zeros_like(l_sc)
        acc_sc[...] = jnp.zeros_like(acc_sc)

    q = q_ref[0]                                             # (tq, Dh) bf16
    k = k_ref[0]                                             # (tk, Dh) bf16
    v = v_ref[0]
    s = lax.dot_general(q, k, (((1,), (1,)), ((), ())),
                        preferred_element_type=jnp.float32) * scale
    m_prev = m_sc[...]
    m_new = jnp.maximum(m_prev, jnp.max(s, axis=-1, keepdims=True))
    alpha = jnp.exp(m_prev - m_new)
    p = jnp.exp(s - m_new)
    l_sc[...] = alpha * l_sc[...] + jnp.sum(p, axis=-1, keepdims=True)
    acc_sc[...] = alpha * acc_sc[...] + lax.dot_general(
        p.astype(v.dtype), v, (((1,), (0,)), ((), ())),
        preferred_element_type=jnp.float32)
    m_sc[...] = m_new

    @pl.when(ki == pl.num_programs(3) - 1)
    def _finalize():
        o_ref[0] = (acc_sc[...] *
                    pl.reciprocal(l_sc[...], approx=True)).astype(o_ref.dtype)


def _flash_attn_mask_kernel(q_ref, k_ref, v_ref, mask_ref, o_ref,
                            m_sc, l_sc, acc_sc, *, scale):
    ki = pl.program_id(3)

    @pl.when(ki == 0)
    def _init():
        m_sc[...] = jnp.full_like(m_sc, NEG_INF)
        l_sc[...] = jnp.zeros_like(l_sc)
        acc_sc[...] = jnp.zeros_like(acc_sc)

    q = q_ref[0]
    k = k_ref[0]
    v = v_ref[0]
    s = lax.dot_general(q, k, (((1,), (1,)), ((), ())),
                        preferred_element_type=jnp.float32) * scale
    s = s + mask_ref[0]
    m_prev = m_sc[...]
    m_new = jnp.maximum(m_prev, jnp.max(s, axis=-1, keepdims=True))
    alpha = jnp.exp(m_prev - m_new)
    p = jnp.exp(s - m_new)
    l_sc[...] = alpha * l_sc[...] + jnp.sum(p, axis=-1, keepdims=True)
    acc_sc[...] = alpha * acc_sc[...] + lax.dot_general(
        p.astype(v.dtype), v, (((1,), (0,)), ((), ())),
        preferred_element_type=jnp.float32)
    m_sc[...] = m_new

    @pl.when(ki == pl.num_programs(3) - 1)
    def _finalize():
        l = l_sc[...]
        l_safe = jnp.where(l == 0.0, 1.0, l)                 # fully-masked guard
        o_ref[0] = (acc_sc[...] / l_safe).astype(o_ref.dtype)


def flash_attention(q, k, v, heads, attn_mask=None):
    """q: (B, Sq, H*Dh), k/v: (B, Sk, H*Dh); returns (B, Sq, H*Dh) fp32."""
    B, Sq, D = q.shape
    Sk = k.shape[1]
    Dh = D // heads
    assert (Dh % 128 == 0) or (Dh == D), (
        "head_dim must be a multiple of 128 (or a single head) for the "
        "BlockSpec head slicing used here")
    scale = 1.0 / math.sqrt(Dh)
    tq = _pick_tile(Sq, (256, 128, 64, 32, 16, 8))
    tk = _pick_tile(Sk, (512, 256, 128, 64, 32, 16, 8))

    qb = q.astype(jnp.bfloat16)
    kb = k.astype(jnp.bfloat16)
    vb = v.astype(jnp.bfloat16)

    q_spec = pl.BlockSpec((1, tq, Dh), lambda b, h, qi, ki: (b, qi, h))
    k_spec = pl.BlockSpec((1, tk, Dh), lambda b, h, qi, ki: (b, ki, h))
    v_spec = pl.BlockSpec((1, tk, Dh), lambda b, h, qi, ki: (b, ki, h))
    o_spec = pl.BlockSpec((1, tq, Dh), lambda b, h, qi, ki: (b, qi, h))

    if attn_mask is None:
        kern = functools.partial(_flash_attn_kernel, scale=scale)
        in_specs = [q_spec, k_spec, v_spec]
        args = (qb, kb, vb)
    else:
        am = attn_mask
        if am.dtype == jnp.bool_:
            am = jnp.where(am, 0.0, NEG_INF)                 # SDPA bool semantics
        am = jnp.broadcast_to(am.astype(jnp.float32), (B, Sq, Sk))
        m_spec = pl.BlockSpec((1, tq, tk), lambda b, h, qi, ki: (b, qi, ki))
        kern = functools.partial(_flash_attn_mask_kernel, scale=scale)
        in_specs = [q_spec, k_spec, v_spec, m_spec]
        args = (qb, kb, vb, am)

    return pl.pallas_call(
        kern,
        out_shape=jax.ShapeDtypeStruct((B, Sq, D), jnp.float32),
        grid=(B, heads, Sq // tq, Sk // tk),
        in_specs=in_specs,
        out_specs=o_spec,
        scratch_shapes=[
            pltpu.VMEM((tq, 1), jnp.float32),
            pltpu.VMEM((tq, 1), jnp.float32),
            pltpu.VMEM((tq, Dh), jnp.float32),
        ],
        compiler_params=pltpu.CompilerParams(
            dimension_semantics=("parallel", "parallel", "parallel", "arbitrary"),
            vmem_limit_bytes=VMEM_LIMIT),
    )(*args)


# ---------------------------- Gated residual adds ----------------------------

def _residual_gate_kernel(x_ref, y_ref, g_ref, o_ref):
    o_ref[...] = x_ref[...] + y_ref[...].astype(jnp.float32) * g_ref[...]


def _residual_add_kernel(x_ref, y_ref, o_ref):
    o_ref[...] = x_ref[...] + y_ref[...].astype(jnp.float32)


def residual_gate(x, y, g):
    B, S, D = x.shape
    ts = _pick_tile(S, (1024, 512, 256, 128, 64, 32, 16, 8))
    return pl.pallas_call(
        _residual_gate_kernel,
        out_shape=jax.ShapeDtypeStruct((B, S, D), jnp.float32),
        grid=(B, S // ts),
        in_specs=[
            pl.BlockSpec((1, ts, D), lambda b, s: (b, s, 0)),
            pl.BlockSpec((1, ts, D), lambda b, s: (b, s, 0)),
            pl.BlockSpec((1, 1, D), lambda b, s: (b, 0, 0)),
        ],
        out_specs=pl.BlockSpec((1, ts, D), lambda b, s: (b, s, 0)),
        input_output_aliases={0: 0},
        compiler_params=pltpu.CompilerParams(
            dimension_semantics=("parallel", "parallel")),
    )(x, y, g)


def residual_add(x, y):
    B, S, D = x.shape
    ts = _pick_tile(S, (1024, 512, 256, 128, 64, 32, 16, 8))
    return pl.pallas_call(
        _residual_add_kernel,
        out_shape=jax.ShapeDtypeStruct((B, S, D), jnp.float32),
        grid=(B, S // ts),
        in_specs=[
            pl.BlockSpec((1, ts, D), lambda b, s: (b, s, 0)),
            pl.BlockSpec((1, ts, D), lambda b, s: (b, s, 0)),
        ],
        out_specs=pl.BlockSpec((1, ts, D), lambda b, s: (b, s, 0)),
        input_output_aliases={0: 0},
        compiler_params=pltpu.CompilerParams(
            dimension_semantics=("parallel", "parallel")),
    )(x, y)


# --------------------------------- JAX glue ----------------------------------

def apply_rotary(x_bsd, cos, sin, heads):
    """x: (B, S, H*Dh); cos/sin: (1, S, 1, Dh//2); interleaved-pair rotation."""
    B, S, D = x_bsd.shape
    Dh = D // heads
    x = x_bsd.reshape(B, S, heads, Dh)
    x0 = x[..., 0::2]
    x1 = x[..., 1::2]
    out0 = x0 * cos - x1 * sin
    out1 = x0 * sin + x1 * cos
    out = jnp.stack([out0, out1], axis=-1).reshape(B, S, heads, Dh)
    return out.reshape(B, S, D)


def attn_forward(p, hs_q, hs_kv, heads, rotary=None, attn_mask=None):
    """diffusers Attention: q/k/v/out linears (bias), rms_norm_across_heads."""
    B, Sq, D = hs_q.shape
    Sk = hs_kv.shape[1]
    q = linear(hs_q.reshape(B * Sq, D), p["wq"], p["bq"])
    k = linear(hs_kv.reshape(B * Sk, D), p["wk"], p["bk"])
    v = linear(hs_kv.reshape(B * Sk, D), p["wv"], p["bv"])
    q = rmsnorm(q, p["norm_q_w"]).reshape(B, Sq, D)
    k = rmsnorm(k, p["norm_k_w"]).reshape(B, Sk, D)
    v = v.reshape(B, Sk, D)
    if rotary is not None:
        cos, sin = rotary
        q = apply_rotary(q, cos, sin, heads)
        k = apply_rotary(k, cos, sin, heads)
    o = flash_attention(q, k, v, heads, attn_mask)          # (B, Sq, D) fp32
    o = linear(o.reshape(B * Sq, D), p["wo"], p["bo"])       # to_out[0]; [1]=dropout id
    return o.reshape(B, Sq, D)


def skyreels_block_forward(params, hidden_states, encoder_hidden_states, temb,
                           rotary, attention_mask=None, heads=4):
    B, S, D = hidden_states.shape
    e = params["scale_shift_table"] + temb.astype(jnp.float32)   # (B, 6, D)
    shift_msa, scale_msa, gate_msa = e[:, 0:1], e[:, 1:2], e[:, 2:3]
    c_shift_msa, c_scale_msa, c_gate_msa = e[:, 3:4], e[:, 4:5], e[:, 5:6]

    hidden_states = hidden_states.astype(jnp.float32)

    # norm1 (FP32 LayerNorm, no affine) + AdaLN modulation -> self-attention
    norm_hs = ln_modulate(hidden_states, scale_msa, shift_msa)
    attn_out = attn_forward(params["attn1"], norm_hs, norm_hs, heads,
                            rotary=rotary, attn_mask=attention_mask)
    hidden_states = residual_gate(hidden_states, attn_out, gate_msa)

    # norm2 = Identity (cross_attn_norm=False); cross-attention on encoder states
    attn_out = attn_forward(params["attn2"], hidden_states,
                            encoder_hidden_states, heads)
    hidden_states = residual_add(hidden_states, attn_out)

    # norm3 + AdaLN modulation -> FFN (tanh-GELU), gated residual
    norm_hs = ln_modulate(hidden_states, c_scale_msa, c_shift_msa)
    M = B * S
    ff = linear(norm_hs.reshape(M, D), params["ffn"]["w1"], params["ffn"]["b1"],
                act="gelu_tanh", out_dtype=jnp.bfloat16)
    ff = linear(ff, params["ffn"]["w2"], params["ffn"]["b2"])
    hidden_states = residual_gate(hidden_states, ff.reshape(B, S, D), c_gate_msa)
    return hidden_states


# --------------------------------- Param init ---------------------------------

def init_params(key, dim, ffn_dim):
    def lin(k, din, dout):
        k1, k2 = jax.random.split(k)
        bound = 1.0 / math.sqrt(din)
        w = jax.random.uniform(k1, (din, dout), jnp.float32, -bound, bound)
        b = jax.random.uniform(k2, (dout,), jnp.float32, -bound, bound)
        return w, b

    def attn_params(k):
        ks = jax.random.split(k, 6)
        wq, bq = lin(ks[0], dim, dim)
        wk, bk = lin(ks[1], dim, dim)
        wv, bv = lin(ks[2], dim, dim)
        wo, bo = lin(ks[3], dim, dim)
        nq = 1.0 + 0.02 * jax.random.normal(ks[4], (dim,), jnp.float32)
        nk = 1.0 + 0.02 * jax.random.normal(ks[5], (dim,), jnp.float32)
        return dict(wq=wq, bq=bq, wk=wk, bk=bk, wv=wv, bv=bv, wo=wo, bo=bo,
                    norm_q_w=nq, norm_k_w=nk)

    keys = jax.random.split(key, 5)
    w1, b1 = lin(keys[0], dim, ffn_dim)
    w2, b2 = lin(keys[1], ffn_dim, dim)
    return dict(
        scale_shift_table=jax.random.normal(keys[2], (1, 6, dim), jnp.float32)
                          / math.sqrt(dim),
        attn1=attn_params(keys[3]),
        attn2=attn_params(keys[4]),
        ffn=dict(w1=w1, b1=b1, w2=w2, b2=b2),
    )


# ------------------------------------ Demo ------------------------------------

if __name__ == "__main__":
    # Small but representative shapes: head_dim = 128 like real SkyReels configs.
    B, S, S_ENC = 2, 32, 16
    HEADS, DH = 2, 128
    DIM, FFN_DIM = HEADS * DH, 512

    key = jax.random.PRNGKey(0)
    kp, kh, ke, kt, kr = jax.random.split(key, 5)
    params = init_params(kp, DIM, FFN_DIM)

    hidden_states = jax.random.normal(kh, (B, S, DIM), jnp.float32)
    encoder_hidden_states = jax.random.normal(ke, (B, S_ENC, DIM), jnp.float32)
    temb = jax.random.normal(kt, (B, 6, DIM), jnp.float32)          # temb.dim()==3 path
    angles = jax.random.normal(kr, (1, S, 1, DH // 2), jnp.float32)
    rotary = (jnp.cos(angles), jnp.sin(angles))                     # complex freqs as (cos, sin)
    attention_mask = None  # F.sdpa attn_mask=None path; additive/bool mask supported

    fwd = jax.jit(skyreels_block_forward, static_argnames=("heads",))
    out = fwd(params, hidden_states, encoder_hidden_states, temb, rotary,
              attention_mask, heads=HEADS)
    jax.block_until_ready(out)
    assert out.shape == (B, S, DIM) and out.dtype == jnp.float32
    assert bool(jnp.all(jnp.isfinite(out)))
    print("KERNEL_OK")
</pallas_src>

<mosaic_0001>
module attributes {stable_mosaic.version = 11 : i64} {
  func.func @_rmsnorm_kernel(%arg0: i32, %arg1: memref<64x256xf32, #tpu.memory_space<vmem>>, %arg2: memref<1x256xf32, #tpu.memory_space<vmem>>, %arg3: memref<64x256xf32, #tpu.memory_space<vmem>>) attributes {dimension_semantics = [#tpu.dimension_semantics<parallel>], iteration_bounds = array<i64: 1>, scalar_prefetch = 0 : i64, scratch_operands = 0 : i64, tpu.core_type = #tpu.core_type<tc>, window_params = [{transform_indices = @transform_0, window_bounds = array<i64: 64, 256>}, {pipeline_mode = #tpu.pipeline_mode<synchronous>, transform_indices = @transform_1, window_bounds = array<i64: 1, 256>}, {transform_indices = @transform_2, window_bounds = array<i64: 64, 256>}]} {
    %c0 = arith.constant 0 : index
    %c0_0 = arith.constant 0 : index
    %0 = vector.load %arg1[%c0, %c0_0] : memref<64x256xf32, #tpu.memory_space<vmem>>, vector<64x256xf32>
    %1 = arith.mulf %0, %0 : vector<64x256xf32>
    %cst = arith.constant dense<0.000000e+00> : vector<64xf32>
    %2 = vector.multi_reduction <add>, %1, %cst [1] : vector<64x256xf32> to vector<64xf32>
    %3 = vector.shape_cast %2 : vector<64xf32> to vector<64x1xf32>
    %cst_1 = arith.constant 2.560000e+02 : f32
    %4 = vector.broadcast %cst_1 : f32 to vector<64x1xf32>
    %5 = arith.divf %3, %4 : vector<64x1xf32>
    %cst_2 = arith.constant 9.99999997E-7 : f32
    %6 = vector.broadcast %cst_2 : f32 to vector<64x1xf32>
    %7 = arith.addf %5, %6 : vector<64x1xf32>
    %8 = math.rsqrt %7 : vector<64x1xf32>
    %9 = vector.broadcast %8 : vector<64x1xf32> to vector<64x256xf32>
    %10 = arith.mulf %0, %9 : vector<64x256xf32>
    %c0_3 = arith.constant 0 : index
    %c0_4 = arith.constant 0 : index
    %11 = vector.load %arg2[%c0_3, %c0_4] : memref<1x256xf32, #tpu.memory_space<vmem>>, vector<1x256xf32>
    %12 = vector.broadcast %11 : vector<1x256xf32> to vector<64x256xf32>
    %13 = arith.mulf %10, %12 : vector<64x256xf32>
    %c0_5 = arith.constant 0 : index
    %c0_6 = arith.constant 0 : index
    %14 = vector.load %arg3[%c0_5, %c0_6] : memref<64x256xf32, #tpu.memory_space<vmem>>, vector<64x256xf32>
    tpu.vector_store %arg3[%c0_5, %c0_6], %13 {strides = array<i32>} : memref<64x256xf32, #tpu.memory_space<vmem>>, vector<64x256xf32>,
    return
  }
  func.func @transform_0(%arg0: i32) -> (i32, i32) {
    %c0_i32 = arith.constant 0 : i32
    %c0_i32_0 = arith.constant 0 : i32
    return %arg0, %c0_i32 : i32, i32
  }
  func.func @transform_1(%arg0: i32) -> (i32, i32) {
    %c0_i32 = arith.constant 0 : i32
    %c0_i32_0 = arith.constant 0 : i32
    %c0_i32_1 = arith.constant 0 : i32
    return %c0_i32, %c0_i32_0 : i32, i32
  }
  func.func @transform_2(%arg0: i32) -> (i32, i32) {
    %c0_i32 = arith.constant 0 : i32
    %c0_i32_0 = arith.constant 0 : i32
    return %arg0, %c0_i32 : i32, i32
  }
}

module attributes {stable_mosaic.version = 11 : i64} {
  func.func @_ln_modulate_kernel(%arg0: i32, %arg1: i32, %arg2: memref<1x32x256xf32, #tpu.memory_space<vmem>>, %arg3: memref<1x1x256xf32, #tpu.memory_space<vmem>>, %arg4: memref<1x1x256xf32, #tpu.memory_space<vmem>>, %arg5: memref<1x32x256xf32, #tpu.memory_space<vmem>>) attributes {dimension_semantics = [#tpu.dimension_semantics<parallel>, #tpu.dimension_semantics<parallel>], iteration_bounds = array<i64: 2, 1>, scalar_prefetch = 0 : i64, scratch_operands = 0 : i64, tpu.core_type = #tpu.core_type<tc>, window_params = [{transform_indices = @transform_0, window_bounds = array<i64: 1, 32, 256>}, {transform_indices = @transform_1, window_bounds = array<i64: 1, 1, 256>}, {transform_indices = @transform_2, window_bounds = array<i64: 1, 1, 256>}, {transform_indices = @transform_3, window_bounds = array<i64: 1, 32, 256>}]} {
    %c0 = arith.constant 0 : index
    %c0_0 = arith.constant 0 : index
    %c0_1 = arith.constant 0 : index
    %0 = vector.load %arg2[%c0, %c0_0, %c0_1] : memref<1x32x256xf32, #tpu.memory_space<vmem>>, vector<1x32x256xf32>
    %cst = arith.constant dense<0.000000e+00> : vector<1x32xf32>
    %1 = vector.multi_reduction <add>, %0, %cst [2] : vector<1x32x256xf32> to vector<1x32xf32>
    %2 = vector.shape_cast %1 : vector<1x32xf32> to vector<1x32x1xf32>
    %cst_2 = arith.constant 2.560000e+02 : f32
    %3 = vector.broadcast %cst_2 : f32 to vector<1x32x1xf32>
    %4 = arith.divf %2, %3 : vector<1x32x1xf32>
    %5 = vector.broadcast %4 : vector<1x32x1xf32> to vector<1x32x256xf32>
    %6 = arith.subf %0, %5 : vector<1x32x256xf32>
    %7 = arith.mulf %6, %6 : vector<1x32x256xf32>
    %cst_3 = arith.constant dense<0.000000e+00> : vector<1x32xf32>
    %8 = vector.multi_reduction <add>, %7, %cst_3 [2] : vector<1x32x256xf32> to vector<1x32xf32>
    %9 = vector.shape_cast %8 : vector<1x32xf32> to vector<1x32x1xf32>
    %cst_4 = arith.constant 2.560000e+02 : f32
    %10 = vector.broadcast %cst_4 : f32 to vector<1x32x1xf32>
    %11 = arith.divf %9, %10 : vector<1x32x1xf32>
    %12 = vector.broadcast %4 : vector<1x32x1xf32> to vector<1x32x256xf32>
    %13 = arith.subf %0, %12 : vector<1x32x256xf32>
    %cst_5 = arith.constant 9.99999997E-7 : f32
    %14 = vector.broadcast %cst_5 : f32 to vector<1x32x1xf32>
    %15 = arith.addf %11, %14 : vector<1x32x1xf32>
    %16 = math.rsqrt %15 : vector<1x32x1xf32>
    %17 = vector.broadcast %16 : vector<1x32x1xf32> to vector<1x32x256xf32>
    %18 = arith.mulf %13, %17 : vector<1x32x256xf32>
    %c0_6 = arith.constant 0 : index
    %c0_7 = arith.constant 0 : index
    %c0_8 = arith.constant 0 : index
    %19 = vector.load %arg3[%c0_6, %c0_7, %c0_8] : memref<1x1x256xf32, #tpu.memory_space<vmem>>, vector<1x1x256xf32>
    %cst_9 = arith.constant 1.000000e+00 : f32
    %20 = vector.broadcast %cst_9 : f32 to vector<1x1x256xf32>
    %21 = arith.addf %20, %19 : vector<1x1x256xf32>
    %22 = vector.broadcast %21 : vector<1x1x256xf32> to vector<1x32x256xf32>
    %23 = arith.mulf %18, %22 : vector<1x32x256xf32>
    %c0_10 = arith.constant 0 : index
    %c0_11 = arith.constant 0 : index
    %c0_12 = arith.constant 0 : index
    %24 = vector.load %arg4[%c0_10, %c0_11, %c0_12] : memref<1x1x256xf32, #tpu.memory_space<vmem>>, vector<1x1x256xf32>
    %25 = vector.broadcast %24 : vector<1x1x256xf32> to vector<1x32x256xf32>
    %26 = arith.addf %23, %25 : vector<1x32x256xf32>
    %c0_13 = arith.constant 0 : index
    %c0_14 = arith.constant 0 : index
    %c0_15 = arith.constant 0 : index
    %27 = vector.load %arg5[%c0_13, %c0_14, %c0_15] : memref<1x32x256xf32, #tpu.memory_space<vmem>>, vector<1x32x256xf32>
    tpu.vector_store %arg5[%c0_13, %c0_14, %c0_15], %26 {strides = array<i32>} : memref<1x32x256xf32, #tpu.memory_space<vmem>>, vector<1x32x256xf32>,
    return
  }
  func.func @transform_0(%arg0: i32, %arg1: i32) -> (i32, i32, i32) {
    %c0_i32 = arith.constant 0 : i32
    %c0_i32_0 = arith.constant 0 : i32
    return %arg0, %arg1, %c0_i32 : i32, i32, i32
  }
  func.func @transform_1(%arg0: i32, %arg1: i32) -> (i32, i32, i32) {
    %c0_i32 = arith.constant 0 : i32
    %c0_i32_0 = arith.constant 0 : i32
    %c0_i32_1 = arith.constant 0 : i32
    return %arg0, %c0_i32, %c0_i32_0 : i32, i32, i32
  }
  func.func @transform_2(%arg0: i32, %arg1: i32) -> (i32, i32, i32) {
    %c0_i32 = arith.constant 0 : i32
    %c0_i32_0 = arith.constant 0 : i32
    %c0_i32_1 = arith.constant 0 : i32
    return %arg0, %c0_i32, %c0_i32_0 : i32, i32, i32
  }
  func.func @transform_3(%arg0: i32, %arg1: i32) -> (i32, i32, i32) {
    %c0_i32 = arith.constant 0 : i32
    %c0_i32_0 = arith.constant 0 : i32
    return %arg0, %arg1, %c0_i32 : i32, i32, i32
  }
}

module attributes {stable_mosaic.version = 11 : i64} {
  func.func @_linear_kernel(%arg0: i32, %arg1: i32, %arg2: i32, %arg3: memref<64x256xbf16, #tpu.memory_space<vmem>>, %arg4: memref<256x256xbf16, #tpu.memory_space<vmem>>, %arg5: memref<1x256xf32, #tpu.memory_space<vmem>>, %arg6: memref<64x256xf32, #tpu.memory_space<vmem>>, %arg7: memref<64x256xf32, #tpu.memory_space<vmem>>) attributes {dimension_semantics = [#tpu.dimension_semantics<parallel>, #tpu.dimension_semantics<parallel>, #tpu.dimension_semantics<arbitrary>], iteration_bounds = array<i64: 1, 1, 1>, scalar_prefetch = 0 : i64, scratch_operands = 1 : i64, tpu.core_type = #tpu.core_type<tc>, window_params = [{transform_indices = @transform_0, window_bounds = array<i64: 64, 256>}, {transform_indices = @transform_1, window_bounds = array<i64: 256, 256>}, {transform_indices = @transform_2, window_bounds = array<i64: 1, 256>}, {transform_indices = @transform_3, window_bounds = array<i64: 64, 256>}]} {
    %c0_i32 = arith.constant 0 : i32
    %0 = arith.cmpi eq, %arg2, %c0_i32 : i32
    %1 = arith.extui %0 : i1 to i32
    %c0_i32_0 = arith.constant 0 : i32
    %2 = arith.cmpi ne, %1, %c0_i32_0 : i32
    scf.if %2 {
      %cst_10 = arith.constant 0.000000e+00 : f32
      %12 = vector.broadcast %cst_10 : f32 to vector<64x256xf32>
      %c0_11 = arith.constant 0 : index
      %c0_12 = arith.constant 0 : index
      %13 = vector.load %arg7[%c0_11, %c0_12] : memref<64x256xf32, #tpu.memory_space<vmem>>, vector<64x256xf32>
      tpu.vector_store %arg7[%c0_11, %c0_12], %12 {strides = array<i32>} : memref<64x256xf32, #tpu.memory_space<vmem>>, vector<64x256xf32>,
    } else {
    }
    %c0 = arith.constant 0 : index
    %c0_1 = arith.constant 0 : index
    %3 = vector.load %arg7[%c0, %c0_1] : memref<64x256xf32, #tpu.memory_space<vmem>>, vector<64x256xf32>
    %c0_2 = arith.constant 0 : index
    %c0_3 = arith.constant 0 : index
    %4 = vector.load %arg3[%c0_2, %c0_3] : memref<64x256xbf16, #tpu.memory_space<vmem>>, vector<64x256xbf16>
    %c0_4 = arith.constant 0 : index
    %c0_5 = arith.constant 0 : index
    %5 = vector.load %arg4[%c0_4, %c0_5] : memref<256x256xbf16, #tpu.memory_space<vmem>>, vector<256x256xbf16>
    %cst = arith.constant dense<0.000000e+00> : vector<64x256xf32>
    %6 = tpu.matmul %4, %5, %cst {dimension_numbers = #tpu.dot_dimension_numbers<[1], [0], [0], [1], [0, 0, 1, 1], [], []>} : vector<64x256xbf16>, vector<256x256xbf16>, vector<64x256xf32> -> vector<64x256xf32>
    %7 = arith.addf %3, %6 : vector<64x256xf32>
    %c0_6 = arith.constant 0 : index
    %c0_7 = arith.constant 0 : index
    %8 = vector.load %arg7[%c0_6, %c0_7] : memref<64x256xf32, #tpu.memory_space<vmem>>, vector<64x256xf32>
    tpu.vector_store %arg7[%c0_6, %c0_7], %7 {strides = array<i32>} : memref<64x256xf32, #tpu.memory_space<vmem>>, vector<64x256xf32>,
    %c0_i32_8 = arith.constant 0 : i32
    %9 = arith.cmpi eq, %arg2, %c0_i32_8 : i32
    %10 = arith.extui %9 : i1 to i32
    %c0_i32_9 = arith.constant 0 : i32
    %11 = arith.cmpi ne, %10, %c0_i32_9 : i32
    scf.if %11 {
      %c0_10 = arith.constant 0 : index
      %c0_11 = arith.constant 0 : index
      %12 = vector.load %arg7[%c0_10, %c0_11] : memref<64x256xf32, #tpu.memory_space<vmem>>, vector<64x256xf32>
      %c0_12 = arith.constant 0 : index
      %c0_13 = arith.constant 0 : index
      %13 = vector.load %arg5[%c0_12, %c0_13] : memref<1x256xf32, #tpu.memory_space<vmem>>, vector<1x256xf32>
      %14 = vector.broadcast %13 : vector<1x256xf32> to vector<64x256xf32>
      %15 = arith.addf %12, %14 : vector<64x256xf32>
      %c0_14 = arith.constant 0 : index
      %c0_15 = arith.constant 0 : index
      %16 = vector.load %arg6[%c0_14, %c0_15] : memref<64x256xf32, #tpu.memory_space<vmem>>, vector<64x256xf32>
      tpu.vector_store %arg6[%c0_14, %c0_15], %15 {strides = array<i32>} : memref<64x256xf32, #tpu.memory_space<vmem>>, vector<64x256xf32>,
    } else {
    }
    return
  }
  func.func @transform_0(%arg0: i32, %arg1: i32, %arg2: i32) -> (i32, i32) {
    %c0_i32 = arith.constant 0 : i32
    return %arg0, %arg2 : i32, i32
  }
  func.func @transform_1(%arg0: i32, %arg1: i32, %arg2: i32) -> (i32, i32) {
    %c0_i32 = arith.constant 0 : i32
    return %arg2, %arg1 : i32, i32
  }
  func.func @transform_2(%arg0: i32, %arg1: i32, %arg2: i32) -> (i32, i32) {
    %c0_i32 = arith.constant 0 : i32
    %c0_i32_0 = arith.constant 0 : i32
    return %c0_i32, %arg1 : i32, i32
  }
  func.func @transform_3(%arg0: i32, %arg1: i32, %arg2: i32) -> (i32, i32) {
    %c0_i32 = arith.constant 0 : i32
    return %arg0, %arg1 : i32, i32
  }
}

module attributes {stable_mosaic.version = 11 : i64} {
  func.func @_flash_attn_kernel(%arg0: i32, %arg1: i32, %arg2: i32, %arg3: i32, %arg4: memref<1x32x128xbf16, #tpu.memory_space<vmem>>, %arg5: memref<1x32x128xbf16, #tpu.memory_space<vmem>>, %arg6: memref<1x32x128xbf16, #tpu.memory_space<vmem>>, %arg7: memref<1x32x128xf32, #tpu.memory_space<vmem>>, %arg8: memref<32x1xf32, #tpu.memory_space<vmem>>, %arg9: memref<32x1xf32, #tpu.memory_space<vmem>>, %arg10: memref<32x128xf32, #tpu.memory_space<vmem>>) attributes {dimension_semantics = [#tpu.dimension_semantics<parallel>, #tpu.dimension_semantics<parallel>, #tpu.dimension_semantics<parallel>, #tpu.dimension_semantics<arbitrary>], iteration_bounds = array<i64: 2, 2, 1, 1>, scalar_prefetch = 0 : i64, scratch_operands = 3 : i64, tpu.core_type = #tpu.core_type<tc>, window_params = [{transform_indices = @transform_0, window_bounds = array<i64: 1, 32, 128>}, {transform_indices = @transform_1, window_bounds = array<i64: 1, 32, 128>}, {transform_indices = @transform_2, window_bounds = array<i64: 1, 32, 128>}, {transform_indices = @transform_3, window_bounds = array<i64: 1, 32, 128>}]} {
    %c0_i32 = arith.constant 0 : i32
    %0 = arith.cmpi eq, %arg3, %c0_i32 : i32
    %1 = arith.extui %0 : i1 to i32
    %c0_i32_0 = arith.constant 0 : i32
    %2 = arith.cmpi ne, %1, %c0_i32_0 : i32
    scf.if %2 {
      %cst_27 = arith.constant -1.000000e+30 : f32
      %38 = vector.broadcast %cst_27 : f32 to vector<32x1xf32>
      %c0_28 = arith.constant 0 : index
      %c0_29 = arith.constant 0 : index
      %39 = vector.load %arg8[%c0_28, %c0_29] : memref<32x1xf32, #tpu.memory_space<vmem>>, vector<32x1xf32>
      tpu.vector_store %arg8[%c0_28, %c0_29], %38 {strides = array<i32>} : memref<32x1xf32, #tpu.memory_space<vmem>>, vector<32x1xf32>,
      %cst_30 = arith.constant 0.000000e+00 : f32
      %40 = vector.broadcast %cst_30 : f32 to vector<32x1xf32>
      %c0_31 = arith.constant 0 : index
      %c0_32 = arith.constant 0 : index
      %41 = vector.load %arg9[%c0_31, %c0_32] : memref<32x1xf32, #tpu.memory_space<vmem>>, vector<32x1xf32>
      tpu.vector_store %arg9[%c0_31, %c0_32], %40 {strides = array<i32>} : memref<32x1xf32, #tpu.memory_space<vmem>>, vector<32x1xf32>,
      %cst_33 = arith.constant 0.000000e+00 : f32
      %42 = vector.broadcast %cst_33 : f32 to vector<32x128xf32>
      %c0_34 = arith.constant 0 : index
      %c0_35 = arith.constant 0 : index
      %43 = vector.load %arg10[%c0_34, %c0_35] : memref<32x128xf32, #tpu.memory_space<vmem>>, vector<32x128xf32>
      tpu.vector_store %arg10[%c0_34, %c0_35], %42 {strides = array<i32>} : memref<32x128xf32, #tpu.memory_space<vmem>>, vector<32x128xf32>,
    } else {
    }
    %c0 = arith.constant 0 : index
    %c0_1 = arith.constant 0 : index
    %c0_2 = arith.constant 0 : index
    %3 = vector.load %arg4[%c0, %c0_1, %c0_2] : memref<1x32x128xbf16, #tpu.memory_space<vmem>>, vector<1x32x128xbf16>
    %4 = vector.shape_cast %3 : vector<1x32x128xbf16> to vector<32x128xbf16>
    %c0_3 = arith.constant 0 : index
    %c0_4 = arith.constant 0 : index
    %c0_5 = arith.constant 0 : index
    %5 = vector.load %arg5[%c0_3, %c0_4, %c0_5] : memref<1x32x128xbf16, #tpu.memory_space<vmem>>, vector<1x32x128xbf16>
    %6 = vector.shape_cast %5 : vector<1x32x128xbf16> to vector<32x128xbf16>
    %c0_6 = arith.constant 0 : index
    %c0_7 = arith.constant 0 : index
    %c0_8 = arith.constant 0 : index
    %7 = vector.load %arg6[%c0_6, %c0_7, %c0_8] : memref<1x32x128xbf16, #tpu.memory_space<vmem>>, vector<1x32x128xbf16>
    %8 = vector.shape_cast %7 : vector<1x32x128xbf16> to vector<32x128xbf16>
    %cst = arith.constant dense<0.000000e+00> : vector<32x32xf32>
    %9 = tpu.matmul %4, %6, %cst {dimension_numbers = #tpu.dot_dimension_numbers<[1], [1], [0], [0], [0, 0, 1, 0], [], []>} : vector<32x128xbf16>, vector<32x128xbf16>, vector<32x32xf32> -> vector<32x32xf32>
    %cst_9 = arith.constant 0.0883883461 : f32
    %10 = vector.broadcast %cst_9 : f32 to vector<32x32xf32>
    %11 = arith.mulf %9, %10 : vector<32x32xf32>
    %c0_10 = arith.constant 0 : index
    %c0_11 = arith.constant 0 : index
    %12 = vector.load %arg8[%c0_10, %c0_11] : memref<32x1xf32, #tpu.memory_space<vmem>>, vector<32x1xf32>
    %cst_12 = arith.constant dense<0xFF800000> : vector<32xf32>
    %13 = vector.multi_reduction <maximumf>, %11, %cst_12 [1] : vector<32x32xf32> to vector<32xf32>
    %14 = vector.shape_cast %13 : vector<32xf32> to vector<32x1xf32>
    %15 = arith.maximumf %12, %14 : vector<32x1xf32>
    %16 = arith.subf %12, %15 : vector<32x1xf32>
    %17 = math.exp %16 : vector<32x1xf32>
    %18 = vector.broadcast %15 : vector<32x1xf32> to vector<32x32xf32>
    %19 = arith.subf %11, %18 : vector<32x32xf32>
    %20 = math.exp %19 : vector<32x32xf32>
    %c0_13 = arith.constant 0 : index
    %c0_14 = arith.constant 0 : index
    %21 = vector.load %arg9[%c0_13, %c0_14] : memref<32x1xf32, #tpu.memory_space<vmem>>, vector<32x1xf32>
    %22 = arith.mulf %17, %21 : vector<32x1xf32>
    %cst_15 = arith.constant dense<0.000000e+00> : vector<32xf32>
    %23 = vector.multi_reduction <add>, %20, %cst_15 [1] : vector<32x32xf32> to vector<32xf32>
    %24 = vector.shape_cast %23 : vector<32xf32> to vector<32x1xf32>
    %25 = arith.addf %22, %24 : vector<32x1xf32>
    %c0_16 = arith.constant 0 : index
    %c0_17 = arith.constant 0 : index
    %26 = vector.load %arg9[%c0_16, %c0_17] : memref<32x1xf32, #tpu.memory_space<vmem>>, vector<32x1xf32>
    tpu.vector_store %arg9[%c0_16, %c0_17], %25 {strides = array<i32>} : memref<32x1xf32, #tpu.memory_space<vmem>>, vector<32x1xf32>,
    %c0_18 = arith.constant 0 : index
    %c0_19 = arith.constant 0 : index
    %27 = vector.load %arg10[%c0_18, %c0_19] : memref<32x128xf32, #tpu.memory_space<vmem>>, vector<32x128xf32>
    %28 = vector.broadcast %17 : vector<32x1xf32> to vector<32x128xf32>
    %29 = arith.mulf %28, %27 : vector<32x128xf32>
    %30 = arith.truncf %20 : vector<32x32xf32> to vector<32x32xbf16>
    %cst_20 = arith.constant dense<0.000000e+00> : vector<32x128xf32>
    %31 = tpu.matmul %30, %8, %cst_20 {dimension_numbers = #tpu.dot_dimension_numbers<[1], [0], [0], [1], [0, 0, 1, 1], [], []>} : vector<32x32xbf16>, vector<32x128xbf16>, vector<32x128xf32> -> vector<32x128xf32>
    %32 = arith.addf %29, %31 : vector<32x128xf32>
    %c0_21 = arith.constant 0 : index
    %c0_22 = arith.constant 0 : index
    %33 = vector.load %arg10[%c0_21, %c0_22] : memref<32x128xf32, #tpu.memory_space<vmem>>, vector<32x128xf32>
    tpu.vector_store %arg10[%c0_21, %c0_22], %32 {strides = array<i32>} : memref<32x128xf32, #tpu.memory_space<vmem>>, vector<32x128xf32>,
    %c0_23 = arith.constant 0 : index
    %c0_24 = arith.constant 0 : index
    %34 = vector.load %arg8[%c0_23, %c0_24] : memref<32x1xf32, #tpu.memory_space<vmem>>, vector<32x1xf32>
    tpu.vector_store %arg8[%c0_23, %c0_24], %15 {strides = array<i32>} : memref<32x1xf32, #tpu.memory_space<vmem>>, vector<32x1xf32>,
    %c0_i32_25 = arith.constant 0 : i32
    %35 = arith.cmpi eq, %arg3, %c0_i32_25 : i32
    %36 = arith.extui %35 : i1 to i32
    %c0_i32_26 = arith.constant 0 : i32
    %37 = arith.cmpi ne, %36, %c0_i32_26 : i32
    scf.if %37 {
      %c0_27 = arith.constant 0 : index
      %c0_28 = arith.constant 0 : index
      %38 = vector.load %arg10[%c0_27, %c0_28] : memref<32x128xf32, #tpu.memory_space<vmem>>, vector<32x128xf32>
      %c0_29 = arith.constant 0 : index
      %c0_30 = arith.constant 0 : index
      %39 = vector.load %arg9[%c0_29, %c0_30] : memref<32x1xf32, #tpu.memory_space<vmem>>, vector<32x1xf32>
      %40 = tpu.reciprocal %39 {approx = true} : vector<32x1xf32> -> vector<32x1xf32>
      %41 = vector.broadcast %40 : vector<32x1xf32> to vector<32x128xf32>
      %42 = arith.mulf %38, %41 : vector<32x128xf32>
      %c0_31 = arith.constant 0 : index
      %c0_32 = arith.constant 0 : index
      %c0_33 = arith.constant 0 : index
      %43 = vector.load %arg7[%c0_31, %c0_32, %c0_33] : memref<1x32x128xf32, #tpu.memory_space<vmem>>, vector<1x32x128xf32>
      %44 = vector.shape_cast %43 : vector<1x32x128xf32> to vector<32x128xf32>
      %45 = vector.shape_cast %42 : vector<32x128xf32> to vector<1x32x128xf32>
      tpu.vector_store %arg7[%c0_31, %c0_32, %c0_33], %45 {strides = array<i32>} : memref<1x32x128xf32, #tpu.memory_space<vmem>>, vector<1x32x128xf32>,
    } else {
    }
    return
  }
  func.func @transform_0(%arg0: i32, %arg1: i32, %arg2: i32, %arg3: i32) -> (i32, i32, i32) {
    %c0_i32 = arith.constant 0 : i32
    return %arg0, %arg2, %arg1 : i32, i32, i32
  }
  func.func @transform_1(%arg0: i32, %arg1: i32, %arg2: i32, %arg3: i32) -> (i32, i32, i32) {
    %c0_i32 = arith.constant 0 : i32
    return %arg0, %arg3, %arg1 : i32, i32, i32
  }
  func.func @transform_2(%arg0: i32, %arg1: i32, %arg2: i32, %arg3: i32) -> (i32, i32, i32) {
    %c0_i32 = arith.constant 0 : i32
    return %arg0, %arg3, %arg1 : i32, i32, i32
  }
  func.func @transform_3(%arg0: i32, %arg1: i32, %arg2: i32, %arg3: i32) -> (i32, i32, i32) {
    %c0_i32 = arith.constant 0 : i32
    return %arg0, %arg2, %arg1 : i32, i32, i32
  }
}

module attributes {stable_mosaic.version = 11 : i64} {
  func.func @_residual_gate_kernel(%arg0: i32, %arg1: i32, %arg2: memref<1x32x256xf32, #tpu.memory_space<vmem>>, %arg3: memref<1x32x256xf32, #tpu.memory_space<vmem>>, %arg4: memref<1x1x256xf32, #tpu.memory_space<vmem>>, %arg5: memref<1x32x256xf32, #tpu.memory_space<vmem>>) attributes {dimension_semantics = [#tpu.dimension_semantics<parallel>, #tpu.dimension_semantics<parallel>], iteration_bounds = array<i64: 2, 1>, scalar_prefetch = 0 : i64, scratch_operands = 0 : i64, tpu.core_type = #tpu.core_type<tc>, window_params = [{transform_indices = @transform_0, window_bounds = array<i64: 1, 32, 256>}, {transform_indices = @transform_1, window_bounds = array<i64: 1, 32, 256>}, {transform_indices = @transform_2, window_bounds = array<i64: 1, 1, 256>}, {transform_indices = @transform_3, window_bounds = array<i64: 1, 32, 256>}]} {
    %c0 = arith.constant 0 : index
    %c0_0 = arith.constant 0 : index
    %c0_1 = arith.constant 0 : index
    %0 = vector.load %arg2[%c0, %c0_0, %c0_1] : memref<1x32x256xf32, #tpu.memory_space<vmem>>, vector<1x32x256xf32>
    %c0_2 = arith.constant 0 : index
    %c0_3 = arith.constant 0 : index
    %c0_4 = arith.constant 0 : index
    %1 = vector.load %arg3[%c0_2, %c0_3, %c0_4] : memref<1x32x256xf32, #tpu.memory_space<vmem>>, vector<1x32x256xf32>
    %c0_5 = arith.constant 0 : index
    %c0_6 = arith.constant 0 : index
    %c0_7 = arith.constant 0 : index
    %2 = vector.load %arg4[%c0_5, %c0_6, %c0_7] : memref<1x1x256xf32, #tpu.memory_space<vmem>>, vector<1x1x256xf32>
    %3 = vector.broadcast %2 : vector<1x1x256xf32> to vector<1x32x256xf32>
    %4 = arith.mulf %1, %3 : vector<1x32x256xf32>
    %5 = arith.addf %0, %4 : vector<1x32x256xf32>
    %c0_8 = arith.constant 0 : index
    %c0_9 = arith.constant 0 : index
    %c0_10 = arith.constant 0 : index
    %6 = vector.load %arg5[%c0_8, %c0_9, %c0_10] : memref<1x32x256xf32, #tpu.memory_space<vmem>>, vector<1x32x256xf32>
    tpu.vector_store %arg5[%c0_8, %c0_9, %c0_10], %5 {strides = array<i32>} : memref<1x32x256xf32, #tpu.memory_space<vmem>>, vector<1x32x256xf32>,
    return
  }
  func.func @transform_0(%arg0: i32, %arg1: i32) -> (i32, i32, i32) {
    %c0_i32 = arith.constant 0 : i32
    %c0_i32_0 = arith.constant 0 : i32
    return %arg0, %arg1, %c0_i32 : i32, i32, i32
  }
  func.func @transform_1(%arg0: i32, %arg1: i32) -> (i32, i32, i32) {
    %c0_i32 = arith.constant 0 : i32
    %c0_i32_0 = arith.constant 0 : i32
    return %arg0, %arg1, %c0_i32 : i32, i32, i32
  }
  func.func @transform_2(%arg0: i32, %arg1: i32) -> (i32, i32, i32) {
    %c0_i32 = arith.constant 0 : i32
    %c0_i32_0 = arith.constant 0 : i32
    %c0_i32_1 = arith.constant 0 : i32
    return %arg0, %c0_i32, %c0_i32_0 : i32, i32, i32
  }
  func.func @transform_3(%arg0: i32, %arg1: i32) -> (i32, i32, i32) {
    %c0_i32 = arith.constant 0 : i32
    %c0_i32_0 = arith.constant 0 : i32
    return %arg0, %arg1, %c0_i32 : i32, i32, i32
  }
}

module attributes {stable_mosaic.version = 11 : i64} {
  func.func @_rmsnorm_kernel(%arg0: i32, %arg1: memref<32x256xf32, #tpu.memory_space<vmem>>, %arg2: memref<1x256xf32, #tpu.memory_space<vmem>>, %arg3: memref<32x256xf32, #tpu.memory_space<vmem>>) attributes {dimension_semantics = [#tpu.dimension_semantics<parallel>], iteration_bounds = array<i64: 1>, scalar_prefetch = 0 : i64, scratch_operands = 0 : i64, tpu.core_type = #tpu.core_type<tc>, window_params = [{transform_indices = @transform_0, window_bounds = array<i64: 32, 256>}, {pipeline_mode = #tpu.pipeline_mode<synchronous>, transform_indices = @transform_1, window_bounds = array<i64: 1, 256>}, {transform_indices = @transform_2, window_bounds = array<i64: 32, 256>}]} {
    %c0 = arith.constant 0 : index
    %c0_0 = arith.constant 0 : index
    %0 = vector.load %arg1[%c0, %c0_0] : memref<32x256xf32, #tpu.memory_space<vmem>>, vector<32x256xf32>
    %1 = arith.mulf %0, %0 : vector<32x256xf32>
    %cst = arith.constant dense<0.000000e+00> : vector<32xf32>
    %2 = vector.multi_reduction <add>, %1, %cst [1] : vector<32x256xf32> to vector<32xf32>
    %3 = vector.shape_cast %2 : vector<32xf32> to vector<32x1xf32>
    %cst_1 = arith.constant 2.560000e+02 : f32
    %4 = vector.broadcast %cst_1 : f32 to vector<32x1xf32>
    %5 = arith.divf %3, %4 : vector<32x1xf32>
    %cst_2 = arith.constant 9.99999997E-7 : f32
    %6 = vector.broadcast %cst_2 : f32 to vector<32x1xf32>
    %7 = arith.addf %5, %6 : vector<32x1xf32>
    %8 = math.rsqrt %7 : vector<32x1xf32>
    %9 = vector.broadcast %8 : vector<32x1xf32> to vector<32x256xf32>
    %10 = arith.mulf %0, %9 : vector<32x256xf32>
    %c0_3 = arith.constant 0 : index
    %c0_4 = arith.constant 0 : index
    %11 = vector.load %arg2[%c0_3, %c0_4] : memref<1x256xf32, #tpu.memory_space<vmem>>, vector<1x256xf32>
    %12 = vector.broadcast %11 : vector<1x256xf32> to vector<32x256xf32>
    %13 = arith.mulf %10, %12 : vector<32x256xf32>
    %c0_5 = arith.constant 0 : index
    %c0_6 = arith.constant 0 : index
    %14 = vector.load %arg3[%c0_5, %c0_6] : memref<32x256xf32, #tpu.memory_space<vmem>>, vector<32x256xf32>
    tpu.vector_store %arg3[%c0_5, %c0_6], %13 {strides = array<i32>} : memref<32x256xf32, #tpu.memory_space<vmem>>, vector<32x256xf32>,
    return
  }
  func.func @transform_0(%arg0: i32) -> (i32, i32) {
    %c0_i32 = arith.constant 0 : i32
    %c0_i32_0 = arith.constant 0 : i32
    return %arg0, %c0_i32 : i32, i32
  }
  func.func @transform_1(%arg0: i32) -> (i32, i32) {
    %c0_i32 = arith.constant 0 : i32
    %c0_i32_0 = arith.constant 0 : i32
    %c0_i32_1 = arith.constant 0 : i32
    return %c0_i32, %c0_i32_0 : i32, i32
  }
  func.func @transform_2(%arg0: i32) -> (i32, i32) {
    %c0_i32 = arith.constant 0 : i32
    %c0_i32_0 = arith.constant 0 : i32
    return %arg0, %c0_i32 : i32, i32
  }
}

module attributes {stable_mosaic.version = 11 : i64} {
  func.func @_linear_kernel(%arg0: i32, %arg1: i32, %arg2: i32, %arg3: memref<32x256xbf16, #tpu.memory_space<vmem>>, %arg4: memref<256x256xbf16, #tpu.memory_space<vmem>>, %arg5: memref<1x256xf32, #tpu.memory_space<vmem>>, %arg6: memref<32x256xf32, #tpu.memory_space<vmem>>, %arg7: memref<32x256xf32, #tpu.memory_space<vmem>>) attributes {dimension_semantics = [#tpu.dimension_semantics<parallel>, #tpu.dimension_semantics<parallel>, #tpu.dimension_semantics<arbitrary>], iteration_bounds = array<i64: 1, 1, 1>, scalar_prefetch = 0 : i64, scratch_operands = 1 : i64, tpu.core_type = #tpu.core_type<tc>, window_params = [{transform_indices = @transform_0, window_bounds = array<i64: 32, 256>}, {transform_indices = @transform_1, window_bounds = array<i64: 256, 256>}, {transform_indices = @transform_2, window_bounds = array<i64: 1, 256>}, {transform_indices = @transform_3, window_bounds = array<i64: 32, 256>}]} {
    %c0_i32 = arith.constant 0 : i32
    %0 = arith.cmpi eq, %arg2, %c0_i32 : i32
    %1 = arith.extui %0 : i1 to i32
    %c0_i32_0 = arith.constant 0 : i32
    %2 = arith.cmpi ne, %1, %c0_i32_0 : i32
    scf.if %2 {
      %cst_10 = arith.constant 0.000000e+00 : f32
      %12 = vector.broadcast %cst_10 : f32 to vector<32x256xf32>
      %c0_11 = arith.constant 0 : index
      %c0_12 = arith.constant 0 : index
      %13 = vector.load %arg7[%c0_11, %c0_12] : memref<32x256xf32, #tpu.memory_space<vmem>>, vector<32x256xf32>
      tpu.vector_store %arg7[%c0_11, %c0_12], %12 {strides = array<i32>} : memref<32x256xf32, #tpu.memory_space<vmem>>, vector<32x256xf32>,
    } else {
    }
    %c0 = arith.constant 0 : index
    %c0_1 = arith.constant 0 : index
    %3 = vector.load %arg7[%c0, %c0_1] : memref<32x256xf32, #tpu.memory_space<vmem>>, vector<32x256xf32>
    %c0_2 = arith.constant 0 : index
    %c0_3 = arith.constant 0 : index
    %4 = vector.load %arg3[%c0_2, %c0_3] : memref<32x256xbf16, #tpu.memory_space<vmem>>, vector<32x256xbf16>
    %c0_4 = arith.constant 0 : index
    %c0_5 = arith.constant 0 : index
    %5 = vector.load %arg4[%c0_4, %c0_5] : memref<256x256xbf16, #tpu.memory_space<vmem>>, vector<256x256xbf16>
    %cst = arith.constant dense<0.000000e+00> : vector<32x256xf32>
    %6 = tpu.matmul %4, %5, %cst {dimension_numbers = #tpu.dot_dimension_numbers<[1], [0], [0], [1], [0, 0, 1, 1], [], []>} : vector<32x256xbf16>, vector<256x256xbf16>, vector<32x256xf32> -> vector<32x256xf32>
    %7 = arith.addf %3, %6 : vector<32x256xf32>
    %c0_6 = arith.constant 0 : index
    %c0_7 = arith.constant 0 : index
    %8 = vector.load %arg7[%c0_6, %c0_7] : memref<32x256xf32, #tpu.memory_space<vmem>>, vector<32x256xf32>
    tpu.vector_store %arg7[%c0_6, %c0_7], %7 {strides = array<i32>} : memref<32x256xf32, #tpu.memory_space<vmem>>, vector<32x256xf32>,
    %c0_i32_8 = arith.constant 0 : i32
    %9 = arith.cmpi eq, %arg2, %c0_i32_8 : i32
    %10 = arith.extui %9 : i1 to i32
    %c0_i32_9 = arith.constant 0 : i32
    %11 = arith.cmpi ne, %10, %c0_i32_9 : i32
    scf.if %11 {
      %c0_10 = arith.constant 0 : index
      %c0_11 = arith.constant 0 : index
      %12 = vector.load %arg7[%c0_10, %c0_11] : memref<32x256xf32, #tpu.memory_space<vmem>>, vector<32x256xf32>
      %c0_12 = arith.constant 0 : index
      %c0_13 = arith.constant 0 : index
      %13 = vector.load %arg5[%c0_12, %c0_13] : memref<1x256xf32, #tpu.memory_space<vmem>>, vector<1x256xf32>
      %14 = vector.broadcast %13 : vector<1x256xf32> to vector<32x256xf32>
      %15 = arith.addf %12, %14 : vector<32x256xf32>
      %c0_14 = arith.constant 0 : index
      %c0_15 = arith.constant 0 : index
      %16 = vector.load %arg6[%c0_14, %c0_15] : memref<32x256xf32, #tpu.memory_space<vmem>>, vector<32x256xf32>
      tpu.vector_store %arg6[%c0_14, %c0_15], %15 {strides = array<i32>} : memref<32x256xf32, #tpu.memory_space<vmem>>, vector<32x256xf32>,
    } else {
    }
    return
  }
  func.func @transform_0(%arg0: i32, %arg1: i32, %arg2: i32) -> (i32, i32) {
    %c0_i32 = arith.constant 0 : i32
    return %arg0, %arg2 : i32, i32
  }
  func.func @transform_1(%arg0: i32, %arg1: i32, %arg2: i32) -> (i32, i32) {
    %c0_i32 = arith.constant 0 : i32
    return %arg2, %arg1 : i32, i32
  }
  func.func @transform_2(%arg0: i32, %arg1: i32, %arg2: i32) -> (i32, i32) {
    %c0_i32 = arith.constant 0 : i32
    %c0_i32_0 = arith.constant 0 : i32
    return %c0_i32, %arg1 : i32, i32
  }
  func.func @transform_3(%arg0: i32, %arg1: i32, %arg2: i32) -> (i32, i32) {
    %c0_i32 = arith.constant 0 : i32
    return %arg0, %arg1 : i32, i32
  }
}

module attributes {stable_mosaic.version = 11 : i64} {
  func.func @_flash_attn_kernel(%arg0: i32, %arg1: i32, %arg2: i32, %arg3: i32, %arg4: memref<1x32x128xbf16, #tpu.memory_space<vmem>>, %arg5: memref<1x16x128xbf16, #tpu.memory_space<vmem>>, %arg6: memref<1x16x128xbf16, #tpu.memory_space<vmem>>, %arg7: memref<1x32x128xf32, #tpu.memory_space<vmem>>, %arg8: memref<32x1xf32, #tpu.memory_space<vmem>>, %arg9: memref<32x1xf32, #tpu.memory_space<vmem>>, %arg10: memref<32x128xf32, #tpu.memory_space<vmem>>) attributes {dimension_semantics = [#tpu.dimension_semantics<parallel>, #tpu.dimension_semantics<parallel>, #tpu.dimension_semantics<parallel>, #tpu.dimension_semantics<arbitrary>], iteration_bounds = array<i64: 2, 2, 1, 1>, scalar_prefetch = 0 : i64, scratch_operands = 3 : i64, tpu.core_type = #tpu.core_type<tc>, window_params = [{transform_indices = @transform_0, window_bounds = array<i64: 1, 32, 128>}, {transform_indices = @transform_1, window_bounds = array<i64: 1, 16, 128>}, {transform_indices = @transform_2, window_bounds = array<i64: 1, 16, 128>}, {transform_indices = @transform_3, window_bounds = array<i64: 1, 32, 128>}]} {
    %c0_i32 = arith.constant 0 : i32
    %0 = arith.cmpi eq, %arg3, %c0_i32 : i32
    %1 = arith.extui %0 : i1 to i32
    %c0_i32_0 = arith.constant 0 : i32
    %2 = arith.cmpi ne, %1, %c0_i32_0 : i32
    scf.if %2 {
      %cst_27 = arith.constant -1.000000e+30 : f32
      %38 = vector.broadcast %cst_27 : f32 to vector<32x1xf32>
      %c0_28 = arith.constant 0 : index
      %c0_29 = arith.constant 0 : index
      %39 = vector.load %arg8[%c0_28, %c0_29] : memref<32x1xf32, #tpu.memory_space<vmem>>, vector<32x1xf32>
      tpu.vector_store %arg8[%c0_28, %c0_29], %38 {strides = array<i32>} : memref<32x1xf32, #tpu.memory_space<vmem>>, vector<32x1xf32>,
      %cst_30 = arith.constant 0.000000e+00 : f32
      %40 = vector.broadcast %cst_30 : f32 to vector<32x1xf32>
      %c0_31 = arith.constant 0 : index
      %c0_32 = arith.constant 0 : index
      %41 = vector.load %arg9[%c0_31, %c0_32] : memref<32x1xf32, #tpu.memory_space<vmem>>, vector<32x1xf32>
      tpu.vector_store %arg9[%c0_31, %c0_32], %40 {strides = array<i32>} : memref<32x1xf32, #tpu.memory_space<vmem>>, vector<32x1xf32>,
      %cst_33 = arith.constant 0.000000e+00 : f32
      %42 = vector.broadcast %cst_33 : f32 to vector<32x128xf32>
      %c0_34 = arith.constant 0 : index
      %c0_35 = arith.constant 0 : index
      %43 = vector.load %arg10[%c0_34, %c0_35] : memref<32x128xf32, #tpu.memory_space<vmem>>, vector<32x128xf32>
      tpu.vector_store %arg10[%c0_34, %c0_35], %42 {strides = array<i32>} : memref<32x128xf32, #tpu.memory_space<vmem>>, vector<32x128xf32>,
    } else {
    }
    %c0 = arith.constant 0 : index
    %c0_1 = arith.constant 0 : index
    %c0_2 = arith.constant 0 : index
    %3 = vector.load %arg4[%c0, %c0_1, %c0_2] : memref<1x32x128xbf16, #tpu.memory_space<vmem>>, vector<1x32x128xbf16>
    %4 = vector.shape_cast %3 : vector<1x32x128xbf16> to vector<32x128xbf16>
    %c0_3 = arith.constant 0 : index
    %c0_4 = arith.constant 0 : index
    %c0_5 = arith.constant 0 : index
    %5 = vector.load %arg5[%c0_3, %c0_4, %c0_5] : memref<1x16x128xbf16, #tpu.memory_space<vmem>>, vector<1x16x128xbf16>
    %6 = vector.shape_cast %5 : vector<1x16x128xbf16> to vector<16x128xbf16>
    %c0_6 = arith.constant 0 : index
    %c0_7 = arith.constant 0 : index
    %c0_8 = arith.constant 0 : index
    %7 = vector.load %arg6[%c0_6, %c0_7, %c0_8] : memref<1x16x128xbf16, #tpu.memory_space<vmem>>, vector<1x16x128xbf16>
    %8 = vector.shape_cast %7 : vector<1x16x128xbf16> to vector<16x128xbf16>
    %cst = arith.constant dense<0.000000e+00> : vector<32x16xf32>
    %9 = tpu.matmul %4, %6, %cst {dimension_numbers = #tpu.dot_dimension_numbers<[1], [1], [0], [0], [0, 0, 1, 0], [], []>} : vector<32x128xbf16>, vector<16x128xbf16>, vector<32x16xf32> -> vector<32x16xf32>
    %cst_9 = arith.constant 0.0883883461 : f32
    %10 = vector.broadcast %cst_9 : f32 to vector<32x16xf32>
    %11 = arith.mulf %9, %10 : vector<32x16xf32>
    %c0_10 = arith.constant 0 : index
    %c0_11 = arith.constant 0 : index
    %12 = vector.load %arg8[%c0_10, %c0_11] : memref<32x1xf32, #tpu.memory_space<vmem>>, vector<32x1xf32>
    %cst_12 = arith.constant dense<0xFF800000> : vector<32xf32>
    %13 = vector.multi_reduction <maximumf>, %11, %cst_12 [1] : vector<32x16xf32> to vector<32xf32>
    %14 = vector.shape_cast %13 : vector<32xf32> to vector<32x1xf32>
    %15 = arith.maximumf %12, %14 : vector<32x1xf32>
    %16 = arith.subf %12, %15 : vector<32x1xf32>
    %17 = math.exp %16 : vector<32x1xf32>
    %18 = vector.broadcast %15 : vector<32x1xf32> to vector<32x16xf32>
    %19 = arith.subf %11, %18 : vector<32x16xf32>
    %20 = math.exp %19 : vector<32x16xf32>
    %c0_13 = arith.constant 0 : index
    %c0_14 = arith.constant 0 : index
    %21 = vector.load %arg9[%c0_13, %c0_14] : memref<32x1xf32, #tpu.memory_space<vmem>>, vector<32x1xf32>
    %22 = arith.mulf %17, %21 : vector<32x1xf32>
    %cst_15 = arith.constant dense<0.000000e+00> : vector<32xf32>
    %23 = vector.multi_reduction <add>, %20, %cst_15 [1] : vector<32x16xf32> to vector<32xf32>
    %24 = vector.shape_cast %23 : vector<32xf32> to vector<32x1xf32>
    %25 = arith.addf %22, %24 : vector<32x1xf32>
    %c0_16 = arith.constant 0 : index
    %c0_17 = arith.constant 0 : index
    %26 = vector.load %arg9[%c0_16, %c0_17] : memref<32x1xf32, #tpu.memory_space<vmem>>, vector<32x1xf32>
    tpu.vector_store %arg9[%c0_16, %c0_17], %25 {strides = array<i32>} : memref<32x1xf32, #tpu.memory_space<vmem>>, vector<32x1xf32>,
    %c0_18 = arith.constant 0 : index
    %c0_19 = arith.constant 0 : index
    %27 = vector.load %arg10[%c0_18, %c0_19] : memref<32x128xf32, #tpu.memory_space<vmem>>, vector<32x128xf32>
    %28 = vector.broadcast %17 : vector<32x1xf32> to vector<32x128xf32>
    %29 = arith.mulf %28, %27 : vector<32x128xf32>
    %30 = arith.truncf %20 : vector<32x16xf32> to vector<32x16xbf16>
    %cst_20 = arith.constant dense<0.000000e+00> : vector<32x128xf32>
    %31 = tpu.matmul %30, %8, %cst_20 {dimension_numbers = #tpu.dot_dimension_numbers<[1], [0], [0], [1], [0, 0, 1, 1], [], []>} : vector<32x16xbf16>, vector<16x128xbf16>, vector<32x128xf32> -> vector<32x128xf32>
    %32 = arith.addf %29, %31 : vector<32x128xf32>
    %c0_21 = arith.constant 0 : index
    %c0_22 = arith.constant 0 : index
    %33 = vector.load %arg10[%c0_21, %c0_22] : memref<32x128xf32, #tpu.memory_space<vmem>>, vector<32x128xf32>
    tpu.vector_store %arg10[%c0_21, %c0_22], %32 {strides = array<i32>} : memref<32x128xf32, #tpu.memory_space<vmem>>, vector<32x128xf32>,
    %c0_23 = arith.constant 0 : index
    %c0_24 = arith.constant 0 : index
    %34 = vector.load %arg8[%c0_23, %c0_24] : memref<32x1xf32, #tpu.memory_space<vmem>>, vector<32x1xf32>
    tpu.vector_store %arg8[%c0_23, %c0_24], %15 {strides = array<i32>} : memref<32x1xf32, #tpu.memory_space<vmem>>, vector<32x1xf32>,
    %c0_i32_25 = arith.constant 0 : i32
    %35 = arith.cmpi eq, %arg3, %c0_i32_25 : i32
    %36 = arith.extui %35 : i1 to i32
    %c0_i32_26 = arith.constant 0 : i32
    %37 = arith.cmpi ne, %36, %c0_i32_26 : i32
    scf.if %37 {
      %c0_27 = arith.constant 0 : index
      %c0_28 = arith.constant 0 : index
      %38 = vector.load %arg10[%c0_27, %c0_28] : memref<32x128xf32, #tpu.memory_space<vmem>>, vector<32x128xf32>
      %c0_29 = arith.constant 0 : index
      %c0_30 = arith.constant 0 : index
      %39 = vector.load %arg9[%c0_29, %c0_30] : memref<32x1xf32, #tpu.memory_space<vmem>>, vector<32x1xf32>
      %40 = tpu.reciprocal %39 {approx = true} : vector<32x1xf32> -> vector<32x1xf32>
      %41 = vector.broadcast %40 : vector<32x1xf32> to vector<32x128xf32>
      %42 = arith.mulf %38, %41 : vector<32x128xf32>
      %c0_31 = arith.constant 0 : index
      %c0_32 = arith.constant 0 : index
      %c0_33 = arith.constant 0 : index
      %43 = vector.load %arg7[%c0_31, %c0_32, %c0_33] : memref<1x32x128xf32, #tpu.memory_space<vmem>>, vector<1x32x128xf32>
      %44 = vector.shape_cast %43 : vector<1x32x128xf32> to vector<32x128xf32>
      %45 = vector.shape_cast %42 : vector<32x128xf32> to vector<1x32x128xf32>
      tpu.vector_store %arg7[%c0_31, %c0_32, %c0_33], %45 {strides = array<i32>} : memref<1x32x128xf32, #tpu.memory_space<vmem>>, vector<1x32x128xf32>,
    } else {
    }
    return
  }
  func.func @transform_0(%arg0: i32, %arg1: i32, %arg2: i32, %arg3: i32) -> (i32, i32, i32) {
    %c0_i32 = arith.constant 0 : i32
    return %arg0, %arg2, %arg1 : i32, i32, i32
  }
  func.func @transform_1(%arg0: i32, %arg1: i32, %arg2: i32, %arg3: i32) -> (i32, i32, i32) {
    %c0_i32 = arith.constant 0 : i32
    return %arg0, %arg3, %arg1 : i32, i32, i32
  }
  func.func @transform_2(%arg0: i32, %arg1: i32, %arg2: i32, %arg3: i32) -> (i32, i32, i32) {
    %c0_i32 = arith.constant 0 : i32
    return %arg0, %arg3, %arg1 : i32, i32, i32
  }
  func.func @transform_3(%arg0: i32, %arg1: i32, %arg2: i32, %arg3: i32) -> (i32, i32, i32) {
    %c0_i32 = arith.constant 0 : i32
    return %arg0, %arg2, %arg1 : i32, i32, i32
  }
}

module attributes {stable_mosaic.version = 11 : i64} {
  func.func @_residual_add_kernel(%arg0: i32, %arg1: i32, %arg2: memref<1x32x256xf32, #tpu.memory_space<vmem>>, %arg3: memref<1x32x256xf32, #tpu.memory_space<vmem>>, %arg4: memref<1x32x256xf32, #tpu.memory_space<vmem>>) attributes {dimension_semantics = [#tpu.dimension_semantics<parallel>, #tpu.dimension_semantics<parallel>], iteration_bounds = array<i64: 2, 1>, scalar_prefetch = 0 : i64, scratch_operands = 0 : i64, tpu.core_type = #tpu.core_type<tc>, window_params = [{transform_indices = @transform_0, window_bounds = array<i64: 1, 32, 256>}, {transform_indices = @transform_1, window_bounds = array<i64: 1, 32, 256>}, {transform_indices = @transform_2, window_bounds = array<i64: 1, 32, 256>}]} {
    %c0 = arith.constant 0 : index
    %c0_0 = arith.constant 0 : index
    %c0_1 = arith.constant 0 : index
    %0 = vector.load %arg2[%c0, %c0_0, %c0_1] : memref<1x32x256xf32, #tpu.memory_space<vmem>>, vector<1x32x256xf32>
    %c0_2 = arith.constant 0 : index
    %c0_3 = arith.constant 0 : index
    %c0_4 = arith.constant 0 : index
    %1 = vector.load %arg3[%c0_2, %c0_3, %c0_4] : memref<1x32x256xf32, #tpu.memory_space<vmem>>, vector<1x32x256xf32>
    %2 = arith.addf %0, %1 : vector<1x32x256xf32>
    %c0_5 = arith.constant 0 : index
    %c0_6 = arith.constant 0 : index
    %c0_7 = arith.constant 0 : index
    %3 = vector.load %arg4[%c0_5, %c0_6, %c0_7] : memref<1x32x256xf32, #tpu.memory_space<vmem>>, vector<1x32x256xf32>
    tpu.vector_store %arg4[%c0_5, %c0_6, %c0_7], %2 {strides = array<i32>} : memref<1x32x256xf32, #tpu.memory_space<vmem>>, vector<1x32x256xf32>,
    return
  }
  func.func @transform_0(%arg0: i32, %arg1: i32) -> (i32, i32, i32) {
    %c0_i32 = arith.constant 0 : i32
    %c0_i32_0 = arith.constant 0 : i32
    return %arg0, %arg1, %c0_i32 : i32, i32, i32
  }
  func.func @transform_1(%arg0: i32, %arg1: i32) -> (i32, i32, i32) {
    %c0_i32 = arith.constant 0 : i32
    %c0_i32_0 = arith.constant 0 : i32
    return %arg0, %arg1, %c0_i32 : i32, i32, i32
  }
  func.func @transform_2(%arg0: i32, %arg1: i32) -> (i32, i32, i32) {
    %c0_i32 = arith.constant 0 : i32
    %c0_i32_0 = arith.constant 0 : i32
    return %arg0, %arg1, %c0_i32 : i32, i32, i32
  }
}

module attributes {stable_mosaic.version = 11 : i64} {
  func.func @_linear_kernel(%arg0: i32, %arg1: i32, %arg2: i32, %arg3: memref<64x256xbf16, #tpu.memory_space<vmem>>, %arg4: memref<256x512xbf16, #tpu.memory_space<vmem>>, %arg5: memref<1x512xf32, #tpu.memory_space<vmem>>, %arg6: memref<64x512xbf16, #tpu.memory_space<vmem>>, %arg7: memref<64x512xf32, #tpu.memory_space<vmem>>) attributes {dimension_semantics = [#tpu.dimension_semantics<parallel>, #tpu.dimension_semantics<parallel>, #tpu.dimension_semantics<arbitrary>], iteration_bounds = array<i64: 1, 1, 1>, scalar_prefetch = 0 : i64, scratch_operands = 1 : i64, tpu.core_type = #tpu.core_type<tc>, window_params = [{transform_indices = @transform_0, window_bounds = array<i64: 64, 256>}, {transform_indices = @transform_1, window_bounds = array<i64: 256, 512>}, {transform_indices = @transform_2, window_bounds = array<i64: 1, 512>}, {transform_indices = @transform_3, window_bounds = array<i64: 64, 512>}]} {
    %c0_i32 = arith.constant 0 : i32
    %0 = arith.cmpi eq, %arg2, %c0_i32 : i32
    %1 = arith.extui %0 : i1 to i32
    %c0_i32_0 = arith.constant 0 : i32
    %2 = arith.cmpi ne, %1, %c0_i32_0 : i32
    scf.if %2 {
      %cst_10 = arith.constant 0.000000e+00 : f32
      %12 = vector.broadcast %cst_10 : f32 to vector<64x512xf32>
      %c0_11 = arith.constant 0 : index
      %c0_12 = arith.constant 0 : index
      %13 = vector.load %arg7[%c0_11, %c0_12] : memref<64x512xf32, #tpu.memory_space<vmem>>, vector<64x512xf32>
      tpu.vector_store %arg7[%c0_11, %c0_12], %12 {strides = array<i32>} : memref<64x512xf32, #tpu.memory_space<vmem>>, vector<64x512xf32>,
    } else {
    }
    %c0 = arith.constant 0 : index
    %c0_1 = arith.constant 0 : index
    %3 = vector.load %arg7[%c0, %c0_1] : memref<64x512xf32, #tpu.memory_space<vmem>>, vector<64x512xf32>
    %c0_2 = arith.constant 0 : index
    %c0_3 = arith.constant 0 : index
    %4 = vector.load %arg3[%c0_2, %c0_3] : memref<64x256xbf16, #tpu.memory_space<vmem>>, vector<64x256xbf16>
    %c0_4 = arith.constant 0 : index
    %c0_5 = arith.constant 0 : index
    %5 = vector.load %arg4[%c0_4, %c0_5] : memref<256x512xbf16, #tpu.memory_space<vmem>>, vector<256x512xbf16>
    %cst = arith.constant dense<0.000000e+00> : vector<64x512xf32>
    %6 = tpu.matmul %4, %5, %cst {dimension_numbers = #tpu.dot_dimension_numbers<[1], [0], [0], [1], [0, 0, 1, 1], [], []>} : vector<64x256xbf16>, vector<256x512xbf16>, vector<64x512xf32> -> vector<64x512xf32>
    %7 = arith.addf %3, %6 : vector<64x512xf32>
    %c0_6 = arith.constant 0 : index
    %c0_7 = arith.constant 0 : index
    %8 = vector.load %arg7[%c0_6, %c0_7] : memref<64x512xf32, #tpu.memory_space<vmem>>, vector<64x512xf32>
    tpu.vector_store %arg7[%c0_6, %c0_7], %7 {strides = array<i32>} : memref<64x512xf32, #tpu.memory_space<vmem>>, vector<64x512xf32>,
    %c0_i32_8 = arith.constant 0 : i32
    %9 = arith.cmpi eq, %arg2, %c0_i32_8 : i32
    %10 = arith.extui %9 : i1 to i32
    %c0_i32_9 = arith.constant 0 : i32
    %11 = arith.cmpi ne, %10, %c0_i32_9 : i32
    scf.if %11 {
      %c0_10 = arith.constant 0 : index
      %c0_11 = arith.constant 0 : index
      %12 = vector.load %arg7[%c0_10, %c0_11] : memref<64x512xf32, #tpu.memory_space<vmem>>, vector<64x512xf32>
      %c0_12 = arith.constant 0 : index
      %c0_13 = arith.constant 0 : index
      %13 = vector.load %arg5[%c0_12, %c0_13] : memref<1x512xf32, #tpu.memory_space<vmem>>, vector<1x512xf32>
      %14 = vector.broadcast %13 : vector<1x512xf32> to vector<64x512xf32>
      %15 = arith.addf %12, %14 : vector<64x512xf32>
      %cst_14 = arith.constant 5.000000e-01 : f32
      %16 = vector.broadcast %cst_14 : f32 to vector<64x512xf32>
      %17 = arith.mulf %16, %15 : vector<64x512xf32>
      %cst_15 = arith.constant 4.471500e-02 : f32
      %18 = vector.broadcast %cst_15 : f32 to vector<64x512xf32>
      %19 = arith.mulf %18, %15 : vector<64x512xf32>
      %20 = arith.mulf %19, %15 : vector<64x512xf32>
      %21 = arith.mulf %20, %15 : vector<64x512xf32>
      %22 = arith.addf %15, %21 : vector<64x512xf32>
      %cst_16 = arith.constant 0.797884583 : f32
      %23 = vector.broadcast %cst_16 : f32 to vector<64x512xf32>
      %24 = arith.mulf %23, %22 : vector<64x512xf32>
      %25 = math.tanh %24 : vector<64x512xf32>
      %cst_17 = arith.constant 1.000000e+00 : f32
      %26 = vector.broadcast %cst_17 : f32 to vector<64x512xf32>
      %27 = arith.addf %26, %25 : vector<64x512xf32>
      %28 = arith.mulf %17, %27 : vector<64x512xf32>
      %29 = arith.truncf %28 : vector<64x512xf32> to vector<64x512xbf16>
      %c0_18 = arith.constant 0 : index
      %c0_19 = arith.constant 0 : index
      %30 = vector.load %arg6[%c0_18, %c0_19] : memref<64x512xbf16, #tpu.memory_space<vmem>>, vector<64x512xbf16>
      tpu.vector_store %arg6[%c0_18, %c0_19], %29 {strides = array<i32>} : memref<64x512xbf16, #tpu.memory_space<vmem>>, vector<64x512xbf16>,
    } else {
    }
    return
  }
  func.func @transform_0(%arg0: i32, %arg1: i32, %arg2: i32) -> (i32, i32) {
    %c0_i32 = arith.constant 0 : i32
    return %arg0, %arg2 : i32, i32
  }
  func.func @transform_1(%arg0: i32, %arg1: i32, %arg2: i32) -> (i32, i32) {
    %c0_i32 = arith.constant 0 : i32
    return %arg2, %arg1 : i32, i32
  }
  func.func @transform_2(%arg0: i32, %arg1: i32, %arg2: i32) -> (i32, i32) {
    %c0_i32 = arith.constant 0 : i32
    %c0_i32_0 = arith.constant 0 : i32
    return %c0_i32, %arg1 : i32, i32
  }
  func.func @transform_3(%arg0: i32, %arg1: i32, %arg2: i32) -> (i32, i32) {
    %c0_i32 = arith.constant 0 : i32
    return %arg0, %arg1 : i32, i32
  }
}

module attributes {stable_mosaic.version = 11 : i64} {
  func.func @_linear_kernel(%arg0: i32, %arg1: i32, %arg2: i32, %arg3: memref<64x512xbf16, #tpu.memory_space<vmem>>, %arg4: memref<512x256xbf16, #tpu.memory_space<vmem>>, %arg5: memref<1x256xf32, #tpu.memory_space<vmem>>, %arg6: memref<64x256xf32, #tpu.memory_space<vmem>>, %arg7: memref<64x256xf32, #tpu.memory_space<vmem>>) attributes {dimension_semantics = [#tpu.dimension_semantics<parallel>, #tpu.dimension_semantics<parallel>, #tpu.dimension_semantics<arbitrary>], iteration_bounds = array<i64: 1, 1, 1>, scalar_prefetch = 0 : i64, scratch_operands = 1 : i64, tpu.core_type = #tpu.core_type<tc>, window_params = [{transform_indices = @transform_0, window_bounds = array<i64: 64, 512>}, {transform_indices = @transform_1, window_bounds = array<i64: 512, 256>}, {transform_indices = @transform_2, window_bounds = array<i64: 1, 256>}, {transform_indices = @transform_3, window_bounds = array<i64: 64, 256>}]} {
    %c0_i32 = arith.constant 0 : i32
    %0 = arith.cmpi eq, %arg2, %c0_i32 : i32
    %1 = arith.extui %0 : i1 to i32
    %c0_i32_0 = arith.constant 0 : i32
    %2 = arith.cmpi ne, %1, %c0_i32_0 : i32
    scf.if %2 {
      %cst_10 = arith.constant 0.000000e+00 : f32
      %12 = vector.broadcast %cst_10 : f32 to vector<64x256xf32>
      %c0_11 = arith.constant 0 : index
      %c0_12 = arith.constant 0 : index
      %13 = vector.load %arg7[%c0_11, %c0_12] : memref<64x256xf32, #tpu.memory_space<vmem>>, vector<64x256xf32>
      tpu.vector_store %arg7[%c0_11, %c0_12], %12 {strides = array<i32>} : memref<64x256xf32, #tpu.memory_space<vmem>>, vector<64x256xf32>,
    } else {
    }
    %c0 = arith.constant 0 : index
    %c0_1 = arith.constant 0 : index
    %3 = vector.load %arg7[%c0, %c0_1] : memref<64x256xf32, #tpu.memory_space<vmem>>, vector<64x256xf32>
    %c0_2 = arith.constant 0 : index
    %c0_3 = arith.constant 0 : index
    %4 = vector.load %arg3[%c0_2, %c0_3] : memref<64x512xbf16, #tpu.memory_space<vmem>>, vector<64x512xbf16>
    %c0_4 = arith.constant 0 : index
    %c0_5 = arith.constant 0 : index
    %5 = vector.load %arg4[%c0_4, %c0_5] : memref<512x256xbf16, #tpu.memory_space<vmem>>, vector<512x256xbf16>
    %cst = arith.constant dense<0.000000e+00> : vector<64x256xf32>
    %6 = tpu.matmul %4, %5, %cst {dimension_numbers = #tpu.dot_dimension_numbers<[1], [0], [0], [1], [0, 0, 1, 1], [], []>} : vector<64x512xbf16>, vector<512x256xbf16>, vector<64x256xf32> -> vector<64x256xf32>
    %7 = arith.addf %3, %6 : vector<64x256xf32>
    %c0_6 = arith.constant 0 : index
    %c0_7 = arith.constant 0 : index
    %8 = vector.load %arg7[%c0_6, %c0_7] : memref<64x256xf32, #tpu.memory_space<vmem>>, vector<64x256xf32>
    tpu.vector_store %arg7[%c0_6, %c0_7], %7 {strides = array<i32>} : memref<64x256xf32, #tpu.memory_space<vmem>>, vector<64x256xf32>,
    %c0_i32_8 = arith.constant 0 : i32
    %9 = arith.cmpi eq, %arg2, %c0_i32_8 : i32
    %10 = arith.extui %9 : i1 to i32
    %c0_i32_9 = arith.constant 0 : i32
    %11 = arith.cmpi ne, %10, %c0_i32_9 : i32
    scf.if %11 {
      %c0_10 = arith.constant 0 : index
      %c0_11 = arith.constant 0 : index
      %12 = vector.load %arg7[%c0_10, %c0_11] : memref<64x256xf32, #tpu.memory_space<vmem>>, vector<64x256xf32>
      %c0_12 = arith.constant 0 : index
      %c0_13 = arith.constant 0 : index
      %13 = vector.load %arg5[%c0_12, %c0_13] : memref<1x256xf32, #tpu.memory_space<vmem>>, vector<1x256xf32>
      %14 = vector.broadcast %13 : vector<1x256xf32> to vector<64x256xf32>
      %15 = arith.addf %12, %14 : vector<64x256xf32>
      %c0_14 = arith.constant 0 : index
      %c0_15 = arith.constant 0 : index
      %16 = vector.load %arg6[%c0_14, %c0_15] : memref<64x256xf32, #tpu.memory_space<vmem>>, vector<64x256xf32>
      tpu.vector_store %arg6[%c0_14, %c0_15], %15 {strides = array<i32>} : memref<64x256xf32, #tpu.memory_space<vmem>>, vector<64x256xf32>,
    } else {
    }
    return
  }
  func.func @transform_0(%arg0: i32, %arg1: i32, %arg2: i32) -> (i32, i32) {
    %c0_i32 = arith.constant 0 : i32
    return %arg0, %arg2 : i32, i32
  }
  func.func @transform_1(%arg0: i32, %arg1: i32, %arg2: i32) -> (i32, i32) {
    %c0_i32 = arith.constant 0 : i32
    return %arg2, %arg1 : i32, i32
  }
  func.func @transform_2(%arg0: i32, %arg1: i32, %arg2: i32) -> (i32, i32) {
    %c0_i32 = arith.constant 0 : i32
    %c0_i32_0 = arith.constant 0 : i32
    return %c0_i32, %arg1 : i32, i32
  }
  func.func @transform_3(%arg0: i32, %arg1: i32, %arg2: i32) -> (i32, i32) {
    %c0_i32 = arith.constant 0 : i32
    return %arg0, %arg1 : i32, i32
  }
}

module attributes {stable_mosaic.version = 11 : i64} {
  func.func @_residual_gate_kernel(%arg0: i32, %arg1: i32, %arg2: memref<1x32x256xf32, #tpu.memory_space<vmem>>, %arg3: memref<1x32x256xf32, #tpu.memory_space<vmem>>, %arg4: memref<1x1x256xf32, #tpu.memory_space<vmem>>, %arg5: memref<1x32x256xf32, #tpu.memory_space<vmem>>) attributes {dimension_semantics = [#tpu.dimension_semantics<parallel>, #tpu.dimension_semantics<parallel>], iteration_bounds = array<i64: 2, 1>, scalar_prefetch = 0 : i64, scratch_operands = 0 : i64, tpu.core_type = #tpu.core_type<tc>, window_params = [{transform_indices = @transform_0, window_bounds = array<i64: 1, 32, 256>}, {transform_indices = @transform_1, window_bounds = array<i64: 1, 32, 256>}, {transform_indices = @transform_2, window_bounds = array<i64: 1, 1, 256>}, {transform_indices = @transform_3, window_bounds = array<i64: 1, 32, 256>}]} {
    %c0 = arith.constant 0 : index
    %c0_0 = arith.constant 0 : index
    %c0_1 = arith.constant 0 : index
    %0 = vector.load %arg2[%c0, %c0_0, %c0_1] : memref<1x32x256xf32, #tpu.memory_space<vmem>>, vector<1x32x256xf32>
    %c0_2 = arith.constant 0 : index
    %c0_3 = arith.constant 0 : index
    %c0_4 = arith.constant 0 : index
    %1 = vector.load %arg3[%c0_2, %c0_3, %c0_4] : memref<1x32x256xf32, #tpu.memory_space<vmem>>, vector<1x32x256xf32>
    %c0_5 = arith.constant 0 : index
    %c0_6 = arith.constant 0 : index
    %c0_7 = arith.constant 0 : index
    %2 = vector.load %arg4[%c0_5, %c0_6, %c0_7] : memref<1x1x256xf32, #tpu.memory_space<vmem>>, vector<1x1x256xf32>
    %3 = vector.broadcast %2 : vector<1x1x256xf32> to vector<1x32x256xf32>
    %4 = arith.mulf %1, %3 : vector<1x32x256xf32>
    %5 = arith.addf %0, %4 : vector<1x32x256xf32>
    %c0_8 = arith.constant 0 : index
    %c0_9 = arith.constant 0 : index
    %c0_10 = arith.constant 0 : index
    %6 = vector.load %arg5[%c0_8, %c0_9, %c0_10] : memref<1x32x256xf32, #tpu.memory_space<vmem>>, vector<1x32x256xf32>
    tpu.vector_store %arg5[%c0_8, %c0_9, %c0_10], %5 {strides = array<i32>} : memref<1x32x256xf32, #tpu.memory_space<vmem>>, vector<1x32x256xf32>,
    return
  }
  func.func @transform_0(%arg0: i32, %arg1: i32) -> (i32, i32, i32) {
    %c0_i32 = arith.constant 0 : i32
    %c0_i32_0 = arith.constant 0 : i32
    return %arg0, %arg1, %c0_i32 : i32, i32, i32
  }
  func.func @transform_1(%arg0: i32, %arg1: i32) -> (i32, i32, i32) {
    %c0_i32 = arith.constant 0 : i32
    %c0_i32_0 = arith.constant 0 : i32
    return %arg0, %arg1, %c0_i32 : i32, i32, i32
  }
  func.func @transform_2(%arg0: i32, %arg1: i32) -> (i32, i32, i32) {
    %c0_i32 = arith.constant 0 : i32
    %c0_i32_0 = arith.constant 0 : i32
    %c0_i32_1 = arith.constant 0 : i32
    return %arg0, %c0_i32, %c0_i32_0 : i32, i32, i32
  }
  func.func @transform_3(%arg0: i32, %arg1: i32) -> (i32, i32, i32) {
    %c0_i32 = arith.constant 0 : i32
    %c0_i32_0 = arith.constant 0 : i32
    return %arg0, %arg1, %c0_i32 : i32, i32, i32
  }
}

</mosaic_0001>

<llo_original>
// kernel: skyreels_block_forward.21
$region0: #{skyreels_block_forward.21}
  #allocation0 [shape = 'u32[]', space=smem, size = 0x4, offset = 0x4, fixed_abs, tag = 'smem constant byte address 0x4 - core index']
  #allocation1 [shape = 'u32[144,128]{1,0:T(1,128)}', space=vmem, size = 0x12000, scoped, tag = 'internal scratch']
  %s0 = inlined_call_operand.vmem [shape: f32[2,32,256], index: 0, kind: input, shape index: {}]
  %s1 = inlined_call_operand.vmem [shape: f32[2,1,256], index: 1, kind: input, shape index: {}]
  %s2 = inlined_call_operand.vmem [shape: f32[2,1,256], index: 2, kind: input, shape index: {}]
  %s3 = inlined_call_operand.vmem [shape: f32[2,32,256], index: 3, kind: output, shape index: {}]
  %s4 = sld [smem:[#allocation0]]
  $region45: #{skyreels_block_forward.21} parent=0
    _
  %s6 = ssub.s32 1, %s4
  %s7 = scalar_select 0, %s6, %s4
  loop: start=0, step=1, limit=4
  $region2: #{skyreels_block_forward.21} parent=0 // loop_pre_header
    _
  $region3: #{skyreels_block_forward.21} parent=0 // loop_header
    %s9 = sphi 0, %s13
    %p10 = scmp.ge.s32.totalorder %s9, 4
    %s16 = sphi 0, %s28
    %s17 = sphi 0, %s24
    %s18 = sphi 0, %s16
    %s19 = sphi 0, %s17
    %s20 = sphi 0, %s18
    %s21 = sphi 0, %s19
    %s33 = sphi 0, %s35
    %s36 = sphi 0, %s33
    %s37 = sphi 0, %s36
    %s53 = sphi 0, %s37
    %s59 = sphi 0, %s61
    %s62 = sphi 0, %s59
    %s63 = sphi 0, %s62
    %s79 = sphi 0, %s63
    %s85 = sphi 0, %s87
    %s88 = sphi 0, %s85
    %s89 = sphi 0, %s88
    %s105 = sphi 0, %s89
    %s113 = sphi 0, %s115
    %s116 = sphi 0, %s113
    %s117 = sphi 0, %s116
    %s133 = sphi 0, %s117
  $region4: #{skyreels_block_forward.21} parent=0 // loop_header_branch
    %12 = sbr.rel (%p10) target = $region8
  $region5: #{skyreels_block_forward.21} parent=0 // loop_body
    %s14 = ssub.s32 %s9, 1
    %s15 = ssub.s32 %s9, 2
    %s22 = sadd.s32 1, %s17
    %p23 = scmp.ge.s32.totalorder %s22, 1
    %s24 = scalar_select %p23, 0, %s22
    %s25 = sadd.s32 1, %s16
    %s26 = scalar_select %p23, %s25, %s16
    %p27 = scmp.ge.s32.totalorder %s26, 2
    %s28 = scalar_select %p27, 0, %s26
    %s29 = ssub.s32 %s16, %s28
    %s30 = ssub.s32 %s17, %s24
    %s31 = sor.u32 %s29, %s30
    %p32 = scmp.eq.s32.totalorder %s31, 0
    %s34 = sadd.s32 %s33, 1
    %s35 = scalar_select %p32, %s33, %s34
    %p38 = pneg %p32
    %p39 = scmp.eq.s32.totalorder %s9, 1
    %p40 = por %p38, %p39
    %p41 = scmp.ne.s32.totalorder %s33, %s36
    %p42 = scmp.eq.s32.totalorder %s9, 0
    %p43 = por %p41, %p42
    %p44 = scmp.ne.s32.totalorder %s33, %s36
    %p45 = scmp.eq.s32.totalorder %s14, 1
    %p46 = por %p44, %p45
    %p47 = scmp.ne.s32.totalorder %s36, %s37
    %p48 = scmp.eq.s32.totalorder %s14, 0
    %p49 = por %p47, %p48
    %p50 = scmp.ne.s32.totalorder %s36, %s37
    %p51 = scmp.eq.s32.totalorder %s15, 1
    %p52 = por %p50, %p51
    %p54 = scmp.ne.s32.totalorder %s37, %s53
    %p55 = scmp.eq.s32.totalorder %s15, 0
    %p56 = por %p54, %p55
    %s57 = ssub.s32 %s16, %s28
    %p58 = scmp.eq.s32.totalorder %s57, 0
    %s60 = sadd.s32 %s59, 1
    %s61 = scalar_select %p58, %s59, %s60
    %p64 = pneg %p58
    %p65 = scmp.eq.s32.totalorder %s9, 1
    %p66 = por %p64, %p65
    %p67 = scmp.ne.s32.totalorder %s59, %s62
    %p68 = scmp.eq.s32.totalorder %s9, 0
    %p69 = por %p67, %p68
    %p70 = scmp.ne.s32.totalorder %s59, %s62
    %p71 = scmp.eq.s32.totalorder %s14, 1
    %p72 = por %p70, %p71
    %p73 = scmp.ne.s32.totalorder %s62, %s63
    %p74 = scmp.eq.s32.totalorder %s14, 0
    %p75 = por %p73, %p74
    %p76 = scmp.ne.s32.totalorder %s62, %s63
    %p77 = scmp.eq.s32.totalorder %s15, 1
    %p78 = por %p76, %p77
    %p80 = scmp.ne.s32.totalorder %s63, %s79
    %p81 = scmp.eq.s32.totalorder %s15, 0
    %p82 = por %p80, %p81
    %s83 = ssub.s32 %s16, %s28
    %p84 = scmp.eq.s32.totalorder %s83, 0
    %s86 = sadd.s32 %s85, 1
    %s87 = scalar_select %p84, %s85, %s86
    %p90 = pneg %p84
    %p91 = scmp.eq.s32.totalorder %s9, 1
    %p92 = por %p90, %p91
    %p93 = scmp.ne.s32.totalorder %s85, %s88
    %p94 = scmp.eq.s32.totalorder %s9, 0
    %p95 = por %p93, %p94
    %p96 = scmp.ne.s32.totalorder %s85, %s88
    %p97 = scmp.eq.s32.totalorder %s14, 1
    %p98 = por %p96, %p97
    %p99 = scmp.ne.s32.totalorder %s88, %s89
    %p100 = scmp.eq.s32.totalorder %s14, 0
    %p101 = por %p99, %p100
    %p102 = scmp.ne.s32.totalorder %s88, %s89
    %p103 = scmp.eq.s32.totalorder %s15, 1
    %p104 = por %p102, %p103
    %p106 = scmp.ne.s32.totalorder %s89, %s105
    %p107 = scmp.eq.s32.totalorder %s15, 0
    %p108 = por %p106, %p107
    %s109 = ssub.s32 %s16, %s28
    %s110 = ssub.s32 %s17, %s24
    %s111 = sor.u32 %s109, %s110
    %p112 = scmp.eq.s32.totalorder %s111, 0
    %s114 = sadd.s32 %s113, 1
    %s115 = scalar_select %p112, %s113, %s114
    %p118 = pneg %p112
    %p119 = scmp.eq.s32.totalorder %s9, 1
    %p120 = por %p118, %p119
    %p121 = scmp.ne.s32.totalorder %s113, %s116
    %p122 = scmp.eq.s32.totalorder %s9, 0
    %p123 = por %p121, %p122
    %p124 = scmp.ne.s32.totalorder %s113, %s116
    %p125 = scmp.eq.s32.totalorder %s14, 1
    %p126 = por %p124, %p125
    %p127 = scmp.ne.s32.totalorder %s116, %s117
    %p128 = scmp.eq.s32.totalorder %s14, 0
    %p129 = por %p127, %p128
    %p130 = scmp.ne.s32.totalorder %s116, %s117
    %p131 = scmp.eq.s32.totalorder %s15, 1
    %p132 = por %p130, %p131
    %p134 = scmp.ne.s32.totalorder %s117, %s133
    %p135 = scmp.eq.s32.totalorder %s15, 0
    %p136 = por %p134, %p135
    %p137 = scmp.le.s32.totalorder 1, %s9
    %p138 = scmp.lt.s32.totalorder %s9, 3
    %p139 = pnand %p137, %p138
    %p140 = pneg %p139
    // Predicated region
    $region9: #{skyreels_block_forward.21} parent=5 // pred_check
      _
    $region10: #{skyreels_block_forward.21} parent=5 // pred_check_branch
      %142 = sbr.rel (%p139) target = $region12
    $region11: #{skyreels_block_forward.21} parent=5 // pred_region
      %s143 = ssub.s32 %s9, 1
    $region12: #{skyreels_block_forward.21} parent=5 // pred_fallthru
      _
    %p144 = scmp.lt.s32.totalorder %s9, 2
    // Predicated region
    $region13: #{skyreels_block_forward.21} parent=5 // pred_check
      %p145 = pneg %p144
    $region14: #{skyreels_block_forward.21} parent=5 // pred_check_branch
      %147 = sbr.rel (%p145) target = $region16
    $region15: #{skyreels_block_forward.21} parent=5 // pred_region
      // Predicated region
      $region17: #{skyreels_block_forward.21} parent=15 // pred_check
        %p148 = pneg %p43
      $region18: #{skyreels_block_forward.21} parent=15 // pred_check_branch
        %150 = sbr.rel (%p148) target = $region20
      $region19: #{skyreels_block_forward.21} parent=15 // pred_region
        %s151 = smul.u32 4, %s17
        %p152 = scmp.lt.s32.totalorder %s16, 1
        %s153 = scalar_select %p152, %s16, 1
        %p154 = scmp.lt.s32.totalorder %s151, 3
        %s155 = scalar_select %p154, %s151, 3
        %s156 = smul.addr %s155, 2
        %s157 = smul.addr %s153, 8
        %s158 = sadd.s32 %s156, %s157
        %s159 = smul.addr %s158, 8
        %s160 = scalar_lea.vmem %s0, %s159
        %s161 = smul.u32 4, %s17
      $region20: #{skyreels_block_forward.21} parent=15 // pred_fallthru
        _
      // Predicated region
      $region21: #{skyreels_block_forward.21} parent=15 // pred_check
        %p162 = pneg %p69
      $region22: #{skyreels_block_forward.21} parent=15 // pred_check_branch
        %164 = sbr.rel (%p162) target = $region24
      $region23: #{skyreels_block_forward.21} parent=15 // pred_region
        %p165 = scmp.lt.s32.totalorder %s16, 1
        %s166 = scalar_select %p165, %s16, 1
        %s167 = smul.addr %s166, 2
        %s168 = scalar_lea.vmem %s1, %s167
      $region24: #{skyreels_block_forward.21} parent=15 // pred_fallthru
        _
      // Predicated region
      $region25: #{skyreels_block_forward.21} parent=15 // pred_check
        %p169 = pneg %p95
      $region26: #{skyreels_block_forward.21} parent=15 // pred_check_branch
        %171 = sbr.rel (%p169) target = $region28
      $region27: #{skyreels_block_forward.21} parent=15 // pred_region
        %p172 = scmp.lt.s32.totalorder %s16, 1
        %s173 = scalar_select %p172, %s16, 1
        %s174 = smul.addr %s173, 2
        %s175 = scalar_lea.vmem %s2, %s174
      $region28: #{skyreels_block_forward.21} parent=15 // pred_fallthru
        _
    $region16: #{skyreels_block_forward.21} parent=5 // pred_fallthru
      _
    %p176 = scmp.le.s32.totalorder 1, %s9
    %p177 = scmp.lt.s32.totalorder %s9, 3
    %p178 = pnand %p176, %p177
    %p179 = pneg %p178
    // Predicated region
    $region29: #{skyreels_block_forward.21} parent=5 // pred_check
      _
    $region30: #{skyreels_block_forward.21} parent=5 // pred_check_branch
      %181 = sbr.rel (%p178) target = $region32
    $region31: #{skyreels_block_forward.21} parent=5 // pred_region
      %s182 = ssub.s32 %s9, 1
      %s183 = smul.u32 4, %s19
      %p184 = scmp.lt.s32.totalorder %s18, 1
      %s185 = scalar_select %p184, %s18, 1
      %p186 = scmp.lt.s32.totalorder %s183, 3
      %s187 = scalar_select %p186, %s183, 3
      %s188 = smul.addr %s187, 2
      %s189 = smul.addr %s185, 8
      %s190 = sadd.s32 %s188, %s189
      %s191 = smul.addr %s190, 8
      %s192 = scalar_lea.vmem %s0, %s191
      %p193 = pneg %p49
      %p194 = pneg %p46
      %p195 = scmp.lt.s32.totalorder %s18, 1
      %s196 = scalar_select %p195, %s18, 1
      %s197 = smul.addr %s196, 2
      %s198 = scalar_lea.vmem %s1, %s197
      %p199 = pneg %p75
      %p200 = pneg %p72
      %p201 = scmp.lt.s32.totalorder %s18, 1
      %s202 = scalar_select %p201, %s18, 1
      %s203 = smul.addr %s202, 2
      %s204 = scalar_lea.vmem %s2, %s203
      %p205 = pneg %p101
      %p206 = pneg %p98
      %p207 = pneg %p129
      %p208 = pneg %p126
      %s209 = smul.u32 4, %s19
      %p210 = scmp.lt.s32.totalorder %s18, 1
      %s211 = scalar_select %p210, %s18, 1
      %p212 = scmp.lt.s32.totalorder %s209, 3
      %s213 = scalar_select %p212, %s209, 3
      %s214 = smul.addr %s213, 2
      %s215 = smul.addr %s211, 8
      %s216 = sadd.s32 %s214, %s215
      %s217 = smul.addr %s216, 8
      %s218 = scalar_lea.vmem %s3, %s217
      %s219 = smul.u32 4, %s19
      %p220 = scmp.lt.s32.totalorder %s18, 1
      %s221 = scalar_select %p220, %s18, 1
      %p222 = scmp.lt.s32.totalorder %s219, 3
      %s223 = scalar_select %p222, %s219, 3
      %s224 = smul.addr %s223, 2
      %s225 = smul.addr %s221, 8
      %s226 = sadd.s32 %s224, %s225
      %s227 = smul.addr %s226, 8
      %s228 = scalar_lea.vmem %s0, %s227
      %s229 = smul.u32 4, %s19
      %p230 = scmp.lt.s32.totalorder %s18, 1
      %s231 = scalar_select %p230, %s18, 1
      %s232 = smul.addr %s231, 2
      %s233 = scalar_lea.vmem %s1, %s232
      %p234 = scmp.lt.s32.totalorder %s18, 1
      %s235 = scalar_select %p234, %s18, 1
      %s236 = smul.addr %s235, 2
      %s237 = scalar_lea.vmem %s2, %s236
      %s238 = smul.u32 4, %s19
      %p239 = scmp.lt.s32.totalorder %s18, 1
      %s240 = scalar_select %p239, %s18, 1
      %p241 = scmp.lt.s32.totalorder %s238, 3
      %s242 = scalar_select %p241, %s238, 3
      %s243 = smul.addr %s242, 2
      %s244 = smul.addr %s240, 8
      %s245 = sadd.s32 %s243, %s244
      %s246 = smul.addr %s245, 8
      %s247 = scalar_lea.vmem %s3, %s246
      %s248 = smul.u32 4, %s19
      %v249 = vld [vmem:[%s228] sm:$0xff]
      %v250 = vld [vmem:[%s228 + $0x8] sm:$0xff]
      %v251 = vld [vmem:[%s228 + $0x10] sm:$0xff]
      %v252 = vld [vmem:[%s228 + $0x18] sm:$0xff]
      %v253 = vld [vmem:[%s228 + $0x20] sm:$0xff]
      %v254 = vld [vmem:[%s228 + $0x28] sm:$0xff]
      %v255 = vld [vmem:[%s228 + $0x30] sm:$0xff]
      %v256 = vld [vmem:[%s228 + $0x38] sm:$0xff]
      %v257 = vadd.f32 %v249, %v250
      %258 = vadd.xlane.f32.xlu0 %v257
      %v259 = vpop.xlane.xlu0 %258
      %v260 = vadd.f32 %v251, %v252
      %261 = vadd.xlane.f32.xlu0 %v260
      %v262 = vpop.xlane.xlu0 %261
      %v263 = vadd.f32 %v253, %v254
      %264 = vadd.xlane.f32.xlu0 %v263
      %v265 = vpop.xlane.xlu0 %264
      %v266 = vadd.f32 %v255, %v256
      %267 = vadd.xlane.f32.xlu0 %v266
      %v268 = vpop.xlane.xlu0 %267
      %v269 = vrcp.pop 256.0
      %v270 = vmul.f32 %v259, %v269
      %v271 = vmul.f32 %v262, %v269
      %v272 = vmul.f32 %v265, %v269
      %v273 = vmul.f32 %v268, %v269
      %v274 = vsub.f32 %v249, %v270
      %v275 = vsub.f32 %v250, %v270
      %v276 = vsub.f32 %v251, %v271
      %v277 = vsub.f32 %v252, %v271
      %v278 = vsub.f32 %v253, %v272
      %v279 = vsub.f32 %v254, %v272
      %v280 = vsub.f32 %v255, %v273
      %v281 = vsub.f32 %v256, %v273
      %v282 = vmul.f32 %v274, %v274
      %v283 = vmul.f32 %v275, %v275
      %v284 = vmul.f32 %v276, %v276
      %v285 = vmul.f32 %v277, %v277
      %v286 = vmul.f32 %v278, %v278
      %v287 = vmul.f32 %v279, %v279
      %v288 = vmul.f32 %v280, %v280
      %v289 = vmul.f32 %v281, %v281
      %v290 = vadd.f32 %v282, %v283
      %291 = vadd.xlane.f32.xlu0 %v290
      %v292 = vpop.xlane.xlu0 %291
      %v293 = vadd.f32 %v284, %v285
      %294 = vadd.xlane.f32.xlu0 %v293
      %v295 = vpop.xlane.xlu0 %294
      %v296 = vadd.f32 %v286, %v287
      %297 = vadd.xlane.f32.xlu0 %v296
      %v298 = vpop.xlane.xlu0 %297
      %v299 = vadd.f32 %v288, %v289
      %300 = vadd.xlane.f32.xlu0 %v299
      %v301 = vpop.xlane.xlu0 %300
      %v302 = vmul.f32 %v292, %v269
      %v303 = vmul.f32 %v295, %v269
      %v304 = vmul.f32 %v298, %v269
      %v305 = vmul.f32 %v301, %v269
      %v306 = vadd.f32 %v302, 1e-06
      %v307 = vadd.f32 %v303, 1e-06
      %v308 = vadd.f32 %v304, 1e-06
      %v309 = vadd.f32 %v305, 1e-06
      %v310 = vrsqrt.pop %v306
      %v311 = vrsqrt.pop %v307
      %v312 = vrsqrt.pop %v308
      %v313 = vrsqrt.pop %v309
      %v314 = vmul.f32 %v274, %v310
      %v315 = vmul.f32 %v275, %v310
      %v316 = vmul.f32 %v276, %v311
      %v317 = vmul.f32 %v277, %v311
      %v318 = vmul.f32 %v278, %v312
      %v319 = vmul.f32 %v279, %v312
      %v320 = vmul.f32 %v280, %v313
      %v321 = vmul.f32 %v281, %v313
      %v322 = vld [vmem:[%s233] sm:$0x3]
      %v323 = vadd.f32 %v322, 1.0
      %v325 = vlaneseq
      %v326 = vshrl.u32 %v325, 7
      %v327 = vsub.s32 0, %v326
      %v328 = vrot.slane %v323, %v327
      %v329 = vlaneseq
      %v330 = vshrl.u32 %v329, 7
      %v331 = vsub.s32 1, %v330
      %v332 = vrot.slane %v323, %v331
      %v335 = vmul.f32 %v314, %v328
      %v336 = vmul.f32 %v315, %v332
      %v337 = vmul.f32 %v316, %v328
      %v338 = vmul.f32 %v317, %v332
      %v339 = vmul.f32 %v318, %v328
      %v340 = vmul.f32 %v319, %v332
      %v341 = vmul.f32 %v320, %v328
      %v342 = vmul.f32 %v321, %v332
      %v343 = vld [vmem:[%s237] sm:$0x3]
      %v345 = vlaneseq
      %v346 = vshrl.u32 %v345, 7
      %v347 = vsub.s32 0, %v346
      %v348 = vrot.slane %v343, %v347
      %v349 = vlaneseq
      %v350 = vshrl.u32 %v349, 7
      %v351 = vsub.s32 1, %v350
      %v352 = vrot.slane %v343, %v351
      %v355 = vadd.f32 %v335, %v348
      %v356 = vadd.f32 %v336, %v352
      %v357 = vadd.f32 %v337, %v348
      %v358 = vadd.f32 %v338, %v352
      %v359 = vadd.f32 %v339, %v348
      %v360 = vadd.f32 %v340, %v352
      %v361 = vadd.f32 %v341, %v348
      %v362 = vadd.f32 %v342, %v352
      %363 = vst [vmem:[%s247] sm:$0xff] %v355
      %364 = vst [vmem:[%s247 + $0x8] sm:$0xff] %v356
      %365 = vst [vmem:[%s247 + $0x10] sm:$0xff] %v357
      %366 = vst [vmem:[%s247 + $0x18] sm:$0xff] %v358
      %367 = vst [vmem:[%s247 + $0x20] sm:$0xff] %v359
      %368 = vst [vmem:[%s247 + $0x28] sm:$0xff] %v360
      %369 = vst [vmem:[%s247 + $0x30] sm:$0xff] %v361
      %370 = vst [vmem:[%s247 + $0x38] sm:$0xff] %v362
      %s371 = smul.u32 4, %s19
      %p372 = scmp.lt.s32.totalorder %s18, 1
      %s373 = scalar_select %p372, %s18, 1
      %p374 = scmp.lt.s32.totalorder %s371, 3
      %s375 = scalar_select %p374, %s371, 3
      %s376 = smul.addr %s375, 2
      %s377 = smul.addr %s373, 8
      %s378 = sadd.s32 %s376, %s377
      %s379 = smul.addr %s378, 8
      %s380 = scalar_lea.vmem %s3, %s379
      // Predicated region
      $region33: #{skyreels_block_forward.21} parent=31 // pred_check
        %p381 = pneg %p126
      $region34: #{skyreels_block_forward.21} parent=31 // pred_check_branch
        %383 = sbr.rel (%p381) target = $region36
      $region35: #{skyreels_block_forward.21} parent=31 // pred_region
        %s384 = smul.u32 4, %s19
      $region36: #{skyreels_block_forward.21} parent=31 // pred_fallthru
        _
    $region32: #{skyreels_block_forward.21} parent=5 // pred_fallthru
      _
    %p385 = scmp.le.s32.totalorder 2, %s9
    // Predicated region
    $region37: #{skyreels_block_forward.21} parent=5 // pred_check
      %p386 = pneg %p385
    $region38: #{skyreels_block_forward.21} parent=5 // pred_check_branch
      %388 = sbr.rel (%p386) target = $region40
    $region39: #{skyreels_block_forward.21} parent=5 // pred_region
      %s389 = ssub.s32 %s9, 2
      // Predicated region
      $region41: #{skyreels_block_forward.21} parent=39 // pred_check
        %p390 = pneg %p132
      $region42: #{skyreels_block_forward.21} parent=39 // pred_check_branch
        %392 = sbr.rel (%p390) target = $region44
      $region43: #{skyreels_block_forward.21} parent=39 // pred_region
        %s393 = smul.u32 4, %s21
        %p394 = scmp.lt.s32.totalorder %s20, 1
        %s395 = scalar_select %p394, %s20, 1
        %p396 = scmp.lt.s32.totalorder %s393, 3
        %s397 = scalar_select %p396, %s393, 3
        %s398 = smul.addr %s397, 2
        %s399 = smul.addr %s395, 8
        %s400 = sadd.s32 %s398, %s399
        %s401 = smul.addr %s400, 8
        %s402 = scalar_lea.vmem %s3, %s401
      $region44: #{skyreels_block_forward.21} parent=39 // pred_fallthru
        _
    $region40: #{skyreels_block_forward.21} parent=5 // pred_fallthru
      _
  $region6: #{skyreels_block_forward.21} parent=0 // loop_footer
    %s13 = sadd.s32 1, %s9
  $region7: #{skyreels_block_forward.21} parent=0 // loop_footer_branch
    %8 = sbr.rel target = $region3
  $region8: #{skyreels_block_forward.21} parent=0 // loop_exit
    _

// kernel: skyreels_block_forward.25
$region0: #{skyreels_block_forward.25}
  #allocation0 [shape = 'u32[]', space=smem, size = 0x4, offset = 0x4, fixed_abs, tag = 'smem constant byte address 0x4 - core index']
  #allocation1 [shape = 'u32[144,128]{1,0:T(1,128)}', space=vmem, size = 0x12000, scoped, tag = 'internal scratch']
  %s0 = inlined_call_operand.vmem [shape: f32[64,256], index: 0, kind: input, shape index: {}]
  %s1 = inlined_call_operand.vmem [shape: f32[1,256], index: 1, kind: input, shape index: {}]
  %s2 = inlined_call_operand.vmem [shape: f32[64,256], index: 2, kind: output, shape index: {}]
  %s3 = sld [smem:[#allocation0]]
  $region18: #{skyreels_block_forward.25} parent=0
    _
  %s5 = ssub.s32 1, %s3
  %s6 = scalar_select 0, %s5, %s3
  // Predicated region
  $region2: #{skyreels_block_forward.25} parent=0 // pred_check
    _
  $region3: #{skyreels_block_forward.25} parent=0 // pred_check_branch
    %8 = sbr.rel (0) target = $region5
  $region4: #{skyreels_block_forward.25} parent=0 // pred_region
    _
  $region5: #{skyreels_block_forward.25} parent=0 // pred_fallthru
    _
  // Predicated region
  $region6: #{skyreels_block_forward.25} parent=0 // pred_check
    _
  $region7: #{skyreels_block_forward.25} parent=0 // pred_check_branch
    %10 = sbr.rel (0) target = $region9
  $region8: #{skyreels_block_forward.25} parent=0 // pred_region
    _
  $region9: #{skyreels_block_forward.25} parent=0 // pred_fallthru
    _
  %v11 = vld [vmem:[%s0] sm:$0xff]
  %v12 = vld [vmem:[%s0 + $0x8] sm:$0xff]
  %v13 = vld [vmem:[%s0 + $0x10] sm:$0xff]
  %v14 = vld [vmem:[%s0 + $0x18] sm:$0xff]
  %v15 = vld [vmem:[%s0 + $0x20] sm:$0xff]
  %v16 = vld [vmem:[%s0 + $0x28] sm:$0xff]
  %v17 = vld [vmem:[%s0 + $0x30] sm:$0xff]
  %v18 = vld [vmem:[%s0 + $0x38] sm:$0xff]
  %v19 = vld [vmem:[%s0 + $0x40] sm:$0xff]
  %v20 = vld [vmem:[%s0 + $0x48] sm:$0xff]
  %v21 = vld [vmem:[%s0 + $0x50] sm:$0xff]
  %v22 = vld [vmem:[%s0 + $0x58] sm:$0xff]
  %v23 = vld [vmem:[%s0 + $0x60] sm:$0xff]
  %v24 = vld [vmem:[%s0 + $0x68] sm:$0xff]
  %v25 = vld [vmem:[%s0 + $0x70] sm:$0xff]
  %v26 = vld [vmem:[%s0 + $0x78] sm:$0xff]
  %v27 = vmul.f32 %v11, %v11
  %v28 = vmul.f32 %v12, %v12
  %v29 = vmul.f32 %v13, %v13
  %v30 = vmul.f32 %v14, %v14
  %v31 = vmul.f32 %v15, %v15
  %v32 = vmul.f32 %v16, %v16
  %v33 = vmul.f32 %v17, %v17
  %v34 = vmul.f32 %v18, %v18
  %v35 = vmul.f32 %v19, %v19
  %v36 = vmul.f32 %v20, %v20
  %v37 = vmul.f32 %v21, %v21
  %v38 = vmul.f32 %v22, %v22
  %v39 = vmul.f32 %v23, %v23
  %v40 = vmul.f32 %v24, %v24
  %v41 = vmul.f32 %v25, %v25
  %v42 = vmul.f32 %v26, %v26
  %v43 = vadd.f32 %v27, %v28
  %44 = vadd.xlane.f32.xlu0 %v43
  %v45 = vpop.xlane.xlu0 %44
  %v46 = vadd.f32 %v29, %v30
  %47 = vadd.xlane.f32.xlu0 %v46
  %v48 = vpop.xlane.xlu0 %47
  %v49 = vadd.f32 %v31, %v32
  %50 = vadd.xlane.f32.xlu0 %v49
  %v51 = vpop.xlane.xlu0 %50
  %v52 = vadd.f32 %v33, %v34
  %53 = vadd.xlane.f32.xlu0 %v52
  %v54 = vpop.xlane.xlu0 %53
  %v55 = vadd.f32 %v35, %v36
  %56 = vadd.xlane.f32.xlu0 %v55
  %v57 = vpop.xlane.xlu0 %56
  %v58 = vadd.f32 %v37, %v38
  %59 = vadd.xlane.f32.xlu0 %v58
  %v60 = vpop.xlane.xlu0 %59
  %v61 = vadd.f32 %v39, %v40
  %62 = vadd.xlane.f32.xlu0 %v61
  %v63 = vpop.xlane.xlu0 %62
  %v64 = vadd.f32 %v41, %v42
  %65 = vadd.xlane.f32.xlu0 %v64
  %v66 = vpop.xlane.xlu0 %65
  %v67 = vrcp.pop 256.0
  %v68 = vmul.f32 %v45, %v67
  %v69 = vmul.f32 %v48, %v67
  %v70 = vmul.f32 %v51, %v67
  %v71 = vmul.f32 %v54, %v67
  %v72 = vmul.f32 %v57, %v67
  %v73 = vmul.f32 %v60, %v67
  %v74 = vmul.f32 %v63, %v67
  %v75 = vmul.f32 %v66, %v67
  %v76 = vadd.f32 %v68, 1e-06
  %v77 = vadd.f32 %v69, 1e-06
  %v78 = vadd.f32 %v70, 1e-06
  %v79 = vadd.f32 %v71, 1e-06
  %v80 = vadd.f32 %v72, 1e-06
  %v81 = vadd.f32 %v73, 1e-06
  %v82 = vadd.f32 %v74, 1e-06
  %v83 = vadd.f32 %v75, 1e-06
  %v84 = vrsqrt.pop %v76
  %v85 = vrsqrt.pop %v77
  %v86 = vrsqrt.pop %v78
  %v87 = vrsqrt.pop %v79
  %v88 = vrsqrt.pop %v80
  %v89 = vrsqrt.pop %v81
  %v90 = vrsqrt.pop %v82
  %v91 = vrsqrt.pop %v83
  %v92 = vmul.f32 %v11, %v84
  %v93 = vmul.f32 %v12, %v84
  %v94 = vmul.f32 %v13, %v85
  %v95 = vmul.f32 %v14, %v85
  %v96 = vmul.f32 %v15, %v86
  %v97 = vmul.f32 %v16, %v86
  %v98 = vmul.f32 %v17, %v87
  %v99 = vmul.f32 %v18, %v87
  %v100 = vmul.f32 %v19, %v88
  %v101 = vmul.f32 %v20, %v88
  %v102 = vmul.f32 %v21, %v89
  %v103 = vmul.f32 %v22, %v89
  %v104 = vmul.f32 %v23, %v90
  %v105 = vmul.f32 %v24, %v90
  %v106 = vmul.f32 %v25, %v91
  %v107 = vmul.f32 %v26, %v91
  %v108 = vld [vmem:[%s1] sm:$0x3]
  %v110 = vlaneseq
  %v111 = vshrl.u32 %v110, 7
  %v112 = vsub.s32 0, %v111
  %v113 = vrot.slane %v108, %v112
  %v114 = vlaneseq
  %v115 = vshrl.u32 %v114, 7
  %v116 = vsub.s32 1, %v115
  %v117 = vrot.slane %v108, %v116
  %v120 = vmul.f32 %v92, %v113
  %v121 = vmul.f32 %v93, %v117
  %v122 = vmul.f32 %v94, %v113
  %v123 = vmul.f32 %v95, %v117
  %v124 = vmul.f32 %v96, %v113
  %v125 = vmul.f32 %v97, %v117
  %v126 = vmul.f32 %v98, %v113
  %v127 = vmul.f32 %v99, %v117
  %v128 = vmul.f32 %v100, %v113
  %v129 = vmul.f32 %v101, %v117
  %v130 = vmul.f32 %v102, %v113
  %v131 = vmul.f32 %v103, %v117
  %v132 = vmul.f32 %v104, %v113
  %v133 = vmul.f32 %v105, %v117
  %v134 = vmul.f32 %v106, %v113
  %v135 = vmul.f32 %v107, %v117
  %136 = vst [vmem:[%s2] sm:$0xff] %v120
  %137 = vst [vmem:[%s2 + $0x8] sm:$0xff] %v121
  %138 = vst [vmem:[%s2 + $0x10] sm:$0xff] %v122
  %139 = vst [vmem:[%s2 + $0x18] sm:$0xff] %v123
  %140 = vst [vmem:[%s2 + $0x20] sm:$0xff] %v124
  %141 = vst [vmem:[%s2 + $0x28] sm:$0xff] %v125
  %142 = vst [vmem:[%s2 + $0x30] sm:$0xff] %v126
  %143 = vst [vmem:[%s2 + $0x38] sm:$0xff] %v127
  %144 = vst [vmem:[%s2 + $0x40] sm:$0xff] %v128
  %145 = vst [vmem:[%s2 + $0x48] sm:$0xff] %v129
  %146 = vst [vmem:[%s2 + $0x50] sm:$0xff] %v130
  %147 = vst [vmem:[%s2 + $0x58] sm:$0xff] %v131
  %148 = vst [vmem:[%s2 + $0x60] sm:$0xff] %v132
  %149 = vst [vmem:[%s2 + $0x68] sm:$0xff] %v133
  %150 = vst [vmem:[%s2 + $0x70] sm:$0xff] %v134
  %151 = vst [vmem:[%s2 + $0x78] sm:$0xff] %v135
  // Predicated region
  $region10: #{skyreels_block_forward.25} parent=0 // pred_check
    _
  $region11: #{skyreels_block_forward.25} parent=0 // pred_check_branch
    %153 = sbr.rel (0) target = $region13
  $region12: #{skyreels_block_forward.25} parent=0 // pred_region
    _
  $region13: #{skyreels_block_forward.25} parent=0 // pred_fallthru
    _
  // Predicated region
  $region14: #{skyreels_block_forward.25} parent=0 // pred_check
    _
  $region15: #{skyreels_block_forward.25} parent=0 // pred_check_branch
    %155 = sbr.rel (0) target = $region17
  $region16: #{skyreels_block_forward.25} parent=0 // pred_region
    _
  $region17: #{skyreels_block_forward.25} parent=0 // pred_fallthru
    _

// kernel: skyreels_block_forward.22
$region0: #{skyreels_block_forward.22}
  #allocation0 [shape = 'u32[]', space=smem, size = 0x4, offset = 0x4, fixed_abs, tag = 'smem constant byte address 0x4 - core index']
  #allocation1 [shape = 'u32[144,128]{1,0:T(1,128)}', space=vmem, size = 0x12000, scoped, tag = 'internal scratch']
  #allocation2 [shape = 'f32[64,256]{1,0:T(8,128)}', space=vmem, size = 0x10000, scoped, tag = 'scratch operand']
  %s0 = inlined_call_operand.vmem [shape: bf16[64,256], index: 0, kind: input, shape index: {}]
  %s1 = inlined_call_operand.vmem [shape: bf16[256,256], index: 1, kind: input, shape index: {}]
  %s2 = inlined_call_operand.vmem [shape: f32[1,256], index: 2, kind: input, shape index: {}]
  %s3 = inlined_call_operand.vmem [shape: f32[64,256], index: 3, kind: output, shape index: {}]
  %s4 = sld [smem:[#allocation0]]
  $region30: #{skyreels_block_forward.22} parent=0
    _
  %s6 = ssub.s32 1, %s4
  %s7 = scalar_select 0, %s6, %s4
  // Predicated region
  $region2: #{skyreels_block_forward.22} parent=0 // pred_check
    _
  $region3: #{skyreels_block_forward.22} parent=0 // pred_check_branch
    %9 = sbr.rel (0) target = $region5
  $region4: #{skyreels_block_forward.22} parent=0 // pred_region
    _
  $region5: #{skyreels_block_forward.22} parent=0 // pred_fallthru
    _
  // Predicated region
  $region6: #{skyreels_block_forward.22} parent=0 // pred_check
    _
  $region7: #{skyreels_block_forward.22} parent=0 // pred_check_branch
    %11 = sbr.rel (0) target = $region9
  $region8: #{skyreels_block_forward.22} parent=0 // pred_region
    _
  $region9: #{skyreels_block_forward.22} parent=0 // pred_fallthru
    _
  // Predicated region
  $region10: #{skyreels_block_forward.22} parent=0 // pred_check
    _
  $region11: #{skyreels_block_forward.22} parent=0 // pred_check_branch
    %13 = sbr.rel (0) target = $region13
  $region12: #{skyreels_block_forward.22} parent=0 // pred_region
    _
  $region13: #{skyreels_block_forward.22} parent=0 // pred_fallthru
    _
  %p14 = scmp.eq.s32.totalorder 0, 0
  // Predicated region
  $region14: #{skyreels_block_forward.22} parent=0 // pred_check
    %p15 = pneg %p14
  $region15: #{skyreels_block_forward.22} parent=0 // pred_check_branch
    %17 = sbr.rel (%p15) target = $region17
  $region16: #{skyreels_block_forward.22} parent=0 // pred_region
    %18 = vst [vmem:[#allocation2] sm:$0xff] 0.0
    %19 = vst [vmem:[#allocation2 + $0x8] sm:$0xff] 0.0
    %20 = vst [vmem:[#allocation2 + $0x10] sm:$0xff] 0.0
    %21 = vst [vmem:[#allocation2 + $0x18] sm:$0xff] 0.0
    %22 = vst [vmem:[#allocation2 + $0x20] sm:$0xff] 0.0
    %23 = vst [vmem:[#allocation2 + $0x28] sm:$0xff] 0.0
    %24 = vst [vmem:[#allocation2 + $0x30] sm:$0xff] 0.0
    %25 = vst [vmem:[#allocation2 + $0x38] sm:$0xff] 0.0
    %26 = vst [vmem:[#allocation2 + $0x40] sm:$0xff] 0.0
    %27 = vst [vmem:[#allocation2 + $0x48] sm:$0xff] 0.0
    %28 = vst [vmem:[#allocation2 + $0x50] sm:$0xff] 0.0
    %29 = vst [vmem:[#allocation2 + $0x58] sm:$0xff] 0.0
    %30 = vst [vmem:[#allocation2 + $0x60] sm:$0xff] 0.0
    %31 = vst [vmem:[#allocation2 + $0x68] sm:$0xff] 0.0
    %32 = vst [vmem:[#allocation2 + $0x70] sm:$0xff] 0.0
    %33 = vst [vmem:[#allocation2 + $0x78] sm:$0xff] 0.0
  $region17: #{skyreels_block_forward.22} parent=0 // pred_fallthru
    _
  %v34 = vld [vmem:[#allocation2] sm:$0xff]
  %v35 = vld [vmem:[#allocation2 + $0x8] sm:$0xff]
  %v36 = vld [vmem:[#allocation2 + $0x10] sm:$0xff]
  %v37 = vld [vmem:[#allocation2 + $0x18] sm:$0xff]
  %v38 = vld [vmem:[#allocation2 + $0x20] sm:$0xff]
  %v39 = vld [vmem:[#allocation2 + $0x28] sm:$0xff]
  %v40 = vld [vmem:[#allocation2 + $0x30] sm:$0xff]
  %v41 = vld [vmem:[#allocation2 + $0x38] sm:$0xff]
  %v42 = vld [vmem:[#allocation2 + $0x40] sm:$0xff]
  %v43 = vld [vmem:[#allocation2 + $0x48] sm:$0xff]
  %v44 = vld [vmem:[#allocation2 + $0x50] sm:$0xff]
  %v45 = vld [vmem:[#allocation2 + $0x58] sm:$0xff]
  %v46 = vld [vmem:[#allocation2 + $0x60] sm:$0xff]
  %v47 = vld [vmem:[#allocation2 + $0x68] sm:$0xff]
  %v48 = vld [vmem:[#allocation2 + $0x70] sm:$0xff]
  %v49 = vld [vmem:[#allocation2 + $0x78] sm:$0xff]
  %v50 = vld [vmem:[%s0] sm:$0xff]
  %v51 = vld [vmem:[%s0 + $0x8] sm:$0xff]
  %v52 = vld [vmem:[%s0 + $0x10] sm:$0xff]
  %v53 = vld [vmem:[%s0 + $0x18] sm:$0xff]
  %v54 = vld [vmem:[%s0 + $0x20] sm:$0xff]
  %v55 = vld [vmem:[%s0 + $0x28] sm:$0xff]
  %v56 = vld [vmem:[%s0 + $0x30] sm:$0xff]
  %v57 = vld [vmem:[%s0 + $0x38] sm:$0xff]
  %v58 = vld [vmem:[%s1] sm:$0xff]
  %v59 = vld [vmem:[%s1 + $0x8] sm:$0xff]
  %v60 = vld [vmem:[%s1 + $0x10] sm:$0xff]
  %v61 = vld [vmem:[%s1 + $0x18] sm:$0xff]
  %v62 = vld [vmem:[%s1 + $0x20] sm:$0xff]
  %v63 = vld [vmem:[%s1 + $0x28] sm:$0xff]
  %v64 = vld [vmem:[%s1 + $0x30] sm:$0xff]
  %v65 = vld [vmem:[%s1 + $0x38] sm:$0xff]
  %v66 = vld [vmem:[%s1 + $0x40] sm:$0xff]
  %v67 = vld [vmem:[%s1 + $0x48] sm:$0xff]
  %v68 = vld [vmem:[%s1 + $0x50] sm:$0xff]
  %v69 = vld [vmem:[%s1 + $0x58] sm:$0xff]
  %v70 = vld [vmem:[%s1 + $0x60] sm:$0xff]
  %v71 = vld [vmem:[%s1 + $0x68] sm:$0xff]
  %v72 = vld [vmem:[%s1 + $0x70] sm:$0xff]
  %v73 = vld [vmem:[%s1 + $0x78] sm:$0xff]
  %v74 = vld [vmem:[%s1 + $0x80] sm:$0xff]
  %v75 = vld [vmem:[%s1 + $0x88] sm:$0xff]
  %v76 = vld [vmem:[%s1 + $0x90] sm:$0xff]
  %v77 = vld [vmem:[%s1 + $0x98] sm:$0xff]
  %v78 = vld [vmem:[%s1 + $0xa0] sm:$0xff]
  %v79 = vld [vmem:[%s1 + $0xa8] sm:$0xff]
  %v80 = vld [vmem:[%s1 + $0xb0] sm:$0xff]
  %v81 = vld [vmem:[%s1 + $0xb8] sm:$0xff]
  %v82 = vld [vmem:[%s1 + $0xc0] sm:$0xff]
  %v83 = vld [vmem:[%s1 + $0xc8] sm:$0xff]
  %v84 = vld [vmem:[%s1 + $0xd0] sm:$0xff]
  %v85 = vld [vmem:[%s1 + $0xd8] sm:$0xff]
  %v86 = vld [vmem:[%s1 + $0xe0] sm:$0xff]
  %v87 = vld [vmem:[%s1 + $0xe8] sm:$0xff]
  %v88 = vld [vmem:[%s1 + $0xf0] sm:$0xff]
  %v89 = vld [vmem:[%s1 + $0xf8] sm:$0xff]
  %v98 = vunpack.c.l.b16 %v50
  %v99 = vunpack.c.h.b16 %v50
  %v100 = vunpack.c.l.b16 %v51
  %v101 = vunpack.c.h.b16 %v51
  %v102 = vunpack.c.l.b16 %v52
  %v103 = vunpack.c.h.b16 %v52
  %v104 = vunpack.c.l.b16 %v53
  %v105 = vunpack.c.h.b16 %v53
  %v106 = vunpack.c.l.b16 %v54
  %v107 = vunpack.c.h.b16 %v54
  %v108 = vunpack.c.l.b16 %v55
  %v109 = vunpack.c.h.b16 %v55
  %v110 = vunpack.c.l.b16 %v56
  %v111 = vunpack.c.h.b16 %v56
  %v112 = vunpack.c.l.b16 %v57
  %v113 = vunpack.c.h.b16 %v57
  %v114 = vpack.c.b16 %v100, %v98
  %v115 = vpack.c.b16 %v101, %v99
  %v116 = vpack.c.b16 %v104, %v102
  %v117 = vpack.c.b16 %v105, %v103
  %v118 = vpack.c.b16 %v108, %v106
  %v119 = vpack.c.b16 %v109, %v107
  %v120 = vpack.c.b16 %v112, %v110
  %v121 = vpack.c.b16 %v113, %v111
  %v162 = vunpack.c.l.b16 %v58
  %v163 = vunpack.c.h.b16 %v58
  %v164 = vunpack.c.l.b16 %v59
  %v165 = vunpack.c.h.b16 %v59
  %v166 = vunpack.c.l.b16 %v60
  %v167 = vunpack.c.h.b16 %v60
  %v168 = vunpack.c.l.b16 %v61
  %v169 = vunpack.c.h.b16 %v61
  %v170 = vunpack.c.l.b16 %v62
  %v171 = vunpack.c.h.b16 %v62
  %v172 = vunpack.c.l.b16 %v63
  %v173 = vunpack.c.h.b16 %v63
  %v174 = vunpack.c.l.b16 %v64
  %v175 = vunpack.c.h.b16 %v64
  %v176 = vunpack.c.l.b16 %v65
  %v177 = vunpack.c.h.b16 %v65
  %v178 = vunpack.c.l.b16 %v66
  %v179 = vunpack.c.h.b16 %v66
  %v180 = vunpack.c.l.b16 %v67
  %v181 = vunpack.c.h.b16 %v67
  %v182 = vunpack.c.l.b16 %v68
  %v183 = vunpack.c.h.b16 %v68
  %v184 = vunpack.c.l.b16 %v69
  %v185 = vunpack.c.h.b16 %v69
  %v186 = vunpack.c.l.b16 %v70
  %v187 = vunpack.c.h.b16 %v70
  %v188 = vunpack.c.l.b16 %v71
  %v189 = vunpack.c.h.b16 %v71
  %v190 = vunpack.c.l.b16 %v72
  %v191 = vunpack.c.h.b16 %v72
  %v192 = vunpack.c.l.b16 %v73
  %v193 = vunpack.c.h.b16 %v73
  %v194 = vunpack.c.l.b16 %v74
  %v195 = vunpack.c.h.b16 %v74
  %v196 = vunpack.c.l.b16 %v75
  %v197 = vunpack.c.h.b16 %v75
  %v198 = vunpack.c.l.b16 %v76
  %v199 = vunpack.c.h.b16 %v76
  %v200 = vunpack.c.l.b16 %v77
  %v201 = vunpack.c.h.b16 %v77
  %v202 = vunpack.c.l.b16 %v78
  %v203 = vunpack.c.h.b16 %v78
  %v204 = vunpack.c.l.b16 %v79
  %v205 = vunpack.c.h.b16 %v79
  %v206 = vunpack.c.l.b16 %v80
  %v207 = vunpack.c.h.b16 %v80
  %v208 = vunpack.c.l.b16 %v81
  %v209 = vunpack.c.h.b16 %v81
  %v210 = vunpack.c.l.b16 %v82
  %v211 = vunpack.c.h.b16 %v82
  %v212 = vunpack.c.l.b16 %v83
  %v213 = vunpack.c.h.b16 %v83
  %v214 = vunpack.c.l.b16 %v84
  %v215 = vunpack.c.h.b16 %v84
  %v216 = vunpack.c.l.b16 %v85
  %v217 = vunpack.c.h.b16 %v85
  %v218 = vunpack.c.l.b16 %v86
  %v219 = vunpack.c.h.b16 %v86
  %v220 = vunpack.c.l.b16 %v87
  %v221 = vunpack.c.h.b16 %v87
  %v222 = vunpack.c.l.b16 %v88
  %v223 = vunpack.c.h.b16 %v88
  %v224 = vunpack.c.l.b16 %v89
  %v225 = vunpack.c.h.b16 %v89
  %v226 = vpack.c.b16 %v164, %v162
  %v227 = vpack.c.b16 %v165, %v163
  %v228 = vpack.c.b16 %v168, %v166
  %v229 = vpack.c.b16 %v169, %v167
  %v230 = vpack.c.b16 %v172, %v170
  %v231 = vpack.c.b16 %v173, %v171
  %v232 = vpack.c.b16 %v176, %v174
  %v233 = vpack.c.b16 %v177, %v175
  %v234 = vpack.c.b16 %v180, %v178
  %v235 = vpack.c.b16 %v181, %v179
  %v236 = vpack.c.b16 %v184, %v182
  %v237 = vpack.c.b16 %v185, %v183
  %v238 = vpack.c.b16 %v188, %v186
  %v239 = vpack.c.b16 %v189, %v187
  %v240 = vpack.c.b16 %v192, %v190
  %v241 = vpack.c.b16 %v193, %v191
  %v242 = vpack.c.b16 %v196, %v194
  %v243 = vpack.c.b16 %v197, %v195
  %v244 = vpack.c.b16 %v200, %v198
  %v245 = vpack.c.b16 %v201, %v199
  %v246 = vpack.c.b16 %v204, %v202
  %v247 = vpack.c.b16 %v205, %v203
  %v248 = vpack.c.b16 %v208, %v206
  %v249 = vpack.c.b16 %v209, %v207
  %v250 = vpack.c.b16 %v212, %v210
  %v251 = vpack.c.b16 %v213, %v211
  %v252 = vpack.c.b16 %v216, %v214
  %v253 = vpack.c.b16 %v217, %v215
  %v254 = vpack.c.b16 %v220, %v218
  %v255 = vpack.c.b16 %v221, %v219
  %v256 = vpack.c.b16 %v224, %v222
  %v257 = vpack.c.b16 %v225, %v223
  %290 = vmatprep.subr.bf16.mxu0 %v241
  %291 = vmatpush1.bf16.msra.mxu0 %v240
  %292 = vmatprep.subr.bf16.mxu0 %v239
  %293 = vmatpush1.bf16.msra.mxu0 %v238
  %294 = vmatprep.subr.bf16.mxu0 %v237
  %295 = vmatpush1.bf16.msra.mxu0 %v236
  %296 = vmatprep.subr.bf16.mxu0 %v235
  %297 = vmatpush1.bf16.msra.mxu0 %v234
  %298 = vmatprep.subr.bf16.mxu0 %v233
  %299 = vmatpush1.bf16.msra.mxu0 %v232
  %300 = vmatprep.subr.bf16.mxu0 %v231
  %301 = vmatpush1.bf16.msra.mxu0 %v230
  %302 = vmatprep.subr.bf16.mxu0 %v229
  %303 = vmatpush1.bf16.msra.mxu0 %v228
  %304 = vmatprep.subr.bf16.mxu0 %v227
  %305 = vmatpush1.bf16.msra.mxu0 %v226
  %306 = vmatprep.subr.bf16.mxu0 %v257
  %307 = vmatpush2.bf16.msra.mxu0 %v256
  %308 = vmatprep.subr.bf16.mxu0 %v255
  %309 = vmatpush2.bf16.msra.mxu0 %v254
  %310 = vmatprep.subr.bf16.mxu0 %v253
  %311 = vmatpush2.bf16.msra.mxu0 %v252
  %312 = vmatprep.subr.bf16.mxu0 %v251
  %313 = vmatpush2.bf16.msra.mxu0 %v250
  %314 = vmatprep.subr.bf16.mxu0 %v249
  %315 = vmatpush2.bf16.msra.mxu0 %v248
  %316 = vmatprep.subr.bf16.mxu0 %v247
  %317 = vmatpush2.bf16.msra.mxu0 %v246
  %318 = vmatprep.subr.bf16.mxu0 %v245
  %319 = vmatpush2.bf16.msra.mxu0 %v244
  %320 = vmatprep.subr.bf16.mxu0 %v243
  %321 = vmatpush2.bf16.msra.mxu0 %v242
  %322 = vmatprep.mubr.bf16.mxu0 %v115
  %323 = vmatmul.mubr.bf16.gmra.mxu0 %v114
  %v324 = vpop.f32.mrf.mxu0
  %v325 = vadd.f32 0.0, %v324
  %v326 = vpop.f32.mrf.mxu0
  %v327 = vadd.f32 0.0, %v326
  %v328 = vpop.f32.mrf.mxu0
  %v329 = vadd.f32 0.0, %v328
  %v330 = vpop.f32.mrf.mxu0
  %v331 = vadd.f32 0.0, %v330
  %332 = vmatprep.mubr.bf16.mxu0 %v117
  %333 = vmatmul.mubr.bf16.gmra.mxu0 %v116
  %v334 = vpop.f32.mrf.mxu0
  %v335 = vadd.f32 0.0, %v334
  %v336 = vpop.f32.mrf.mxu0
  %v337 = vadd.f32 0.0, %v336
  %v338 = vpop.f32.mrf.mxu0
  %v339 = vadd.f32 0.0, %v338
  %v340 = vpop.f32.mrf.mxu0
  %v341 = vadd.f32 0.0, %v340
  %342 = vmatprep.mubr.bf16.mxu0 %v119
  %343 = vmatmul.mubr.bf16.gmra.mxu0 %v118
  %v344 = vpop.f32.mrf.mxu0
  %v345 = vadd.f32 0.0, %v344
  %v346 = vpop.f32.mrf.mxu0
  %v347 = vadd.f32 0.0, %v346
  %v348 = vpop.f32.mrf.mxu0
  %v349 = vadd.f32 0.0, %v348
  %v350 = vpop.f32.mrf.mxu0
  %v351 = vadd.f32 0.0, %v350
  %352 = vmatprep.mubr.bf16.mxu0 %v121
  %353 = vmatmul.mubr.bf16.gmra.mxu0 %v120
  %v354 = vpop.f32.mrf.mxu0
  %v355 = vadd.f32 0.0, %v354
  %v356 = vpop.f32.mrf.mxu0
  %v357 = vadd.f32 0.0, %v356
  %v358 = vpop.f32.mrf.mxu0
  %v359 = vadd.f32 0.0, %v358
  %v360 = vpop.f32.mrf.mxu0
  %v361 = vadd.f32 0.0, %v360
  %362 = vdwg.mxu0
  %v363 = vadd.f32 %v34, %v325
  %v364 = vadd.f32 %v35, %v327
  %v365 = vadd.f32 %v36, %v329
  %v366 = vadd.f32 %v37, %v331
  %v367 = vadd.f32 %v38, %v335
  %v368 = vadd.f32 %v39, %v337
  %v369 = vadd.f32 %v40, %v339
  %v370 = vadd.f32 %v41, %v341
  %v371 = vadd.f32 %v42, %v345
  %v372 = vadd.f32 %v43, %v347
  %v373 = vadd.f32 %v44, %v349
  %v374 = vadd.f32 %v45, %v351
  %v375 = vadd.f32 %v46, %v355
  %v376 = vadd.f32 %v47, %v357
  %v377 = vadd.f32 %v48, %v359
  %v378 = vadd.f32 %v49, %v361
  %379 = vst [vmem:[#allocation2] sm:$0xff] %v363
  %380 = vst [vmem:[#allocation2 + $0x8] sm:$0xff] %v364
  %381 = vst [vmem:[#allocation2 + $0x10] sm:$0xff] %v365
  %382 = vst [vmem:[#allocation2 + $0x18] sm:$0xff] %v366
  %383 = vst [vmem:[#allocation2 + $0x20] sm:$0xff] %v367
  %384 = vst [vmem:[#allocation2 + $0x28] sm:$0xff] %v368
  %385 = vst [vmem:[#allocation2 + $0x30] sm:$0xff] %v369
  %386 = vst [vmem:[#allocation2 + $0x38] sm:$0xff] %v370
  %387 = vst [vmem:[#allocation2 + $0x40] sm:$0xff] %v371
  %388 = vst [vmem:[#allocation2 + $0x48] sm:$0xff] %v372
  %389 = vst [vmem:[#allocation2 + $0x50] sm:$0xff] %v373
  %390 = vst [vmem:[#allocation2 + $0x58] sm:$0xff] %v374
  %391 = vst [vmem:[#allocation2 + $0x60] sm:$0xff] %v375
  %392 = vst [vmem:[#allocation2 + $0x68] sm:$0xff] %v376
  %393 = vst [vmem:[#allocation2 + $0x70] sm:$0xff] %v377
  %394 = vst [vmem:[#allocation2 + $0x78] sm:$0xff] %v378
  // Predicated region
  $region18: #{skyreels_block_forward.22} parent=0 // pred_check
    %p395 = pneg %p14
  $region19: #{skyreels_block_forward.22} parent=0 // pred_check_branch
    %397 = sbr.rel (%p395) target = $region21
  $region20: #{skyreels_block_forward.22} parent=0 // pred_region
    %v398 = vld [vmem:[#allocation2] sm:$0xff]
    %v399 = vld [vmem:[#allocation2 + $0x8] sm:$0xff]
    %v400 = vld [vmem:[#allocation2 + $0x10] sm:$0xff]
    %v401 = vld [vmem:[#allocation2 + $0x18] sm:$0xff]
    %v402 = vld [vmem:[#allocation2 + $0x20] sm:$0xff]
    %v403 = vld [vmem:[#allocation2 + $0x28] sm:$0xff]
    %v404 = vld [vmem:[#allocation2 + $0x30] sm:$0xff]
    %v405 = vld [vmem:[#allocation2 + $0x38] sm:$0xff]
    %v406 = vld [vmem:[#allocation2 + $0x40] sm:$0xff]
    %v407 = vld [vmem:[#allocation2 + $0x48] sm:$0xff]
    %v408 = vld [vmem:[#allocation2 + $0x50] sm:$0xff]
    %v409 = vld [vmem:[#allocation2 + $0x58] sm:$0xff]
    %v410 = vld [vmem:[#allocation2 + $0x60] sm:$0xff]
    %v411 = vld [vmem:[#allocation2 + $0x68] sm:$0xff]
    %v412 = vld [vmem:[#allocation2 + $0x70] sm:$0xff]
    %v413 = vld [vmem:[#allocation2 + $0x78] sm:$0xff]
    %v414 = vld [vmem:[%s2] sm:$0x3]
    %v416 = vlaneseq
    %v417 = vshrl.u32 %v416, 7
    %v418 = vsub.s32 0, %v417
    %v419 = vrot.slane %v414, %v418
    %v420 = vlaneseq
    %v421 = vshrl.u32 %v420, 7
    %v422 = vsub.s32 1, %v421
    %v423 = vrot.slane %v414, %v422
    %v426 = vadd.f32 %v398, %v419
    %v427 = vadd.f32 %v399, %v423
    %v428 = vadd.f32 %v400, %v419
    %v429 = vadd.f32 %v401, %v423
    %v430 = vadd.f32 %v402, %v419
    %v431 = vadd.f32 %v403, %v423
    %v432 = vadd.f32 %v404, %v419
    %v433 = vadd.f32 %v405, %v423
    %v434 = vadd.f32 %v406, %v419
    %v435 = vadd.f32 %v407, %v423
    %v436 = vadd.f32 %v408, %v419
    %v437 = vadd.f32 %v409, %v423
    %v438 = vadd.f32 %v410, %v419
    %v439 = vadd.f32 %v411, %v423
    %v440 = vadd.f32 %v412, %v419
    %v441 = vadd.f32 %v413, %v423
    %442 = vst [vmem:[%s3] sm:$0xff] %v426
    %443 = vst [vmem:[%s3 + $0x8] sm:$0xff] %v427
    %444 = vst [vmem:[%s3 + $0x10] sm:$0xff] %v428
    %445 = vst [vmem:[%s3 + $0x18] sm:$0xff] %v429
    %446 = vst [vmem:[%s3 + $0x20] sm:$0xff] %v430
    %447 = vst [vmem:[%s3 + $0x28] sm:$0xff] %v431
    %448 = vst [vmem:[%s3 + $0x30] sm:$0xff] %v432
    %449 = vst [vmem:[%s3 + $0x38] sm:$0xff] %v433
    %450 = vst [vmem:[%s3 + $0x40] sm:$0xff] %v434
    %451 = vst [vmem:[%s3 + $0x48] sm:$0xff] %v435
    %452 = vst [vmem:[%s3 + $0x50] sm:$0xff] %v436
    %453 = vst [vmem:[%s3 + $0x58] sm:$0xff] %v437
    %454 = vst [vmem:[%s3 + $0x60] sm:$0xff] %v438
    %455 = vst [vmem:[%s3 + $0x68] sm:$0xff] %v439
    %456 = vst [vmem:[%s3 + $0x70] sm:$0xff] %v440
    %457 = vst [vmem:[%s3 + $0x78] sm:$0xff] %v441
  $region21: #{skyreels_block_forward.22} parent=0 // pred_fallthru
    _
  // Predicated region
  $region22: #{skyreels_block_forward.22} parent=0 // pred_check
    _
  $region23: #{skyreels_block_forward.22} parent=0 // pred_check_branch
    %459 = sbr.rel (0) target = $region25
  $region24: #{skyreels_block_forward.22} parent=0 // pred_region
    _
  $region25: #{skyreels_block_forward.22} parent=0 // pred_fallthru
    _
  // Predicated region
  $region26: #{skyreels_block_forward.22} parent=0 // pred_check
    _
  $region27: #{skyreels_block_forward.22} parent=0 // pred_check_branch
    %461 = sbr.rel (0) target = $region29
  $region28: #{skyreels_block_forward.22} parent=0 // pred_region
    _
  $region29: #{skyreels_block_forward.22} parent=0 // pred_fallthru
    _

// kernel: skyreels_block_forward.27
$region0: #{skyreels_block_forward.27}
  #allocation0 [shape = 'u32[]', space=smem, size = 0x4, offset = 0x4, fixed_abs, tag = 'smem constant byte address 0x4 - core index']
  #allocation1 [shape = 'u32[144,128]{1,0:T(1,128)}', space=vmem, size = 0x12000, scoped, tag = 'internal scratch']
  #allocation2 [shape = 'f32[32,1]{1,0:T(8,128)}', space=vmem, size = 0x4000, scoped, tag = 'scratch operand']
  #allocation3 [shape = 'f32[32,1]{1,0:T(8,128)}', space=vmem, size = 0x4000, scoped, tag = 'scratch operand']
  #allocation4 [shape = 'f32[32,128]{1,0:T(8,128)}', space=vmem, size = 0x4000, scoped, tag = 'scratch operand']
  %s0 = inlined_call_operand.vmem [shape: bf16[2,32,256], index: 0, kind: input, shape index: {}]
  %s1 = inlined_call_operand.vmem [shape: bf16[2,32,256], index: 1, kind: input, shape index: {}]
  %s2 = inlined_call_operand.vmem [shape: bf16[2,32,256], index: 2, kind: input, shape index: {}]
  %s3 = inlined_call_operand.vmem [shape: f32[2,32,256], index: 3, kind: output, shape index: {}]
  %s4 = sld [smem:[#allocation0]]
  $region210: #{skyreels_block_forward.27} parent=0
    _
  %s6 = ssub.s32 1, %s4
  %s7 = scalar_select 0, %s6, %s4
  $region1: #{skyreels_block_forward.27} parent=0
    #allocation5 [shape = 'u8[16384]{0}', space=vmem, size = 0x4000, scoped, tag = 'input window, operand 0']
    #allocation6 [shape = 'u8[16384]{0}', space=vmem, size = 0x4000, scoped, tag = 'input window, operand 1']
    #allocation7 [shape = 'u8[16384]{0}', space=vmem, size = 0x4000, scoped, tag = 'input window, operand 2']
    #allocation8 [shape = 'u8[32768]{0}', space=vmem, size = 0x8000, scoped, tag = 'output window, operand 0']
    loop: start=0, step=1, limit=6
    $region2: #{skyreels_block_forward.27} parent=1 // loop_pre_header
      _
    $region3: #{skyreels_block_forward.27} parent=1 // loop_header
      %s9 = sphi 0, %s13
      %p10 = scmp.ge.s32.totalorder %s9, 6
      %s16 = sphi 0, %s42
      %s17 = sphi 0, %s38
      %s18 = sphi 0, %s34
      %s19 = sphi 0, %s30
      %s20 = sphi 0, %s16
      %s21 = sphi 0, %s17
      %s22 = sphi 0, %s18
      %s23 = sphi 0, %s19
      %s24 = sphi 0, %s20
      %s25 = sphi 0, %s21
      %s26 = sphi 0, %s22
      %s27 = sphi 0, %s23
      %s49 = sphi 0, %s51
      %s52 = sphi 0, %s49
      %s53 = sphi 0, %s52
      %s69 = sphi 0, %s53
      %s79 = sphi 0, %s81
      %s82 = sphi 0, %s79
      %s83 = sphi 0, %s82
      %s99 = sphi 0, %s83
      %s109 = sphi 0, %s111
      %s112 = sphi 0, %s109
      %s113 = sphi 0, %s112
      %s129 = sphi 0, %s113
      %s139 = sphi 0, %s141
      %s142 = sphi 0, %s139
      %s143 = sphi 0, %s142
      %s159 = sphi 0, %s143
    $region4: #{skyreels_block_forward.27} parent=1 // loop_header_branch
      %12 = sbr.rel (%p10) target = $region8
    $region5: #{skyreels_block_forward.27} parent=1 // loop_body
      %s14 = ssub.s32 %s9, 1
      %s15 = ssub.s32 %s9, 2
      %s28 = sadd.s32 1, %s19
      %p29 = scmp.ge.s32.totalorder %s28, 1
      %s30 = scalar_select %p29, 0, %s28
      %s31 = sadd.s32 1, %s18
      %s32 = scalar_select %p29, %s31, %s18
      %p33 = scmp.ge.s32.totalorder %s32, 1
      %s34 = scalar_select %p33, 0, %s32
      %s35 = sadd.s32 1, %s17
      %s36 = scalar_select %p33, %s35, %s17
      %p37 = scmp.ge.s32.totalorder %s36, 2
      %s38 = scalar_select %p37, 0, %s36
      %s39 = sadd.s32 1, %s16
      %s40 = scalar_select %p37, %s39, %s16
      %p41 = scmp.ge.s32.totalorder %s40, 2
      %s42 = scalar_select %p41, 0, %s40
      %s43 = ssub.s32 %s16, %s42
      %s44 = ssub.s32 %s18, %s34
      %s45 = sor.u32 %s43, %s44
      %s46 = ssub.s32 %s17, %s38
      %s47 = sor.u32 %s45, %s46
      %p48 = scmp.eq.s32.totalorder %s47, 0
      %s50 = sadd.s32 %s49, 1
      %s51 = scalar_select %p48, %s49, %s50
      %p54 = pneg %p48
      %p55 = scmp.eq.s32.totalorder %s9, 3
      %p56 = por %p54, %p55
      %p57 = scmp.ne.s32.totalorder %s49, %s52
      %p58 = scmp.eq.s32.totalorder %s9, 0
      %p59 = por %p57, %p58
      %p60 = scmp.ne.s32.totalorder %s49, %s52
      %p61 = scmp.eq.s32.totalorder %s14, 3
      %p62 = por %p60, %p61
      %p63 = scmp.ne.s32.totalorder %s52, %s53
      %p64 = scmp.eq.s32.totalorder %s14, 0
      %p65 = por %p63, %p64
      %p66 = scmp.ne.s32.totalorder %s52, %s53
      %p67 = scmp.eq.s32.totalorder %s15, 3
      %p68 = por %p66, %p67
      %p70 = scmp.ne.s32.totalorder %s53, %s69
      %p71 = scmp.eq.s32.totalorder %s15, 0
      %p72 = por %p70, %p71
      %s73 = ssub.s32 %s16, %s42
      %s74 = ssub.s32 %s19, %s30
      %s75 = sor.u32 %s73, %s74
      %s76 = ssub.s32 %s17, %s38
      %s77 = sor.u32 %s75, %s76
      %p78 = scmp.eq.s32.totalorder %s77, 0
      %s80 = sadd.s32 %s79, 1
      %s81 = scalar_select %p78, %s79, %s80
      %p84 = pneg %p78
      %p85 = scmp.eq.s32.totalorder %s9, 3
      %p86 = por %p84, %p85
      %p87 = scmp.ne.s32.totalorder %s79, %s82
      %p88 = scmp.eq.s32.totalorder %s9, 0
      %p89 = por %p87, %p88
      %p90 = scmp.ne.s32.totalorder %s79, %s82
      %p91 = scmp.eq.s32.totalorder %s14, 3
      %p92 = por %p90, %p91
      %p93 = scmp.ne.s32.totalorder %s82, %s83
      %p94 = scmp.eq.s32.totalorder %s14, 0
      %p95 = por %p93, %p94
      %p96 = scmp.ne.s32.totalorder %s82, %s83
      %p97 = scmp.eq.s32.totalorder %s15, 3
      %p98 = por %p96, %p97
      %p100 = scmp.ne.s32.totalorder %s83, %s99
      %p101 = scmp.eq.s32.totalorder %s15, 0
      %p102 = por %p100, %p101
      %s103 = ssub.s32 %s16, %s42
      %s104 = ssub.s32 %s19, %s30
      %s105 = sor.u32 %s103, %s104
      %s106 = ssub.s32 %s17, %s38
      %s107 = sor.u32 %s105, %s106
      %p108 = scmp.eq.s32.totalorder %s107, 0
      %s110 = sadd.s32 %s109, 1
      %s111 = scalar_select %p108, %s109, %s110
      %p114 = pneg %p108
      %p115 = scmp.eq.s32.totalorder %s9, 3
      %p116 = por %p114, %p115
      %p117 = scmp.ne.s32.totalorder %s109, %s112
      %p118 = scmp.eq.s32.totalorder %s9, 0
      %p119 = por %p117, %p118
      %p120 = scmp.ne.s32.totalorder %s109, %s112
      %p121 = scmp.eq.s32.totalorder %s14, 3
      %p122 = por %p120, %p121
      %p123 = scmp.ne.s32.totalorder %s112, %s113
      %p124 = scmp.eq.s32.totalorder %s14, 0
      %p125 = por %p123, %p124
      %p126 = scmp.ne.s32.totalorder %s112, %s113
      %p127 = scmp.eq.s32.totalorder %s15, 3
      %p128 = por %p126, %p127
      %p130 = scmp.ne.s32.totalorder %s113, %s129
      %p131 = scmp.eq.s32.totalorder %s15, 0
      %p132 = por %p130, %p131
      %s133 = ssub.s32 %s16, %s42
      %s134 = ssub.s32 %s18, %s34
      %s135 = sor.u32 %s133, %s134
      %s136 = ssub.s32 %s17, %s38
      %s137 = sor.u32 %s135, %s136
      %p138 = scmp.eq.s32.totalorder %s137, 0
      %s140 = sadd.s32 %s139, 1
      %s141 = scalar_select %p138, %s139, %s140
      %p144 = pneg %p138
      %p145 = scmp.eq.s32.totalorder %s9, 3
      %p146 = por %p144, %p145
      %p147 = scmp.ne.s32.totalorder %s139, %s142
      %p148 = scmp.eq.s32.totalorder %s9, 0
      %p149 = por %p147, %p148
      %p150 = scmp.ne.s32.totalorder %s139, %s142
      %p151 = scmp.eq.s32.totalorder %s14, 3
      %p152 = por %p150, %p151
      %p153 = scmp.ne.s32.totalorder %s142, %s143
      %p154 = scmp.eq.s32.totalorder %s14, 0
      %p155 = por %p153, %p154
      %p156 = scmp.ne.s32.totalorder %s142, %s143
      %p157 = scmp.eq.s32.totalorder %s15, 3
      %p158 = por %p156, %p157
      %p160 = scmp.ne.s32.totalorder %s143, %s159
      %p161 = scmp.eq.s32.totalorder %s15, 0
      %p162 = por %p160, %p161
      %p163 = scmp.le.s32.totalorder 1, %s9
      %p164 = scmp.lt.s32.totalorder %s9, 5
      %p165 = pnand %p163, %p164
      %p166 = pneg %p165
      // Predicated region
      $region9: #{skyreels_block_forward.27} parent=5 // pred_check
        _
      $region10: #{skyreels_block_forward.27} parent=5 // pred_check_branch
        %168 = sbr.rel (%p165) target = $region12
      $region11: #{skyreels_block_forward.27} parent=5 // pred_region
        %s169 = ssub.s32 %s9, 1
      $region12: #{skyreels_block_forward.27} parent=5 // pred_fallthru
        _
      %p170 = scmp.lt.s32.totalorder %s9, 4
      // Predicated region
      $region13: #{skyreels_block_forward.27} parent=5 // pred_check
        %p171 = pneg %p170
      $region14: #{skyreels_block_forward.27} parent=5 // pred_check_branch
        %173 = sbr.rel (%p171) target = $region16
      $region15: #{skyreels_block_forward.27} parent=5 // pred_region
        // Predicated region
        $region17: #{skyreels_block_forward.27} parent=15 // pred_check
          %p174 = pneg %p59
        $region18: #{skyreels_block_forward.27} parent=15 // pred_check_branch
          %176 = sbr.rel (%p174) target = $region20
        $region19: #{skyreels_block_forward.27} parent=15 // pred_region
          %s177 = sand.u32 %s49, 1
          %s178 = sand.u32 %s49, 1
          %s179 = smul.addr %s178, 16
          %s180 = scalar_lea.vmem [#allocation5], %s179
          %s181 = smul.u32 4, %s18
          %s182 = smul.addr %s181, 2
          %s183 = sadd.s32 %s17, %s182
          %s184 = smul.addr %s16, 8
          %s185 = sadd.s32 %s183, %s184
          %s186 = smul.addr %s185, 4
          %s187 = scalar_lea.vmem %s0, %s186
          // Predicated region
          $region21: #{skyreels_block_forward.27} parent=19 // pred_check
            _
          $region22: #{skyreels_block_forward.27} parent=19 // pred_check_branch
            %189 = sbr.rel (0) target = $region24
          $region23: #{skyreels_block_forward.27} parent=19 // pred_region
            // Predicated region
            $region25: #{skyreels_block_forward.27} parent=23 // pred_check
              _
            $region26: #{skyreels_block_forward.27} parent=23 // pred_check_branch
              %191 = sbr.rel target = $region28
            $region27: #{skyreels_block_forward.27} parent=23 // pred_region
              // Predicated region
              $region40: #{skyreels_block_forward.27} parent=27 // pred_check
                _
              $region41: #{skyreels_block_forward.27} parent=27 // pred_check_branch
                %213 = sbr.rel (0) target = $region43
              $region42: #{skyreels_block_forward.27} parent=27 // pred_region
                loop: start=0, step=1, limit=1
                $region44: #{skyreels_block_forward.27} parent=42 // loop_pre_header
                  _
                $region45: #{skyreels_block_forward.27} parent=42 // loop_header
                  %s215 = sphi 0, %s219
                  %p216 = scmp.ge.s32.totalorder %s215, 1
                  %s220 = sphi %s187, %s187
                  %s221 = sphi %s180, %s180
                $region46: #{skyreels_block_forward.27} parent=42 // loop_header_branch
                  %218 = sbr.rel (%p216) target = $region50
                $region47: #{skyreels_block_forward.27} parent=42 // loop_body
                  _
                $region48: #{skyreels_block_forward.27} parent=42 // loop_footer
                  %s219 = sadd.s32 1, %s215
                $region49: #{skyreels_block_forward.27} parent=42 // loop_footer_branch
                  %214 = sbr.rel target = $region45
                $region50: #{skyreels_block_forward.27} parent=42 // loop_exit
                  _
                %s223 = ssub.s32 16, 1
                loop: start=0, step=1, limit=1
                $region51: #{skyreels_block_forward.27} parent=42 // loop_pre_header
                  _
                $region52: #{skyreels_block_forward.27} parent=42 // loop_header
                  %s225 = sphi 0, %s229
                  %p226 = scmp.ge.s32.totalorder %s225, 1
                  %s230 = sphi %s187, %s187
                  %s231 = sphi %s180, %s180
                $region53: #{skyreels_block_forward.27} parent=42 // loop_header_branch
                  %228 = sbr.rel (%p226) target = $region57
                $region54: #{skyreels_block_forward.27} parent=42 // loop_body
                  %v232 = vld [vmem:[%s230] sm:%s223]
                  %233 = vst [vmem:[%s231] sm:%s223] %v232
                  %v234 = vld [vmem:[%s230 + $0x8] sm:%s223]
                  %235 = vst [vmem:[%s231 + $0x4] sm:%s223] %v234
                  %v236 = vld [vmem:[%s230 + $0x10] sm:%s223]
                  %237 = vst [vmem:[%s231 + $0x8] sm:%s223] %v236
                  %v238 = vld [vmem:[%s230 + $0x18] sm:%s223]
                  %239 = vst [vmem:[%s231 + $0xc] sm:%s223] %v238
                $region55: #{skyreels_block_forward.27} parent=42 // loop_footer
                  %s229 = sadd.s32 1, %s225
                $region56: #{skyreels_block_forward.27} parent=42 // loop_footer_branch
                  %224 = sbr.rel target = $region52
                $region57: #{skyreels_block_forward.27} parent=42 // loop_exit
                  _
              $region43: #{skyreels_block_forward.27} parent=27 // pred_fallthru
                _
            $region28: #{skyreels_block_forward.27} parent=23 // pred_fallthru
              _
            // Predicated region
            $region29: #{skyreels_block_forward.27} parent=23 // pred_check
              _
            $region30: #{skyreels_block_forward.27} parent=23 // pred_check_branch
              %193 = sbr.rel (0) target = $region32
            $region31: #{skyreels_block_forward.27} parent=23 // pred_region
              %s195 = ssub.s32 16, 1
              loop: start=0, step=1, limit=1
              $region33: #{skyreels_block_forward.27} parent=31 // loop_pre_header
                _
              $region34: #{skyreels_block_forward.27} parent=31 // loop_header
                %s197 = sphi 0, %s201
                %p198 = scmp.ge.s32.totalorder %s197, 1
                %s202 = sphi %s187, %s187
                %s203 = sphi %s180, %s180
              $region35: #{skyreels_block_forward.27} parent=31 // loop_header_branch
                %200 = sbr.rel (%p198) target = $region39
              $region36: #{skyreels_block_forward.27} parent=31 // loop_body
                %v204 = vld [vmem:[%s202] sm:%s195]
                %205 = vst [vmem:[%s203] sm:%s195] %v204
                %v206 = vld [vmem:[%s202 + $0x8] sm:%s195]
                %207 = vst [vmem:[%s203 + $0x4] sm:%s195] %v206
                %v208 = vld [vmem:[%s202 + $0x10] sm:%s195]
                %209 = vst [vmem:[%s203 + $0x8] sm:%s195] %v208
                %v210 = vld [vmem:[%s202 + $0x18] sm:%s195]
                %211 = vst [vmem:[%s203 + $0xc] sm:%s195] %v210
              $region37: #{skyreels_block_forward.27} parent=31 // loop_footer
                %s201 = sadd.s32 1, %s197
              $region38: #{skyreels_block_forward.27} parent=31 // loop_footer_branch
                %196 = sbr.rel target = $region34
              $region39: #{skyreels_block_forward.27} parent=31 // loop_exit
                _
            $region32: #{skyreels_block_forward.27} parent=23 // pred_fallthru
              _
          $region24: #{skyreels_block_forward.27} parent=19 // pred_fallthru
            _
          %240 = vnop
        $region20: #{skyreels_block_forward.27} parent=15 // pred_fallthru
          _
        // Predicated region
        $region58: #{skyreels_block_forward.27} parent=15 // pred_check
          %p241 = pneg %p89
        $region59: #{skyreels_block_forward.27} parent=15 // pred_check_branch
          %243 = sbr.rel (%p241) target = $region61
        $region60: #{skyreels_block_forward.27} parent=15 // pred_region
          %s244 = sand.u32 %s79, 1
          %s245 = sand.u32 %s79, 1
          %s246 = smul.addr %s245, 16
          %s247 = scalar_lea.vmem [#allocation6], %s246
          %s248 = smul.u32 4, %s19
          %s249 = smul.addr %s248, 2
          %s250 = sadd.s32 %s17, %s249
          %s251 = smul.addr %s16, 8
          %s252 = sadd.s32 %s250, %s251
          %s253 = smul.addr %s252, 4
          %s254 = scalar_lea.vmem %s1, %s253
          // Predicated region
          $region62: #{skyreels_block_forward.27} parent=60 // pred_check
            _
          $region63: #{skyreels_block_forward.27} parent=60 // pred_check_branch
            %256 = sbr.rel (0) target = $region65
          $region64: #{skyreels_block_forward.27} parent=60 // pred_region
            // Predicated region
            $region66: #{skyreels_block_forward.27} parent=64 // pred_check
              _
            $region67: #{skyreels_block_forward.27} parent=64 // pred_check_branch
              %258 = sbr.rel target = $region69
            $region68: #{skyreels_block_forward.27} parent=64 // pred_region
              // Predicated region
              $region81: #{skyreels_block_forward.27} parent=68 // pred_check
                _
              $region82: #{skyreels_block_forward.27} parent=68 // pred_check_branch
                %280 = sbr.rel (0) target = $region84
              $region83: #{skyreels_block_forward.27} parent=68 // pred_region
                loop: start=0, step=1, limit=1
                $region85: #{skyreels_block_forward.27} parent=83 // loop_pre_header
                  _
                $region86: #{skyreels_block_forward.27} parent=83 // loop_header
                  %s282 = sphi 0, %s286
                  %p283 = scmp.ge.s32.totalorder %s282, 1
                  %s287 = sphi %s254, %s254
                  %s288 = sphi %s247, %s247
                $region87: #{skyreels_block_forward.27} parent=83 // loop_header_branch
                  %285 = sbr.rel (%p283) target = $region91
                $region88: #{skyreels_block_forward.27} parent=83 // loop_body
                  _
                $region89: #{skyreels_block_forward.27} parent=83 // loop_footer
                  %s286 = sadd.s32 1, %s282
                $region90: #{skyreels_block_forward.27} parent=83 // loop_footer_branch
                  %281 = sbr.rel target = $region86
                $region91: #{skyreels_block_forward.27} parent=83 // loop_exit
                  _
                %s290 = ssub.s32 16, 1
                loop: start=0, step=1, limit=1
                $region92: #{skyreels_block_forward.27} parent=83 // loop_pre_header
                  _
                $region93: #{skyreels_block_forward.27} parent=83 // loop_header
                  %s292 = sphi 0, %s296
                  %p293 = scmp.ge.s32.totalorder %s292, 1
                  %s297 = sphi %s254, %s254
                  %s298 = sphi %s247, %s247
                $region94: #{skyreels_block_forward.27} parent=83 // loop_header_branch
                  %295 = sbr.rel (%p293) target = $region98
                $region95: #{skyreels_block_forward.27} parent=83 // loop_body
                  %v299 = vld [vmem:[%s297] sm:%s290]
                  %300 = vst [vmem:[%s298] sm:%s290] %v299
                  %v301 = vld [vmem:[%s297 + $0x8] sm:%s290]
                  %302 = vst [vmem:[%s298 + $0x4] sm:%s290] %v301
                  %v303 = vld [vmem:[%s297 + $0x10] sm:%s290]
                  %304 = vst [vmem:[%s298 + $0x8] sm:%s290] %v303
                  %v305 = vld [vmem:[%s297 + $0x18] sm:%s290]
                  %306 = vst [vmem:[%s298 + $0xc] sm:%s290] %v305
                $region96: #{skyreels_block_forward.27} parent=83 // loop_footer
                  %s296 = sadd.s32 1, %s292
                $region97: #{skyreels_block_forward.27} parent=83 // loop_footer_branch
                  %291 = sbr.rel target = $region93
                $region98: #{skyreels_block_forward.27} parent=83 // loop_exit
                  _
              $region84: #{skyreels_block_forward.27} parent=68 // pred_fallthru
                _
            $region69: #{skyreels_block_forward.27} parent=64 // pred_fallthru
              _
            // Predicated region
            $region70: #{skyreels_block_forward.27} parent=64 // pred_check
              _
            $region71: #{skyreels_block_forward.27} parent=64 // pred_check_branch
              %260 = sbr.rel (0) target = $region73
            $region72: #{skyreels_block_forward.27} parent=64 // pred_region
              %s262 = ssub.s32 16, 1
              loop: start=0, step=1, limit=1
              $region74: #{skyreels_block_forward.27} parent=72 // loop_pre_header
                _
              $region75: #{skyreels_block_forward.27} parent=72 // loop_header
                %s264 = sphi 0, %s268
                %p265 = scmp.ge.s32.totalorder %s264, 1
                %s269 = sphi %s254, %s254
                %s270 = sphi %s247, %s247
              $region76: #{skyreels_block_forward.27} parent=72 // loop_header_branch
                %267 = sbr.rel (%p265) target = $region80
              $region77: #{skyreels_block_forward.27} parent=72 // loop_body
                %v271 = vld [vmem:[%s269] sm:%s262]
                %272 = vst [vmem:[%s270] sm:%s262] %v271
                %v273 = vld [vmem:[%s269 + $0x8] sm:%s262]
                %274 = vst [vmem:[%s270 + $0x4] sm:%s262] %v273
                %v275 = vld [vmem:[%s269 + $0x10] sm:%s262]
                %276 = vst [vmem:[%s270 + $0x8] sm:%s262] %v275
                %v277 = vld [vmem:[%s269 + $0x18] sm:%s262]
                %278 = vst [vmem:[%s270 + $0xc] sm:%s262] %v277
              $region78: #{skyreels_block_forward.27} parent=72 // loop_footer
                %s268 = sadd.s32 1, %s264
              $region79: #{skyreels_block_forward.27} parent=72 // loop_footer_branch
                %263 = sbr.rel target = $region75
              $region80: #{skyreels_block_forward.27} parent=72 // loop_exit
                _
            $region73: #{skyreels_block_forward.27} parent=64 // pred_fallthru
              _
          $region65: #{skyreels_block_forward.27} parent=60 // pred_fallthru
            _
          %307 = vnop
        $region61: #{skyreels_block_forward.27} parent=15 // pred_fallthru
          _
        // Predicated region
        $region99: #{skyreels_block_forward.27} parent=15 // pred_check
          %p308 = pneg %p119
        $region100: #{skyreels_block_forward.27} parent=15 // pred_check_branch
          %310 = sbr.rel (%p308) target = $region102
        $region101: #{skyreels_block_forward.27} parent=15 // pred_region
          %s311 = sand.u32 %s109, 1
          %s312 = sand.u32 %s109, 1
          %s313 = smul.addr %s312, 16
          %s314 = scalar_lea.vmem [#allocation7], %s313
          %s315 = smul.u32 4, %s19
          %s316 = smul.addr %s315, 2
          %s317 = sadd.s32 %s17, %s316
          %s318 = smul.addr %s16, 8
          %s319 = sadd.s32 %s317, %s318
          %s320 = smul.addr %s319, 4
          %s321 = scalar_lea.vmem %s2, %s320
          // Predicated region
          $region103: #{skyreels_block_forward.27} parent=101 // pred_check
            _
          $region104: #{skyreels_block_forward.27} parent=101 // pred_check_branch
            %323 = sbr.rel (0) target = $region106
          $region105: #{skyreels_block_forward.27} parent=101 // pred_region
            // Predicated region
            $region107: #{skyreels_block_forward.27} parent=105 // pred_check
              _
            $region108: #{skyreels_block_forward.27} parent=105 // pred_check_branch
              %325 = sbr.rel target = $region110
            $region109: #{skyreels_block_forward.27} parent=105 // pred_region
              // Predicated region
              $region122: #{skyreels_block_forward.27} parent=109 // pred_check
                _
              $region123: #{skyreels_block_forward.27} parent=109 // pred_check_branch
                %347 = sbr.rel (0) target = $region125
              $region124: #{skyreels_block_forward.27} parent=109 // pred_region
                loop: start=0, step=1, limit=1
                $region126: #{skyreels_block_forward.27} parent=124 // loop_pre_header
                  _
                $region127: #{skyreels_block_forward.27} parent=124 // loop_header
                  %s349 = sphi 0, %s353
                  %p350 = scmp.ge.s32.totalorder %s349, 1
                  %s354 = sphi %s321, %s321
                  %s355 = sphi %s314, %s314
                $region128: #{skyreels_block_forward.27} parent=124 // loop_header_branch
                  %352 = sbr.rel (%p350) target = $region132
                $region129: #{skyreels_block_forward.27} parent=124 // loop_body
                  _
                $region130: #{skyreels_block_forward.27} parent=124 // loop_footer
                  %s353 = sadd.s32 1, %s349
                $region131: #{skyreels_block_forward.27} parent=124 // loop_footer_branch
                  %348 = sbr.rel target = $region127
                $region132: #{skyreels_block_forward.27} parent=124 // loop_exit
                  _
                %s357 = ssub.s32 16, 1
                loop: start=0, step=1, limit=1
                $region133: #{skyreels_block_forward.27} parent=124 // loop_pre_header
                  _
                $region134: #{skyreels_block_forward.27} parent=124 // loop_header
                  %s359 = sphi 0, %s363
                  %p360 = scmp.ge.s32.totalorder %s359, 1
                  %s364 = sphi %s321, %s321
                  %s365 = sphi %s314, %s314
                $region135: #{skyreels_block_forward.27} parent=124 // loop_header_branch
                  %362 = sbr.rel (%p360) target = $region139
                $region136: #{skyreels_block_forward.27} parent=124 // loop_body
                  %v366 = vld [vmem:[%s364] sm:%s357]
                  %367 = vst [vmem:[%s365] sm:%s357] %v366
                  %v368 = vld [vmem:[%s364 + $0x8] sm:%s357]
                  %369 = vst [vmem:[%s365 + $0x4] sm:%s357] %v368
                  %v370 = vld [vmem:[%s364 + $0x10] sm:%s357]
                  %371 = vst [vmem:[%s365 + $0x8] sm:%s357] %v370
                  %v372 = vld [vmem:[%s364 + $0x18] sm:%s357]
                  %373 = vst [vmem:[%s365 + $0xc] sm:%s357] %v372
                $region137: #{skyreels_block_forward.27} parent=124 // loop_footer
                  %s363 = sadd.s32 1, %s359
                $region138: #{skyreels_block_forward.27} parent=124 // loop_footer_branch
                  %358 = sbr.rel target = $region134
                $region139: #{skyreels_block_forward.27} parent=124 // loop_exit
                  _
              $region125: #{skyreels_block_forward.27} parent=109 // pred_fallthru
                _
            $region110: #{skyreels_block_forward.27} parent=105 // pred_fallthru
              _
            // Predicated region
            $region111: #{skyreels_block_forward.27} parent=105 // pred_check
              _
            $region112: #{skyreels_block_forward.27} parent=105 // pred_check_branch
              %327 = sbr.rel (0) target = $region114
            $region113: #{skyreels_block_forward.27} parent=105 // pred_region
              %s329 = ssub.s32 16, 1
              loop: start=0, step=1, limit=1
              $region115: #{skyreels_block_forward.27} parent=113 // loop_pre_header
                _
              $region116: #{skyreels_block_forward.27} parent=113 // loop_header
                %s331 = sphi 0, %s335
                %p332 = scmp.ge.s32.totalorder %s331, 1
                %s336 = sphi %s321, %s321
                %s337 = sphi %s314, %s314
              $region117: #{skyreels_block_forward.27} parent=113 // loop_header_branch
                %334 = sbr.rel (%p332) target = $region121
              $region118: #{skyreels_block_forward.27} parent=113 // loop_body
                %v338 = vld [vmem:[%s336] sm:%s329]
                %339 = vst [vmem:[%s337] sm:%s329] %v338
                %v340 = vld [vmem:[%s336 + $0x8] sm:%s329]
                %341 = vst [vmem:[%s337 + $0x4] sm:%s329] %v340
                %v342 = vld [vmem:[%s336 + $0x10] sm:%s329]
                %343 = vst [vmem:[%s337 + $0x8] sm:%s329] %v342
                %v344 = vld [vmem:[%s336 + $0x18] sm:%s329]
                %345 = vst [vmem:[%s337 + $0xc] sm:%s329] %v344
              $region119: #{skyreels_block_forward.27} parent=113 // loop_footer
                %s335 = sadd.s32 1, %s331
              $region120: #{skyreels_block_forward.27} parent=113 // loop_footer_branch
                %330 = sbr.rel target = $region116
              $region121: #{skyreels_block_forward.27} parent=113 // loop_exit
                _
            $region114: #{skyreels_block_forward.27} parent=105 // pred_fallthru
              _
          $region106: #{skyreels_block_forward.27} parent=101 // pred_fallthru
            _
          %374 = vnop
        $region102: #{skyreels_block_forward.27} parent=15 // pred_fallthru
          _
      $region16: #{skyreels_block_forward.27} parent=5 // pred_fallthru
        _
      %p375 = scmp.le.s32.totalorder 1, %s9
      %p376 = scmp.lt.s32.totalorder %s9, 5
      %p377 = pnand %p375, %p376
      %p378 = pneg %p377
      // Predicated region
      $region140: #{skyreels_block_forward.27} parent=5 // pred_check
        _
      $region141: #{skyreels_block_forward.27} parent=5 // pred_check_branch
        %380 = sbr.rel (%p377) target = $region143
      $region142: #{skyreels_block_forward.27} parent=5 // pred_region
        %s381 = ssub.s32 %s9, 1
        %s382 = sand.u32 %s52, 1
        %s383 = sand.u32 %s52, 1
        %s384 = smul.addr %s383, 16
        %s385 = scalar_lea.vmem [#allocation5], %s384
        // Predicated region
        $region144: #{skyreels_block_forward.27} parent=142 // pred_check
          %p386 = pneg %p65
        $region145: #{skyreels_block_forward.27} parent=142 // pred_check_branch
          %388 = sbr.rel (%p386) target = $region147
        $region146: #{skyreels_block_forward.27} parent=142 // pred_region
          _
        $region147: #{skyreels_block_forward.27} parent=142 // pred_fallthru
          _
        %s389 = sand.u32 %s82, 1
        %s390 = sand.u32 %s82, 1
        %s391 = smul.addr %s390, 16
        %s392 = scalar_lea.vmem [#allocation6], %s391
        // Predicated region
        $region148: #{skyreels_block_forward.27} parent=142 // pred_check
          %p393 = pneg %p95
        $region149: #{skyreels_block_forward.27} parent=142 // pred_check_branch
          %395 = sbr.rel (%p393) target = $region151
        $region150: #{skyreels_block_forward.27} parent=142 // pred_region
          _
        $region151: #{skyreels_block_forward.27} parent=142 // pred_fallthru
          _
        %s396 = sand.u32 %s112, 1
        %s397 = sand.u32 %s112, 1
        %s398 = smul.addr %s397, 16
        %s399 = scalar_lea.vmem [#allocation7], %s398
        // Predicated region
        $region152: #{skyreels_block_forward.27} parent=142 // pred_check
          %p400 = pneg %p125
        $region153: #{skyreels_block_forward.27} parent=142 // pred_check_branch
          %402 = sbr.rel (%p400) target = $region155
        $region154: #{skyreels_block_forward.27} parent=142 // pred_region
          _
        $region155: #{skyreels_block_forward.27} parent=142 // pred_fallthru
          _
        %s403 = sand.u32 %s52, 1
        %s404 = sand.u32 %s52, 1
        %s405 = smul.addr %s404, 16
        %s406 = scalar_lea.vmem [#allocation5], %s405
        %p407 = pneg %p65
        %p408 = pneg %p62
        %s409 = sand.u32 %s82, 1
        %s410 = sand.u32 %s82, 1
        %s411 = smul.addr %s410, 16
        %s412 = scalar_lea.vmem [#allocation6], %s411
        %p413 = pneg %p95
        %p414 = pneg %p92
        %s415 = sand.u32 %s112, 1
        %s416 = sand.u32 %s112, 1
        %s417 = smul.addr %s416, 16
        %s418 = scalar_lea.vmem [#allocation7], %s417
        %p419 = pneg %p125
        %p420 = pneg %p122
        %p421 = pneg %p155
        %p422 = pneg %p152
        %s423 = sand.u32 %s142, 1
        %s424 = sand.u32 %s142, 1
        %s425 = smul.addr %s424, 32
        %s426 = scalar_lea.vmem [#allocation8], %s425
        %s427 = smul.u32 4, %s22
        %s428 = smul.u32 4, %s23
        %s429 = smul.u32 4, %s23
        %s430 = smul.u32 4, %s22
        %p432 = scmp.eq.s32.totalorder %s23, 0
        // Predicated region
        $region156: #{skyreels_block_forward.27} parent=142 // pred_check
          %p433 = pneg %p432
        $region157: #{skyreels_block_forward.27} parent=142 // pred_check_branch
          %435 = sbr.rel (%p433) target = $region159
        $region158: #{skyreels_block_forward.27} parent=142 // pred_region
          %vm436 = vcmask 7168
          %437 = vst.msk [vmem:[#allocation2] sm:$0xff] %vm436, -1e+30
          %438 = vst.msk [vmem:[#allocation2 + $0x8] sm:$0xff] %vm436, -1e+30
          %439 = vst.msk [vmem:[#allocation2 + $0x10] sm:$0xff] %vm436, -1e+30
          %440 = vst.msk [vmem:[#allocation2 + $0x18] sm:$0xff] %vm436, -1e+30
          %441 = vst.msk [vmem:[#allocation3] sm:$0xff] %vm436, 0.0
          %442 = vst.msk [vmem:[#allocation3 + $0x8] sm:$0xff] %vm436, 0.0
          %443 = vst.msk [vmem:[#allocation3 + $0x10] sm:$0xff] %vm436, 0.0
          %444 = vst.msk [vmem:[#allocation3 + $0x18] sm:$0xff] %vm436, 0.0
          %445 = vst [vmem:[#allocation4] sm:$0xff] 0.0
          %446 = vst [vmem:[#allocation4 + $0x8] sm:$0xff] 0.0
          %447 = vst [vmem:[#allocation4 + $0x10] sm:$0xff] 0.0
          %448 = vst [vmem:[#allocation4 + $0x18] sm:$0xff] 0.0
        $region159: #{skyreels_block_forward.27} parent=142 // pred_fallthru
          _
        %v449 = vld [vmem:[%s385] sm:$0xf]
        %v450 = vld [vmem:[%s385 + $0x4] sm:$0xf]
        %v451 = vld [vmem:[%s385 + $0x8] sm:$0xf]
        %v452 = vld [vmem:[%s385 + $0xc] sm:$0xf]
        %v453 = vld [vmem:[%s392] sm:$0xf]
        %v454 = vld [vmem:[%s392 + $0x4] sm:$0xf]
        %v455 = vld [vmem:[%s392 + $0x8] sm:$0xf]
        %v456 = vld [vmem:[%s392 + $0xc] sm:$0xf]
        %v457 = vld [vmem:[%s399] sm:$0xf]
        %v458 = vld [vmem:[%s399 + $0x4] sm:$0xf]
        %v459 = vld [vmem:[%s399 + $0x8] sm:$0xf]
        %v460 = vld [vmem:[%s399 + $0xc] sm:$0xf]
        %v465 = vunpack.c.l.b16 %v449
        %v466 = vunpack.c.l.b16 %v450
        %v467 = vunpack.c.l.b16 %v451
        %v468 = vunpack.c.l.b16 %v452
        %v469 = vpack.c.b16 %v466, %v465
        %v470 = vpack.c.b16 %v468, %v467
        %v477 = vunpack.c.l.b16 %v453
        %v478 = vunpack.c.l.b16 %v454
        %v479 = vunpack.c.l.b16 %v455
        %v480 = vunpack.c.l.b16 %v456
        %v481 = vpack.c.b16 %v478, %v477
        %v482 = vpack.c.b16 %v480, %v479
        %485 = vmatprep.subr.bf16.mxu0 0
        %486 = vmatpush1.bf16.xpose.msra.mxu0 0
        %487 = vmatprep.subr.bf16.mxu0 0
        %488 = vmatpush1.bf16.xpose.msra.mxu0 0
        %489 = vmatprep.subr.bf16.mxu0 0
        %490 = vmatpush1.bf16.xpose.msra.mxu0 0
        %491 = vmatprep.subr.bf16.mxu0 0
        %492 = vmatpush1.bf16.xpose.msra.mxu0 0
        %493 = vmatprep.subr.bf16.mxu0 0
        %494 = vmatpush1.bf16.xpose.msra.mxu0 0
        %495 = vmatprep.subr.bf16.mxu0 0
        %496 = vmatpush1.bf16.xpose.msra.mxu0 0
        %497 = vmatprep.subr.bf16.mxu0 0
        %498 = vmatpush1.bf16.xpose.msra.mxu0 %v482
        %499 = vmatprep.subr.bf16.mxu0 0
        %500 = vmatpush1.bf16.xpose.msra.mxu0 %v481
        %501 = vmatprep.subr.bf16.mxu0 0
        %502 = vmatpush2.bf16.xpose.msra.mxu0 0
        %503 = vmatprep.subr.bf16.mxu0 0
        %504 = vmatpush2.bf16.xpose.msra.mxu0 0
        %505 = vmatprep.subr.bf16.mxu0 0
        %506 = vmatpush2.bf16.xpose.msra.mxu0 0
        %507 = vmatprep.subr.bf16.mxu0 0
        %508 = vmatpush2.bf16.xpose.msra.mxu0 0
        %509 = vmatprep.subr.bf16.mxu0 0
        %510 = vmatpush2.bf16.xpose.msra.mxu0 0
        %511 = vmatprep.subr.bf16.mxu0 0
        %512 = vmatpush2.bf16.xpose.msra.mxu0 0
        %513 = vmatprep.subr.bf16.mxu0 0
        %514 = vmatpush2.bf16.xpose.msra.mxu0 0
        %515 = vmatprep.subr.bf16.mxu0 0
        %516 = vmatpush2.bf16.xpose.msra.mxu0 0
        %517 = vmatprep.mubr.bf16.mxu0 0
        %518 = vmatmul.mubr.bf16.gmra.mxu0 %v469
        %v519 = vpop.f32.mrf.mxu0
        %v520 = vadd.f32 0.0, %v519
        %v521 = vpop.f32.mrf.mxu0
        %v522 = vpop.f32.mrf.mxu0
        %v523 = vadd.f32 0.0, %v522
        %v524 = vpop.f32.mrf.mxu0
        %525 = vmatprep.mubr.bf16.mxu0 0
        %526 = vmatmul.mubr.bf16.gmra.mxu0 %v470
        %v527 = vpop.f32.mrf.mxu0
        %v528 = vadd.f32 0.0, %v527
        %v529 = vpop.f32.mrf.mxu0
        %v530 = vpop.f32.mrf.mxu0
        %v531 = vadd.f32 0.0, %v530
        %v532 = vpop.f32.mrf.mxu0
        %533 = vdwg.mxu0
        %v534 = vmul.f32 %v520, 0.088388346
        %v535 = vmul.f32 %v523, 0.088388346
        %v536 = vmul.f32 %v528, 0.088388346
        %v537 = vmul.f32 %v531, 0.088388346
        %v538 = vld [vmem:[#allocation2] sm:$0xff]
        %v539 = vld [vmem:[#allocation2 + $0x8] sm:$0xff]
        %v540 = vld [vmem:[#allocation2 + $0x10] sm:$0xff]
        %v541 = vld [vmem:[#allocation2 + $0x18] sm:$0xff]
        %vm542 = vcmask 261120
        %v543 = vsel %vm542, %v534, -inf
        %544 = vmax.xlane.f32.xlu0 %v543
        %v545 = vpop.xlane.xlu0 %544
        %v546 = vsel %vm542, %v535, -inf
        %547 = vmax.xlane.f32.xlu0 %v546
        %v548 = vpop.xlane.xlu0 %547
        %v549 = vsel %vm542, %v536, -inf
        %550 = vmax.xlane.f32.xlu0 %v549
        %v551 = vpop.xlane.xlu0 %550
        %v552 = vsel %vm542, %v537, -inf
        %553 = vmax.xlane.f32.xlu0 %v552
        %v554 = vpop.xlane.xlu0 %553
        %v555 = vmax.f32 %v538, %v545
        %v556 = vmax.f32 %v539, %v548
        %v557 = vmax.f32 %v540, %v551
        %v558 = vmax.f32 %v541, %v554
        %v559 = vsub.f32 %v538, %v555
        %v560 = vsub.f32 %v539, %v556
        %v561 = vsub.f32 %v540, %v557
        %v562 = vsub.f32 %v541, %v558
        %v563 = vmul.f32 %v559, 1.442695
        %v564 = vpow.pop %v563
        %v565 = vmul.f32 %v560, 1.442695
        %v566 = vpow.pop %v565
        %v567 = vmul.f32 %v561, 1.442695
        %v568 = vpow.pop %v567
        %v569 = vmul.f32 %v562, 1.442695
        %v570 = vpow.pop %v569
        %572 = vset.pattern.permute.xlu0 0
        %573 = vperm.xlu0 %572, %v555
        %v574 = vpop.permute.xlu0 %573
        %577 = vset.pattern.permute.xlu0 0
        %578 = vperm.xlu0 %577, %v556
        %v579 = vpop.permute.xlu0 %578
        %582 = vset.pattern.permute.xlu0 0
        %583 = vperm.xlu0 %582, %v557
        %v584 = vpop.permute.xlu0 %583
        %587 = vset.pattern.permute.xlu0 0
        %588 = vperm.xlu0 %587, %v558
        %v589 = vpop.permute.xlu0 %588
        %v591 = vsub.f32 %v534, %v574
        %v592 = vsub.f32 %v535, %v579
        %v593 = vsub.f32 %v536, %v584
        %v594 = vsub.f32 %v537, %v589
        %v595 = vmul.f32 %v591, 1.442695
        %v596 = vpow.pop %v595
        %v597 = vmul.f32 %v592, 1.442695
        %v598 = vpow.pop %v597
        %v599 = vmul.f32 %v593, 1.442695
        %v600 = vpow.pop %v599
        %v601 = vmul.f32 %v594, 1.442695
        %v602 = vpow.pop %v601
        %v603 = vld [vmem:[#allocation3] sm:$0xff]
        %v604 = vld [vmem:[#allocation3 + $0x8] sm:$0xff]
        %v605 = vld [vmem:[#allocation3 + $0x10] sm:$0xff]
        %v606 = vld [vmem:[#allocation3 + $0x18] sm:$0xff]
        %v607 = vmul.f32 %v564, %v603
        %v608 = vmul.f32 %v566, %v604
        %v609 = vmul.f32 %v568, %v605
        %v610 = vmul.f32 %v570, %v606
        %v611 = vsel %vm542, %v596, 0.0
        %612 = vadd.xlane.f32.xlu0 %v611
        %v613 = vpop.xlane.xlu0 %612
        %v614 = vsel %vm542, %v598, 0.0
        %615 = vadd.xlane.f32.xlu0 %v614
        %v616 = vpop.xlane.xlu0 %615
        %v617 = vsel %vm542, %v600, 0.0
        %618 = vadd.xlane.f32.xlu0 %v617
        %v619 = vpop.xlane.xlu0 %618
        %v620 = vsel %vm542, %v602, 0.0
        %621 = vadd.xlane.f32.xlu0 %v620
        %v622 = vpop.xlane.xlu0 %621
        %v623 = vadd.f32 %v607, %v613
        %v624 = vadd.f32 %v608, %v616
        %v625 = vadd.f32 %v609, %v619
        %v626 = vadd.f32 %v610, %v622
        %vm627 = vcmask 7168
        %628 = vst.msk [vmem:[#allocation3] sm:$0xff] %vm627, %v623
        %629 = vst.msk [vmem:[#allocation3 + $0x8] sm:$0xff] %vm627, %v624
        %630 = vst.msk [vmem:[#allocation3 + $0x10] sm:$0xff] %vm627, %v625
        %631 = vst.msk [vmem:[#allocation3 + $0x18] sm:$0xff] %vm627, %v626
        %v632 = vld [vmem:[#allocation4] sm:$0xff]
        %v633 = vld [vmem:[#allocation4 + $0x8] sm:$0xff]
        %v634 = vld [vmem:[#allocation4 + $0x10] sm:$0xff]
        %v635 = vld [vmem:[#allocation4 + $0x18] sm:$0xff]
        %637 = vset.pattern.permute.xlu0 0
        %638 = vperm.xlu0 %637, %v564
        %v639 = vpop.permute.xlu0 %638
        %642 = vset.pattern.permute.xlu0 0
        %643 = vperm.xlu0 %642, %v566
        %v644 = vpop.permute.xlu0 %643
        %647 = vset.pattern.permute.xlu0 0
        %648 = vperm.xlu0 %647, %v568
        %v649 = vpop.permute.xlu0 %648
        %652 = vset.pattern.permute.xlu0 0
        %653 = vperm.xlu0 %652, %v570
        %v654 = vpop.permute.xlu0 %653
        %v656 = vmul.f32 %v639, %v632
        %v657 = vmul.f32 %v644, %v633
        %v658 = vmul.f32 %v649, %v634
        %v659 = vmul.f32 %v654, %v635
        %v660 = vpack.c.bf16 %v598, %v596
        %v661 = vpack.c.bf16 %v602, %v600
        %v666 = vunpack.c.l.b16 %v457
        %v667 = vunpack.c.l.b16 %v458
        %v668 = vunpack.c.l.b16 %v459
        %v669 = vunpack.c.l.b16 %v460
        %v670 = vpack.c.b16 %v667, %v666
        %v671 = vpack.c.b16 %v669, %v668
        %v675 = vsel %vm542, %v660, 0
        %v678 = vsel %vm542, %v661, 0
        %680 = vmatprep.subr.bf16.mxu0 0
        %681 = vmatpush1.bf16.msra.mxu0 0
        %682 = vmatprep.subr.bf16.mxu0 0
        %683 = vmatpush1.bf16.msra.mxu0 0
        %684 = vmatprep.subr.bf16.mxu0 0
        %685 = vmatpush1.bf16.msra.mxu0 0
        %686 = vmatprep.subr.bf16.mxu0 0
        %687 = vmatpush1.bf16.msra.mxu0 0
        %688 = vmatprep.subr.bf16.mxu0 0
        %689 = vmatpush1.bf16.msra.mxu0 0
        %690 = vmatprep.subr.bf16.mxu0 0
        %691 = vmatpush1.bf16.msra.mxu0 0
        %692 = vmatprep.subr.bf16.mxu0 0
        %693 = vmatpush1.bf16.msra.mxu0 %v671
        %694 = vmatprep.subr.bf16.mxu0 0
        %695 = vmatpush1.bf16.msra.mxu0 %v670
        %696 = vmatprep.subr.bf16.mxu0 0
        %697 = vmatpush2.bf16.msra.mxu0 0
        %698 = vmatprep.subr.bf16.mxu0 0
        %699 = vmatpush2.bf16.msra.mxu0 0
        %700 = vmatprep.subr.bf16.mxu0 0
        %701 = vmatpush2.bf16.msra.mxu0 0
        %702 = vmatprep.subr.bf16.mxu0 0
        %703 = vmatpush2.bf16.msra.mxu0 0
        %704 = vmatprep.subr.bf16.mxu0 0
        %705 = vmatpush2.bf16.msra.mxu0 0
        %706 = vmatprep.subr.bf16.mxu0 0
        %707 = vmatpush2.bf16.msra.mxu0 0
        %708 = vmatprep.subr.bf16.mxu0 0
        %709 = vmatpush2.bf16.msra.mxu0 0
        %710 = vmatprep.subr.bf16.mxu0 0
        %711 = vmatpush2.bf16.msra.mxu0 0
        %712 = vmatprep.mubr.bf16.mxu0 0
        %713 = vmatmul.mubr.bf16.gmra.mxu0 %v675
        %v714 = vpop.f32.mrf.mxu0
        %v715 = vadd.f32 0.0, %v714
        %v716 = vpop.f32.mrf.mxu0
        %v717 = vpop.f32.mrf.mxu0
        %v718 = vadd.f32 0.0, %v717
        %v719 = vpop.f32.mrf.mxu0
        %720 = vmatprep.mubr.bf16.mxu0 0
        %721 = vmatmul.mubr.bf16.gmra.mxu0 %v678
        %v722 = vpop.f32.mrf.mxu0
        %v723 = vadd.f32 0.0, %v722
        %v724 = vpop.f32.mrf.mxu0
        %v725 = vpop.f32.mrf.mxu0
        %v726 = vadd.f32 0.0, %v725
        %v727 = vpop.f32.mrf.mxu0
        %728 = vdwg.mxu0
        %v729 = vadd.f32 %v656, %v715
        %v730 = vadd.f32 %v657, %v718
        %v731 = vadd.f32 %v658, %v723
        %v732 = vadd.f32 %v659, %v726
        %733 = vst [vmem:[#allocation4] sm:$0xff] %v729
        %734 = vst [vmem:[#allocation4 + $0x8] sm:$0xff] %v730
        %735 = vst [vmem:[#allocation4 + $0x10] sm:$0xff] %v731
        %736 = vst [vmem:[#allocation4 + $0x18] sm:$0xff] %v732
        %737 = vst.msk [vmem:[#allocation2] sm:$0xff] %vm627, %v555
        %738 = vst.msk [vmem:[#allocation2 + $0x8] sm:$0xff] %vm627, %v556
        %739 = vst.msk [vmem:[#allocation2 + $0x10] sm:$0xff] %vm627, %v557
        %740 = vst.msk [vmem:[#allocation2 + $0x18] sm:$0xff] %vm627, %v558
        // Predicated region
        $region160: #{skyreels_block_forward.27} parent=142 // pred_check
          %p741 = pneg %p432
        $region161: #{skyreels_block_forward.27} parent=142 // pred_check_branch
          %743 = sbr.rel (%p741) target = $region163
        $region162: #{skyreels_block_forward.27} parent=142 // pred_region
          %v744 = vld [vmem:[#allocation4] sm:$0xff]
          %v745 = vld [vmem:[#allocation4 + $0x8] sm:$0xff]
          %v746 = vld [vmem:[#allocation4 + $0x10] sm:$0xff]
          %v747 = vld [vmem:[#allocation4 + $0x18] sm:$0xff]
          %v748 = vld [vmem:[#allocation3] sm:$0xff]
          %v749 = vld [vmem:[#allocation3 + $0x8] sm:$0xff]
          %v750 = vld [vmem:[#allocation3 + $0x10] sm:$0xff]
          %v751 = vld [vmem:[#allocation3 + $0x18] sm:$0xff]
          %v752 = vrcp.pop %v748
          %v753 = vrcp.pop %v749
          %v754 = vrcp.pop %v750
          %v755 = vrcp.pop %v751
          %757 = vset.pattern.permute.xlu0 0
          %758 = vperm.xlu0 %757, %v752
          %v759 = vpop.permute.xlu0 %758
          %762 = vset.pattern.permute.xlu0 0
          %763 = vperm.xlu0 %762, %v753
          %v764 = vpop.permute.xlu0 %763
          %767 = vset.pattern.permute.xlu0 0
          %768 = vperm.xlu0 %767, %v754
          %v769 = vpop.permute.xlu0 %768
          %772 = vset.pattern.permute.xlu0 0
          %773 = vperm.xlu0 %772, %v755
          %v774 = vpop.permute.xlu0 %773
          %v776 = vmul.f32 %v744, %v759
          %v777 = vmul.f32 %v745, %v764
          %v778 = vmul.f32 %v746, %v769
          %v779 = vmul.f32 %v747, %v774
          %780 = vst [vmem:[%s426] sm:$0xff] %v776
          %781 = vst [vmem:[%s426 + $0x8] sm:$0xff] %v777
          %782 = vst [vmem:[%s426 + $0x10] sm:$0xff] %v778
          %783 = vst [vmem:[%s426 + $0x18] sm:$0xff] %v779
        $region163: #{skyreels_block_forward.27} parent=142 // pred_fallthru
          _
        %s784 = sand.u32 %s142, 1
        %s785 = sand.u32 %s142, 1
        %s786 = smul.addr %s785, 32
        %s787 = scalar_lea.vmem [#allocation8], %s786
        // Predicated region
        $region164: #{skyreels_block_forward.27} parent=142 // pred_check
          %p788 = pneg %p152
        $region165: #{skyreels_block_forward.27} parent=142 // pred_check_branch
          %790 = sbr.rel (%p788) target = $region167
        $region166: #{skyreels_block_forward.27} parent=142 // pred_region
          %s791 = smul.u32 4, %s22
          %s792 = smul.addr %s791, 2
          %s793 = sadd.s32 %s21, %s792
          %s794 = smul.addr %s20, 8
          %s795 = sadd.s32 %s793, %s794
          %s796 = smul.addr %s795, 8
          %s797 = scalar_lea.vmem %s3, %s796
          // Predicated region
          $region168: #{skyreels_block_forward.27} parent=166 // pred_check
            _
          $region169: #{skyreels_block_forward.27} parent=166 // pred_check_branch
            %799 = sbr.rel (0) target = $region171
          $region170: #{skyreels_block_forward.27} parent=166 // pred_region
            // Predicated region
            $region172: #{skyreels_block_forward.27} parent=170 // pred_check
              _
            $region173: #{skyreels_block_forward.27} parent=170 // pred_check_branch
              %801 = sbr.rel (0) target = $region175
            $region174: #{skyreels_block_forward.27} parent=170 // pred_region
              // Predicated region
              $region187: #{skyreels_block_forward.27} parent=174 // pred_check
                _
              $region188: #{skyreels_block_forward.27} parent=174 // pred_check_branch
                %823 = sbr.rel (0) target = $region190
              $region189: #{skyreels_block_forward.27} parent=174 // pred_region
                loop: start=0, step=1, limit=1
                $region191: #{skyreels_block_forward.27} parent=189 // loop_pre_header
                  _
                $region192: #{skyreels_block_forward.27} parent=189 // loop_header
                  %s825 = sphi 0, %s829
                  %p826 = scmp.ge.s32.totalorder %s825, 1
                  %s830 = sphi %s787, %s787
                  %s831 = sphi %s797, %s797
                $region193: #{skyreels_block_forward.27} parent=189 // loop_header_branch
                  %828 = sbr.rel (%p826) target = $region197
                $region194: #{skyreels_block_forward.27} parent=189 // loop_body
                  %v832 = vld [vmem:[%s830] sm:$0xff]
                  %833 = vst [vmem:[%s831] sm:$0xff] %v832
                  %v834 = vld [vmem:[%s830 + $0x8] sm:$0xff]
                  %835 = vst [vmem:[%s831 + $0x10] sm:$0xff] %v834
                  %v836 = vld [vmem:[%s830 + $0x10] sm:$0xff]
                  %837 = vst [vmem:[%s831 + $0x20] sm:$0xff] %v836
                  %v838 = vld [vmem:[%s830 + $0x18] sm:$0xff]
                  %839 = vst [vmem:[%s831 + $0x30] sm:$0xff] %v838
                $region195: #{skyreels_block_forward.27} parent=189 // loop_footer
                  %s829 = sadd.s32 1, %s825
                $region196: #{skyreels_block_forward.27} parent=189 // loop_footer_branch
                  %824 = sbr.rel target = $region192
                $region197: #{skyreels_block_forward.27} parent=189 // loop_exit
                  _
              $region190: #{skyreels_block_forward.27} parent=174 // pred_fallthru
                _
              // Predicated region
              $region198: #{skyreels_block_forward.27} parent=174 // pred_check
                _
              $region199: #{skyreels_block_forward.27} parent=174 // pred_check_branch
                %841 = sbr.rel target = $region201
              $region200: #{skyreels_block_forward.27} parent=174 // pred_region
                _
              $region201: #{skyreels_block_forward.27} parent=174 // pred_fallthru
                _
            $region175: #{skyreels_block_forward.27} parent=170 // pred_fallthru
              _
            // Predicated region
            $region176: #{skyreels_block_forward.27} parent=170 // pred_check
              _
            $region177: #{skyreels_block_forward.27} parent=170 // pred_check_branch
              %803 = sbr.rel target = $region179
            $region178: #{skyreels_block_forward.27} parent=170 // pred_region
              %s805 = ssub.s32 256, 1
              loop: start=0, step=1, limit=1
              $region180: #{skyreels_block_forward.27} parent=178 // loop_pre_header
                _
              $region181: #{skyreels_block_forward.27} parent=178 // loop_header
                %s807 = sphi 0, %s811
                %p808 = scmp.ge.s32.totalorder %s807, 1
                %s812 = sphi %s787, %s787
                %s813 = sphi %s797, %s797
              $region182: #{skyreels_block_forward.27} parent=178 // loop_header_branch
                %810 = sbr.rel (%p808) target = $region186
              $region183: #{skyreels_block_forward.27} parent=178 // loop_body
                %v814 = vld [vmem:[%s812] sm:%s805]
                %815 = vst [vmem:[%s813] sm:%s805] %v814
                %v816 = vld [vmem:[%s812 + $0x8] sm:%s805]
                %817 = vst [vmem:[%s813 + $0x10] sm:%s805] %v816
                %v818 = vld [vmem:[%s812 + $0x10] sm:%s805]
                %819 = vst [vmem:[%s813 + $0x20] sm:%s805] %v818
                %v820 = vld [vmem:[%s812 + $0x18] sm:%s805]
                %821 = vst [vmem:[%s813 + $0x30] sm:%s805] %v820
              $region184: #{skyreels_block_forward.27} parent=178 // loop_footer
                %s811 = sadd.s32 1, %s807
              $region185: #{skyreels_block_forward.27} parent=178 // loop_footer_branch
                %806 = sbr.rel target = $region181
              $region186: #{skyreels_block_forward.27} parent=178 // loop_exit
                _
            $region179: #{skyreels_block_forward.27} parent=170 // pred_fallthru
              _
          $region171: #{skyreels_block_forward.27} parent=166 // pred_fallthru
            _
          %842 = vnop
        $region167: #{skyreels_block_forward.27} parent=142 // pred_fallthru
          _
      $region143: #{skyreels_block_forward.27} parent=5 // pred_fallthru
        _
      %p843 = scmp.le.s32.totalorder 2, %s9
      // Predicated region
      $region202: #{skyreels_block_forward.27} parent=5 // pred_check
        %p844 = pneg %p843
      $region203: #{skyreels_block_forward.27} parent=5 // pred_check_branch
        %846 = sbr.rel (%p844) target = $region205
      $region204: #{skyreels_block_forward.27} parent=5 // pred_region
        %s847 = ssub.s32 %s9, 2
        // Predicated region
        $region206: #{skyreels_block_forward.27} parent=204 // pred_check
          %p848 = pneg %p158
        $region207: #{skyreels_block_forward.27} parent=204 // pred_check_branch
          %850 = sbr.rel (%p848) target = $region209
        $region208: #{skyreels_block_forward.27} parent=204 // pred_region
          %s851 = sand.u32 %s143, 1
          %s852 = sand.u32 %s143, 1
          %s853 = smul.addr %s852, 32
          %s854 = scalar_lea.vmem [#allocation8], %s853
        $region209: #{skyreels_block_forward.27} parent=204 // pred_fallthru
          _
      $region205: #{skyreels_block_forward.27} parent=5 // pred_fallthru
        _
    $region6: #{skyreels_block_forward.27} parent=1 // loop_footer
      %s13 = sadd.s32 1, %s9
    $region7: #{skyreels_block_forward.27} parent=1 // loop_footer_branch
      %8 = sbr.rel target = $region3
    $region8: #{skyreels_block_forward.27} parent=1 // loop_exit
      _

// kernel: skyreels_block_forward.29
$region0: #{skyreels_block_forward.29}
  #allocation0 [shape = 'u32[]', space=smem, size = 0x4, offset = 0x4, fixed_abs, tag = 'smem constant byte address 0x4 - core index']
  #allocation1 [shape = 'u32[144,128]{1,0:T(1,128)}', space=vmem, size = 0x12000, scoped, tag = 'internal scratch']
  %s0 = inlined_call_operand.vmem [shape: f32[2,32,256], index: 0, kind: input, shape index: {}, may-alias: {0,3}]
  %s1 = inlined_call_operand.vmem [shape: f32[2,32,256], index: 1, kind: input, shape index: {}]
  %s2 = inlined_call_operand.vmem [shape: f32[2,1,256], index: 2, kind: input, shape index: {}]
  %s3 = inlined_call_operand.vmem [shape: f32[2,32,256], index: 3, kind: output, shape index: {}, may-alias: {0,3}]
  %s4 = sld [smem:[#allocation0]]
  $region45: #{skyreels_block_forward.29} parent=0
    _
  %s6 = ssub.s32 1, %s4
  %s7 = scalar_select 0, %s6, %s4
  loop: start=0, step=1, limit=4
  $region2: #{skyreels_block_forward.29} parent=0 // loop_pre_header
    _
  $region3: #{skyreels_block_forward.29} parent=0 // loop_header
    %s9 = sphi 0, %s13
    %p10 = scmp.ge.s32.totalorder %s9, 4
    %s16 = sphi 0, %s28
    %s17 = sphi 0, %s24
    %s18 = sphi 0, %s16
    %s19 = sphi 0, %s17
    %s20 = sphi 0, %s18
    %s21 = sphi 0, %s19
    %s33 = sphi 0, %s35
    %s36 = sphi 0, %s33
    %s37 = sphi 0, %s36
    %s53 = sphi 0, %s37
    %s61 = sphi 0, %s63
    %s64 = sphi 0, %s61
    %s65 = sphi 0, %s64
    %s81 = sphi 0, %s65
    %s87 = sphi 0, %s89
    %s90 = sphi 0, %s87
    %s91 = sphi 0, %s90
    %s107 = sphi 0, %s91
    %s115 = sphi 0, %s117
    %s118 = sphi 0, %s115
    %s119 = sphi 0, %s118
    %s135 = sphi 0, %s119
  $region4: #{skyreels_block_forward.29} parent=0 // loop_header_branch
    %12 = sbr.rel (%p10) target = $region8
  $region5: #{skyreels_block_forward.29} parent=0 // loop_body
    %s14 = ssub.s32 %s9, 1
    %s15 = ssub.s32 %s9, 2
    %s22 = sadd.s32 1, %s17
    %p23 = scmp.ge.s32.totalorder %s22, 1
    %s24 = scalar_select %p23, 0, %s22
    %s25 = sadd.s32 1, %s16
    %s26 = scalar_select %p23, %s25, %s16
    %p27 = scmp.ge.s32.totalorder %s26, 2
    %s28 = scalar_select %p27, 0, %s26
    %s29 = ssub.s32 %s16, %s28
    %s30 = ssub.s32 %s17, %s24
    %s31 = sor.u32 %s29, %s30
    %p32 = scmp.eq.s32.totalorder %s31, 0
    %s34 = sadd.s32 %s33, 1
    %s35 = scalar_select %p32, %s33, %s34
    %p38 = pneg %p32
    %p39 = scmp.eq.s32.totalorder %s9, 1
    %p40 = por %p38, %p39
    %p41 = scmp.ne.s32.totalorder %s33, %s36
    %p42 = scmp.eq.s32.totalorder %s9, 0
    %p43 = por %p41, %p42
    %p44 = scmp.ne.s32.totalorder %s33, %s36
    %p45 = scmp.eq.s32.totalorder %s14, 1
    %p46 = por %p44, %p45
    %p47 = scmp.ne.s32.totalorder %s36, %s37
    %p48 = scmp.eq.s32.totalorder %s14, 0
    %p49 = por %p47, %p48
    %p50 = scmp.ne.s32.totalorder %s36, %s37
    %p51 = scmp.eq.s32.totalorder %s15, 1
    %p52 = por %p50, %p51
    %p54 = scmp.ne.s32.totalorder %s37, %s53
    %p55 = scmp.eq.s32.totalorder %s15, 0
    %p56 = por %p54, %p55
    %s57 = ssub.s32 %s16, %s28
    %s58 = ssub.s32 %s17, %s24
    %s59 = sor.u32 %s57, %s58
    %p60 = scmp.eq.s32.totalorder %s59, 0
    %s62 = sadd.s32 %s61, 1
    %s63 = scalar_select %p60, %s61, %s62
    %p66 = pneg %p60
    %p67 = scmp.eq.s32.totalorder %s9, 1
    %p68 = por %p66, %p67
    %p69 = scmp.ne.s32.totalorder %s61, %s64
    %p70 = scmp.eq.s32.totalorder %s9, 0
    %p71 = por %p69, %p70
    %p72 = scmp.ne.s32.totalorder %s61, %s64
    %p73 = scmp.eq.s32.totalorder %s14, 1
    %p74 = por %p72, %p73
    %p75 = scmp.ne.s32.totalorder %s64, %s65
    %p76 = scmp.eq.s32.totalorder %s14, 0
    %p77 = por %p75, %p76
    %p78 = scmp.ne.s32.totalorder %s64, %s65
    %p79 = scmp.eq.s32.totalorder %s15, 1
    %p80 = por %p78, %p79
    %p82 = scmp.ne.s32.totalorder %s65, %s81
    %p83 = scmp.eq.s32.totalorder %s15, 0
    %p84 = por %p82, %p83
    %s85 = ssub.s32 %s16, %s28
    %p86 = scmp.eq.s32.totalorder %s85, 0
    %s88 = sadd.s32 %s87, 1
    %s89 = scalar_select %p86, %s87, %s88
    %p92 = pneg %p86
    %p93 = scmp.eq.s32.totalorder %s9, 1
    %p94 = por %p92, %p93
    %p95 = scmp.ne.s32.totalorder %s87, %s90
    %p96 = scmp.eq.s32.totalorder %s9, 0
    %p97 = por %p95, %p96
    %p98 = scmp.ne.s32.totalorder %s87, %s90
    %p99 = scmp.eq.s32.totalorder %s14, 1
    %p100 = por %p98, %p99
    %p101 = scmp.ne.s32.totalorder %s90, %s91
    %p102 = scmp.eq.s32.totalorder %s14, 0
    %p103 = por %p101, %p102
    %p104 = scmp.ne.s32.totalorder %s90, %s91
    %p105 = scmp.eq.s32.totalorder %s15, 1
    %p106 = por %p104, %p105
    %p108 = scmp.ne.s32.totalorder %s91, %s107
    %p109 = scmp.eq.s32.totalorder %s15, 0
    %p110 = por %p108, %p109
    %s111 = ssub.s32 %s16, %s28
    %s112 = ssub.s32 %s17, %s24
    %s113 = sor.u32 %s111, %s112
    %p114 = scmp.eq.s32.totalorder %s113, 0
    %s116 = sadd.s32 %s115, 1
    %s117 = scalar_select %p114, %s115, %s116
    %p120 = pneg %p114
    %p121 = scmp.eq.s32.totalorder %s9, 1
    %p122 = por %p120, %p121
    %p123 = scmp.ne.s32.totalorder %s115, %s118
    %p124 = scmp.eq.s32.totalorder %s9, 0
    %p125 = por %p123, %p124
    %p126 = scmp.ne.s32.totalorder %s115, %s118
    %p127 = scmp.eq.s32.totalorder %s14, 1
    %p128 = por %p126, %p127
    %p129 = scmp.ne.s32.totalorder %s118, %s119
    %p130 = scmp.eq.s32.totalorder %s14, 0
    %p131 = por %p129, %p130
    %p132 = scmp.ne.s32.totalorder %s118, %s119
    %p133 = scmp.eq.s32.totalorder %s15, 1
    %p134 = por %p132, %p133
    %p136 = scmp.ne.s32.totalorder %s119, %s135
    %p137 = scmp.eq.s32.totalorder %s15, 0
    %p138 = por %p136, %p137
    %p139 = scmp.le.s32.totalorder 1, %s9
    %p140 = scmp.lt.s32.totalorder %s9, 3
    %p141 = pnand %p139, %p140
    %p142 = pneg %p141
    // Predicated region
    $region9: #{skyreels_block_forward.29} parent=5 // pred_check
      _
    $region10: #{skyreels_block_forward.29} parent=5 // pred_check_branch
      %144 = sbr.rel (%p141) target = $region12
    $region11: #{skyreels_block_forward.29} parent=5 // pred_region
      %s145 = ssub.s32 %s9, 1
    $region12: #{skyreels_block_forward.29} parent=5 // pred_fallthru
      _
    %p146 = scmp.lt.s32.totalorder %s9, 2
    // Predicated region
    $region13: #{skyreels_block_forward.29} parent=5 // pred_check
      %p147 = pneg %p146
    $region14: #{skyreels_block_forward.29} parent=5 // pred_check_branch
      %149 = sbr.rel (%p147) target = $region16
    $region15: #{skyreels_block_forward.29} parent=5 // pred_region
      // Predicated region
      $region17: #{skyreels_block_forward.29} parent=15 // pred_check
        %p150 = pneg %p43
      $region18: #{skyreels_block_forward.29} parent=15 // pred_check_branch
        %152 = sbr.rel (%p150) target = $region20
      $region19: #{skyreels_block_forward.29} parent=15 // pred_region
        %s153 = smul.u32 4, %s17
        %p154 = scmp.lt.s32.totalorder %s16, 1
        %s155 = scalar_select %p154, %s16, 1
        %p156 = scmp.lt.s32.totalorder %s153, 3
        %s157 = scalar_select %p156, %s153, 3
        %s158 = smul.addr %s157, 2
        %s159 = smul.addr %s155, 8
        %s160 = sadd.s32 %s158, %s159
        %s161 = smul.addr %s160, 8
        %s162 = scalar_lea.vmem %s0, %s161
        %s163 = smul.u32 4, %s17
      $region20: #{skyreels_block_forward.29} parent=15 // pred_fallthru
        _
      // Predicated region
      $region21: #{skyreels_block_forward.29} parent=15 // pred_check
        %p164 = pneg %p71
      $region22: #{skyreels_block_forward.29} parent=15 // pred_check_branch
        %166 = sbr.rel (%p164) target = $region24
      $region23: #{skyreels_block_forward.29} parent=15 // pred_region
        %s167 = smul.u32 4, %s17
        %p168 = scmp.lt.s32.totalorder %s16, 1
        %s169 = scalar_select %p168, %s16, 1
        %p170 = scmp.lt.s32.totalorder %s167, 3
        %s171 = scalar_select %p170, %s167, 3
        %s172 = smul.addr %s171, 2
        %s173 = smul.addr %s169, 8
        %s174 = sadd.s32 %s172, %s173
        %s175 = smul.addr %s174, 8
        %s176 = scalar_lea.vmem %s1, %s175
        %s177 = smul.u32 4, %s17
      $region24: #{skyreels_block_forward.29} parent=15 // pred_fallthru
        _
      // Predicated region
      $region25: #{skyreels_block_forward.29} parent=15 // pred_check
        %p178 = pneg %p97
      $region26: #{skyreels_block_forward.29} parent=15 // pred_check_branch
        %180 = sbr.rel (%p178) target = $region28
      $region27: #{skyreels_block_forward.29} parent=15 // pred_region
        %p181 = scmp.lt.s32.totalorder %s16, 1
        %s182 = scalar_select %p181, %s16, 1
        %s183 = smul.addr %s182, 2
        %s184 = scalar_lea.vmem %s2, %s183
      $region28: #{skyreels_block_forward.29} parent=15 // pred_fallthru
        _
    $region16: #{skyreels_block_forward.29} parent=5 // pred_fallthru
      _
    %p185 = scmp.le.s32.totalorder 1, %s9
    %p186 = scmp.lt.s32.totalorder %s9, 3
    %p187 = pnand %p185, %p186
    %p188 = pneg %p187
    // Predicated region
    $region29: #{skyreels_block_forward.29} parent=5 // pred_check
      _
    $region30: #{skyreels_block_forward.29} parent=5 // pred_check_branch
      %190 = sbr.rel (%p187) target = $region32
    $region31: #{skyreels_block_forward.29} parent=5 // pred_region
      %s191 = ssub.s32 %s9, 1
      %s192 = smul.u32 4, %s19
      %p193 = scmp.lt.s32.totalorder %s18, 1
      %s194 = scalar_select %p193, %s18, 1
      %p195 = scmp.lt.s32.totalorder %s192, 3
      %s196 = scalar_select %p195, %s192, 3
      %s197 = smul.addr %s196, 2
      %s198 = smul.addr %s194, 8
      %s199 = sadd.s32 %s197, %s198
      %s200 = smul.addr %s199, 8
      %s201 = scalar_lea.vmem %s0, %s200
      %p202 = pneg %p49
      %p203 = pneg %p46
      %s204 = smul.u32 4, %s19
      %p205 = scmp.lt.s32.totalorder %s18, 1
      %s206 = scalar_select %p205, %s18, 1
      %p207 = scmp.lt.s32.totalorder %s204, 3
      %s208 = scalar_select %p207, %s204, 3
      %s209 = smul.addr %s208, 2
      %s210 = smul.addr %s206, 8
      %s211 = sadd.s32 %s209, %s210
      %s212 = smul.addr %s211, 8
      %s213 = scalar_lea.vmem %s1, %s212
      %p214 = pneg %p77
      %p215 = pneg %p74
      %p216 = scmp.lt.s32.totalorder %s18, 1
      %s217 = scalar_select %p216, %s18, 1
      %s218 = smul.addr %s217, 2
      %s219 = scalar_lea.vmem %s2, %s218
      %p220 = pneg %p103
      %p221 = pneg %p100
      %p222 = pneg %p131
      %p223 = pneg %p128
      %s224 = smul.u32 4, %s19
      %p225 = scmp.lt.s32.totalorder %s18, 1
      %s226 = scalar_select %p225, %s18, 1
      %p227 = scmp.lt.s32.totalorder %s224, 3
      %s228 = scalar_select %p227, %s224, 3
      %s229 = smul.addr %s228, 2
      %s230 = smul.addr %s226, 8
      %s231 = sadd.s32 %s229, %s230
      %s232 = smul.addr %s231, 8
      %s233 = scalar_lea.vmem %s3, %s232
      %s234 = smul.u32 4, %s19
      %p235 = scmp.lt.s32.totalorder %s18, 1
      %s236 = scalar_select %p235, %s18, 1
      %p237 = scmp.lt.s32.totalorder %s234, 3
      %s238 = scalar_select %p237, %s234, 3
      %s239 = smul.addr %s238, 2
      %s240 = smul.addr %s236, 8
      %s241 = sadd.s32 %s239, %s240
      %s242 = smul.addr %s241, 8
      %s243 = scalar_lea.vmem %s0, %s242
      %s244 = smul.u32 4, %s19
      %s245 = smul.u32 4, %s19
      %p246 = scmp.lt.s32.totalorder %s18, 1
      %s247 = scalar_select %p246, %s18, 1
      %p248 = scmp.lt.s32.totalorder %s245, 3
      %s249 = scalar_select %p248, %s245, 3
      %s250 = smul.addr %s249, 2
      %s251 = smul.addr %s247, 8
      %s252 = sadd.s32 %s250, %s251
      %s253 = smul.addr %s252, 8
      %s254 = scalar_lea.vmem %s1, %s253
      %s255 = smul.u32 4, %s19
      %p256 = scmp.lt.s32.totalorder %s18, 1
      %s257 = scalar_select %p256, %s18, 1
      %s258 = smul.addr %s257, 2
      %s259 = scalar_lea.vmem %s2, %s258
      %s260 = smul.u32 4, %s19
      %p261 = scmp.lt.s32.totalorder %s18, 1
      %s262 = scalar_select %p261, %s18, 1
      %p263 = scmp.lt.s32.totalorder %s260, 3
      %s264 = scalar_select %p263, %s260, 3
      %s265 = smul.addr %s264, 2
      %s266 = smul.addr %s262, 8
      %s267 = sadd.s32 %s265, %s266
      %s268 = smul.addr %s267, 8
      %s269 = scalar_lea.vmem %s3, %s268
      %s270 = smul.u32 4, %s19
      %v271 = vld [vmem:[%s243] sm:$0xff]
      %v272 = vld [vmem:[%s243 + $0x8] sm:$0xff]
      %v273 = vld [vmem:[%s243 + $0x10] sm:$0xff]
      %v274 = vld [vmem:[%s243 + $0x18] sm:$0xff]
      %v275 = vld [vmem:[%s243 + $0x20] sm:$0xff]
      %v276 = vld [vmem:[%s243 + $0x28] sm:$0xff]
      %v277 = vld [vmem:[%s243 + $0x30] sm:$0xff]
      %v278 = vld [vmem:[%s243 + $0x38] sm:$0xff]
      %v279 = vld [vmem:[%s254] sm:$0xff]
      %v280 = vld [vmem:[%s254 + $0x8] sm:$0xff]
      %v281 = vld [vmem:[%s254 + $0x10] sm:$0xff]
      %v282 = vld [vmem:[%s254 + $0x18] sm:$0xff]
      %v283 = vld [vmem:[%s254 + $0x20] sm:$0xff]
      %v284 = vld [vmem:[%s254 + $0x28] sm:$0xff]
      %v285 = vld [vmem:[%s254 + $0x30] sm:$0xff]
      %v286 = vld [vmem:[%s254 + $0x38] sm:$0xff]
      %v287 = vld [vmem:[%s259] sm:$0x3]
      %v289 = vlaneseq
      %v290 = vshrl.u32 %v289, 7
      %v291 = vsub.s32 0, %v290
      %v292 = vrot.slane %v287, %v291
      %v293 = vlaneseq
      %v294 = vshrl.u32 %v293, 7
      %v295 = vsub.s32 1, %v294
      %v296 = vrot.slane %v287, %v295
      %v299 = vmul.f32 %v279, %v292
      %v300 = vmul.f32 %v280, %v296
      %v301 = vmul.f32 %v281, %v292
      %v302 = vmul.f32 %v282, %v296
      %v303 = vmul.f32 %v283, %v292
      %v304 = vmul.f32 %v284, %v296
      %v305 = vmul.f32 %v285, %v292
      %v306 = vmul.f32 %v286, %v296
      %v307 = vadd.f32 %v271, %v299
      %v308 = vadd.f32 %v272, %v300
      %v309 = vadd.f32 %v273, %v301
      %v310 = vadd.f32 %v274, %v302
      %v311 = vadd.f32 %v275, %v303
      %v312 = vadd.f32 %v276, %v304
      %v313 = vadd.f32 %v277, %v305
      %v314 = vadd.f32 %v278, %v306
      %315 = vst [vmem:[%s269] sm:$0xff] %v307
      %316 = vst [vmem:[%s269 + $0x8] sm:$0xff] %v308
      %317 = vst [vmem:[%s269 + $0x10] sm:$0xff] %v309
      %318 = vst [vmem:[%s269 + $0x18] sm:$0xff] %v310
      %319 = vst [vmem:[%s269 + $0x20] sm:$0xff] %v311
      %320 = vst [vmem:[%s269 + $0x28] sm:$0xff] %v312
      %321 = vst [vmem:[%s269 + $0x30] sm:$0xff] %v313
      %322 = vst [vmem:[%s269 + $0x38] sm:$0xff] %v314
      %s323 = smul.u32 4, %s19
      %p324 = scmp.lt.s32.totalorder %s18, 1
      %s325 = scalar_select %p324, %s18, 1
      %p326 = scmp.lt.s32.totalorder %s323, 3
      %s327 = scalar_select %p326, %s323, 3
      %s328 = smul.addr %s327, 2
      %s329 = smul.addr %s325, 8
      %s330 = sadd.s32 %s328, %s329
      %s331 = smul.addr %s330, 8
      %s332 = scalar_lea.vmem %s3, %s331
      // Predicated region
      $region33: #{skyreels_block_forward.29} parent=31 // pred_check
        %p333 = pneg %p128
      $region34: #{skyreels_block_forward.29} parent=31 // pred_check_branch
        %335 = sbr.rel (%p333) target = $region36
      $region35: #{skyreels_block_forward.29} parent=31 // pred_region
        %s336 = smul.u32 4, %s19
      $region36: #{skyreels_block_forward.29} parent=31 // pred_fallthru
        _
    $region32: #{skyreels_block_forward.29} parent=5 // pred_fallthru
      _
    %p337 = scmp.le.s32.totalorder 2, %s9
    // Predicated region
    $region37: #{skyreels_block_forward.29} parent=5 // pred_check
      %p338 = pneg %p337
    $region38: #{skyreels_block_forward.29} parent=5 // pred_check_branch
      %340 = sbr.rel (%p338) target = $region40
    $region39: #{skyreels_block_forward.29} parent=5 // pred_region
      %s341 = ssub.s32 %s9, 2
      // Predicated region
      $region41: #{skyreels_block_forward.29} parent=39 // pred_check
        %p342 = pneg %p134
      $region42: #{skyreels_block_forward.29} parent=39 // pred_check_branch
        %344 = sbr.rel (%p342) target = $region44
      $region43: #{skyreels_block_forward.29} parent=39 // pred_region
        %s345 = smul.u32 4, %s21
        %p346 = scmp.lt.s32.totalorder %s20, 1
        %s347 = scalar_select %p346, %s20, 1
        %p348 = scmp.lt.s32.totalorder %s345, 3
        %s349 = scalar_select %p348, %s345, 3
        %s350 = smul.addr %s349, 2
        %s351 = smul.addr %s347, 8
        %s352 = sadd.s32 %s350, %s351
        %s353 = smul.addr %s352, 8
        %s354 = scalar_lea.vmem %s3, %s353
      $region44: #{skyreels_block_forward.29} parent=39 // pred_fallthru
        _
    $region40: #{skyreels_block_forward.29} parent=5 // pred_fallthru
      _
  $region6: #{skyreels_block_forward.29} parent=0 // loop_footer
    %s13 = sadd.s32 1, %s9
  $region7: #{skyreels_block_forward.29} parent=0 // loop_footer_branch
    %8 = sbr.rel target = $region3
  $region8: #{skyreels_block_forward.29} parent=0 // loop_exit
    _

// kernel: skyreels_block_forward.34
$region0: #{skyreels_block_forward.34}
  #allocation0 [shape = 'u32[]', space=smem, size = 0x4, offset = 0x4, fixed_abs, tag = 'smem constant byte address 0x4 - core index']
  #allocation1 [shape = 'u32[144,128]{1,0:T(1,128)}', space=vmem, size = 0x12000, scoped, tag = 'internal scratch']
  %s0 = inlined_call_operand.vmem [shape: f32[32,256], index: 0, kind: input, shape index: {}]
  %s1 = inlined_call_operand.vmem [shape: f32[1,256], index: 1, kind: input, shape index: {}]
  %s2 = inlined_call_operand.vmem [shape: f32[32,256], index: 2, kind: output, shape index: {}]
  %s3 = sld [smem:[#allocation0]]
  $region18: #{skyreels_block_forward.34} parent=0
    _
  %s5 = ssub.s32 1, %s3
  %s6 = scalar_select 0, %s5, %s3
  // Predicated region
  $region2: #{skyreels_block_forward.34} parent=0 // pred_check
    _
  $region3: #{skyreels_block_forward.34} parent=0 // pred_check_branch
    %8 = sbr.rel (0) target = $region5
  $region4: #{skyreels_block_forward.34} parent=0 // pred_region
    _
  $region5: #{skyreels_block_forward.34} parent=0 // pred_fallthru
    _
  // Predicated region
  $region6: #{skyreels_block_forward.34} parent=0 // pred_check
    _
  $region7: #{skyreels_block_forward.34} parent=0 // pred_check_branch
    %10 = sbr.rel (0) target = $region9
  $region8: #{skyreels_block_forward.34} parent=0 // pred_region
    _
  $region9: #{skyreels_block_forward.34} parent=0 // pred_fallthru
    _
  %v11 = vld [vmem:[%s0] sm:$0xff]
  %v12 = vld [vmem:[%s0 + $0x8] sm:$0xff]
  %v13 = vld [vmem:[%s0 + $0x10] sm:$0xff]
  %v14 = vld [vmem:[%s0 + $0x18] sm:$0xff]
  %v15 = vld [vmem:[%s0 + $0x20] sm:$0xff]
  %v16 = vld [vmem:[%s0 + $0x28] sm:$0xff]
  %v17 = vld [vmem:[%s0 + $0x30] sm:$0xff]
  %v18 = vld [vmem:[%s0 + $0x38] sm:$0xff]
  %v19 = vmul.f32 %v11, %v11
  %v20 = vmul.f32 %v12, %v12
  %v21 = vmul.f32 %v13, %v13
  %v22 = vmul.f32 %v14, %v14
  %v23 = vmul.f32 %v15, %v15
  %v24 = vmul.f32 %v16, %v16
  %v25 = vmul.f32 %v17, %v17
  %v26 = vmul.f32 %v18, %v18
  %v27 = vadd.f32 %v19, %v20
  %28 = vadd.xlane.f32.xlu0 %v27
  %v29 = vpop.xlane.xlu0 %28
  %v30 = vadd.f32 %v21, %v22
  %31 = vadd.xlane.f32.xlu0 %v30
  %v32 = vpop.xlane.xlu0 %31
  %v33 = vadd.f32 %v23, %v24
  %34 = vadd.xlane.f32.xlu0 %v33
  %v35 = vpop.xlane.xlu0 %34
  %v36 = vadd.f32 %v25, %v26
  %37 = vadd.xlane.f32.xlu0 %v36
  %v38 = vpop.xlane.xlu0 %37
  %v39 = vrcp.pop 256.0
  %v40 = vmul.f32 %v29, %v39
  %v41 = vmul.f32 %v32, %v39
  %v42 = vmul.f32 %v35, %v39
  %v43 = vmul.f32 %v38, %v39
  %v44 = vadd.f32 %v40, 1e-06
  %v45 = vadd.f32 %v41, 1e-06
  %v46 = vadd.f32 %v42, 1e-06
  %v47 = vadd.f32 %v43, 1e-06
  %v48 = vrsqrt.pop %v44
  %v49 = vrsqrt.pop %v45
  %v50 = vrsqrt.pop %v46
  %v51 = vrsqrt.pop %v47
  %v52 = vmul.f32 %v11, %v48
  %v53 = vmul.f32 %v12, %v48
  %v54 = vmul.f32 %v13, %v49
  %v55 = vmul.f32 %v14, %v49
  %v56 = vmul.f32 %v15, %v50
  %v57 = vmul.f32 %v16, %v50
  %v58 = vmul.f32 %v17, %v51
  %v59 = vmul.f32 %v18, %v51
  %v60 = vld [vmem:[%s1] sm:$0x3]
  %v62 = vlaneseq
  %v63 = vshrl.u32 %v62, 7
  %v64 = vsub.s32 0, %v63
  %v65 = vrot.slane %v60, %v64
  %v66 = vlaneseq
  %v67 = vshrl.u32 %v66, 7
  %v68 = vsub.s32 1, %v67
  %v69 = vrot.slane %v60, %v68
  %v72 = vmul.f32 %v52, %v65
  %v73 = vmul.f32 %v53, %v69
  %v74 = vmul.f32 %v54, %v65
  %v75 = vmul.f32 %v55, %v69
  %v76 = vmul.f32 %v56, %v65
  %v77 = vmul.f32 %v57, %v69
  %v78 = vmul.f32 %v58, %v65
  %v79 = vmul.f32 %v59, %v69
  %80 = vst [vmem:[%s2] sm:$0xff] %v72
  %81 = vst [vmem:[%s2 + $0x8] sm:$0xff] %v73
  %82 = vst [vmem:[%s2 + $0x10] sm:$0xff] %v74
  %83 = vst [vmem:[%s2 + $0x18] sm:$0xff] %v75
  %84 = vst [vmem:[%s2 + $0x20] sm:$0xff] %v76
  %85 = vst [vmem:[%s2 + $0x28] sm:$0xff] %v77
  %86 = vst [vmem:[%s2 + $0x30] sm:$0xff] %v78
  %87 = vst [vmem:[%s2 + $0x38] sm:$0xff] %v79
  // Predicated region
  $region10: #{skyreels_block_forward.34} parent=0 // pred_check
    _
  $region11: #{skyreels_block_forward.34} parent=0 // pred_check_branch
    %89 = sbr.rel (0) target = $region13
  $region12: #{skyreels_block_forward.34} parent=0 // pred_region
    _
  $region13: #{skyreels_block_forward.34} parent=0 // pred_fallthru
    _
  // Predicated region
  $region14: #{skyreels_block_forward.34} parent=0 // pred_check
    _
  $region15: #{skyreels_block_forward.34} parent=0 // pred_check_branch
    %91 = sbr.rel (0) target = $region17
  $region16: #{skyreels_block_forward.34} parent=0 // pred_region
    _
  $region17: #{skyreels_block_forward.34} parent=0 // pred_fallthru
    _

// kernel: skyreels_block_forward.31
$region0: #{skyreels_block_forward.31}
  #allocation0 [shape = 'u32[]', space=smem, size = 0x4, offset = 0x4, fixed_abs, tag = 'smem constant byte address 0x4 - core index']
  #allocation1 [shape = 'u32[144,128]{1,0:T(1,128)}', space=vmem, size = 0x12000, scoped, tag = 'internal scratch']
  #allocation2 [shape = 'f32[32,256]{1,0:T(8,128)}', space=vmem, size = 0x8000, scoped, tag = 'scratch operand']
  %s0 = inlined_call_operand.vmem [shape: bf16[32,256], index: 0, kind: input, shape index: {}]
  %s1 = inlined_call_operand.vmem [shape: bf16[256,256], index: 1, kind: input, shape index: {}]
  %s2 = inlined_call_operand.vmem [shape: f32[1,256], index: 2, kind: input, shape index: {}]
  %s3 = inlined_call_operand.vmem [shape: f32[32,256], index: 3, kind: output, shape index: {}]
  %s4 = sld [smem:[#allocation0]]
  $region30: #{skyreels_block_forward.31} parent=0
    _
  %s6 = ssub.s32 1, %s4
  %s7 = scalar_select 0, %s6, %s4
  // Predicated region
  $region2: #{skyreels_block_forward.31} parent=0 // pred_check
    _
  $region3: #{skyreels_block_forward.31} parent=0 // pred_check_branch
    %9 = sbr.rel (0) target = $region5
  $region4: #{skyreels_block_forward.31} parent=0 // pred_region
    _
  $region5: #{skyreels_block_forward.31} parent=0 // pred_fallthru
    _
  // Predicated region
  $region6: #{skyreels_block_forward.31} parent=0 // pred_check
    _
  $region7: #{skyreels_block_forward.31} parent=0 // pred_check_branch
    %11 = sbr.rel (0) target = $region9
  $region8: #{skyreels_block_forward.31} parent=0 // pred_region
    _
  $region9: #{skyreels_block_forward.31} parent=0 // pred_fallthru
    _
  // Predicated region
  $region10: #{skyreels_block_forward.31} parent=0 // pred_check
    _
  $region11: #{skyreels_block_forward.31} parent=0 // pred_check_branch
    %13 = sbr.rel (0) target = $region13
  $region12: #{skyreels_block_forward.31} parent=0 // pred_region
    _
  $region13: #{skyreels_block_forward.31} parent=0 // pred_fallthru
    _
  %p14 = scmp.eq.s32.totalorder 0, 0
  // Predicated region
  $region14: #{skyreels_block_forward.31} parent=0 // pred_check
    %p15 = pneg %p14
  $region15: #{skyreels_block_forward.31} parent=0 // pred_check_branch
    %17 = sbr.rel (%p15) target = $region17
  $region16: #{skyreels_block_forward.31} parent=0 // pred_region
    %18 = vst [vmem:[#allocation2] sm:$0xff] 0.0
    %19 = vst [vmem:[#allocation2 + $0x8] sm:$0xff] 0.0
    %20 = vst [vmem:[#allocation2 + $0x10] sm:$0xff] 0.0
    %21 = vst [vmem:[#allocation2 + $0x18] sm:$0xff] 0.0
    %22 = vst [vmem:[#allocation2 + $0x20] sm:$0xff] 0.0
    %23 = vst [vmem:[#allocation2 + $0x28] sm:$0xff] 0.0
    %24 = vst [vmem:[#allocation2 + $0x30] sm:$0xff] 0.0
    %25 = vst [vmem:[#allocation2 + $0x38] sm:$0xff] 0.0
  $region17: #{skyreels_block_forward.31} parent=0 // pred_fallthru
    _
  %v26 = vld [vmem:[#allocation2] sm:$0xff]
  %v27 = vld [vmem:[#allocation2 + $0x8] sm:$0xff]
  %v28 = vld [vmem:[#allocation2 + $0x10] sm:$0xff]
  %v29 = vld [vmem:[#allocation2 + $0x18] sm:$0xff]
  %v30 = vld [vmem:[#allocation2 + $0x20] sm:$0xff]
  %v31 = vld [vmem:[#allocation2 + $0x28] sm:$0xff]
  %v32 = vld [vmem:[#allocation2 + $0x30] sm:$0xff]
  %v33 = vld [vmem:[#allocation2 + $0x38] sm:$0xff]
  %v34 = vld [vmem:[%s0] sm:$0xff]
  %v35 = vld [vmem:[%s0 + $0x8] sm:$0xff]
  %v36 = vld [vmem:[%s0 + $0x10] sm:$0xff]
  %v37 = vld [vmem:[%s0 + $0x18] sm:$0xff]
  %v38 = vld [vmem:[%s1] sm:$0xff]
  %v39 = vld [vmem:[%s1 + $0x8] sm:$0xff]
  %v40 = vld [vmem:[%s1 + $0x10] sm:$0xff]
  %v41 = vld [vmem:[%s1 + $0x18] sm:$0xff]
  %v42 = vld [vmem:[%s1 + $0x20] sm:$0xff]
  %v43 = vld [vmem:[%s1 + $0x28] sm:$0xff]
  %v44 = vld [vmem:[%s1 + $0x30] sm:$0xff]
  %v45 = vld [vmem:[%s1 + $0x38] sm:$0xff]
  %v46 = vld [vmem:[%s1 + $0x40] sm:$0xff]
  %v47 = vld [vmem:[%s1 + $0x48] sm:$0xff]
  %v48 = vld [vmem:[%s1 + $0x50] sm:$0xff]
  %v49 = vld [vmem:[%s1 + $0x58] sm:$0xff]
  %v50 = vld [vmem:[%s1 + $0x60] sm:$0xff]
  %v51 = vld [vmem:[%s1 + $0x68] sm:$0xff]
  %v52 = vld [vmem:[%s1 + $0x70] sm:$0xff]
  %v53 = vld [vmem:[%s1 + $0x78] sm:$0xff]
  %v54 = vld [vmem:[%s1 + $0x80] sm:$0xff]
  %v55 = vld [vmem:[%s1 + $0x88] sm:$0xff]
  %v56 = vld [vmem:[%s1 + $0x90] sm:$0xff]
  %v57 = vld [vmem:[%s1 + $0x98] sm:$0xff]
  %v58 = vld [vmem:[%s1 + $0xa0] sm:$0xff]
  %v59 = vld [vmem:[%s1 + $0xa8] sm:$0xff]
  %v60 = vld [vmem:[%s1 + $0xb0] sm:$0xff]
  %v61 = vld [vmem:[%s1 + $0xb8] sm:$0xff]
  %v62 = vld [vmem:[%s1 + $0xc0] sm:$0xff]
  %v63 = vld [vmem:[%s1 + $0xc8] sm:$0xff]
  %v64 = vld [vmem:[%s1 + $0xd0] sm:$0xff]
  %v65 = vld [vmem:[%s1 + $0xd8] sm:$0xff]
  %v66 = vld [vmem:[%s1 + $0xe0] sm:$0xff]
  %v67 = vld [vmem:[%s1 + $0xe8] sm:$0xff]
  %v68 = vld [vmem:[%s1 + $0xf0] sm:$0xff]
  %v69 = vld [vmem:[%s1 + $0xf8] sm:$0xff]
  %v74 = vunpack.c.l.b16 %v34
  %v75 = vunpack.c.h.b16 %v34
  %v76 = vunpack.c.l.b16 %v35
  %v77 = vunpack.c.h.b16 %v35
  %v78 = vunpack.c.l.b16 %v36
  %v79 = vunpack.c.h.b16 %v36
  %v80 = vunpack.c.l.b16 %v37
  %v81 = vunpack.c.h.b16 %v37
  %v82 = vpack.c.b16 %v76, %v74
  %v83 = vpack.c.b16 %v77, %v75
  %v84 = vpack.c.b16 %v80, %v78
  %v85 = vpack.c.b16 %v81, %v79
  %v122 = vunpack.c.l.b16 %v38
  %v123 = vunpack.c.h.b16 %v38
  %v124 = vunpack.c.l.b16 %v39
  %v125 = vunpack.c.h.b16 %v39
  %v126 = vunpack.c.l.b16 %v40
  %v127 = vunpack.c.h.b16 %v40
  %v128 = vunpack.c.l.b16 %v41
  %v129 = vunpack.c.h.b16 %v41
  %v130 = vunpack.c.l.b16 %v42
  %v131 = vunpack.c.h.b16 %v42
  %v132 = vunpack.c.l.b16 %v43
  %v133 = vunpack.c.h.b16 %v43
  %v134 = vunpack.c.l.b16 %v44
  %v135 = vunpack.c.h.b16 %v44
  %v136 = vunpack.c.l.b16 %v45
  %v137 = vunpack.c.h.b16 %v45
  %v138 = vunpack.c.l.b16 %v46
  %v139 = vunpack.c.h.b16 %v46
  %v140 = vunpack.c.l.b16 %v47
  %v141 = vunpack.c.h.b16 %v47
  %v142 = vunpack.c.l.b16 %v48
  %v143 = vunpack.c.h.b16 %v48
  %v144 = vunpack.c.l.b16 %v49
  %v145 = vunpack.c.h.b16 %v49
  %v146 = vunpack.c.l.b16 %v50
  %v147 = vunpack.c.h.b16 %v50
  %v148 = vunpack.c.l.b16 %v51
  %v149 = vunpack.c.h.b16 %v51
  %v150 = vunpack.c.l.b16 %v52
  %v151 = vunpack.c.h.b16 %v52
  %v152 = vunpack.c.l.b16 %v53
  %v153 = vunpack.c.h.b16 %v53
  %v154 = vunpack.c.l.b16 %v54
  %v155 = vunpack.c.h.b16 %v54
  %v156 = vunpack.c.l.b16 %v55
  %v157 = vunpack.c.h.b16 %v55
  %v158 = vunpack.c.l.b16 %v56
  %v159 = vunpack.c.h.b16 %v56
  %v160 = vunpack.c.l.b16 %v57
  %v161 = vunpack.c.h.b16 %v57
  %v162 = vunpack.c.l.b16 %v58
  %v163 = vunpack.c.h.b16 %v58
  %v164 = vunpack.c.l.b16 %v59
  %v165 = vunpack.c.h.b16 %v59
  %v166 = vunpack.c.l.b16 %v60
  %v167 = vunpack.c.h.b16 %v60
  %v168 = vunpack.c.l.b16 %v61
  %v169 = vunpack.c.h.b16 %v61
  %v170 = vunpack.c.l.b16 %v62
  %v171 = vunpack.c.h.b16 %v62
  %v172 = vunpack.c.l.b16 %v63
  %v173 = vunpack.c.h.b16 %v63
  %v174 = vunpack.c.l.b16 %v64
  %v175 = vunpack.c.h.b16 %v64
  %v176 = vunpack.c.l.b16 %v65
  %v177 = vunpack.c.h.b16 %v65
  %v178 = vunpack.c.l.b16 %v66
  %v179 = vunpack.c.h.b16 %v66
  %v180 = vunpack.c.l.b16 %v67
  %v181 = vunpack.c.h.b16 %v67
  %v182 = vunpack.c.l.b16 %v68
  %v183 = vunpack.c.h.b16 %v68
  %v184 = vunpack.c.l.b16 %v69
  %v185 = vunpack.c.h.b16 %v69
  %v186 = vpack.c.b16 %v124, %v122
  %v187 = vpack.c.b16 %v125, %v123
  %v188 = vpack.c.b16 %v128, %v126
  %v189 = vpack.c.b16 %v129, %v127
  %v190 = vpack.c.b16 %v132, %v130
  %v191 = vpack.c.b16 %v133, %v131
  %v192 = vpack.c.b16 %v136, %v134
  %v193 = vpack.c.b16 %v137, %v135
  %v194 = vpack.c.b16 %v140, %v138
  %v195 = vpack.c.b16 %v141, %v139
  %v196 = vpack.c.b16 %v144, %v142
  %v197 = vpack.c.b16 %v145, %v143
  %v198 = vpack.c.b16 %v148, %v146
  %v199 = vpack.c.b16 %v149, %v147
  %v200 = vpack.c.b16 %v152, %v150
  %v201 = vpack.c.b16 %v153, %v151
  %v202 = vpack.c.b16 %v156, %v154
  %v203 = vpack.c.b16 %v157, %v155
  %v204 = vpack.c.b16 %v160, %v158
  %v205 = vpack.c.b16 %v161, %v159
  %v206 = vpack.c.b16 %v164, %v162
  %v207 = vpack.c.b16 %v165, %v163
  %v208 = vpack.c.b16 %v168, %v166
  %v209 = vpack.c.b16 %v169, %v167
  %v210 = vpack.c.b16 %v172, %v170
  %v211 = vpack.c.b16 %v173, %v171
  %v212 = vpack.c.b16 %v176, %v174
  %v213 = vpack.c.b16 %v177, %v175
  %v214 = vpack.c.b16 %v180, %v178
  %v215 = vpack.c.b16 %v181, %v179
  %v216 = vpack.c.b16 %v184, %v182
  %v217 = vpack.c.b16 %v185, %v183
  %250 = vmatprep.subr.bf16.mxu0 %v201
  %251 = vmatpush1.bf16.msra.mxu0 %v200
  %252 = vmatprep.subr.bf16.mxu0 %v199
  %253 = vmatpush1.bf16.msra.mxu0 %v198
  %254 = vmatprep.subr.bf16.mxu0 %v197
  %255 = vmatpush1.bf16.msra.mxu0 %v196
  %256 = vmatprep.subr.bf16.mxu0 %v195
  %257 = vmatpush1.bf16.msra.mxu0 %v194
  %258 = vmatprep.subr.bf16.mxu0 %v193
  %259 = vmatpush1.bf16.msra.mxu0 %v192
  %260 = vmatprep.subr.bf16.mxu0 %v191
  %261 = vmatpush1.bf16.msra.mxu0 %v190
  %262 = vmatprep.subr.bf16.mxu0 %v189
  %263 = vmatpush1.bf16.msra.mxu0 %v188
  %264 = vmatprep.subr.bf16.mxu0 %v187
  %265 = vmatpush1.bf16.msra.mxu0 %v186
  %266 = vmatprep.subr.bf16.mxu0 %v217
  %267 = vmatpush2.bf16.msra.mxu0 %v216
  %268 = vmatprep.subr.bf16.mxu0 %v215
  %269 = vmatpush2.bf16.msra.mxu0 %v214
  %270 = vmatprep.subr.bf16.mxu0 %v213
  %271 = vmatpush2.bf16.msra.mxu0 %v212
  %272 = vmatprep.subr.bf16.mxu0 %v211
  %273 = vmatpush2.bf16.msra.mxu0 %v210
  %274 = vmatprep.subr.bf16.mxu0 %v209
  %275 = vmatpush2.bf16.msra.mxu0 %v208
  %276 = vmatprep.subr.bf16.mxu0 %v207
  %277 = vmatpush2.bf16.msra.mxu0 %v206
  %278 = vmatprep.subr.bf16.mxu0 %v205
  %279 = vmatpush2.bf16.msra.mxu0 %v204
  %280 = vmatprep.subr.bf16.mxu0 %v203
  %281 = vmatpush2.bf16.msra.mxu0 %v202
  %282 = vmatprep.mubr.bf16.mxu0 %v83
  %283 = vmatmul.mubr.bf16.gmra.mxu0 %v82
  %v284 = vpop.f32.mrf.mxu0
  %v285 = vadd.f32 0.0, %v284
  %v286 = vpop.f32.mrf.mxu0
  %v287 = vadd.f32 0.0, %v286
  %v288 = vpop.f32.mrf.mxu0
  %v289 = vadd.f32 0.0, %v288
  %v290 = vpop.f32.mrf.mxu0
  %v291 = vadd.f32 0.0, %v290
  %292 = vmatprep.mubr.bf16.mxu0 %v85
  %293 = vmatmul.mubr.bf16.gmra.mxu0 %v84
  %v294 = vpop.f32.mrf.mxu0
  %v295 = vadd.f32 0.0, %v294
  %v296 = vpop.f32.mrf.mxu0
  %v297 = vadd.f32 0.0, %v296
  %v298 = vpop.f32.mrf.mxu0
  %v299 = vadd.f32 0.0, %v298
  %v300 = vpop.f32.mrf.mxu0
  %v301 = vadd.f32 0.0, %v300
  %302 = vdwg.mxu0
  %v303 = vadd.f32 %v26, %v285
  %v304 = vadd.f32 %v27, %v287
  %v305 = vadd.f32 %v28, %v289
  %v306 = vadd.f32 %v29, %v291
  %v307 = vadd.f32 %v30, %v295
  %v308 = vadd.f32 %v31, %v297
  %v309 = vadd.f32 %v32, %v299
  %v310 = vadd.f32 %v33, %v301
  %311 = vst [vmem:[#allocation2] sm:$0xff] %v303
  %312 = vst [vmem:[#allocation2 + $0x8] sm:$0xff] %v304
  %313 = vst [vmem:[#allocation2 + $0x10] sm:$0xff] %v305
  %314 = vst [vmem:[#allocation2 + $0x18] sm:$0xff] %v306
  %315 = vst [vmem:[#allocation2 + $0x20] sm:$0xff] %v307
  %316 = vst [vmem:[#allocation2 + $0x28] sm:$0xff] %v308
  %317 = vst [vmem:[#allocation2 + $0x30] sm:$0xff] %v309
  %318 = vst [vmem:[#allocation2 + $0x38] sm:$0xff] %v310
  // Predicated region
  $region18: #{skyreels_block_forward.31} parent=0 // pred_check
    %p319 = pneg %p14
  $region19: #{skyreels_block_forward.31} parent=0 // pred_check_branch
    %321 = sbr.rel (%p319) target = $region21
  $region20: #{skyreels_block_forward.31} parent=0 // pred_region
    %v322 = vld [vmem:[#allocation2] sm:$0xff]
    %v323 = vld [vmem:[#allocation2 + $0x8] sm:$0xff]
    %v324 = vld [vmem:[#allocation2 + $0x10] sm:$0xff]
    %v325 = vld [vmem:[#allocation2 + $0x18] sm:$0xff]
    %v326 = vld [vmem:[#allocation2 + $0x20] sm:$0xff]
    %v327 = vld [vmem:[#allocation2 + $0x28] sm:$0xff]
    %v328 = vld [vmem:[#allocation2 + $0x30] sm:$0xff]
    %v329 = vld [vmem:[#allocation2 + $0x38] sm:$0xff]
    %v330 = vld [vmem:[%s2] sm:$0x3]
    %v332 = vlaneseq
    %v333 = vshrl.u32 %v332, 7
    %v334 = vsub.s32 0, %v333
    %v335 = vrot.slane %v330, %v334
    %v336 = vlaneseq
    %v337 = vshrl.u32 %v336, 7
    %v338 = vsub.s32 1, %v337
    %v339 = vrot.slane %v330, %v338
    %v342 = vadd.f32 %v322, %v335
    %v343 = vadd.f32 %v323, %v339
    %v344 = vadd.f32 %v324, %v335
    %v345 = vadd.f32 %v325, %v339
    %v346 = vadd.f32 %v326, %v335
    %v347 = vadd.f32 %v327, %v339
    %v348 = vadd.f32 %v328, %v335
    %v349 = vadd.f32 %v329, %v339
    %350 = vst [vmem:[%s3] sm:$0xff] %v342
    %351 = vst [vmem:[%s3 + $0x8] sm:$0xff] %v343
    %352 = vst [vmem:[%s3 + $0x10] sm:$0xff] %v344
    %353 = vst [vmem:[%s3 + $0x18] sm:$0xff] %v345
    %354 = vst [vmem:[%s3 + $0x20] sm:$0xff] %v346
    %355 = vst [vmem:[%s3 + $0x28] sm:$0xff] %v347
    %356 = vst [vmem:[%s3 + $0x30] sm:$0xff] %v348
    %357 = vst [vmem:[%s3 + $0x38] sm:$0xff] %v349
  $region21: #{skyreels_block_forward.31} parent=0 // pred_fallthru
    _
  // Predicated region
  $region22: #{skyreels_block_forward.31} parent=0 // pred_check
    _
  $region23: #{skyreels_block_forward.31} parent=0 // pred_check_branch
    %359 = sbr.rel (0) target = $region25
  $region24: #{skyreels_block_forward.31} parent=0 // pred_region
    _
  $region25: #{skyreels_block_forward.31} parent=0 // pred_fallthru
    _
  // Predicated region
  $region26: #{skyreels_block_forward.31} parent=0 // pred_check
    _
  $region27: #{skyreels_block_forward.31} parent=0 // pred_check_branch
    %361 = sbr.rel (0) target = $region29
  $region28: #{skyreels_block_forward.31} parent=0 // pred_region
    _
  $region29: #{skyreels_block_forward.31} parent=0 // pred_fallthru
    _

// kernel: skyreels_block_forward.37
$region0: #{skyreels_block_forward.37}
  #allocation0 [shape = 'u32[]', space=smem, size = 0x4, offset = 0x4, fixed_abs, tag = 'smem constant byte address 0x4 - core index']
  #allocation1 [shape = 'u32[144,128]{1,0:T(1,128)}', space=vmem, size = 0x12000, scoped, tag = 'internal scratch']
  %s0 = inlined_call_operand.vmem [shape: f32[2,32,256], index: 0, kind: input, shape index: {}, may-alias: {0,2}]
  %s1 = inlined_call_operand.vmem [shape: f32[2,32,256], index: 1, kind: input, shape index: {}]
  %s2 = inlined_call_operand.vmem [shape: f32[2,32,256], index: 2, kind: output, shape index: {}, may-alias: {0,2}]
  %s3 = sld [smem:[#allocation0]]
  $region41: #{skyreels_block_forward.37} parent=0
    _
  %s5 = ssub.s32 1, %s3
  %s6 = scalar_select 0, %s5, %s3
  loop: start=0, step=1, limit=4
  $region2: #{skyreels_block_forward.37} parent=0 // loop_pre_header
    _
  $region3: #{skyreels_block_forward.37} parent=0 // loop_header
    %s8 = sphi 0, %s12
    %p9 = scmp.ge.s32.totalorder %s8, 4
    %s15 = sphi 0, %s27
    %s16 = sphi 0, %s23
    %s17 = sphi 0, %s15
    %s18 = sphi 0, %s16
    %s19 = sphi 0, %s17
    %s20 = sphi 0, %s18
    %s32 = sphi 0, %s34
    %s35 = sphi 0, %s32
    %s36 = sphi 0, %s35
    %s52 = sphi 0, %s36
    %s60 = sphi 0, %s62
    %s63 = sphi 0, %s60
    %s64 = sphi 0, %s63
    %s80 = sphi 0, %s64
    %s88 = sphi 0, %s90
    %s91 = sphi 0, %s88
    %s92 = sphi 0, %s91
    %s108 = sphi 0, %s92
  $region4: #{skyreels_block_forward.37} parent=0 // loop_header_branch
    %11 = sbr.rel (%p9) target = $region8
  $region5: #{skyreels_block_forward.37} parent=0 // loop_body
    %s13 = ssub.s32 %s8, 1
    %s14 = ssub.s32 %s8, 2
    %s21 = sadd.s32 1, %s16
    %p22 = scmp.ge.s32.totalorder %s21, 1
    %s23 = scalar_select %p22, 0, %s21
    %s24 = sadd.s32 1, %s15
    %s25 = scalar_select %p22, %s24, %s15
    %p26 = scmp.ge.s32.totalorder %s25, 2
    %s27 = scalar_select %p26, 0, %s25
    %s28 = ssub.s32 %s15, %s27
    %s29 = ssub.s32 %s16, %s23
    %s30 = sor.u32 %s28, %s29
    %p31 = scmp.eq.s32.totalorder %s30, 0
    %s33 = sadd.s32 %s32, 1
    %s34 = scalar_select %p31, %s32, %s33
    %p37 = pneg %p31
    %p38 = scmp.eq.s32.totalorder %s8, 1
    %p39 = por %p37, %p38
    %p40 = scmp.ne.s32.totalorder %s32, %s35
    %p41 = scmp.eq.s32.totalorder %s8, 0
    %p42 = por %p40, %p41
    %p43 = scmp.ne.s32.totalorder %s32, %s35
    %p44 = scmp.eq.s32.totalorder %s13, 1
    %p45 = por %p43, %p44
    %p46 = scmp.ne.s32.totalorder %s35, %s36
    %p47 = scmp.eq.s32.totalorder %s13, 0
    %p48 = por %p46, %p47
    %p49 = scmp.ne.s32.totalorder %s35, %s36
    %p50 = scmp.eq.s32.totalorder %s14, 1
    %p51 = por %p49, %p50
    %p53 = scmp.ne.s32.totalorder %s36, %s52
    %p54 = scmp.eq.s32.totalorder %s14, 0
    %p55 = por %p53, %p54
    %s56 = ssub.s32 %s15, %s27
    %s57 = ssub.s32 %s16, %s23
    %s58 = sor.u32 %s56, %s57
    %p59 = scmp.eq.s32.totalorder %s58, 0
    %s61 = sadd.s32 %s60, 1
    %s62 = scalar_select %p59, %s60, %s61
    %p65 = pneg %p59
    %p66 = scmp.eq.s32.totalorder %s8, 1
    %p67 = por %p65, %p66
    %p68 = scmp.ne.s32.totalorder %s60, %s63
    %p69 = scmp.eq.s32.totalorder %s8, 0
    %p70 = por %p68, %p69
    %p71 = scmp.ne.s32.totalorder %s60, %s63
    %p72 = scmp.eq.s32.totalorder %s13, 1
    %p73 = por %p71, %p72
    %p74 = scmp.ne.s32.totalorder %s63, %s64
    %p75 = scmp.eq.s32.totalorder %s13, 0
    %p76 = por %p74, %p75
    %p77 = scmp.ne.s32.totalorder %s63, %s64
    %p78 = scmp.eq.s32.totalorder %s14, 1
    %p79 = por %p77, %p78
    %p81 = scmp.ne.s32.totalorder %s64, %s80
    %p82 = scmp.eq.s32.totalorder %s14, 0
    %p83 = por %p81, %p82
    %s84 = ssub.s32 %s15, %s27
    %s85 = ssub.s32 %s16, %s23
    %s86 = sor.u32 %s84, %s85
    %p87 = scmp.eq.s32.totalorder %s86, 0
    %s89 = sadd.s32 %s88, 1
    %s90 = scalar_select %p87, %s88, %s89
    %p93 = pneg %p87
    %p94 = scmp.eq.s32.totalorder %s8, 1
    %p95 = por %p93, %p94
    %p96 = scmp.ne.s32.totalorder %s88, %s91
    %p97 = scmp.eq.s32.totalorder %s8, 0
    %p98 = por %p96, %p97
    %p99 = scmp.ne.s32.totalorder %s88, %s91
    %p100 = scmp.eq.s32.totalorder %s13, 1
    %p101 = por %p99, %p100
    %p102 = scmp.ne.s32.totalorder %s91, %s92
    %p103 = scmp.eq.s32.totalorder %s13, 0
    %p104 = por %p102, %p103
    %p105 = scmp.ne.s32.totalorder %s91, %s92
    %p106 = scmp.eq.s32.totalorder %s14, 1
    %p107 = por %p105, %p106
    %p109 = scmp.ne.s32.totalorder %s92, %s108
    %p110 = scmp.eq.s32.totalorder %s14, 0
    %p111 = por %p109, %p110
    %p112 = scmp.le.s32.totalorder 1, %s8
    %p113 = scmp.lt.s32.totalorder %s8, 3
    %p114 = pnand %p112, %p113
    %p115 = pneg %p114
    // Predicated region
    $region9: #{skyreels_block_forward.37} parent=5 // pred_check
      _
    $region10: #{skyreels_block_forward.37} parent=5 // pred_check_branch
      %117 = sbr.rel (%p114) target = $region12
    $region11: #{skyreels_block_forward.37} parent=5 // pred_region
      %s118 = ssub.s32 %s8, 1
    $region12: #{skyreels_block_forward.37} parent=5 // pred_fallthru
      _
    %p119 = scmp.lt.s32.totalorder %s8, 2
    // Predicated region
    $region13: #{skyreels_block_forward.37} parent=5 // pred_check
      %p120 = pneg %p119
    $region14: #{skyreels_block_forward.37} parent=5 // pred_check_branch
      %122 = sbr.rel (%p120) target = $region16
    $region15: #{skyreels_block_forward.37} parent=5 // pred_region
      // Predicated region
      $region17: #{skyreels_block_forward.37} parent=15 // pred_check
        %p123 = pneg %p42
      $region18: #{skyreels_block_forward.37} parent=15 // pred_check_branch
        %125 = sbr.rel (%p123) target = $region20
      $region19: #{skyreels_block_forward.37} parent=15 // pred_region
        %s126 = smul.u32 4, %s16
        %p127 = scmp.lt.s32.totalorder %s15, 1
        %s128 = scalar_select %p127, %s15, 1
        %p129 = scmp.lt.s32.totalorder %s126, 3
        %s130 = scalar_select %p129, %s126, 3
        %s131 = smul.addr %s130, 2
        %s132 = smul.addr %s128, 8
        %s133 = sadd.s32 %s131, %s132
        %s134 = smul.addr %s133, 8
        %s135 = scalar_lea.vmem %s0, %s134
        %s136 = smul.u32 4, %s16
      $region20: #{skyreels_block_forward.37} parent=15 // pred_fallthru
        _
      // Predicated region
      $region21: #{skyreels_block_forward.37} parent=15 // pred_check
        %p137 = pneg %p70
      $region22: #{skyreels_block_forward.37} parent=15 // pred_check_branch
        %139 = sbr.rel (%p137) target = $region24
      $region23: #{skyreels_block_forward.37} parent=15 // pred_region
        %s140 = smul.u32 4, %s16
        %p141 = scmp.lt.s32.totalorder %s15, 1
        %s142 = scalar_select %p141, %s15, 1
        %p143 = scmp.lt.s32.totalorder %s140, 3
        %s144 = scalar_select %p143, %s140, 3
        %s145 = smul.addr %s144, 2
        %s146 = smul.addr %s142, 8
        %s147 = sadd.s32 %s145, %s146
        %s148 = smul.addr %s147, 8
        %s149 = scalar_lea.vmem %s1, %s148
        %s150 = smul.u32 4, %s16
      $region24: #{skyreels_block_forward.37} parent=15 // pred_fallthru
        _
    $region16: #{skyreels_block_forward.37} parent=5 // pred_fallthru
      _
    %p151 = scmp.le.s32.totalorder 1, %s8
    %p152 = scmp.lt.s32.totalorder %s8, 3
    %p153 = pnand %p151, %p152
    %p154 = pneg %p153
    // Predicated region
    $region25: #{skyreels_block_forward.37} parent=5 // pred_check
      _
    $region26: #{skyreels_block_forward.37} parent=5 // pred_check_branch
      %156 = sbr.rel (%p153) target = $region28
    $region27: #{skyreels_block_forward.37} parent=5 // pred_region
      %s157 = ssub.s32 %s8, 1
      %s158 = smul.u32 4, %s18
      %p159 = scmp.lt.s32.totalorder %s17, 1
      %s160 = scalar_select %p159, %s17, 1
      %p161 = scmp.lt.s32.totalorder %s158, 3
      %s162 = scalar_select %p161, %s158, 3
      %s163 = smul.addr %s162, 2
      %s164 = smul.addr %s160, 8
      %s165 = sadd.s32 %s163, %s164
      %s166 = smul.addr %s165, 8
      %s167 = scalar_lea.vmem %s0, %s166
      %p168 = pneg %p48
      %p169 = pneg %p45
      %s170 = smul.u32 4, %s18
      %p171 = scmp.lt.s32.totalorder %s17, 1
      %s172 = scalar_select %p171, %s17, 1
      %p173 = scmp.lt.s32.totalorder %s170, 3
      %s174 = scalar_select %p173, %s170, 3
      %s175 = smul.addr %s174, 2
      %s176 = smul.addr %s172, 8
      %s177 = sadd.s32 %s175, %s176
      %s178 = smul.addr %s177, 8
      %s179 = scalar_lea.vmem %s1, %s178
      %p180 = pneg %p76
      %p181 = pneg %p73
      %p182 = pneg %p104
      %p183 = pneg %p101
      %s184 = smul.u32 4, %s18
      %p185 = scmp.lt.s32.totalorder %s17, 1
      %s186 = scalar_select %p185, %s17, 1
      %p187 = scmp.lt.s32.totalorder %s184, 3
      %s188 = scalar_select %p187, %s184, 3
      %s189 = smul.addr %s188, 2
      %s190 = smul.addr %s186, 8
      %s191 = sadd.s32 %s189, %s190
      %s192 = smul.addr %s191, 8
      %s193 = scalar_lea.vmem %s2, %s192
      %s194 = smul.u32 4, %s18
      %p195 = scmp.lt.s32.totalorder %s17, 1
      %s196 = scalar_select %p195, %s17, 1
      %p197 = scmp.lt.s32.totalorder %s194, 3
      %s198 = scalar_select %p197, %s194, 3
      %s199 = smul.addr %s198, 2
      %s200 = smul.addr %s196, 8
      %s201 = sadd.s32 %s199, %s200
      %s202 = smul.addr %s201, 8
      %s203 = scalar_lea.vmem %s0, %s202
      %s204 = smul.u32 4, %s18
      %s205 = smul.u32 4, %s18
      %p206 = scmp.lt.s32.totalorder %s17, 1
      %s207 = scalar_select %p206, %s17, 1
      %p208 = scmp.lt.s32.totalorder %s205, 3
      %s209 = scalar_select %p208, %s205, 3
      %s210 = smul.addr %s209, 2
      %s211 = smul.addr %s207, 8
      %s212 = sadd.s32 %s210, %s211
      %s213 = smul.addr %s212, 8
      %s214 = scalar_lea.vmem %s1, %s213
      %s215 = smul.u32 4, %s18
      %s216 = smul.u32 4, %s18
      %p217 = scmp.lt.s32.totalorder %s17, 1
      %s218 = scalar_select %p217, %s17, 1
      %p219 = scmp.lt.s32.totalorder %s216, 3
      %s220 = scalar_select %p219, %s216, 3
      %s221 = smul.addr %s220, 2
      %s222 = smul.addr %s218, 8
      %s223 = sadd.s32 %s221, %s222
      %s224 = smul.addr %s223, 8
      %s225 = scalar_lea.vmem %s2, %s224
      %s226 = smul.u32 4, %s18
      %v227 = vld [vmem:[%s203] sm:$0xff]
      %v228 = vld [vmem:[%s203 + $0x8] sm:$0xff]
      %v229 = vld [vmem:[%s203 + $0x10] sm:$0xff]
      %v230 = vld [vmem:[%s203 + $0x18] sm:$0xff]
      %v231 = vld [vmem:[%s203 + $0x20] sm:$0xff]
      %v232 = vld [vmem:[%s203 + $0x28] sm:$0xff]
      %v233 = vld [vmem:[%s203 + $0x30] sm:$0xff]
      %v234 = vld [vmem:[%s203 + $0x38] sm:$0xff]
      %v235 = vld [vmem:[%s214] sm:$0xff]
      %v236 = vld [vmem:[%s214 + $0x8] sm:$0xff]
      %v237 = vld [vmem:[%s214 + $0x10] sm:$0xff]
      %v238 = vld [vmem:[%s214 + $0x18] sm:$0xff]
      %v239 = vld [vmem:[%s214 + $0x20] sm:$0xff]
      %v240 = vld [vmem:[%s214 + $0x28] sm:$0xff]
      %v241 = vld [vmem:[%s214 + $0x30] sm:$0xff]
      %v242 = vld [vmem:[%s214 + $0x38] sm:$0xff]
      %v243 = vadd.f32 %v227, %v235
      %v244 = vadd.f32 %v228, %v236
      %v245 = vadd.f32 %v229, %v237
      %v246 = vadd.f32 %v230, %v238
      %v247 = vadd.f32 %v231, %v239
      %v248 = vadd.f32 %v232, %v240
      %v249 = vadd.f32 %v233, %v241
      %v250 = vadd.f32 %v234, %v242
      %251 = vst [vmem:[%s225] sm:$0xff] %v243
      %252 = vst [vmem:[%s225 + $0x8] sm:$0xff] %v244
      %253 = vst [vmem:[%s225 + $0x10] sm:$0xff] %v245
      %254 = vst [vmem:[%s225 + $0x18] sm:$0xff] %v246
      %255 = vst [vmem:[%s225 + $0x20] sm:$0xff] %v247
      %256 = vst [vmem:[%s225 + $0x28] sm:$0xff] %v248
      %257 = vst [vmem:[%s225 + $0x30] sm:$0xff] %v249
      %258 = vst [vmem:[%s225 + $0x38] sm:$0xff] %v250
      %s259 = smul.u32 4, %s18
      %p260 = scmp.lt.s32.totalorder %s17, 1
      %s261 = scalar_select %p260, %s17, 1
      %p262 = scmp.lt.s32.totalorder %s259, 3
      %s263 = scalar_select %p262, %s259, 3
      %s264 = smul.addr %s263, 2
      %s265 = smul.addr %s261, 8
      %s266 = sadd.s32 %s264, %s265
      %s267 = smul.addr %s266, 8
      %s268 = scalar_lea.vmem %s2, %s267
      // Predicated region
      $region29: #{skyreels_block_forward.37} parent=27 // pred_check
        %p269 = pneg %p101
      $region30: #{skyreels_block_forward.37} parent=27 // pred_check_branch
        %271 = sbr.rel (%p269) target = $region32
      $region31: #{skyreels_block_forward.37} parent=27 // pred_region
        %s272 = smul.u32 4, %s18
      $region32: #{skyreels_block_forward.37} parent=27 // pred_fallthru
        _
    $region28: #{skyreels_block_forward.37} parent=5 // pred_fallthru
      _
    %p273 = scmp.le.s32.totalorder 2, %s8
    // Predicated region
    $region33: #{skyreels_block_forward.37} parent=5 // pred_check
      %p274 = pneg %p273
    $region34: #{skyreels_block_forward.37} parent=5 // pred_check_branch
      %276 = sbr.rel (%p274) target = $region36
    $region35: #{skyreels_block_forward.37} parent=5 // pred_region
      %s277 = ssub.s32 %s8, 2
      // Predicated region
      $region37: #{skyreels_block_forward.37} parent=35 // pred_check
        %p278 = pneg %p107
      $region38: #{skyreels_block_forward.37} parent=35 // pred_check_branch
        %280 = sbr.rel (%p278) target = $region40
      $region39: #{skyreels_block_forward.37} parent=35 // pred_region
        %s281 = smul.u32 4, %s20
        %p282 = scmp.lt.s32.totalorder %s19, 1
        %s283 = scalar_select %p282, %s19, 1
        %p284 = scmp.lt.s32.totalorder %s281, 3
        %s285 = scalar_select %p284, %s281, 3
        %s286 = smul.addr %s285, 2
        %s287 = smul.addr %s283, 8
        %s288 = sadd.s32 %s286, %s287
        %s289 = smul.addr %s288, 8
        %s290 = scalar_lea.vmem %s2, %s289
      $region40: #{skyreels_block_forward.37} parent=35 // pred_fallthru
        _
    $region36: #{skyreels_block_forward.37} parent=5 // pred_fallthru
      _
  $region6: #{skyreels_block_forward.37} parent=0 // loop_footer
    %s12 = sadd.s32 1, %s8
  $region7: #{skyreels_block_forward.37} parent=0 // loop_footer_branch
    %7 = sbr.rel target = $region3
  $region8: #{skyreels_block_forward.37} parent=0 // loop_exit
    _

// kernel: skyreels_block_forward.35
$region0: #{skyreels_block_forward.35}
  #allocation0 [shape = 'u32[]', space=smem, size = 0x4, offset = 0x4, fixed_abs, tag = 'smem constant byte address 0x4 - core index']
  #allocation1 [shape = 'u32[144,128]{1,0:T(1,128)}', space=vmem, size = 0x12000, scoped, tag = 'internal scratch']
  #allocation2 [shape = 'f32[32,1]{1,0:T(8,128)}', space=vmem, size = 0x4000, scoped, tag = 'scratch operand']
  #allocation3 [shape = 'f32[32,1]{1,0:T(8,128)}', space=vmem, size = 0x4000, scoped, tag = 'scratch operand']
  #allocation4 [shape = 'f32[32,128]{1,0:T(8,128)}', space=vmem, size = 0x4000, scoped, tag = 'scratch operand']
  %s0 = inlined_call_operand.vmem [shape: bf16[2,32,256], index: 0, kind: input, shape index: {}]
  %s1 = inlined_call_operand.vmem [shape: bf16[2,16,256], index: 1, kind: input, shape index: {}]
  %s2 = inlined_call_operand.vmem [shape: bf16[2,16,256], index: 2, kind: input, shape index: {}]
  %s3 = inlined_call_operand.vmem [shape: f32[2,32,256], index: 3, kind: output, shape index: {}]
  %s4 = sld [smem:[#allocation0]]
  $region210: #{skyreels_block_forward.35} parent=0
    _
  %s6 = ssub.s32 1, %s4
  %s7 = scalar_select 0, %s6, %s4
  $region1: #{skyreels_block_forward.35} parent=0
    #allocation5 [shape = 'u8[16384]{0}', space=vmem, size = 0x4000, scoped, tag = 'input window, operand 0']
    #allocation6 [shape = 'u8[8192]{0}', space=vmem, size = 0x2000, scoped, tag = 'input window, operand 1']
    #allocation7 [shape = 'u8[8192]{0}', space=vmem, size = 0x2000, scoped, tag = 'input window, operand 2']
    #allocation8 [shape = 'u8[32768]{0}', space=vmem, size = 0x8000, scoped, tag = 'output window, operand 0']
    loop: start=0, step=1, limit=6
    $region2: #{skyreels_block_forward.35} parent=1 // loop_pre_header
      _
    $region3: #{skyreels_block_forward.35} parent=1 // loop_header
      %s9 = sphi 0, %s13
      %p10 = scmp.ge.s32.totalorder %s9, 6
      %s16 = sphi 0, %s42
      %s17 = sphi 0, %s38
      %s18 = sphi 0, %s34
      %s19 = sphi 0, %s30
      %s20 = sphi 0, %s16
      %s21 = sphi 0, %s17
      %s22 = sphi 0, %s18
      %s23 = sphi 0, %s19
      %s24 = sphi 0, %s20
      %s25 = sphi 0, %s21
      %s26 = sphi 0, %s22
      %s27 = sphi 0, %s23
      %s49 = sphi 0, %s51
      %s52 = sphi 0, %s49
      %s53 = sphi 0, %s52
      %s69 = sphi 0, %s53
      %s79 = sphi 0, %s81
      %s82 = sphi 0, %s79
      %s83 = sphi 0, %s82
      %s99 = sphi 0, %s83
      %s109 = sphi 0, %s111
      %s112 = sphi 0, %s109
      %s113 = sphi 0, %s112
      %s129 = sphi 0, %s113
      %s139 = sphi 0, %s141
      %s142 = sphi 0, %s139
      %s143 = sphi 0, %s142
      %s159 = sphi 0, %s143
    $region4: #{skyreels_block_forward.35} parent=1 // loop_header_branch
      %12 = sbr.rel (%p10) target = $region8
    $region5: #{skyreels_block_forward.35} parent=1 // loop_body
      %s14 = ssub.s32 %s9, 1
      %s15 = ssub.s32 %s9, 2
      %s28 = sadd.s32 1, %s19
      %p29 = scmp.ge.s32.totalorder %s28, 1
      %s30 = scalar_select %p29, 0, %s28
      %s31 = sadd.s32 1, %s18
      %s32 = scalar_select %p29, %s31, %s18
      %p33 = scmp.ge.s32.totalorder %s32, 1
      %s34 = scalar_select %p33, 0, %s32
      %s35 = sadd.s32 1, %s17
      %s36 = scalar_select %p33, %s35, %s17
      %p37 = scmp.ge.s32.totalorder %s36, 2
      %s38 = scalar_select %p37, 0, %s36
      %s39 = sadd.s32 1, %s16
      %s40 = scalar_select %p37, %s39, %s16
      %p41 = scmp.ge.s32.totalorder %s40, 2
      %s42 = scalar_select %p41, 0, %s40
      %s43 = ssub.s32 %s16, %s42
      %s44 = ssub.s32 %s18, %s34
      %s45 = sor.u32 %s43, %s44
      %s46 = ssub.s32 %s17, %s38
      %s47 = sor.u32 %s45, %s46
      %p48 = scmp.eq.s32.totalorder %s47, 0
      %s50 = sadd.s32 %s49, 1
      %s51 = scalar_select %p48, %s49, %s50
      %p54 = pneg %p48
      %p55 = scmp.eq.s32.totalorder %s9, 3
      %p56 = por %p54, %p55
      %p57 = scmp.ne.s32.totalorder %s49, %s52
      %p58 = scmp.eq.s32.totalorder %s9, 0
      %p59 = por %p57, %p58
      %p60 = scmp.ne.s32.totalorder %s49, %s52
      %p61 = scmp.eq.s32.totalorder %s14, 3
      %p62 = por %p60, %p61
      %p63 = scmp.ne.s32.totalorder %s52, %s53
      %p64 = scmp.eq.s32.totalorder %s14, 0
      %p65 = por %p63, %p64
      %p66 = scmp.ne.s32.totalorder %s52, %s53
      %p67 = scmp.eq.s32.totalorder %s15, 3
      %p68 = por %p66, %p67
      %p70 = scmp.ne.s32.totalorder %s53, %s69
      %p71 = scmp.eq.s32.totalorder %s15, 0
      %p72 = por %p70, %p71
      %s73 = ssub.s32 %s16, %s42
      %s74 = ssub.s32 %s19, %s30
      %s75 = sor.u32 %s73, %s74
      %s76 = ssub.s32 %s17, %s38
      %s77 = sor.u32 %s75, %s76
      %p78 = scmp.eq.s32.totalorder %s77, 0
      %s80 = sadd.s32 %s79, 1
      %s81 = scalar_select %p78, %s79, %s80
      %p84 = pneg %p78
      %p85 = scmp.eq.s32.totalorder %s9, 3
      %p86 = por %p84, %p85
      %p87 = scmp.ne.s32.totalorder %s79, %s82
      %p88 = scmp.eq.s32.totalorder %s9, 0
      %p89 = por %p87, %p88
      %p90 = scmp.ne.s32.totalorder %s79, %s82
      %p91 = scmp.eq.s32.totalorder %s14, 3
      %p92 = por %p90, %p91
      %p93 = scmp.ne.s32.totalorder %s82, %s83
      %p94 = scmp.eq.s32.totalorder %s14, 0
      %p95 = por %p93, %p94
      %p96 = scmp.ne.s32.totalorder %s82, %s83
      %p97 = scmp.eq.s32.totalorder %s15, 3
      %p98 = por %p96, %p97
      %p100 = scmp.ne.s32.totalorder %s83, %s99
      %p101 = scmp.eq.s32.totalorder %s15, 0
      %p102 = por %p100, %p101
      %s103 = ssub.s32 %s16, %s42
      %s104 = ssub.s32 %s19, %s30
      %s105 = sor.u32 %s103, %s104
      %s106 = ssub.s32 %s17, %s38
      %s107 = sor.u32 %s105, %s106
      %p108 = scmp.eq.s32.totalorder %s107, 0
      %s110 = sadd.s32 %s109, 1
      %s111 = scalar_select %p108, %s109, %s110
      %p114 = pneg %p108
      %p115 = scmp.eq.s32.totalorder %s9, 3
      %p116 = por %p114, %p115
      %p117 = scmp.ne.s32.totalorder %s109, %s112
      %p118 = scmp.eq.s32.totalorder %s9, 0
      %p119 = por %p117, %p118
      %p120 = scmp.ne.s32.totalorder %s109, %s112
      %p121 = scmp.eq.s32.totalorder %s14, 3
      %p122 = por %p120, %p121
      %p123 = scmp.ne.s32.totalorder %s112, %s113
      %p124 = scmp.eq.s32.totalorder %s14, 0
      %p125 = por %p123, %p124
      %p126 = scmp.ne.s32.totalorder %s112, %s113
      %p127 = scmp.eq.s32.totalorder %s15, 3
      %p128 = por %p126, %p127
      %p130 = scmp.ne.s32.totalorder %s113, %s129
      %p131 = scmp.eq.s32.totalorder %s15, 0
      %p132 = por %p130, %p131
      %s133 = ssub.s32 %s16, %s42
      %s134 = ssub.s32 %s18, %s34
      %s135 = sor.u32 %s133, %s134
      %s136 = ssub.s32 %s17, %s38
      %s137 = sor.u32 %s135, %s136
      %p138 = scmp.eq.s32.totalorder %s137, 0
      %s140 = sadd.s32 %s139, 1
      %s141 = scalar_select %p138, %s139, %s140
      %p144 = pneg %p138
      %p145 = scmp.eq.s32.totalorder %s9, 3
      %p146 = por %p144, %p145
      %p147 = scmp.ne.s32.totalorder %s139, %s142
      %p148 = scmp.eq.s32.totalorder %s9, 0
      %p149 = por %p147, %p148
      %p150 = scmp.ne.s32.totalorder %s139, %s142
      %p151 = scmp.eq.s32.totalorder %s14, 3
      %p152 = por %p150, %p151
      %p153 = scmp.ne.s32.totalorder %s142, %s143
      %p154 = scmp.eq.s32.totalorder %s14, 0
      %p155 = por %p153, %p154
      %p156 = scmp.ne.s32.totalorder %s142, %s143
      %p157 = scmp.eq.s32.totalorder %s15, 3
      %p158 = por %p156, %p157
      %p160 = scmp.ne.s32.totalorder %s143, %s159
      %p161 = scmp.eq.s32.totalorder %s15, 0
      %p162 = por %p160, %p161
      %p163 = scmp.le.s32.totalorder 1, %s9
      %p164 = scmp.lt.s32.totalorder %s9, 5
      %p165 = pnand %p163, %p164
      %p166 = pneg %p165
      // Predicated region
      $region9: #{skyreels_block_forward.35} parent=5 // pred_check
        _
      $region10: #{skyreels_block_forward.35} parent=5 // pred_check_branch
        %168 = sbr.rel (%p165) target = $region12
      $region11: #{skyreels_block_forward.35} parent=5 // pred_region
        %s169 = ssub.s32 %s9, 1
      $region12: #{skyreels_block_forward.35} parent=5 // pred_fallthru
        _
      %p170 = scmp.lt.s32.totalorder %s9, 4
      // Predicated region
      $region13: #{skyreels_block_forward.35} parent=5 // pred_check
        %p171 = pneg %p170
      $region14: #{skyreels_block_forward.35} parent=5 // pred_check_branch
        %173 = sbr.rel (%p171) target = $region16
      $region15: #{skyreels_block_forward.35} parent=5 // pred_region
        // Predicated region
        $region17: #{skyreels_block_forward.35} parent=15 // pred_check
          %p174 = pneg %p59
        $region18: #{skyreels_block_forward.35} parent=15 // pred_check_branch
          %176 = sbr.rel (%p174) target = $region20
        $region19: #{skyreels_block_forward.35} parent=15 // pred_region
          %s177 = sand.u32 %s49, 1
          %s178 = sand.u32 %s49, 1
          %s179 = smul.addr %s178, 16
          %s180 = scalar_lea.vmem [#allocation5], %s179
          %s181 = smul.u32 4, %s18
          %s182 = smul.addr %s181, 2
          %s183 = sadd.s32 %s17, %s182
          %s184 = smul.addr %s16, 8
          %s185 = sadd.s32 %s183, %s184
          %s186 = smul.addr %s185, 4
          %s187 = scalar_lea.vmem %s0, %s186
          // Predicated region
          $region21: #{skyreels_block_forward.35} parent=19 // pred_check
            _
          $region22: #{skyreels_block_forward.35} parent=19 // pred_check_branch
            %189 = sbr.rel (0) target = $region24
          $region23: #{skyreels_block_forward.35} parent=19 // pred_region
            // Predicated region
            $region25: #{skyreels_block_forward.35} parent=23 // pred_check
              _
            $region26: #{skyreels_block_forward.35} parent=23 // pred_check_branch
              %191 = sbr.rel target = $region28
            $region27: #{skyreels_block_forward.35} parent=23 // pred_region
              // Predicated region
              $region40: #{skyreels_block_forward.35} parent=27 // pred_check
                _
              $region41: #{skyreels_block_forward.35} parent=27 // pred_check_branch
                %213 = sbr.rel (0) target = $region43
              $region42: #{skyreels_block_forward.35} parent=27 // pred_region
                loop: start=0, step=1, limit=1
                $region44: #{skyreels_block_forward.35} parent=42 // loop_pre_header
                  _
                $region45: #{skyreels_block_forward.35} parent=42 // loop_header
                  %s215 = sphi 0, %s219
                  %p216 = scmp.ge.s32.totalorder %s215, 1
                  %s220 = sphi %s187, %s187
                  %s221 = sphi %s180, %s180
                $region46: #{skyreels_block_forward.35} parent=42 // loop_header_branch
                  %218 = sbr.rel (%p216) target = $region50
                $region47: #{skyreels_block_forward.35} parent=42 // loop_body
                  _
                $region48: #{skyreels_block_forward.35} parent=42 // loop_footer
                  %s219 = sadd.s32 1, %s215
                $region49: #{skyreels_block_forward.35} parent=42 // loop_footer_branch
                  %214 = sbr.rel target = $region45
                $region50: #{skyreels_block_forward.35} parent=42 // loop_exit
                  _
                %s223 = ssub.s32 16, 1
                loop: start=0, step=1, limit=1
                $region51: #{skyreels_block_forward.35} parent=42 // loop_pre_header
                  _
                $region52: #{skyreels_block_forward.35} parent=42 // loop_header
                  %s225 = sphi 0, %s229
                  %p226 = scmp.ge.s32.totalorder %s225, 1
                  %s230 = sphi %s187, %s187
                  %s231 = sphi %s180, %s180
                $region53: #{skyreels_block_forward.35} parent=42 // loop_header_branch
                  %228 = sbr.rel (%p226) target = $region57
                $region54: #{skyreels_block_forward.35} parent=42 // loop_body
                  %v232 = vld [vmem:[%s230] sm:%s223]
                  %233 = vst [vmem:[%s231] sm:%s223] %v232
                  %v234 = vld [vmem:[%s230 + $0x8] sm:%s223]
                  %235 = vst [vmem:[%s231 + $0x4] sm:%s223] %v234
                  %v236 = vld [vmem:[%s230 + $0x10] sm:%s223]
                  %237 = vst [vmem:[%s231 + $0x8] sm:%s223] %v236
                  %v238 = vld [vmem:[%s230 + $0x18] sm:%s223]
                  %239 = vst [vmem:[%s231 + $0xc] sm:%s223] %v238
                $region55: #{skyreels_block_forward.35} parent=42 // loop_footer
                  %s229 = sadd.s32 1, %s225
                $region56: #{skyreels_block_forward.35} parent=42 // loop_footer_branch
                  %224 = sbr.rel target = $region52
                $region57: #{skyreels_block_forward.35} parent=42 // loop_exit
                  _
              $region43: #{skyreels_block_forward.35} parent=27 // pred_fallthru
                _
            $region28: #{skyreels_block_forward.35} parent=23 // pred_fallthru
              _
            // Predicated region
            $region29: #{skyreels_block_forward.35} parent=23 // pred_check
              _
            $region30: #{skyreels_block_forward.35} parent=23 // pred_check_branch
              %193 = sbr.rel (0) target = $region32
            $region31: #{skyreels_block_forward.35} parent=23 // pred_region
              %s195 = ssub.s32 16, 1
              loop: start=0, step=1, limit=1
              $region33: #{skyreels_block_forward.35} parent=31 // loop_pre_header
                _
              $region34: #{skyreels_block_forward.35} parent=31 // loop_header
                %s197 = sphi 0, %s201
                %p198 = scmp.ge.s32.totalorder %s197, 1
                %s202 = sphi %s187, %s187
                %s203 = sphi %s180, %s180
              $region35: #{skyreels_block_forward.35} parent=31 // loop_header_branch
                %200 = sbr.rel (%p198) target = $region39
              $region36: #{skyreels_block_forward.35} parent=31 // loop_body
                %v204 = vld [vmem:[%s202] sm:%s195]
                %205 = vst [vmem:[%s203] sm:%s195] %v204
                %v206 = vld [vmem:[%s202 + $0x8] sm:%s195]
                %207 = vst [vmem:[%s203 + $0x4] sm:%s195] %v206
                %v208 = vld [vmem:[%s202 + $0x10] sm:%s195]
                %209 = vst [vmem:[%s203 + $0x8] sm:%s195] %v208
                %v210 = vld [vmem:[%s202 + $0x18] sm:%s195]
                %211 = vst [vmem:[%s203 + $0xc] sm:%s195] %v210
              $region37: #{skyreels_block_forward.35} parent=31 // loop_footer
                %s201 = sadd.s32 1, %s197
              $region38: #{skyreels_block_forward.35} parent=31 // loop_footer_branch
                %196 = sbr.rel target = $region34
              $region39: #{skyreels_block_forward.35} parent=31 // loop_exit
                _
            $region32: #{skyreels_block_forward.35} parent=23 // pred_fallthru
              _
          $region24: #{skyreels_block_forward.35} parent=19 // pred_fallthru
            _
          %240 = vnop
        $region20: #{skyreels_block_forward.35} parent=15 // pred_fallthru
          _
        // Predicated region
        $region58: #{skyreels_block_forward.35} parent=15 // pred_check
          %p241 = pneg %p89
        $region59: #{skyreels_block_forward.35} parent=15 // pred_check_branch
          %243 = sbr.rel (%p241) target = $region61
        $region60: #{skyreels_block_forward.35} parent=15 // pred_region
          %s244 = sand.u32 %s79, 1
          %s245 = sand.u32 %s79, 1
          %s246 = smul.addr %s245, 8
          %s247 = scalar_lea.vmem [#allocation6], %s246
          %s248 = smul.u32 2, %s19
          %s249 = smul.addr %s248, 2
          %s250 = sadd.s32 %s17, %s249
          %s251 = smul.addr %s16, 4
          %s252 = sadd.s32 %s250, %s251
          %s253 = smul.addr %s252, 4
          %s254 = scalar_lea.vmem %s1, %s253
          // Predicated region
          $region62: #{skyreels_block_forward.35} parent=60 // pred_check
            _
          $region63: #{skyreels_block_forward.35} parent=60 // pred_check_branch
            %256 = sbr.rel (0) target = $region65
          $region64: #{skyreels_block_forward.35} parent=60 // pred_region
            // Predicated region
            $region66: #{skyreels_block_forward.35} parent=64 // pred_check
              _
            $region67: #{skyreels_block_forward.35} parent=64 // pred_check_branch
              %258 = sbr.rel target = $region69
            $region68: #{skyreels_block_forward.35} parent=64 // pred_region
              // Predicated region
              $region81: #{skyreels_block_forward.35} parent=68 // pred_check
                _
              $region82: #{skyreels_block_forward.35} parent=68 // pred_check_branch
                %276 = sbr.rel (0) target = $region84
              $region83: #{skyreels_block_forward.35} parent=68 // pred_region
                loop: start=0, step=1, limit=1
                $region85: #{skyreels_block_forward.35} parent=83 // loop_pre_header
                  _
                $region86: #{skyreels_block_forward.35} parent=83 // loop_header
                  %s278 = sphi 0, %s282
                  %p279 = scmp.ge.s32.totalorder %s278, 1
                  %s283 = sphi %s254, %s254
                  %s284 = sphi %s247, %s247
                $region87: #{skyreels_block_forward.35} parent=83 // loop_header_branch
                  %281 = sbr.rel (%p279) target = $region91
                $region88: #{skyreels_block_forward.35} parent=83 // loop_body
                  _
                $region89: #{skyreels_block_forward.35} parent=83 // loop_footer
                  %s282 = sadd.s32 1, %s278
                $region90: #{skyreels_block_forward.35} parent=83 // loop_footer_branch
                  %277 = sbr.rel target = $region86
                $region91: #{skyreels_block_forward.35} parent=83 // loop_exit
                  _
                %s286 = ssub.s32 16, 1
                loop: start=0, step=1, limit=1
                $region92: #{skyreels_block_forward.35} parent=83 // loop_pre_header
                  _
                $region93: #{skyreels_block_forward.35} parent=83 // loop_header
                  %s288 = sphi 0, %s292
                  %p289 = scmp.ge.s32.totalorder %s288, 1
                  %s293 = sphi %s254, %s254
                  %s294 = sphi %s247, %s247
                $region94: #{skyreels_block_forward.35} parent=83 // loop_header_branch
                  %291 = sbr.rel (%p289) target = $region98
                $region95: #{skyreels_block_forward.35} parent=83 // loop_body
                  %v295 = vld [vmem:[%s293] sm:%s286]
                  %296 = vst [vmem:[%s294] sm:%s286] %v295
                  %v297 = vld [vmem:[%s293 + $0x8] sm:%s286]
                  %298 = vst [vmem:[%s294 + $0x4] sm:%s286] %v297
                $region96: #{skyreels_block_forward.35} parent=83 // loop_footer
                  %s292 = sadd.s32 1, %s288
                $region97: #{skyreels_block_forward.35} parent=83 // loop_footer_branch
                  %287 = sbr.rel target = $region93
                $region98: #{skyreels_block_forward.35} parent=83 // loop_exit
                  _
              $region84: #{skyreels_block_forward.35} parent=68 // pred_fallthru
                _
            $region69: #{skyreels_block_forward.35} parent=64 // pred_fallthru
              _
            // Predicated region
            $region70: #{skyreels_block_forward.35} parent=64 // pred_check
              _
            $region71: #{skyreels_block_forward.35} parent=64 // pred_check_branch
              %260 = sbr.rel (0) target = $region73
            $region72: #{skyreels_block_forward.35} parent=64 // pred_region
              %s262 = ssub.s32 16, 1
              loop: start=0, step=1, limit=1
              $region74: #{skyreels_block_forward.35} parent=72 // loop_pre_header
                _
              $region75: #{skyreels_block_forward.35} parent=72 // loop_header
                %s264 = sphi 0, %s268
                %p265 = scmp.ge.s32.totalorder %s264, 1
                %s269 = sphi %s254, %s254
                %s270 = sphi %s247, %s247
              $region76: #{skyreels_block_forward.35} parent=72 // loop_header_branch
                %267 = sbr.rel (%p265) target = $region80
              $region77: #{skyreels_block_forward.35} parent=72 // loop_body
                %v271 = vld [vmem:[%s269] sm:%s262]
                %272 = vst [vmem:[%s270] sm:%s262] %v271
                %v273 = vld [vmem:[%s269 + $0x8] sm:%s262]
                %274 = vst [vmem:[%s270 + $0x4] sm:%s262] %v273
              $region78: #{skyreels_block_forward.35} parent=72 // loop_footer
                %s268 = sadd.s32 1, %s264
              $region79: #{skyreels_block_forward.35} parent=72 // loop_footer_branch
                %263 = sbr.rel target = $region75
              $region80: #{skyreels_block_forward.35} parent=72 // loop_exit
                _
            $region73: #{skyreels_block_forward.35} parent=64 // pred_fallthru
              _
          $region65: #{skyreels_block_forward.35} parent=60 // pred_fallthru
            _
          %299 = vnop
        $region61: #{skyreels_block_forward.35} parent=15 // pred_fallthru
          _
        // Predicated region
        $region99: #{skyreels_block_forward.35} parent=15 // pred_check
          %p300 = pneg %p119
        $region100: #{skyreels_block_forward.35} parent=15 // pred_check_branch
          %302 = sbr.rel (%p300) target = $region102
        $region101: #{skyreels_block_forward.35} parent=15 // pred_region
          %s303 = sand.u32 %s109, 1
          %s304 = sand.u32 %s109, 1
          %s305 = smul.addr %s304, 8
          %s306 = scalar_lea.vmem [#allocation7], %s305
          %s307 = smul.u32 2, %s19
          %s308 = smul.addr %s307, 2
          %s309 = sadd.s32 %s17, %s308
          %s310 = smul.addr %s16, 4
          %s311 = sadd.s32 %s309, %s310
          %s312 = smul.addr %s311, 4
          %s313 = scalar_lea.vmem %s2, %s312
          // Predicated region
          $region103: #{skyreels_block_forward.35} parent=101 // pred_check
            _
          $region104: #{skyreels_block_forward.35} parent=101 // pred_check_branch
            %315 = sbr.rel (0) target = $region106
          $region105: #{skyreels_block_forward.35} parent=101 // pred_region
            // Predicated region
            $region107: #{skyreels_block_forward.35} parent=105 // pred_check
              _
            $region108: #{skyreels_block_forward.35} parent=105 // pred_check_branch
              %317 = sbr.rel target = $region110
            $region109: #{skyreels_block_forward.35} parent=105 // pred_region
              // Predicated region
              $region122: #{skyreels_block_forward.35} parent=109 // pred_check
                _
              $region123: #{skyreels_block_forward.35} parent=109 // pred_check_branch
                %335 = sbr.rel (0) target = $region125
              $region124: #{skyreels_block_forward.35} parent=109 // pred_region
                loop: start=0, step=1, limit=1
                $region126: #{skyreels_block_forward.35} parent=124 // loop_pre_header
                  _
                $region127: #{skyreels_block_forward.35} parent=124 // loop_header
                  %s337 = sphi 0, %s341
                  %p338 = scmp.ge.s32.totalorder %s337, 1
                  %s342 = sphi %s313, %s313
                  %s343 = sphi %s306, %s306
                $region128: #{skyreels_block_forward.35} parent=124 // loop_header_branch
                  %340 = sbr.rel (%p338) target = $region132
                $region129: #{skyreels_block_forward.35} parent=124 // loop_body
                  _
                $region130: #{skyreels_block_forward.35} parent=124 // loop_footer
                  %s341 = sadd.s32 1, %s337
                $region131: #{skyreels_block_forward.35} parent=124 // loop_footer_branch
                  %336 = sbr.rel target = $region127
                $region132: #{skyreels_block_forward.35} parent=124 // loop_exit
                  _
                %s345 = ssub.s32 16, 1
                loop: start=0, step=1, limit=1
                $region133: #{skyreels_block_forward.35} parent=124 // loop_pre_header
                  _
                $region134: #{skyreels_block_forward.35} parent=124 // loop_header
                  %s347 = sphi 0, %s351
                  %p348 = scmp.ge.s32.totalorder %s347, 1
                  %s352 = sphi %s313, %s313
                  %s353 = sphi %s306, %s306
                $region135: #{skyreels_block_forward.35} parent=124 // loop_header_branch
                  %350 = sbr.rel (%p348) target = $region139
                $region136: #{skyreels_block_forward.35} parent=124 // loop_body
                  %v354 = vld [vmem:[%s352] sm:%s345]
                  %355 = vst [vmem:[%s353] sm:%s345] %v354
                  %v356 = vld [vmem:[%s352 + $0x8] sm:%s345]
                  %357 = vst [vmem:[%s353 + $0x4] sm:%s345] %v356
                $region137: #{skyreels_block_forward.35} parent=124 // loop_footer
                  %s351 = sadd.s32 1, %s347
                $region138: #{skyreels_block_forward.35} parent=124 // loop_footer_branch
                  %346 = sbr.rel target = $region134
                $region139: #{skyreels_block_forward.35} parent=124 // loop_exit
                  _
              $region125: #{skyreels_block_forward.35} parent=109 // pred_fallthru
                _
            $region110: #{skyreels_block_forward.35} parent=105 // pred_fallthru
              _
            // Predicated region
            $region111: #{skyreels_block_forward.35} parent=105 // pred_check
              _
            $region112: #{skyreels_block_forward.35} parent=105 // pred_check_branch
              %319 = sbr.rel (0) target = $region114
            $region113: #{skyreels_block_forward.35} parent=105 // pred_region
              %s321 = ssub.s32 16, 1
              loop: start=0, step=1, limit=1
              $region115: #{skyreels_block_forward.35} parent=113 // loop_pre_header
                _
              $region116: #{skyreels_block_forward.35} parent=113 // loop_header
                %s323 = sphi 0, %s327
                %p324 = scmp.ge.s32.totalorder %s323, 1
                %s328 = sphi %s313, %s313
                %s329 = sphi %s306, %s306
              $region117: #{skyreels_block_forward.35} parent=113 // loop_header_branch
                %326 = sbr.rel (%p324) target = $region121
              $region118: #{skyreels_block_forward.35} parent=113 // loop_body
                %v330 = vld [vmem:[%s328] sm:%s321]
                %331 = vst [vmem:[%s329] sm:%s321] %v330
                %v332 = vld [vmem:[%s328 + $0x8] sm:%s321]
                %333 = vst [vmem:[%s329 + $0x4] sm:%s321] %v332
              $region119: #{skyreels_block_forward.35} parent=113 // loop_footer
                %s327 = sadd.s32 1, %s323
              $region120: #{skyreels_block_forward.35} parent=113 // loop_footer_branch
                %322 = sbr.rel target = $region116
              $region121: #{skyreels_block_forward.35} parent=113 // loop_exit
                _
            $region114: #{skyreels_block_forward.35} parent=105 // pred_fallthru
              _
          $region106: #{skyreels_block_forward.35} parent=101 // pred_fallthru
            _
          %358 = vnop
        $region102: #{skyreels_block_forward.35} parent=15 // pred_fallthru
          _
      $region16: #{skyreels_block_forward.35} parent=5 // pred_fallthru
        _
      %p359 = scmp.le.s32.totalorder 1, %s9
      %p360 = scmp.lt.s32.totalorder %s9, 5
      %p361 = pnand %p359, %p360
      %p362 = pneg %p361
      // Predicated region
      $region140: #{skyreels_block_forward.35} parent=5 // pred_check
        _
      $region141: #{skyreels_block_forward.35} parent=5 // pred_check_branch
        %364 = sbr.rel (%p361) target = $region143
      $region142: #{skyreels_block_forward.35} parent=5 // pred_region
        %s365 = ssub.s32 %s9, 1
        %s366 = sand.u32 %s52, 1
        %s367 = sand.u32 %s52, 1
        %s368 = smul.addr %s367, 16
        %s369 = scalar_lea.vmem [#allocation5], %s368
        // Predicated region
        $region144: #{skyreels_block_forward.35} parent=142 // pred_check
          %p370 = pneg %p65
        $region145: #{skyreels_block_forward.35} parent=142 // pred_check_branch
          %372 = sbr.rel (%p370) target = $region147
        $region146: #{skyreels_block_forward.35} parent=142 // pred_region
          _
        $region147: #{skyreels_block_forward.35} parent=142 // pred_fallthru
          _
        %s373 = sand.u32 %s82, 1
        %s374 = sand.u32 %s82, 1
        %s375 = smul.addr %s374, 8
        %s376 = scalar_lea.vmem [#allocation6], %s375
        // Predicated region
        $region148: #{skyreels_block_forward.35} parent=142 // pred_check
          %p377 = pneg %p95
        $region149: #{skyreels_block_forward.35} parent=142 // pred_check_branch
          %379 = sbr.rel (%p377) target = $region151
        $region150: #{skyreels_block_forward.35} parent=142 // pred_region
          _
        $region151: #{skyreels_block_forward.35} parent=142 // pred_fallthru
          _
        %s380 = sand.u32 %s112, 1
        %s381 = sand.u32 %s112, 1
        %s382 = smul.addr %s381, 8
        %s383 = scalar_lea.vmem [#allocation7], %s382
        // Predicated region
        $region152: #{skyreels_block_forward.35} parent=142 // pred_check
          %p384 = pneg %p125
        $region153: #{skyreels_block_forward.35} parent=142 // pred_check_branch
          %386 = sbr.rel (%p384) target = $region155
        $region154: #{skyreels_block_forward.35} parent=142 // pred_region
          _
        $region155: #{skyreels_block_forward.35} parent=142 // pred_fallthru
          _
        %s387 = sand.u32 %s52, 1
        %s388 = sand.u32 %s52, 1
        %s389 = smul.addr %s388, 16
        %s390 = scalar_lea.vmem [#allocation5], %s389
        %p391 = pneg %p65
        %p392 = pneg %p62
        %s393 = sand.u32 %s82, 1
        %s394 = sand.u32 %s82, 1
        %s395 = smul.addr %s394, 8
        %s396 = scalar_lea.vmem [#allocation6], %s395
        %p397 = pneg %p95
        %p398 = pneg %p92
        %s399 = sand.u32 %s112, 1
        %s400 = sand.u32 %s112, 1
        %s401 = smul.addr %s400, 8
        %s402 = scalar_lea.vmem [#allocation7], %s401
        %p403 = pneg %p125
        %p404 = pneg %p122
        %p405 = pneg %p155
        %p406 = pneg %p152
        %s407 = sand.u32 %s142, 1
        %s408 = sand.u32 %s142, 1
        %s409 = smul.addr %s408, 32
        %s410 = scalar_lea.vmem [#allocation8], %s409
        %s411 = smul.u32 4, %s22
        %s412 = smul.u32 2, %s23
        %s413 = smul.u32 2, %s23
        %s414 = smul.u32 4, %s22
        %p416 = scmp.eq.s32.totalorder %s23, 0
        // Predicated region
        $region156: #{skyreels_block_forward.35} parent=142 // pred_check
          %p417 = pneg %p416
        $region157: #{skyreels_block_forward.35} parent=142 // pred_check_branch
          %419 = sbr.rel (%p417) target = $region159
        $region158: #{skyreels_block_forward.35} parent=142 // pred_region
          %vm420 = vcmask 7168
          %421 = vst.msk [vmem:[#allocation2] sm:$0xff] %vm420, -1e+30
          %422 = vst.msk [vmem:[#allocation2 + $0x8] sm:$0xff] %vm420, -1e+30
          %423 = vst.msk [vmem:[#allocation2 + $0x10] sm:$0xff] %vm420, -1e+30
          %424 = vst.msk [vmem:[#allocation2 + $0x18] sm:$0xff] %vm420, -1e+30
          %425 = vst.msk [vmem:[#allocation3] sm:$0xff] %vm420, 0.0
          %426 = vst.msk [vmem:[#allocation3 + $0x8] sm:$0xff] %vm420, 0.0
          %427 = vst.msk [vmem:[#allocation3 + $0x10] sm:$0xff] %vm420, 0.0
          %428 = vst.msk [vmem:[#allocation3 + $0x18] sm:$0xff] %vm420, 0.0
          %429 = vst [vmem:[#allocation4] sm:$0xff] 0.0
          %430 = vst [vmem:[#allocation4 + $0x8] sm:$0xff] 0.0
          %431 = vst [vmem:[#allocation4 + $0x10] sm:$0xff] 0.0
          %432 = vst [vmem:[#allocation4 + $0x18] sm:$0xff] 0.0
        $region159: #{skyreels_block_forward.35} parent=142 // pred_fallthru
          _
        %v433 = vld [vmem:[%s369] sm:$0xf]
        %v434 = vld [vmem:[%s369 + $0x4] sm:$0xf]
        %v435 = vld [vmem:[%s369 + $0x8] sm:$0xf]
        %v436 = vld [vmem:[%s369 + $0xc] sm:$0xf]
        %v437 = vld [vmem:[%s376] sm:$0xf]
        %v438 = vld [vmem:[%s376 + $0x4] sm:$0xf]
        %v439 = vld [vmem:[%s383] sm:$0xf]
        %v440 = vld [vmem:[%s383 + $0x4] sm:$0xf]
        %v445 = vunpack.c.l.b16 %v433
        %v446 = vunpack.c.l.b16 %v434
        %v447 = vunpack.c.l.b16 %v435
        %v448 = vunpack.c.l.b16 %v436
        %v449 = vpack.c.b16 %v446, %v445
        %v450 = vpack.c.b16 %v448, %v447
        %v455 = vunpack.c.l.b16 %v437
        %v456 = vunpack.c.l.b16 %v438
        %v457 = vpack.c.b16 %v456, %v455
        %459 = vmatprep.subr.bf16.mxu0 0
        %460 = vmatpush1.bf16.xpose.msra.mxu0 0
        %461 = vmatprep.subr.bf16.mxu0 0
        %462 = vmatpush1.bf16.xpose.msra.mxu0 0
        %463 = vmatprep.subr.bf16.mxu0 0
        %464 = vmatpush1.bf16.xpose.msra.mxu0 0
        %465 = vmatprep.subr.bf16.mxu0 0
        %466 = vmatpush1.bf16.xpose.msra.mxu0 0
        %467 = vmatprep.subr.bf16.mxu0 0
        %468 = vmatpush1.bf16.xpose.msra.mxu0 0
        %469 = vmatprep.subr.bf16.mxu0 0
        %470 = vmatpush1.bf16.xpose.msra.mxu0 0
        %471 = vmatprep.subr.bf16.mxu0 0
        %472 = vmatpush1.bf16.xpose.msra.mxu0 0
        %473 = vmatprep.subr.bf16.mxu0 0
        %474 = vmatpush1.bf16.xpose.msra.mxu0 %v457
        %475 = vmatprep.subr.bf16.mxu0 0
        %476 = vmatpush2.bf16.xpose.msra.mxu0 0
        %477 = vmatprep.subr.bf16.mxu0 0
        %478 = vmatpush2.bf16.xpose.msra.mxu0 0
        %479 = vmatprep.subr.bf16.mxu0 0
        %480 = vmatpush2.bf16.xpose.msra.mxu0 0
        %481 = vmatprep.subr.bf16.mxu0 0
        %482 = vmatpush2.bf16.xpose.msra.mxu0 0
        %483 = vmatprep.subr.bf16.mxu0 0
        %484 = vmatpush2.bf16.xpose.msra.mxu0 0
        %485 = vmatprep.subr.bf16.mxu0 0
        %486 = vmatpush2.bf16.xpose.msra.mxu0 0
        %487 = vmatprep.subr.bf16.mxu0 0
        %488 = vmatpush2.bf16.xpose.msra.mxu0 0
        %489 = vmatprep.subr.bf16.mxu0 0
        %490 = vmatpush2.bf16.xpose.msra.mxu0 0
        %491 = vmatprep.mubr.bf16.mxu0 0
        %492 = vmatmul.mubr.bf16.gmra.mxu0 %v449
        %v493 = vpop.f32.mrf.mxu0
        %v494 = vadd.f32 0.0, %v493
        %v495 = vpop.f32.mrf.mxu0
        %v496 = vpop.f32.mrf.mxu0
        %v497 = vadd.f32 0.0, %v496
        %v498 = vpop.f32.mrf.mxu0
        %499 = vmatprep.mubr.bf16.mxu0 0
        %500 = vmatmul.mubr.bf16.gmra.mxu0 %v450
        %v501 = vpop.f32.mrf.mxu0
        %v502 = vadd.f32 0.0, %v501
        %v503 = vpop.f32.mrf.mxu0
        %v504 = vpop.f32.mrf.mxu0
        %v505 = vadd.f32 0.0, %v504
        %v506 = vpop.f32.mrf.mxu0
        %507 = vdwg.mxu0
        %v508 = vmul.f32 %v494, 0.088388346
        %v509 = vmul.f32 %v497, 0.088388346
        %v510 = vmul.f32 %v502, 0.088388346
        %v511 = vmul.f32 %v505, 0.088388346
        %v512 = vld [vmem:[#allocation2] sm:$0xff]
        %v513 = vld [vmem:[#allocation2 + $0x8] sm:$0xff]
        %v514 = vld [vmem:[#allocation2 + $0x10] sm:$0xff]
        %v515 = vld [vmem:[#allocation2 + $0x18] sm:$0xff]
        %vm516 = vcmask 130048
        %v517 = vsel %vm516, %v508, -inf
        %518 = vmax.xlane.f32.xlu0 %v517
        %v519 = vpop.xlane.xlu0 %518
        %v520 = vsel %vm516, %v509, -inf
        %521 = vmax.xlane.f32.xlu0 %v520
        %v522 = vpop.xlane.xlu0 %521
        %v523 = vsel %vm516, %v510, -inf
        %524 = vmax.xlane.f32.xlu0 %v523
        %v525 = vpop.xlane.xlu0 %524
        %v526 = vsel %vm516, %v511, -inf
        %527 = vmax.xlane.f32.xlu0 %v526
        %v528 = vpop.xlane.xlu0 %527
        %v529 = vmax.f32 %v512, %v519
        %v530 = vmax.f32 %v513, %v522
        %v531 = vmax.f32 %v514, %v525
        %v532 = vmax.f32 %v515, %v528
        %v533 = vsub.f32 %v512, %v529
        %v534 = vsub.f32 %v513, %v530
        %v535 = vsub.f32 %v514, %v531
        %v536 = vsub.f32 %v515, %v532
        %v537 = vmul.f32 %v533, 1.442695
        %v538 = vpow.pop %v537
        %v539 = vmul.f32 %v534, 1.442695
        %v540 = vpow.pop %v539
        %v541 = vmul.f32 %v535, 1.442695
        %v542 = vpow.pop %v541
        %v543 = vmul.f32 %v536, 1.442695
        %v544 = vpow.pop %v543
        %546 = vset.pattern.permute.xlu0 0
        %547 = vperm.xlu0 %546, %v529
        %v548 = vpop.permute.xlu0 %547
        %551 = vset.pattern.permute.xlu0 0
        %552 = vperm.xlu0 %551, %v530
        %v553 = vpop.permute.xlu0 %552
        %556 = vset.pattern.permute.xlu0 0
        %557 = vperm.xlu0 %556, %v531
        %v558 = vpop.permute.xlu0 %557
        %561 = vset.pattern.permute.xlu0 0
        %562 = vperm.xlu0 %561, %v532
        %v563 = vpop.permute.xlu0 %562
        %v565 = vsub.f32 %v508, %v548
        %v566 = vsub.f32 %v509, %v553
        %v567 = vsub.f32 %v510, %v558
        %v568 = vsub.f32 %v511, %v563
        %v569 = vmul.f32 %v565, 1.442695
        %v570 = vpow.pop %v569
        %v571 = vmul.f32 %v566, 1.442695
        %v572 = vpow.pop %v571
        %v573 = vmul.f32 %v567, 1.442695
        %v574 = vpow.pop %v573
        %v575 = vmul.f32 %v568, 1.442695
        %v576 = vpow.pop %v575
        %v577 = vld [vmem:[#allocation3] sm:$0xff]
        %v578 = vld [vmem:[#allocation3 + $0x8] sm:$0xff]
        %v579 = vld [vmem:[#allocation3 + $0x10] sm:$0xff]
        %v580 = vld [vmem:[#allocation3 + $0x18] sm:$0xff]
        %v581 = vmul.f32 %v538, %v577
        %v582 = vmul.f32 %v540, %v578
        %v583 = vmul.f32 %v542, %v579
        %v584 = vmul.f32 %v544, %v580
        %v585 = vsel %vm516, %v570, 0.0
        %586 = vadd.xlane.f32.xlu0 %v585
        %v587 = vpop.xlane.xlu0 %586
        %v588 = vsel %vm516, %v572, 0.0
        %589 = vadd.xlane.f32.xlu0 %v588
        %v590 = vpop.xlane.xlu0 %589
        %v591 = vsel %vm516, %v574, 0.0
        %592 = vadd.xlane.f32.xlu0 %v591
        %v593 = vpop.xlane.xlu0 %592
        %v594 = vsel %vm516, %v576, 0.0
        %595 = vadd.xlane.f32.xlu0 %v594
        %v596 = vpop.xlane.xlu0 %595
        %v597 = vadd.f32 %v581, %v587
        %v598 = vadd.f32 %v582, %v590
        %v599 = vadd.f32 %v583, %v593
        %v600 = vadd.f32 %v584, %v596
        %vm601 = vcmask 7168
        %602 = vst.msk [vmem:[#allocation3] sm:$0xff] %vm601, %v597
        %603 = vst.msk [vmem:[#allocation3 + $0x8] sm:$0xff] %vm601, %v598
        %604 = vst.msk [vmem:[#allocation3 + $0x10] sm:$0xff] %vm601, %v599
        %605 = vst.msk [vmem:[#allocation3 + $0x18] sm:$0xff] %vm601, %v600
        %v606 = vld [vmem:[#allocation4] sm:$0xff]
        %v607 = vld [vmem:[#allocation4 + $0x8] sm:$0xff]
        %v608 = vld [vmem:[#allocation4 + $0x10] sm:$0xff]
        %v609 = vld [vmem:[#allocation4 + $0x18] sm:$0xff]
        %611 = vset.pattern.permute.xlu0 0
        %612 = vperm.xlu0 %611, %v538
        %v613 = vpop.permute.xlu0 %612
        %616 = vset.pattern.permute.xlu0 0
        %617 = vperm.xlu0 %616, %v540
        %v618 = vpop.permute.xlu0 %617
        %621 = vset.pattern.permute.xlu0 0
        %622 = vperm.xlu0 %621, %v542
        %v623 = vpop.permute.xlu0 %622
        %626 = vset.pattern.permute.xlu0 0
        %627 = vperm.xlu0 %626, %v544
        %v628 = vpop.permute.xlu0 %627
        %v630 = vmul.f32 %v613, %v606
        %v631 = vmul.f32 %v618, %v607
        %v632 = vmul.f32 %v623, %v608
        %v633 = vmul.f32 %v628, %v609
        %v634 = vpack.c.bf16 %v572, %v570
        %v635 = vpack.c.bf16 %v576, %v574
        %v638 = vunpack.c.l.b16 %v439
        %v639 = vunpack.c.l.b16 %v440
        %v640 = vpack.c.b16 %v639, %v638
        %v643 = vsel %vm516, %v634, 0
        %v646 = vsel %vm516, %v635, 0
        %648 = vmatprep.subr.bf16.mxu0 0
        %649 = vmatpush1.bf16.msra.mxu0 0
        %650 = vmatprep.subr.bf16.mxu0 0
        %651 = vmatpush1.bf16.msra.mxu0 0
        %652 = vmatprep.subr.bf16.mxu0 0
        %653 = vmatpush1.bf16.msra.mxu0 0
        %654 = vmatprep.subr.bf16.mxu0 0
        %655 = vmatpush1.bf16.msra.mxu0 0
        %656 = vmatprep.subr.bf16.mxu0 0
        %657 = vmatpush1.bf16.msra.mxu0 0
        %658 = vmatprep.subr.bf16.mxu0 0
        %659 = vmatpush1.bf16.msra.mxu0 0
        %660 = vmatprep.subr.bf16.mxu0 0
        %661 = vmatpush1.bf16.msra.mxu0 0
        %662 = vmatprep.subr.bf16.mxu0 0
        %663 = vmatpush1.bf16.msra.mxu0 %v640
        %664 = vmatprep.subr.bf16.mxu0 0
        %665 = vmatpush2.bf16.msra.mxu0 0
        %666 = vmatprep.subr.bf16.mxu0 0
        %667 = vmatpush2.bf16.msra.mxu0 0
        %668 = vmatprep.subr.bf16.mxu0 0
        %669 = vmatpush2.bf16.msra.mxu0 0
        %670 = vmatprep.subr.bf16.mxu0 0
        %671 = vmatpush2.bf16.msra.mxu0 0
        %672 = vmatprep.subr.bf16.mxu0 0
        %673 = vmatpush2.bf16.msra.mxu0 0
        %674 = vmatprep.subr.bf16.mxu0 0
        %675 = vmatpush2.bf16.msra.mxu0 0
        %676 = vmatprep.subr.bf16.mxu0 0
        %677 = vmatpush2.bf16.msra.mxu0 0
        %678 = vmatprep.subr.bf16.mxu0 0
        %679 = vmatpush2.bf16.msra.mxu0 0
        %680 = vmatprep.mubr.bf16.mxu0 0
        %681 = vmatmul.mubr.bf16.gmra.mxu0 %v643
        %v682 = vpop.f32.mrf.mxu0
        %v683 = vadd.f32 0.0, %v682
        %v684 = vpop.f32.mrf.mxu0
        %v685 = vpop.f32.mrf.mxu0
        %v686 = vadd.f32 0.0, %v685
        %v687 = vpop.f32.mrf.mxu0
        %688 = vmatprep.mubr.bf16.mxu0 0
        %689 = vmatmul.mubr.bf16.gmra.mxu0 %v646
        %v690 = vpop.f32.mrf.mxu0
        %v691 = vadd.f32 0.0, %v690
        %v692 = vpop.f32.mrf.mxu0
        %v693 = vpop.f32.mrf.mxu0
        %v694 = vadd.f32 0.0, %v693
        %v695 = vpop.f32.mrf.mxu0
        %696 = vdwg.mxu0
        %v697 = vadd.f32 %v630, %v683
        %v698 = vadd.f32 %v631, %v686
        %v699 = vadd.f32 %v632, %v691
        %v700 = vadd.f32 %v633, %v694
        %701 = vst [vmem:[#allocation4] sm:$0xff] %v697
        %702 = vst [vmem:[#allocation4 + $0x8] sm:$0xff] %v698
        %703 = vst [vmem:[#allocation4 + $0x10] sm:$0xff] %v699
        %704 = vst [vmem:[#allocation4 + $0x18] sm:$0xff] %v700
        %705 = vst.msk [vmem:[#allocation2] sm:$0xff] %vm601, %v529
        %706 = vst.msk [vmem:[#allocation2 + $0x8] sm:$0xff] %vm601, %v530
        %707 = vst.msk [vmem:[#allocation2 + $0x10] sm:$0xff] %vm601, %v531
        %708 = vst.msk [vmem:[#allocation2 + $0x18] sm:$0xff] %vm601, %v532
        // Predicated region
        $region160: #{skyreels_block_forward.35} parent=142 // pred_check
          %p709 = pneg %p416
        $region161: #{skyreels_block_forward.35} parent=142 // pred_check_branch
          %711 = sbr.rel (%p709) target = $region163
        $region162: #{skyreels_block_forward.35} parent=142 // pred_region
          %v712 = vld [vmem:[#allocation4] sm:$0xff]
          %v713 = vld [vmem:[#allocation4 + $0x8] sm:$0xff]
          %v714 = vld [vmem:[#allocation4 + $0x10] sm:$0xff]
          %v715 = vld [vmem:[#allocation4 + $0x18] sm:$0xff]
          %v716 = vld [vmem:[#allocation3] sm:$0xff]
          %v717 = vld [vmem:[#allocation3 + $0x8] sm:$0xff]
          %v718 = vld [vmem:[#allocation3 + $0x10] sm:$0xff]
          %v719 = vld [vmem:[#allocation3 + $0x18] sm:$0xff]
          %v720 = vrcp.pop %v716
          %v721 = vrcp.pop %v717
          %v722 = vrcp.pop %v718
          %v723 = vrcp.pop %v719
          %725 = vset.pattern.permute.xlu0 0
          %726 = vperm.xlu0 %725, %v720
          %v727 = vpop.permute.xlu0 %726
          %730 = vset.pattern.permute.xlu0 0
          %731 = vperm.xlu0 %730, %v721
          %v732 = vpop.permute.xlu0 %731
          %735 = vset.pattern.permute.xlu0 0
          %736 = vperm.xlu0 %735, %v722
          %v737 = vpop.permute.xlu0 %736
          %740 = vset.pattern.permute.xlu0 0
          %741 = vperm.xlu0 %740, %v723
          %v742 = vpop.permute.xlu0 %741
          %v744 = vmul.f32 %v712, %v727
          %v745 = vmul.f32 %v713, %v732
          %v746 = vmul.f32 %v714, %v737
          %v747 = vmul.f32 %v715, %v742
          %748 = vst [vmem:[%s410] sm:$0xff] %v744
          %749 = vst [vmem:[%s410 + $0x8] sm:$0xff] %v745
          %750 = vst [vmem:[%s410 + $0x10] sm:$0xff] %v746
          %751 = vst [vmem:[%s410 + $0x18] sm:$0xff] %v747
        $region163: #{skyreels_block_forward.35} parent=142 // pred_fallthru
          _
        %s752 = sand.u32 %s142, 1
        %s753 = sand.u32 %s142, 1
        %s754 = smul.addr %s753, 32
        %s755 = scalar_lea.vmem [#allocation8], %s754
        // Predicated region
        $region164: #{skyreels_block_forward.35} parent=142 // pred_check
          %p756 = pneg %p152
        $region165: #{skyreels_block_forward.35} parent=142 // pred_check_branch
          %758 = sbr.rel (%p756) target = $region167
        $region166: #{skyreels_block_forward.35} parent=142 // pred_region
          %s759 = smul.u32 4, %s22
          %s760 = smul.addr %s759, 2
          %s761 = sadd.s32 %s21, %s760
          %s762 = smul.addr %s20, 8
          %s763 = sadd.s32 %s761, %s762
          %s764 = smul.addr %s763, 8
          %s765 = scalar_lea.vmem %s3, %s764
          // Predicated region
          $region168: #{skyreels_block_forward.35} parent=166 // pred_check
            _
          $region169: #{skyreels_block_forward.35} parent=166 // pred_check_branch
            %767 = sbr.rel (0) target = $region171
          $region170: #{skyreels_block_forward.35} parent=166 // pred_region
            // Predicated region
            $region172: #{skyreels_block_forward.35} parent=170 // pred_check
              _
            $region173: #{skyreels_block_forward.35} parent=170 // pred_check_branch
              %769 = sbr.rel (0) target = $region175
            $region174: #{skyreels_block_forward.35} parent=170 // pred_region
              // Predicated region
              $region187: #{skyreels_block_forward.35} parent=174 // pred_check
                _
              $region188: #{skyreels_block_forward.35} parent=174 // pred_check_branch
                %791 = sbr.rel (0) target = $region190
              $region189: #{skyreels_block_forward.35} parent=174 // pred_region
                loop: start=0, step=1, limit=1
                $region191: #{skyreels_block_forward.35} parent=189 // loop_pre_header
                  _
                $region192: #{skyreels_block_forward.35} parent=189 // loop_header
                  %s793 = sphi 0, %s797
                  %p794 = scmp.ge.s32.totalorder %s793, 1
                  %s798 = sphi %s755, %s755
                  %s799 = sphi %s765, %s765
                $region193: #{skyreels_block_forward.35} parent=189 // loop_header_branch
                  %796 = sbr.rel (%p794) target = $region197
                $region194: #{skyreels_block_forward.35} parent=189 // loop_body
                  %v800 = vld [vmem:[%s798] sm:$0xff]
                  %801 = vst [vmem:[%s799] sm:$0xff] %v800
                  %v802 = vld [vmem:[%s798 + $0x8] sm:$0xff]
                  %803 = vst [vmem:[%s799 + $0x10] sm:$0xff] %v802
                  %v804 = vld [vmem:[%s798 + $0x10] sm:$0xff]
                  %805 = vst [vmem:[%s799 + $0x20] sm:$0xff] %v804
                  %v806 = vld [vmem:[%s798 + $0x18] sm:$0xff]
                  %807 = vst [vmem:[%s799 + $0x30] sm:$0xff] %v806
                $region195: #{skyreels_block_forward.35} parent=189 // loop_footer
                  %s797 = sadd.s32 1, %s793
                $region196: #{skyreels_block_forward.35} parent=189 // loop_footer_branch
                  %792 = sbr.rel target = $region192
                $region197: #{skyreels_block_forward.35} parent=189 // loop_exit
                  _
              $region190: #{skyreels_block_forward.35} parent=174 // pred_fallthru
                _
              // Predicated region
              $region198: #{skyreels_block_forward.35} parent=174 // pred_check
                _
              $region199: #{skyreels_block_forward.35} parent=174 // pred_check_branch
                %809 = sbr.rel target = $region201
              $region200: #{skyreels_block_forward.35} parent=174 // pred_region
                _
              $region201: #{skyreels_block_forward.35} parent=174 // pred_fallthru
                _
            $region175: #{skyreels_block_forward.35} parent=170 // pred_fallthru
              _
            // Predicated region
            $region176: #{skyreels_block_forward.35} parent=170 // pred_check
              _
            $region177: #{skyreels_block_forward.35} parent=170 // pred_check_branch
              %771 = sbr.rel target = $region179
            $region178: #{skyreels_block_forward.35} parent=170 // pred_region
              %s773 = ssub.s32 256, 1
              loop: start=0, step=1, limit=1
              $region180: #{skyreels_block_forward.35} parent=178 // loop_pre_header
                _
              $region181: #{skyreels_block_forward.35} parent=178 // loop_header
                %s775 = sphi 0, %s779
                %p776 = scmp.ge.s32.totalorder %s775, 1
                %s780 = sphi %s755, %s755
                %s781 = sphi %s765, %s765
              $region182: #{skyreels_block_forward.35} parent=178 // loop_header_branch
                %778 = sbr.rel (%p776) target = $region186
              $region183: #{skyreels_block_forward.35} parent=178 // loop_body
                %v782 = vld [vmem:[%s780] sm:%s773]
                %783 = vst [vmem:[%s781] sm:%s773] %v782
                %v784 = vld [vmem:[%s780 + $0x8] sm:%s773]
                %785 = vst [vmem:[%s781 + $0x10] sm:%s773] %v784
                %v786 = vld [vmem:[%s780 + $0x10] sm:%s773]
                %787 = vst [vmem:[%s781 + $0x20] sm:%s773] %v786
                %v788 = vld [vmem:[%s780 + $0x18] sm:%s773]
                %789 = vst [vmem:[%s781 + $0x30] sm:%s773] %v788
              $region184: #{skyreels_block_forward.35} parent=178 // loop_footer
                %s779 = sadd.s32 1, %s775
              $region185: #{skyreels_block_forward.35} parent=178 // loop_footer_branch
                %774 = sbr.rel target = $region181
              $region186: #{skyreels_block_forward.35} parent=178 // loop_exit
                _
            $region179: #{skyreels_block_forward.35} parent=170 // pred_fallthru
              _
          $region171: #{skyreels_block_forward.35} parent=166 // pred_fallthru
            _
          %810 = vnop
        $region167: #{skyreels_block_forward.35} parent=142 // pred_fallthru
          _
      $region143: #{skyreels_block_forward.35} parent=5 // pred_fallthru
        _
      %p811 = scmp.le.s32.totalorder 2, %s9
      // Predicated region
      $region202: #{skyreels_block_forward.35} parent=5 // pred_check
        %p812 = pneg %p811
      $region203: #{skyreels_block_forward.35} parent=5 // pred_check_branch
        %814 = sbr.rel (%p812) target = $region205
      $region204: #{skyreels_block_forward.35} parent=5 // pred_region
        %s815 = ssub.s32 %s9, 2
        // Predicated region
        $region206: #{skyreels_block_forward.35} parent=204 // pred_check
          %p816 = pneg %p158
        $region207: #{skyreels_block_forward.35} parent=204 // pred_check_branch
          %818 = sbr.rel (%p816) target = $region209
        $region208: #{skyreels_block_forward.35} parent=204 // pred_region
          %s819 = sand.u32 %s143, 1
          %s820 = sand.u32 %s143, 1
          %s821 = smul.addr %s820, 32
          %s822 = scalar_lea.vmem [#allocation8], %s821
        $region209: #{skyreels_block_forward.35} parent=204 // pred_fallthru
          _
      $region205: #{skyreels_block_forward.35} parent=5 // pred_fallthru
        _
    $region6: #{skyreels_block_forward.35} parent=1 // loop_footer
      %s13 = sadd.s32 1, %s9
    $region7: #{skyreels_block_forward.35} parent=1 // loop_footer_branch
      %8 = sbr.rel target = $region3
    $region8: #{skyreels_block_forward.35} parent=1 // loop_exit
      _

// kernel: skyreels_block_forward.39
$region0: #{skyreels_block_forward.39}
  #allocation0 [shape = 'u32[]', space=smem, size = 0x4, offset = 0x4, fixed_abs, tag = 'smem constant byte address 0x4 - core index']
  #allocation1 [shape = 'u32[144,128]{1,0:T(1,128)}', space=vmem, size = 0x12000, scoped, tag = 'internal scratch']
  #allocation2 [shape = 'f32[64,512]{1,0:T(8,128)}', space=vmem, size = 0x20000, scoped, tag = 'scratch operand']
  %s0 = inlined_call_operand.vmem [shape: bf16[64,256], index: 0, kind: input, shape index: {}]
  %s1 = inlined_call_operand.vmem [shape: bf16[256,512], index: 1, kind: input, shape index: {}]
  %s2 = inlined_call_operand.vmem [shape: f32[1,512], index: 2, kind: input, shape index: {}]
  %s3 = inlined_call_operand.vmem [shape: bf16[64,512], index: 3, kind: output, shape index: {}]
  %s4 = sld [smem:[#allocation0]]
  $region30: #{skyreels_block_forward.39} parent=0
    _
  %s6 = ssub.s32 1, %s4
  %s7 = scalar_select 0, %s6, %s4
  // Predicated region
  $region2: #{skyreels_block_forward.39} parent=0 // pred_check
    _
  $region3: #{skyreels_block_forward.39} parent=0 // pred_check_branch
    %9 = sbr.rel (0) target = $region5
  $region4: #{skyreels_block_forward.39} parent=0 // pred_region
    _
  $region5: #{skyreels_block_forward.39} parent=0 // pred_fallthru
    _
  // Predicated region
  $region6: #{skyreels_block_forward.39} parent=0 // pred_check
    _
  $region7: #{skyreels_block_forward.39} parent=0 // pred_check_branch
    %11 = sbr.rel (0) target = $region9
  $region8: #{skyreels_block_forward.39} parent=0 // pred_region
    _
  $region9: #{skyreels_block_forward.39} parent=0 // pred_fallthru
    _
  // Predicated region
  $region10: #{skyreels_block_forward.39} parent=0 // pred_check
    _
  $region11: #{skyreels_block_forward.39} parent=0 // pred_check_branch
    %13 = sbr.rel (0) target = $region13
  $region12: #{skyreels_block_forward.39} parent=0 // pred_region
    _
  $region13: #{skyreels_block_forward.39} parent=0 // pred_fallthru
    _
  %p14 = scmp.eq.s32.totalorder 0, 0
  // Predicated region
  $region14: #{skyreels_block_forward.39} parent=0 // pred_check
    %p15 = pneg %p14
  $region15: #{skyreels_block_forward.39} parent=0 // pred_check_branch
    %17 = sbr.rel (%p15) target = $region17
  $region16: #{skyreels_block_forward.39} parent=0 // pred_region
    %18 = vst [vmem:[#allocation2] sm:$0xff] 0.0
    %19 = vst [vmem:[#allocation2 + $0x8] sm:$0xff] 0.0
    %20 = vst [vmem:[#allocation2 + $0x10] sm:$0xff] 0.0
    %21 = vst [vmem:[#allocation2 + $0x18] sm:$0xff] 0.0
    %22 = vst [vmem:[#allocation2 + $0x20] sm:$0xff] 0.0
    %23 = vst [vmem:[#allocation2 + $0x28] sm:$0xff] 0.0
    %24 = vst [vmem:[#allocation2 + $0x30] sm:$0xff] 0.0
    %25 = vst [vmem:[#allocation2 + $0x38] sm:$0xff] 0.0
    %26 = vst [vmem:[#allocation2 + $0x40] sm:$0xff] 0.0
    %27 = vst [vmem:[#allocation2 + $0x48] sm:$0xff] 0.0
    %28 = vst [vmem:[#allocation2 + $0x50] sm:$0xff] 0.0
    %29 = vst [vmem:[#allocation2 + $0x58] sm:$0xff] 0.0
    %30 = vst [vmem:[#allocation2 + $0x60] sm:$0xff] 0.0
    %31 = vst [vmem:[#allocation2 + $0x68] sm:$0xff] 0.0
    %32 = vst [vmem:[#allocation2 + $0x70] sm:$0xff] 0.0
    %33 = vst [vmem:[#allocation2 + $0x78] sm:$0xff] 0.0
    %34 = vst [vmem:[#allocation2 + $0x80] sm:$0xff] 0.0
    %35 = vst [vmem:[#allocation2 + $0x88] sm:$0xff] 0.0
    %36 = vst [vmem:[#allocation2 + $0x90] sm:$0xff] 0.0
    %37 = vst [vmem:[#allocation2 + $0x98] sm:$0xff] 0.0
    %38 = vst [vmem:[#allocation2 + $0xa0] sm:$0xff] 0.0
    %39 = vst [vmem:[#allocation2 + $0xa8] sm:$0xff] 0.0
    %40 = vst [vmem:[#allocation2 + $0xb0] sm:$0xff] 0.0
    %41 = vst [vmem:[#allocation2 + $0xb8] sm:$0xff] 0.0
    %42 = vst [vmem:[#allocation2 + $0xc0] sm:$0xff] 0.0
    %43 = vst [vmem:[#allocation2 + $0xc8] sm:$0xff] 0.0
    %44 = vst [vmem:[#allocation2 + $0xd0] sm:$0xff] 0.0
    %45 = vst [vmem:[#allocation2 + $0xd8] sm:$0xff] 0.0
    %46 = vst [vmem:[#allocation2 + $0xe0] sm:$0xff] 0.0
    %47 = vst [vmem:[#allocation2 + $0xe8] sm:$0xff] 0.0
    %48 = vst [vmem:[#allocation2 + $0xf0] sm:$0xff] 0.0
    %49 = vst [vmem:[#allocation2 + $0xf8] sm:$0xff] 0.0
  $region17: #{skyreels_block_forward.39} parent=0 // pred_fallthru
    _
  %v50 = vld [vmem:[#allocation2] sm:$0xff]
  %v51 = vld [vmem:[#allocation2 + $0x8] sm:$0xff]
  %v52 = vld [vmem:[#allocation2 + $0x10] sm:$0xff]
  %v53 = vld [vmem:[#allocation2 + $0x18] sm:$0xff]
  %v54 = vld [vmem:[#allocation2 + $0x20] sm:$0xff]
  %v55 = vld [vmem:[#allocation2 + $0x28] sm:$0xff]
  %v56 = vld [vmem:[#allocation2 + $0x30] sm:$0xff]
  %v57 = vld [vmem:[#allocation2 + $0x38] sm:$0xff]
  %v58 = vld [vmem:[#allocation2 + $0x40] sm:$0xff]
  %v59 = vld [vmem:[#allocation2 + $0x48] sm:$0xff]
  %v60 = vld [vmem:[#allocation2 + $0x50] sm:$0xff]
  %v61 = vld [vmem:[#allocation2 + $0x58] sm:$0xff]
  %v62 = vld [vmem:[#allocation2 + $0x60] sm:$0xff]
  %v63 = vld [vmem:[#allocation2 + $0x68] sm:$0xff]
  %v64 = vld [vmem:[#allocation2 + $0x70] sm:$0xff]
  %v65 = vld [vmem:[#allocation2 + $0x78] sm:$0xff]
  %v66 = vld [vmem:[#allocation2 + $0x80] sm:$0xff]
  %v67 = vld [vmem:[#allocation2 + $0x88] sm:$0xff]
  %v68 = vld [vmem:[#allocation2 + $0x90] sm:$0xff]
  %v69 = vld [vmem:[#allocation2 + $0x98] sm:$0xff]
  %v70 = vld [vmem:[#allocation2 + $0xa0] sm:$0xff]
  %v71 = vld [vmem:[#allocation2 + $0xa8] sm:$0xff]
  %v72 = vld [vmem:[#allocation2 + $0xb0] sm:$0xff]
  %v73 = vld [vmem:[#allocation2 + $0xb8] sm:$0xff]
  %v74 = vld [vmem:[#allocation2 + $0xc0] sm:$0xff]
  %v75 = vld [vmem:[#allocation2 + $0xc8] sm:$0xff]
  %v76 = vld [vmem:[#allocation2 + $0xd0] sm:$0xff]
  %v77 = vld [vmem:[#allocation2 + $0xd8] sm:$0xff]
  %v78 = vld [vmem:[#allocation2 + $0xe0] sm:$0xff]
  %v79 = vld [vmem:[#allocation2 + $0xe8] sm:$0xff]
  %v80 = vld [vmem:[#allocation2 + $0xf0] sm:$0xff]
  %v81 = vld [vmem:[#allocation2 + $0xf8] sm:$0xff]
  %v82 = vld [vmem:[%s0] sm:$0xff]
  %v83 = vld [vmem:[%s0 + $0x8] sm:$0xff]
  %v84 = vld [vmem:[%s0 + $0x10] sm:$0xff]
  %v85 = vld [vmem:[%s0 + $0x18] sm:$0xff]
  %v86 = vld [vmem:[%s0 + $0x20] sm:$0xff]
  %v87 = vld [vmem:[%s0 + $0x28] sm:$0xff]
  %v88 = vld [vmem:[%s0 + $0x30] sm:$0xff]
  %v89 = vld [vmem:[%s0 + $0x38] sm:$0xff]
  %v90 = vld [vmem:[%s1] sm:$0xff]
  %v91 = vld [vmem:[%s1 + $0x8] sm:$0xff]
  %v92 = vld [vmem:[%s1 + $0x10] sm:$0xff]
  %v93 = vld [vmem:[%s1 + $0x18] sm:$0xff]
  %v94 = vld [vmem:[%s1 + $0x20] sm:$0xff]
  %v95 = vld [vmem:[%s1 + $0x28] sm:$0xff]
  %v96 = vld [vmem:[%s1 + $0x30] sm:$0xff]
  %v97 = vld [vmem:[%s1 + $0x38] sm:$0xff]
  %v98 = vld [vmem:[%s1 + $0x40] sm:$0xff]
  %v99 = vld [vmem:[%s1 + $0x48] sm:$0xff]
  %v100 = vld [vmem:[%s1 + $0x50] sm:$0xff]
  %v101 = vld [vmem:[%s1 + $0x58] sm:$0xff]
  %v102 = vld [vmem:[%s1 + $0x60] sm:$0xff]
  %v103 = vld [vmem:[%s1 + $0x68] sm:$0xff]
  %v104 = vld [vmem:[%s1 + $0x70] sm:$0xff]
  %v105 = vld [vmem:[%s1 + $0x78] sm:$0xff]
  %v106 = vld [vmem:[%s1 + $0x80] sm:$0xff]
  %v107 = vld [vmem:[%s1 + $0x88] sm:$0xff]
  %v108 = vld [vmem:[%s1 + $0x90] sm:$0xff]
  %v109 = vld [vmem:[%s1 + $0x98] sm:$0xff]
  %v110 = vld [vmem:[%s1 + $0xa0] sm:$0xff]
  %v111 = vld [vmem:[%s1 + $0xa8] sm:$0xff]
  %v112 = vld [vmem:[%s1 + $0xb0] sm:$0xff]
  %v113 = vld [vmem:[%s1 + $0xb8] sm:$0xff]
  %v114 = vld [vmem:[%s1 + $0xc0] sm:$0xff]
  %v115 = vld [vmem:[%s1 + $0xc8] sm:$0xff]
  %v116 = vld [vmem:[%s1 + $0xd0] sm:$0xff]
  %v117 = vld [vmem:[%s1 + $0xd8] sm:$0xff]
  %v118 = vld [vmem:[%s1 + $0xe0] sm:$0xff]
  %v119 = vld [vmem:[%s1 + $0xe8] sm:$0xff]
  %v120 = vld [vmem:[%s1 + $0xf0] sm:$0xff]
  %v121 = vld [vmem:[%s1 + $0xf8] sm:$0xff]
  %v122 = vld [vmem:[%s1 + $0x100] sm:$0xff]
  %v123 = vld [vmem:[%s1 + $0x108] sm:$0xff]
  %v124 = vld [vmem:[%s1 + $0x110] sm:$0xff]
  %v125 = vld [vmem:[%s1 + $0x118] sm:$0xff]
  %v126 = vld [vmem:[%s1 + $0x120] sm:$0xff]
  %v127 = vld [vmem:[%s1 + $0x128] sm:$0xff]
  %v128 = vld [vmem:[%s1 + $0x130] sm:$0xff]
  %v129 = vld [vmem:[%s1 + $0x138] sm:$0xff]
  %v130 = vld [vmem:[%s1 + $0x140] sm:$0xff]
  %v131 = vld [vmem:[%s1 + $0x148] sm:$0xff]
  %v132 = vld [vmem:[%s1 + $0x150] sm:$0xff]
  %v133 = vld [vmem:[%s1 + $0x158] sm:$0xff]
  %v134 = vld [vmem:[%s1 + $0x160] sm:$0xff]
  %v135 = vld [vmem:[%s1 + $0x168] sm:$0xff]
  %v136 = vld [vmem:[%s1 + $0x170] sm:$0xff]
  %v137 = vld [vmem:[%s1 + $0x178] sm:$0xff]
  %v138 = vld [vmem:[%s1 + $0x180] sm:$0xff]
  %v139 = vld [vmem:[%s1 + $0x188] sm:$0xff]
  %v140 = vld [vmem:[%s1 + $0x190] sm:$0xff]
  %v141 = vld [vmem:[%s1 + $0x198] sm:$0xff]
  %v142 = vld [vmem:[%s1 + $0x1a0] sm:$0xff]
  %v143 = vld [vmem:[%s1 + $0x1a8] sm:$0xff]
  %v144 = vld [vmem:[%s1 + $0x1b0] sm:$0xff]
  %v145 = vld [vmem:[%s1 + $0x1b8] sm:$0xff]
  %v146 = vld [vmem:[%s1 + $0x1c0] sm:$0xff]
  %v147 = vld [vmem:[%s1 + $0x1c8] sm:$0xff]
  %v148 = vld [vmem:[%s1 + $0x1d0] sm:$0xff]
  %v149 = vld [vmem:[%s1 + $0x1d8] sm:$0xff]
  %v150 = vld [vmem:[%s1 + $0x1e0] sm:$0xff]
  %v151 = vld [vmem:[%s1 + $0x1e8] sm:$0xff]
  %v152 = vld [vmem:[%s1 + $0x1f0] sm:$0xff]
  %v153 = vld [vmem:[%s1 + $0x1f8] sm:$0xff]
  %v162 = vunpack.c.l.b16 %v82
  %v163 = vunpack.c.h.b16 %v82
  %v164 = vunpack.c.l.b16 %v83
  %v165 = vunpack.c.h.b16 %v83
  %v166 = vunpack.c.l.b16 %v84
  %v167 = vunpack.c.h.b16 %v84
  %v168 = vunpack.c.l.b16 %v85
  %v169 = vunpack.c.h.b16 %v85
  %v170 = vunpack.c.l.b16 %v86
  %v171 = vunpack.c.h.b16 %v86
  %v172 = vunpack.c.l.b16 %v87
  %v173 = vunpack.c.h.b16 %v87
  %v174 = vunpack.c.l.b16 %v88
  %v175 = vunpack.c.h.b16 %v88
  %v176 = vunpack.c.l.b16 %v89
  %v177 = vunpack.c.h.b16 %v89
  %v178 = vpack.c.b16 %v164, %v162
  %v179 = vpack.c.b16 %v165, %v163
  %v180 = vpack.c.b16 %v168, %v166
  %v181 = vpack.c.b16 %v169, %v167
  %v182 = vpack.c.b16 %v172, %v170
  %v183 = vpack.c.b16 %v173, %v171
  %v184 = vpack.c.b16 %v176, %v174
  %v185 = vpack.c.b16 %v177, %v175
  %v258 = vunpack.c.l.b16 %v90
  %v259 = vunpack.c.h.b16 %v90
  %v260 = vunpack.c.l.b16 %v91
  %v261 = vunpack.c.h.b16 %v91
  %v262 = vunpack.c.l.b16 %v92
  %v263 = vunpack.c.h.b16 %v92
  %v264 = vunpack.c.l.b16 %v93
  %v265 = vunpack.c.h.b16 %v93
  %v266 = vunpack.c.l.b16 %v94
  %v267 = vunpack.c.h.b16 %v94
  %v268 = vunpack.c.l.b16 %v95
  %v269 = vunpack.c.h.b16 %v95
  %v270 = vunpack.c.l.b16 %v96
  %v271 = vunpack.c.h.b16 %v96
  %v272 = vunpack.c.l.b16 %v97
  %v273 = vunpack.c.h.b16 %v97
  %v274 = vunpack.c.l.b16 %v98
  %v275 = vunpack.c.h.b16 %v98
  %v276 = vunpack.c.l.b16 %v99
  %v277 = vunpack.c.h.b16 %v99
  %v278 = vunpack.c.l.b16 %v100
  %v279 = vunpack.c.h.b16 %v100
  %v280 = vunpack.c.l.b16 %v101
  %v281 = vunpack.c.h.b16 %v101
  %v282 = vunpack.c.l.b16 %v102
  %v283 = vunpack.c.h.b16 %v102
  %v284 = vunpack.c.l.b16 %v103
  %v285 = vunpack.c.h.b16 %v103
  %v286 = vunpack.c.l.b16 %v104
  %v287 = vunpack.c.h.b16 %v104
  %v288 = vunpack.c.l.b16 %v105
  %v289 = vunpack.c.h.b16 %v105
  %v290 = vunpack.c.l.b16 %v106
  %v291 = vunpack.c.h.b16 %v106
  %v292 = vunpack.c.l.b16 %v107
  %v293 = vunpack.c.h.b16 %v107
  %v294 = vunpack.c.l.b16 %v108
  %v295 = vunpack.c.h.b16 %v108
  %v296 = vunpack.c.l.b16 %v109
  %v297 = vunpack.c.h.b16 %v109
  %v298 = vunpack.c.l.b16 %v110
  %v299 = vunpack.c.h.b16 %v110
  %v300 = vunpack.c.l.b16 %v111
  %v301 = vunpack.c.h.b16 %v111
  %v302 = vunpack.c.l.b16 %v112
  %v303 = vunpack.c.h.b16 %v112
  %v304 = vunpack.c.l.b16 %v113
  %v305 = vunpack.c.h.b16 %v113
  %v306 = vunpack.c.l.b16 %v114
  %v307 = vunpack.c.h.b16 %v114
  %v308 = vunpack.c.l.b16 %v115
  %v309 = vunpack.c.h.b16 %v115
  %v310 = vunpack.c.l.b16 %v116
  %v311 = vunpack.c.h.b16 %v116
  %v312 = vunpack.c.l.b16 %v117
  %v313 = vunpack.c.h.b16 %v117
  %v314 = vunpack.c.l.b16 %v118
  %v315 = vunpack.c.h.b16 %v118
  %v316 = vunpack.c.l.b16 %v119
  %v317 = vunpack.c.h.b16 %v119
  %v318 = vunpack.c.l.b16 %v120
  %v319 = vunpack.c.h.b16 %v120
  %v320 = vunpack.c.l.b16 %v121
  %v321 = vunpack.c.h.b16 %v121
  %v322 = vunpack.c.l.b16 %v122
  %v323 = vunpack.c.h.b16 %v122
  %v324 = vunpack.c.l.b16 %v123
  %v325 = vunpack.c.h.b16 %v123
  %v326 = vunpack.c.l.b16 %v124
  %v327 = vunpack.c.h.b16 %v124
  %v328 = vunpack.c.l.b16 %v125
  %v329 = vunpack.c.h.b16 %v125
  %v330 = vunpack.c.l.b16 %v126
  %v331 = vunpack.c.h.b16 %v126
  %v332 = vunpack.c.l.b16 %v127
  %v333 = vunpack.c.h.b16 %v127
  %v334 = vunpack.c.l.b16 %v128
  %v335 = vunpack.c.h.b16 %v128
  %v336 = vunpack.c.l.b16 %v129
  %v337 = vunpack.c.h.b16 %v129
  %v338 = vunpack.c.l.b16 %v130
  %v339 = vunpack.c.h.b16 %v130
  %v340 = vunpack.c.l.b16 %v131
  %v341 = vunpack.c.h.b16 %v131
  %v342 = vunpack.c.l.b16 %v132
  %v343 = vunpack.c.h.b16 %v132
  %v344 = vunpack.c.l.b16 %v133
  %v345 = vunpack.c.h.b16 %v133
  %v346 = vunpack.c.l.b16 %v134
  %v347 = vunpack.c.h.b16 %v134
  %v348 = vunpack.c.l.b16 %v135
  %v349 = vunpack.c.h.b16 %v135
  %v350 = vunpack.c.l.b16 %v136
  %v351 = vunpack.c.h.b16 %v136
  %v352 = vunpack.c.l.b16 %v137
  %v353 = vunpack.c.h.b16 %v137
  %v354 = vunpack.c.l.b16 %v138
  %v355 = vunpack.c.h.b16 %v138
  %v356 = vunpack.c.l.b16 %v139
  %v357 = vunpack.c.h.b16 %v139
  %v358 = vunpack.c.l.b16 %v140
  %v359 = vunpack.c.h.b16 %v140
  %v360 = vunpack.c.l.b16 %v141
  %v361 = vunpack.c.h.b16 %v141
  %v362 = vunpack.c.l.b16 %v142
  %v363 = vunpack.c.h.b16 %v142
  %v364 = vunpack.c.l.b16 %v143
  %v365 = vunpack.c.h.b16 %v143
  %v366 = vunpack.c.l.b16 %v144
  %v367 = vunpack.c.h.b16 %v144
  %v368 = vunpack.c.l.b16 %v145
  %v369 = vunpack.c.h.b16 %v145
  %v370 = vunpack.c.l.b16 %v146
  %v371 = vunpack.c.h.b16 %v146
  %v372 = vunpack.c.l.b16 %v147
  %v373 = vunpack.c.h.b16 %v147
  %v374 = vunpack.c.l.b16 %v148
  %v375 = vunpack.c.h.b16 %v148
  %v376 = vunpack.c.l.b16 %v149
  %v377 = vunpack.c.h.b16 %v149
  %v378 = vunpack.c.l.b16 %v150
  %v379 = vunpack.c.h.b16 %v150
  %v380 = vunpack.c.l.b16 %v151
  %v381 = vunpack.c.h.b16 %v151
  %v382 = vunpack.c.l.b16 %v152
  %v383 = vunpack.c.h.b16 %v152
  %v384 = vunpack.c.l.b16 %v153
  %v385 = vunpack.c.h.b16 %v153
  %v386 = vpack.c.b16 %v262, %v258
  %v387 = vpack.c.b16 %v263, %v259
  %v388 = vpack.c.b16 %v264, %v260
  %v389 = vpack.c.b16 %v265, %v261
  %v390 = vpack.c.b16 %v270, %v266
  %v391 = vpack.c.b16 %v271, %v267
  %v392 = vpack.c.b16 %v272, %v268
  %v393 = vpack.c.b16 %v273, %v269
  %v394 = vpack.c.b16 %v278, %v274
  %v395 = vpack.c.b16 %v279, %v275
  %v396 = vpack.c.b16 %v280, %v276
  %v397 = vpack.c.b16 %v281, %v277
  %v398 = vpack.c.b16 %v286, %v282
  %v399 = vpack.c.b16 %v287, %v283
  %v400 = vpack.c.b16 %v288, %v284
  %v401 = vpack.c.b16 %v289, %v285
  %v402 = vpack.c.b16 %v294, %v290
  %v403 = vpack.c.b16 %v295, %v291
  %v404 = vpack.c.b16 %v296, %v292
  %v405 = vpack.c.b16 %v297, %v293
  %v406 = vpack.c.b16 %v302, %v298
  %v407 = vpack.c.b16 %v303, %v299
  %v408 = vpack.c.b16 %v304, %v300
  %v409 = vpack.c.b16 %v305, %v301
  %v410 = vpack.c.b16 %v310, %v306
  %v411 = vpack.c.b16 %v311, %v307
  %v412 = vpack.c.b16 %v312, %v308
  %v413 = vpack.c.b16 %v313, %v309
  %v414 = vpack.c.b16 %v318, %v314
  %v415 = vpack.c.b16 %v319, %v315
  %v416 = vpack.c.b16 %v320, %v316
  %v417 = vpack.c.b16 %v321, %v317
  %v418 = vpack.c.b16 %v326, %v322
  %v419 = vpack.c.b16 %v327, %v323
  %v420 = vpack.c.b16 %v328, %v324
  %v421 = vpack.c.b16 %v329, %v325
  %v422 = vpack.c.b16 %v334, %v330
  %v423 = vpack.c.b16 %v335, %v331
  %v424 = vpack.c.b16 %v336, %v332
  %v425 = vpack.c.b16 %v337, %v333
  %v426 = vpack.c.b16 %v342, %v338
  %v427 = vpack.c.b16 %v343, %v339
  %v428 = vpack.c.b16 %v344, %v340
  %v429 = vpack.c.b16 %v345, %v341
  %v430 = vpack.c.b16 %v350, %v346
  %v431 = vpack.c.b16 %v351, %v347
  %v432 = vpack.c.b16 %v352, %v348
  %v433 = vpack.c.b16 %v353, %v349
  %v434 = vpack.c.b16 %v358, %v354
  %v435 = vpack.c.b16 %v359, %v355
  %v436 = vpack.c.b16 %v360, %v356
  %v437 = vpack.c.b16 %v361, %v357
  %v438 = vpack.c.b16 %v366, %v362
  %v439 = vpack.c.b16 %v367, %v363
  %v440 = vpack.c.b16 %v368, %v364
  %v441 = vpack.c.b16 %v369, %v365
  %v442 = vpack.c.b16 %v374, %v370
  %v443 = vpack.c.b16 %v375, %v371
  %v444 = vpack.c.b16 %v376, %v372
  %v445 = vpack.c.b16 %v377, %v373
  %v446 = vpack.c.b16 %v382, %v378
  %v447 = vpack.c.b16 %v383, %v379
  %v448 = vpack.c.b16 %v384, %v380
  %v449 = vpack.c.b16 %v385, %v381
  %514 = vmatprep.subr.bf16.mxu0 %v415
  %515 = vmatpush1.bf16.msra.mxu0 %v414
  %516 = vmatprep.subr.bf16.mxu0 %v411
  %517 = vmatpush1.bf16.msra.mxu0 %v410
  %518 = vmatprep.subr.bf16.mxu0 %v407
  %519 = vmatpush1.bf16.msra.mxu0 %v406
  %520 = vmatprep.subr.bf16.mxu0 %v403
  %521 = vmatpush1.bf16.msra.mxu0 %v402
  %522 = vmatprep.subr.bf16.mxu0 %v399
  %523 = vmatpush1.bf16.msra.mxu0 %v398
  %524 = vmatprep.subr.bf16.mxu0 %v395
  %525 = vmatpush1.bf16.msra.mxu0 %v394
  %526 = vmatprep.subr.bf16.mxu0 %v391
  %527 = vmatpush1.bf16.msra.mxu0 %v390
  %528 = vmatprep.subr.bf16.mxu0 %v387
  %529 = vmatpush1.bf16.msra.mxu0 %v386
  %530 = vmatprep.subr.bf16.mxu0 %v447
  %531 = vmatpush2.bf16.msra.mxu0 %v446
  %532 = vmatprep.subr.bf16.mxu0 %v443
  %533 = vmatpush2.bf16.msra.mxu0 %v442
  %534 = vmatprep.subr.bf16.mxu0 %v439
  %535 = vmatpush2.bf16.msra.mxu0 %v438
  %536 = vmatprep.subr.bf16.mxu0 %v435
  %537 = vmatpush2.bf16.msra.mxu0 %v434
  %538 = vmatprep.subr.bf16.mxu0 %v431
  %539 = vmatpush2.bf16.msra.mxu0 %v430
  %540 = vmatprep.subr.bf16.mxu0 %v427
  %541 = vmatpush2.bf16.msra.mxu0 %v426
  %542 = vmatprep.subr.bf16.mxu0 %v423
  %543 = vmatpush2.bf16.msra.mxu0 %v422
  %544 = vmatprep.subr.bf16.mxu0 %v419
  %545 = vmatpush2.bf16.msra.mxu0 %v418
  %546 = vmatprep.mubr.bf16.mxu0 %v179
  %547 = vmatmul.mubr.bf16.gmra.mxu0 %v178
  %v548 = vpop.f32.mrf.mxu0
  %v549 = vadd.f32 0.0, %v548
  %v550 = vpop.f32.mrf.mxu0
  %v551 = vadd.f32 0.0, %v550
  %v552 = vpop.f32.mrf.mxu0
  %v553 = vadd.f32 0.0, %v552
  %v554 = vpop.f32.mrf.mxu0
  %v555 = vadd.f32 0.0, %v554
  %556 = vmatprep.mubr.bf16.mxu0 %v181
  %557 = vmatmul.mubr.bf16.gmra.mxu0 %v180
  %v558 = vpop.f32.mrf.mxu0
  %v559 = vadd.f32 0.0, %v558
  %v560 = vpop.f32.mrf.mxu0
  %v561 = vadd.f32 0.0, %v560
  %v562 = vpop.f32.mrf.mxu0
  %v563 = vadd.f32 0.0, %v562
  %v564 = vpop.f32.mrf.mxu0
  %v565 = vadd.f32 0.0, %v564
  %566 = vmatprep.mubr.bf16.mxu0 %v183
  %567 = vmatmul.mubr.bf16.gmra.mxu0 %v182
  %v568 = vpop.f32.mrf.mxu0
  %v569 = vadd.f32 0.0, %v568
  %v570 = vpop.f32.mrf.mxu0
  %v571 = vadd.f32 0.0, %v570
  %v572 = vpop.f32.mrf.mxu0
  %v573 = vadd.f32 0.0, %v572
  %v574 = vpop.f32.mrf.mxu0
  %v575 = vadd.f32 0.0, %v574
  %576 = vmatprep.mubr.bf16.mxu0 %v185
  %577 = vmatmul.mubr.bf16.gmra.mxu0 %v184
  %v578 = vpop.f32.mrf.mxu0
  %v579 = vadd.f32 0.0, %v578
  %v580 = vpop.f32.mrf.mxu0
  %v581 = vadd.f32 0.0, %v580
  %v582 = vpop.f32.mrf.mxu0
  %v583 = vadd.f32 0.0, %v582
  %v584 = vpop.f32.mrf.mxu0
  %v585 = vadd.f32 0.0, %v584
  %586 = vdwg.mxu0
  %587 = vmatprep.subr.bf16.mxu0 %v417
  %588 = vmatpush1.bf16.msra.mxu0 %v416
  %589 = vmatprep.subr.bf16.mxu0 %v413
  %590 = vmatpush1.bf16.msra.mxu0 %v412
  %591 = vmatprep.subr.bf16.mxu0 %v409
  %592 = vmatpush1.bf16.msra.mxu0 %v408
  %593 = vmatprep.subr.bf16.mxu0 %v405
  %594 = vmatpush1.bf16.msra.mxu0 %v404
  %595 = vmatprep.subr.bf16.mxu0 %v401
  %596 = vmatpush1.bf16.msra.mxu0 %v400
  %597 = vmatprep.subr.bf16.mxu0 %v397
  %598 = vmatpush1.bf16.msra.mxu0 %v396
  %599 = vmatprep.subr.bf16.mxu0 %v393
  %600 = vmatpush1.bf16.msra.mxu0 %v392
  %601 = vmatprep.subr.bf16.mxu0 %v389
  %602 = vmatpush1.bf16.msra.mxu0 %v388
  %603 = vmatprep.subr.bf16.mxu0 %v449
  %604 = vmatpush2.bf16.msra.mxu0 %v448
  %605 = vmatprep.subr.bf16.mxu0 %v445
  %606 = vmatpush2.bf16.msra.mxu0 %v444
  %607 = vmatprep.subr.bf16.mxu0 %v441
  %608 = vmatpush2.bf16.msra.mxu0 %v440
  %609 = vmatprep.subr.bf16.mxu0 %v437
  %610 = vmatpush2.bf16.msra.mxu0 %v436
  %611 = vmatprep.subr.bf16.mxu0 %v433
  %612 = vmatpush2.bf16.msra.mxu0 %v432
  %613 = vmatprep.subr.bf16.mxu0 %v429
  %614 = vmatpush2.bf16.msra.mxu0 %v428
  %615 = vmatprep.subr.bf16.mxu0 %v425
  %616 = vmatpush2.bf16.msra.mxu0 %v424
  %617 = vmatprep.subr.bf16.mxu0 %v421
  %618 = vmatpush2.bf16.msra.mxu0 %v420
  %619 = vmatprep.mubr.bf16.mxu0 %v179
  %620 = vmatmul.mubr.bf16.gmra.mxu0 %v178
  %v621 = vpop.f32.mrf.mxu0
  %v622 = vadd.f32 0.0, %v621
  %v623 = vpop.f32.mrf.mxu0
  %v624 = vadd.f32 0.0, %v623
  %v625 = vpop.f32.mrf.mxu0
  %v626 = vadd.f32 0.0, %v625
  %v627 = vpop.f32.mrf.mxu0
  %v628 = vadd.f32 0.0, %v627
  %629 = vmatprep.mubr.bf16.mxu0 %v181
  %630 = vmatmul.mubr.bf16.gmra.mxu0 %v180
  %v631 = vpop.f32.mrf.mxu0
  %v632 = vadd.f32 0.0, %v631
  %v633 = vpop.f32.mrf.mxu0
  %v634 = vadd.f32 0.0, %v633
  %v635 = vpop.f32.mrf.mxu0
  %v636 = vadd.f32 0.0, %v635
  %v637 = vpop.f32.mrf.mxu0
  %v638 = vadd.f32 0.0, %v637
  %639 = vmatprep.mubr.bf16.mxu0 %v183
  %640 = vmatmul.mubr.bf16.gmra.mxu0 %v182
  %v641 = vpop.f32.mrf.mxu0
  %v642 = vadd.f32 0.0, %v641
  %v643 = vpop.f32.mrf.mxu0
  %v644 = vadd.f32 0.0, %v643
  %v645 = vpop.f32.mrf.mxu0
  %v646 = vadd.f32 0.0, %v645
  %v647 = vpop.f32.mrf.mxu0
  %v648 = vadd.f32 0.0, %v647
  %649 = vmatprep.mubr.bf16.mxu0 %v185
  %650 = vmatmul.mubr.bf16.gmra.mxu0 %v184
  %v651 = vpop.f32.mrf.mxu0
  %v652 = vadd.f32 0.0, %v651
  %v653 = vpop.f32.mrf.mxu0
  %v654 = vadd.f32 0.0, %v653
  %v655 = vpop.f32.mrf.mxu0
  %v656 = vadd.f32 0.0, %v655
  %v657 = vpop.f32.mrf.mxu0
  %v658 = vadd.f32 0.0, %v657
  %659 = vdwg.mxu0
  %v660 = vadd.f32 %v50, %v549
  %v661 = vadd.f32 %v51, %v551
  %v662 = vadd.f32 %v52, %v622
  %v663 = vadd.f32 %v53, %v624
  %v664 = vadd.f32 %v54, %v553
  %v665 = vadd.f32 %v55, %v555
  %v666 = vadd.f32 %v56, %v626
  %v667 = vadd.f32 %v57, %v628
  %v668 = vadd.f32 %v58, %v559
  %v669 = vadd.f32 %v59, %v561
  %v670 = vadd.f32 %v60, %v632
  %v671 = vadd.f32 %v61, %v634
  %v672 = vadd.f32 %v62, %v563
  %v673 = vadd.f32 %v63, %v565
  %v674 = vadd.f32 %v64, %v636
  %v675 = vadd.f32 %v65, %v638
  %v676 = vadd.f32 %v66, %v569
  %v677 = vadd.f32 %v67, %v571
  %v678 = vadd.f32 %v68, %v642
  %v679 = vadd.f32 %v69, %v644
  %v680 = vadd.f32 %v70, %v573
  %v681 = vadd.f32 %v71, %v575
  %v682 = vadd.f32 %v72, %v646
  %v683 = vadd.f32 %v73, %v648
  %v684 = vadd.f32 %v74, %v579
  %v685 = vadd.f32 %v75, %v581
  %v686 = vadd.f32 %v76, %v652
  %v687 = vadd.f32 %v77, %v654
  %v688 = vadd.f32 %v78, %v583
  %v689 = vadd.f32 %v79, %v585
  %v690 = vadd.f32 %v80, %v656
  %v691 = vadd.f32 %v81, %v658
  %692 = vst [vmem:[#allocation2] sm:$0xff] %v660
  %693 = vst [vmem:[#allocation2 + $0x8] sm:$0xff] %v661
  %694 = vst [vmem:[#allocation2 + $0x10] sm:$0xff] %v662
  %695 = vst [vmem:[#allocation2 + $0x18] sm:$0xff] %v663
  %696 = vst [vmem:[#allocation2 + $0x20] sm:$0xff] %v664
  %697 = vst [vmem:[#allocation2 + $0x28] sm:$0xff] %v665
  %698 = vst [vmem:[#allocation2 + $0x30] sm:$0xff] %v666
  %699 = vst [vmem:[#allocation2 + $0x38] sm:$0xff] %v667
  %700 = vst [vmem:[#allocation2 + $0x40] sm:$0xff] %v668
  %701 = vst [vmem:[#allocation2 + $0x48] sm:$0xff] %v669
  %702 = vst [vmem:[#allocation2 + $0x50] sm:$0xff] %v670
  %703 = vst [vmem:[#allocation2 + $0x58] sm:$0xff] %v671
  %704 = vst [vmem:[#allocation2 + $0x60] sm:$0xff] %v672
  %705 = vst [vmem:[#allocation2 + $0x68] sm:$0xff] %v673
  %706 = vst [vmem:[#allocation2 + $0x70] sm:$0xff] %v674
  %707 = vst [vmem:[#allocation2 + $0x78] sm:$0xff] %v675
  %708 = vst [vmem:[#allocation2 + $0x80] sm:$0xff] %v676
  %709 = vst [vmem:[#allocation2 + $0x88] sm:$0xff] %v677
  %710 = vst [vmem:[#allocation2 + $0x90] sm:$0xff] %v678
  %711 = vst [vmem:[#allocation2 + $0x98] sm:$0xff] %v679
  %712 = vst [vmem:[#allocation2 + $0xa0] sm:$0xff] %v680
  %713 = vst [vmem:[#allocation2 + $0xa8] sm:$0xff] %v681
  %714 = vst [vmem:[#allocation2 + $0xb0] sm:$0xff] %v682
  %715 = vst [vmem:[#allocation2 + $0xb8] sm:$0xff] %v683
  %716 = vst [vmem:[#allocation2 + $0xc0] sm:$0xff] %v684
  %717 = vst [vmem:[#allocation2 + $0xc8] sm:$0xff] %v685
  %718 = vst [vmem:[#allocation2 + $0xd0] sm:$0xff] %v686
  %719 = vst [vmem:[#allocation2 + $0xd8] sm:$0xff] %v687
  %720 = vst [vmem:[#allocation2 + $0xe0] sm:$0xff] %v688
  %721 = vst [vmem:[#allocation2 + $0xe8] sm:$0xff] %v689
  %722 = vst [vmem:[#allocation2 + $0xf0] sm:$0xff] %v690
  %723 = vst [vmem:[#allocation2 + $0xf8] sm:$0xff] %v691
  // Predicated region
  $region18: #{skyreels_block_forward.39} parent=0 // pred_check
    %p724 = pneg %p14
  $region19: #{skyreels_block_forward.39} parent=0 // pred_check_branch
    %726 = sbr.rel (%p724) target = $region21
  $region20: #{skyreels_block_forward.39} parent=0 // pred_region
    %v727 = vld [vmem:[#allocation2] sm:$0xff]
    %v728 = vld [vmem:[#allocation2 + $0x8] sm:$0xff]
    %v729 = vld [vmem:[#allocation2 + $0x10] sm:$0xff]
    %v730 = vld [vmem:[#allocation2 + $0x18] sm:$0xff]
    %v731 = vld [vmem:[#allocation2 + $0x20] sm:$0xff]
    %v732 = vld [vmem:[#allocation2 + $0x28] sm:$0xff]
    %v733 = vld [vmem:[#allocation2 + $0x30] sm:$0xff]
    %v734 = vld [vmem:[#allocation2 + $0x38] sm:$0xff]
    %v735 = vld [vmem:[#allocation2 + $0x40] sm:$0xff]
    %v736 = vld [vmem:[#allocation2 + $0x48] sm:$0xff]
    %v737 = vld [vmem:[#allocation2 + $0x50] sm:$0xff]
    %v738 = vld [vmem:[#allocation2 + $0x58] sm:$0xff]
    %v739 = vld [vmem:[#allocation2 + $0x60] sm:$0xff]
    %v740 = vld [vmem:[#allocation2 + $0x68] sm:$0xff]
    %v741 = vld [vmem:[#allocation2 + $0x70] sm:$0xff]
    %v742 = vld [vmem:[#allocation2 + $0x78] sm:$0xff]
    %v743 = vld [vmem:[#allocation2 + $0x80] sm:$0xff]
    %v744 = vld [vmem:[#allocation2 + $0x88] sm:$0xff]
    %v745 = vld [vmem:[#allocation2 + $0x90] sm:$0xff]
    %v746 = vld [vmem:[#allocation2 + $0x98] sm:$0xff]
    %v747 = vld [vmem:[#allocation2 + $0xa0] sm:$0xff]
    %v748 = vld [vmem:[#allocation2 + $0xa8] sm:$0xff]
    %v749 = vld [vmem:[#allocation2 + $0xb0] sm:$0xff]
    %v750 = vld [vmem:[#allocation2 + $0xb8] sm:$0xff]
    %v751 = vld [vmem:[#allocation2 + $0xc0] sm:$0xff]
    %v752 = vld [vmem:[#allocation2 + $0xc8] sm:$0xff]
    %v753 = vld [vmem:[#allocation2 + $0xd0] sm:$0xff]
    %v754 = vld [vmem:[#allocation2 + $0xd8] sm:$0xff]
    %v755 = vld [vmem:[#allocation2 + $0xe0] sm:$0xff]
    %v756 = vld [vmem:[#allocation2 + $0xe8] sm:$0xff]
    %v757 = vld [vmem:[#allocation2 + $0xf0] sm:$0xff]
    %v758 = vld [vmem:[#allocation2 + $0xf8] sm:$0xff]
    %v759 = vld [vmem:[%s2] sm:$0xf]
    %v761 = vlaneseq
    %v762 = vshrl.u32 %v761, 7
    %v763 = vsub.s32 0, %v762
    %v764 = vrot.slane %v759, %v763
    %v765 = vlaneseq
    %v766 = vshrl.u32 %v765, 7
    %v767 = vsub.s32 1, %v766
    %v768 = vrot.slane %v759, %v767
    %v769 = vlaneseq
    %v770 = vshrl.u32 %v769, 7
    %v771 = vsub.s32 2, %v770
    %v772 = vrot.slane %v759, %v771
    %v773 = vlaneseq
    %v774 = vshrl.u32 %v773, 7
    %v775 = vsub.s32 3, %v774
    %v776 = vrot.slane %v759, %v775
    %v781 = vadd.f32 %v727, %v764
    %v782 = vadd.f32 %v728, %v768
    %v783 = vadd.f32 %v729, %v772
    %v784 = vadd.f32 %v730, %v776
    %v785 = vadd.f32 %v731, %v764
    %v786 = vadd.f32 %v732, %v768
    %v787 = vadd.f32 %v733, %v772
    %v788 = vadd.f32 %v734, %v776
    %v789 = vadd.f32 %v735, %v764
    %v790 = vadd.f32 %v736, %v768
    %v791 = vadd.f32 %v737, %v772
    %v792 = vadd.f32 %v738, %v776
    %v793 = vadd.f32 %v739, %v764
    %v794 = vadd.f32 %v740, %v768
    %v795 = vadd.f32 %v741, %v772
    %v796 = vadd.f32 %v742, %v776
    %v797 = vadd.f32 %v743, %v764
    %v798 = vadd.f32 %v744, %v768
    %v799 = vadd.f32 %v745, %v772
    %v800 = vadd.f32 %v746, %v776
    %v801 = vadd.f32 %v747, %v764
    %v802 = vadd.f32 %v748, %v768
    %v803 = vadd.f32 %v749, %v772
    %v804 = vadd.f32 %v750, %v776
    %v805 = vadd.f32 %v751, %v764
    %v806 = vadd.f32 %v752, %v768
    %v807 = vadd.f32 %v753, %v772
    %v808 = vadd.f32 %v754, %v776
    %v809 = vadd.f32 %v755, %v764
    %v810 = vadd.f32 %v756, %v768
    %v811 = vadd.f32 %v757, %v772
    %v812 = vadd.f32 %v758, %v776
    %v813 = vmul.f32 %v781, 0.5
    %v814 = vmul.f32 %v782, 0.5
    %v815 = vmul.f32 %v783, 0.5
    %v816 = vmul.f32 %v784, 0.5
    %v817 = vmul.f32 %v785, 0.5
    %v818 = vmul.f32 %v786, 0.5
    %v819 = vmul.f32 %v787, 0.5
    %v820 = vmul.f32 %v788, 0.5
    %v821 = vmul.f32 %v789, 0.5
    %v822 = vmul.f32 %v790, 0.5
    %v823 = vmul.f32 %v791, 0.5
    %v824 = vmul.f32 %v792, 0.5
    %v825 = vmul.f32 %v793, 0.5
    %v826 = vmul.f32 %v794, 0.5
    %v827 = vmul.f32 %v795, 0.5
    %v828 = vmul.f32 %v796, 0.5
    %v829 = vmul.f32 %v797, 0.5
    %v830 = vmul.f32 %v798, 0.5
    %v831 = vmul.f32 %v799, 0.5
    %v832 = vmul.f32 %v800, 0.5
    %v833 = vmul.f32 %v801, 0.5
    %v834 = vmul.f32 %v802, 0.5
    %v835 = vmul.f32 %v803, 0.5
    %v836 = vmul.f32 %v804, 0.5
    %v837 = vmul.f32 %v805, 0.5
    %v838 = vmul.f32 %v806, 0.5
    %v839 = vmul.f32 %v807, 0.5
    %v840 = vmul.f32 %v808, 0.5
    %v841 = vmul.f32 %v809, 0.5
    %v842 = vmul.f32 %v810, 0.5
    %v843 = vmul.f32 %v811, 0.5
    %v844 = vmul.f32 %v812, 0.5
    %v845 = vmul.f32 %v781, 0.044715
    %v846 = vmul.f32 %v782, 0.044715
    %v847 = vmul.f32 %v783, 0.044715
    %v848 = vmul.f32 %v784, 0.044715
    %v849 = vmul.f32 %v785, 0.044715
    %v850 = vmul.f32 %v786, 0.044715
    %v851 = vmul.f32 %v787, 0.044715
    %v852 = vmul.f32 %v788, 0.044715
    %v853 = vmul.f32 %v789, 0.044715
    %v854 = vmul.f32 %v790, 0.044715
    %v855 = vmul.f32 %v791, 0.044715
    %v856 = vmul.f32 %v792, 0.044715
    %v857 = vmul.f32 %v793, 0.044715
    %v858 = vmul.f32 %v794, 0.044715
    %v859 = vmul.f32 %v795, 0.044715
    %v860 = vmul.f32 %v796, 0.044715
    %v861 = vmul.f32 %v797, 0.044715
    %v862 = vmul.f32 %v798, 0.044715
    %v863 = vmul.f32 %v799, 0.044715
    %v864 = vmul.f32 %v800, 0.044715
    %v865 = vmul.f32 %v801, 0.044715
    %v866 = vmul.f32 %v802, 0.044715
    %v867 = vmul.f32 %v803, 0.044715
    %v868 = vmul.f32 %v804, 0.044715
    %v869 = vmul.f32 %v805, 0.044715
    %v870 = vmul.f32 %v806, 0.044715
    %v871 = vmul.f32 %v807, 0.044715
    %v872 = vmul.f32 %v808, 0.044715
    %v873 = vmul.f32 %v809, 0.044715
    %v874 = vmul.f32 %v810, 0.044715
    %v875 = vmul.f32 %v811, 0.044715
    %v876 = vmul.f32 %v812, 0.044715
    %v877 = vmul.f32 %v845, %v781
    %v878 = vmul.f32 %v846, %v782
    %v879 = vmul.f32 %v847, %v783
    %v880 = vmul.f32 %v848, %v784
    %v881 = vmul.f32 %v849, %v785
    %v882 = vmul.f32 %v850, %v786
    %v883 = vmul.f32 %v851, %v787
    %v884 = vmul.f32 %v852, %v788
    %v885 = vmul.f32 %v853, %v789
    %v886 = vmul.f32 %v854, %v790
    %v887 = vmul.f32 %v855, %v791
    %v888 = vmul.f32 %v856, %v792
    %v889 = vmul.f32 %v857, %v793
    %v890 = vmul.f32 %v858, %v794
    %v891 = vmul.f32 %v859, %v795
    %v892 = vmul.f32 %v860, %v796
    %v893 = vmul.f32 %v861, %v797
    %v894 = vmul.f32 %v862, %v798
    %v895 = vmul.f32 %v863, %v799
    %v896 = vmul.f32 %v864, %v800
    %v897 = vmul.f32 %v865, %v801
    %v898 = vmul.f32 %v866, %v802
    %v899 = vmul.f32 %v867, %v803
    %v900 = vmul.f32 %v868, %v804
    %v901 = vmul.f32 %v869, %v805
    %v902 = vmul.f32 %v870, %v806
    %v903 = vmul.f32 %v871, %v807
    %v904 = vmul.f32 %v872, %v808
    %v905 = vmul.f32 %v873, %v809
    %v906 = vmul.f32 %v874, %v810
    %v907 = vmul.f32 %v875, %v811
    %v908 = vmul.f32 %v876, %v812
    %v909 = vmul.f32 %v877, %v781
    %v910 = vmul.f32 %v878, %v782
    %v911 = vmul.f32 %v879, %v783
    %v912 = vmul.f32 %v880, %v784
    %v913 = vmul.f32 %v881, %v785
    %v914 = vmul.f32 %v882, %v786
    %v915 = vmul.f32 %v883, %v787
    %v916 = vmul.f32 %v884, %v788
    %v917 = vmul.f32 %v885, %v789
    %v918 = vmul.f32 %v886, %v790
    %v919 = vmul.f32 %v887, %v791
    %v920 = vmul.f32 %v888, %v792
    %v921 = vmul.f32 %v889, %v793
    %v922 = vmul.f32 %v890, %v794
    %v923 = vmul.f32 %v891, %v795
    %v924 = vmul.f32 %v892, %v796
    %v925 = vmul.f32 %v893, %v797
    %v926 = vmul.f32 %v894, %v798
    %v927 = vmul.f32 %v895, %v799
    %v928 = vmul.f32 %v896, %v800
    %v929 = vmul.f32 %v897, %v801
    %v930 = vmul.f32 %v898, %v802
    %v931 = vmul.f32 %v899, %v803
    %v932 = vmul.f32 %v900, %v804
    %v933 = vmul.f32 %v901, %v805
    %v934 = vmul.f32 %v902, %v806
    %v935 = vmul.f32 %v903, %v807
    %v936 = vmul.f32 %v904, %v808
    %v937 = vmul.f32 %v905, %v809
    %v938 = vmul.f32 %v906, %v810
    %v939 = vmul.f32 %v907, %v811
    %v940 = vmul.f32 %v908, %v812
    %v941 = vadd.f32 %v781, %v909
    %v942 = vadd.f32 %v782, %v910
    %v943 = vadd.f32 %v783, %v911
    %v944 = vadd.f32 %v784, %v912
    %v945 = vadd.f32 %v785, %v913
    %v946 = vadd.f32 %v786, %v914
    %v947 = vadd.f32 %v787, %v915
    %v948 = vadd.f32 %v788, %v916
    %v949 = vadd.f32 %v789, %v917
    %v950 = vadd.f32 %v790, %v918
    %v951 = vadd.f32 %v791, %v919
    %v952 = vadd.f32 %v792, %v920
    %v953 = vadd.f32 %v793, %v921
    %v954 = vadd.f32 %v794, %v922
    %v955 = vadd.f32 %v795, %v923
    %v956 = vadd.f32 %v796, %v924
    %v957 = vadd.f32 %v797, %v925
    %v958 = vadd.f32 %v798, %v926
    %v959 = vadd.f32 %v799, %v927
    %v960 = vadd.f32 %v800, %v928
    %v961 = vadd.f32 %v801, %v929
    %v962 = vadd.f32 %v802, %v930
    %v963 = vadd.f32 %v803, %v931
    %v964 = vadd.f32 %v804, %v932
    %v965 = vadd.f32 %v805, %v933
    %v966 = vadd.f32 %v806, %v934
    %v967 = vadd.f32 %v807, %v935
    %v968 = vadd.f32 %v808, %v936
    %v969 = vadd.f32 %v809, %v937
    %v970 = vadd.f32 %v810, %v938
    %v971 = vadd.f32 %v811, %v939
    %v972 = vadd.f32 %v812, %v940
    %v973 = vmul.f32 %v941, 0.7978846
    %v974 = vmul.f32 %v942, 0.7978846
    %v975 = vmul.f32 %v943, 0.7978846
    %v976 = vmul.f32 %v944, 0.7978846
    %v977 = vmul.f32 %v945, 0.7978846
    %v978 = vmul.f32 %v946, 0.7978846
    %v979 = vmul.f32 %v947, 0.7978846
    %v980 = vmul.f32 %v948, 0.7978846
    %v981 = vmul.f32 %v949, 0.7978846
    %v982 = vmul.f32 %v950, 0.7978846
    %v983 = vmul.f32 %v951, 0.7978846
    %v984 = vmul.f32 %v952, 0.7978846
    %v985 = vmul.f32 %v953, 0.7978846
    %v986 = vmul.f32 %v954, 0.7978846
    %v987 = vmul.f32 %v955, 0.7978846
    %v988 = vmul.f32 %v956, 0.7978846
    %v989 = vmul.f32 %v957, 0.7978846
    %v990 = vmul.f32 %v958, 0.7978846
    %v991 = vmul.f32 %v959, 0.7978846
    %v992 = vmul.f32 %v960, 0.7978846
    %v993 = vmul.f32 %v961, 0.7978846
    %v994 = vmul.f32 %v962, 0.7978846
    %v995 = vmul.f32 %v963, 0.7978846
    %v996 = vmul.f32 %v964, 0.7978846
    %v997 = vmul.f32 %v965, 0.7978846
    %v998 = vmul.f32 %v966, 0.7978846
    %v999 = vmul.f32 %v967, 0.7978846
    %v1000 = vmul.f32 %v968, 0.7978846
    %v1001 = vmul.f32 %v969, 0.7978846
    %v1002 = vmul.f32 %v970, 0.7978846
    %v1003 = vmul.f32 %v971, 0.7978846
    %v1004 = vmul.f32 %v972, 0.7978846
    %v1005 = vtanh.pop %v973
    %v1006 = vtanh.pop %v974
    %v1007 = vtanh.pop %v975
    %v1008 = vtanh.pop %v976
    %v1009 = vtanh.pop %v977
    %v1010 = vtanh.pop %v978
    %v1011 = vtanh.pop %v979
    %v1012 = vtanh.pop %v980
    %v1013 = vtanh.pop %v981
    %v1014 = vtanh.pop %v982
    %v1015 = vtanh.pop %v983
    %v1016 = vtanh.pop %v984
    %v1017 = vtanh.pop %v985
    %v1018 = vtanh.pop %v986
    %v1019 = vtanh.pop %v987
    %v1020 = vtanh.pop %v988
    %v1021 = vtanh.pop %v989
    %v1022 = vtanh.pop %v990
    %v1023 = vtanh.pop %v991
    %v1024 = vtanh.pop %v992
    %v1025 = vtanh.pop %v993
    %v1026 = vtanh.pop %v994
    %v1027 = vtanh.pop %v995
    %v1028 = vtanh.pop %v996
    %v1029 = vtanh.pop %v997
    %v1030 = vtanh.pop %v998
    %v1031 = vtanh.pop %v999
    %v1032 = vtanh.pop %v1000
    %v1033 = vtanh.pop %v1001
    %v1034 = vtanh.pop %v1002
    %v1035 = vtanh.pop %v1003
    %v1036 = vtanh.pop %v1004
    %v1037 = vadd.f32 %v1005, 1.0
    %v1038 = vadd.f32 %v1006, 1.0
    %v1039 = vadd.f32 %v1007, 1.0
    %v1040 = vadd.f32 %v1008, 1.0
    %v1041 = vadd.f32 %v1009, 1.0
    %v1042 = vadd.f32 %v1010, 1.0
    %v1043 = vadd.f32 %v1011, 1.0
    %v1044 = vadd.f32 %v1012, 1.0
    %v1045 = vadd.f32 %v1013, 1.0
    %v1046 = vadd.f32 %v1014, 1.0
    %v1047 = vadd.f32 %v1015, 1.0
    %v1048 = vadd.f32 %v1016, 1.0
    %v1049 = vadd.f32 %v1017, 1.0
    %v1050 = vadd.f32 %v1018, 1.0
    %v1051 = vadd.f32 %v1019, 1.0
    %v1052 = vadd.f32 %v1020, 1.0
    %v1053 = vadd.f32 %v1021, 1.0
    %v1054 = vadd.f32 %v1022, 1.0
    %v1055 = vadd.f32 %v1023, 1.0
    %v1056 = vadd.f32 %v1024, 1.0
    %v1057 = vadd.f32 %v1025, 1.0
    %v1058 = vadd.f32 %v1026, 1.0
    %v1059 = vadd.f32 %v1027, 1.0
    %v1060 = vadd.f32 %v1028, 1.0
    %v1061 = vadd.f32 %v1029, 1.0
    %v1062 = vadd.f32 %v1030, 1.0
    %v1063 = vadd.f32 %v1031, 1.0
    %v1064 = vadd.f32 %v1032, 1.0
    %v1065 = vadd.f32 %v1033, 1.0
    %v1066 = vadd.f32 %v1034, 1.0
    %v1067 = vadd.f32 %v1035, 1.0
    %v1068 = vadd.f32 %v1036, 1.0
    %v1069 = vmul.f32 %v813, %v1037
    %v1070 = vmul.f32 %v814, %v1038
    %v1071 = vmul.f32 %v815, %v1039
    %v1072 = vmul.f32 %v816, %v1040
    %v1073 = vmul.f32 %v817, %v1041
    %v1074 = vmul.f32 %v818, %v1042
    %v1075 = vmul.f32 %v819, %v1043
    %v1076 = vmul.f32 %v820, %v1044
    %v1077 = vmul.f32 %v821, %v1045
    %v1078 = vmul.f32 %v822, %v1046
    %v1079 = vmul.f32 %v823, %v1047
    %v1080 = vmul.f32 %v824, %v1048
    %v1081 = vmul.f32 %v825, %v1049
    %v1082 = vmul.f32 %v826, %v1050
    %v1083 = vmul.f32 %v827, %v1051
    %v1084 = vmul.f32 %v828, %v1052
    %v1085 = vmul.f32 %v829, %v1053
    %v1086 = vmul.f32 %v830, %v1054
    %v1087 = vmul.f32 %v831, %v1055
    %v1088 = vmul.f32 %v832, %v1056
    %v1089 = vmul.f32 %v833, %v1057
    %v1090 = vmul.f32 %v834, %v1058
    %v1091 = vmul.f32 %v835, %v1059
    %v1092 = vmul.f32 %v836, %v1060
    %v1093 = vmul.f32 %v837, %v1061
    %v1094 = vmul.f32 %v838, %v1062
    %v1095 = vmul.f32 %v839, %v1063
    %v1096 = vmul.f32 %v840, %v1064
    %v1097 = vmul.f32 %v841, %v1065
    %v1098 = vmul.f32 %v842, %v1066
    %v1099 = vmul.f32 %v843, %v1067
    %v1100 = vmul.f32 %v844, %v1068
    %v1101 = vpack.c.bf16 %v1073, %v1069
    %v1102 = vpack.c.bf16 %v1074, %v1070
    %v1103 = vpack.c.bf16 %v1075, %v1071
    %v1104 = vpack.c.bf16 %v1076, %v1072
    %v1105 = vpack.c.bf16 %v1081, %v1077
    %v1106 = vpack.c.bf16 %v1082, %v1078
    %v1107 = vpack.c.bf16 %v1083, %v1079
    %v1108 = vpack.c.bf16 %v1084, %v1080
    %v1109 = vpack.c.bf16 %v1089, %v1085
    %v1110 = vpack.c.bf16 %v1090, %v1086
    %v1111 = vpack.c.bf16 %v1091, %v1087
    %v1112 = vpack.c.bf16 %v1092, %v1088
    %v1113 = vpack.c.bf16 %v1097, %v1093
    %v1114 = vpack.c.bf16 %v1098, %v1094
    %v1115 = vpack.c.bf16 %v1099, %v1095
    %v1116 = vpack.c.bf16 %v1100, %v1096
    %v1133 = vunpack.c.l.b16 %v1101
    %v1134 = vunpack.c.l.b16 %v1102
    %v1135 = vunpack.c.l.b16 %v1103
    %v1136 = vunpack.c.l.b16 %v1104
    %v1137 = vunpack.c.h.b16 %v1101
    %v1138 = vunpack.c.h.b16 %v1102
    %v1139 = vunpack.c.h.b16 %v1103
    %v1140 = vunpack.c.h.b16 %v1104
    %v1141 = vunpack.c.l.b16 %v1105
    %v1142 = vunpack.c.l.b16 %v1106
    %v1143 = vunpack.c.l.b16 %v1107
    %v1144 = vunpack.c.l.b16 %v1108
    %v1145 = vunpack.c.h.b16 %v1105
    %v1146 = vunpack.c.h.b16 %v1106
    %v1147 = vunpack.c.h.b16 %v1107
    %v1148 = vunpack.c.h.b16 %v1108
    %v1149 = vunpack.c.l.b16 %v1109
    %v1150 = vunpack.c.l.b16 %v1110
    %v1151 = vunpack.c.l.b16 %v1111
    %v1152 = vunpack.c.l.b16 %v1112
    %v1153 = vunpack.c.h.b16 %v1109
    %v1154 = vunpack.c.h.b16 %v1110
    %v1155 = vunpack.c.h.b16 %v1111
    %v1156 = vunpack.c.h.b16 %v1112
    %v1157 = vunpack.c.l.b16 %v1113
    %v1158 = vunpack.c.l.b16 %v1114
    %v1159 = vunpack.c.l.b16 %v1115
    %v1160 = vunpack.c.l.b16 %v1116
    %v1161 = vunpack.c.h.b16 %v1113
    %v1162 = vunpack.c.h.b16 %v1114
    %v1163 = vunpack.c.h.b16 %v1115
    %v1164 = vunpack.c.h.b16 %v1116
    %v1165 = vpack.c.b16 %v1134, %v1133
    %v1166 = vpack.c.b16 %v1136, %v1135
    %v1167 = vpack.c.b16 %v1138, %v1137
    %v1168 = vpack.c.b16 %v1140, %v1139
    %v1169 = vpack.c.b16 %v1142, %v1141
    %v1170 = vpack.c.b16 %v1144, %v1143
    %v1171 = vpack.c.b16 %v1146, %v1145
    %v1172 = vpack.c.b16 %v1148, %v1147
    %v1173 = vpack.c.b16 %v1150, %v1149
    %v1174 = vpack.c.b16 %v1152, %v1151
    %v1175 = vpack.c.b16 %v1154, %v1153
    %v1176 = vpack.c.b16 %v1156, %v1155
    %v1177 = vpack.c.b16 %v1158, %v1157
    %v1178 = vpack.c.b16 %v1160, %v1159
    %v1179 = vpack.c.b16 %v1162, %v1161
    %v1180 = vpack.c.b16 %v1164, %v1163
    %1197 = vst [vmem:[%s3] sm:$0xff] %v1165
    %1198 = vst [vmem:[%s3 + $0x8] sm:$0xff] %v1166
    %1199 = vst [vmem:[%s3 + $0x10] sm:$0xff] %v1167
    %1200 = vst [vmem:[%s3 + $0x18] sm:$0xff] %v1168
    %1201 = vst [vmem:[%s3 + $0x20] sm:$0xff] %v1169
    %1202 = vst [vmem:[%s3 + $0x28] sm:$0xff] %v1170
    %1203 = vst [vmem:[%s3 + $0x30] sm:$0xff] %v1171
    %1204 = vst [vmem:[%s3 + $0x38] sm:$0xff] %v1172
    %1205 = vst [vmem:[%s3 + $0x40] sm:$0xff] %v1173
    %1206 = vst [vmem:[%s3 + $0x48] sm:$0xff] %v1174
    %1207 = vst [vmem:[%s3 + $0x50] sm:$0xff] %v1175
    %1208 = vst [vmem:[%s3 + $0x58] sm:$0xff] %v1176
    %1209 = vst [vmem:[%s3 + $0x60] sm:$0xff] %v1177
    %1210 = vst [vmem:[%s3 + $0x68] sm:$0xff] %v1178
    %1211 = vst [vmem:[%s3 + $0x70] sm:$0xff] %v1179
    %1212 = vst [vmem:[%s3 + $0x78] sm:$0xff] %v1180
  $region21: #{skyreels_block_forward.39} parent=0 // pred_fallthru
    _
  // Predicated region
  $region22: #{skyreels_block_forward.39} parent=0 // pred_check
    _
  $region23: #{skyreels_block_forward.39} parent=0 // pred_check_branch
    %1214 = sbr.rel (0) target = $region25
  $region24: #{skyreels_block_forward.39} parent=0 // pred_region
    _
  $region25: #{skyreels_block_forward.39} parent=0 // pred_fallthru
    _
  // Predicated region
  $region26: #{skyreels_block_forward.39} parent=0 // pred_check
    _
  $region27: #{skyreels_block_forward.39} parent=0 // pred_check_branch
    %1216 = sbr.rel (0) target = $region29
  $region28: #{skyreels_block_forward.39} parent=0 // pred_region
    _
  $region29: #{skyreels_block_forward.39} parent=0 // pred_fallthru
    _

// kernel: skyreels_block_forward.40
$region0: #{skyreels_block_forward.40}
  #allocation0 [shape = 'u32[]', space=smem, size = 0x4, offset = 0x4, fixed_abs, tag = 'smem constant byte address 0x4 - core index']
  #allocation1 [shape = 'u32[144,128]{1,0:T(1,128)}', space=vmem, size = 0x12000, scoped, tag = 'internal scratch']
  #allocation2 [shape = 'f32[64,256]{1,0:T(8,128)}', space=vmem, size = 0x10000, scoped, tag = 'scratch operand']
  %s0 = inlined_call_operand.vmem [shape: bf16[64,512], index: 0, kind: input, shape index: {}]
  %s1 = inlined_call_operand.vmem [shape: bf16[512,256], index: 1, kind: input, shape index: {}]
  %s2 = inlined_call_operand.vmem [shape: f32[1,256], index: 2, kind: input, shape index: {}]
  %s3 = inlined_call_operand.vmem [shape: f32[64,256], index: 3, kind: output, shape index: {}]
  %s4 = sld [smem:[#allocation0]]
  $region30: #{skyreels_block_forward.40} parent=0
    _
  %s6 = ssub.s32 1, %s4
  %s7 = scalar_select 0, %s6, %s4
  // Predicated region
  $region2: #{skyreels_block_forward.40} parent=0 // pred_check
    _
  $region3: #{skyreels_block_forward.40} parent=0 // pred_check_branch
    %9 = sbr.rel (0) target = $region5
  $region4: #{skyreels_block_forward.40} parent=0 // pred_region
    _
  $region5: #{skyreels_block_forward.40} parent=0 // pred_fallthru
    _
  // Predicated region
  $region6: #{skyreels_block_forward.40} parent=0 // pred_check
    _
  $region7: #{skyreels_block_forward.40} parent=0 // pred_check_branch
    %11 = sbr.rel (0) target = $region9
  $region8: #{skyreels_block_forward.40} parent=0 // pred_region
    _
  $region9: #{skyreels_block_forward.40} parent=0 // pred_fallthru
    _
  // Predicated region
  $region10: #{skyreels_block_forward.40} parent=0 // pred_check
    _
  $region11: #{skyreels_block_forward.40} parent=0 // pred_check_branch
    %13 = sbr.rel (0) target = $region13
  $region12: #{skyreels_block_forward.40} parent=0 // pred_region
    _
  $region13: #{skyreels_block_forward.40} parent=0 // pred_fallthru
    _
  %p14 = scmp.eq.s32.totalorder 0, 0
  // Predicated region
  $region14: #{skyreels_block_forward.40} parent=0 // pred_check
    %p15 = pneg %p14
  $region15: #{skyreels_block_forward.40} parent=0 // pred_check_branch
    %17 = sbr.rel (%p15) target = $region17
  $region16: #{skyreels_block_forward.40} parent=0 // pred_region
    %18 = vst [vmem:[#allocation2] sm:$0xff] 0.0
    %19 = vst [vmem:[#allocation2 + $0x8] sm:$0xff] 0.0
    %20 = vst [vmem:[#allocation2 + $0x10] sm:$0xff] 0.0
    %21 = vst [vmem:[#allocation2 + $0x18] sm:$0xff] 0.0
    %22 = vst [vmem:[#allocation2 + $0x20] sm:$0xff] 0.0
    %23 = vst [vmem:[#allocation2 + $0x28] sm:$0xff] 0.0
    %24 = vst [vmem:[#allocation2 + $0x30] sm:$0xff] 0.0
    %25 = vst [vmem:[#allocation2 + $0x38] sm:$0xff] 0.0
    %26 = vst [vmem:[#allocation2 + $0x40] sm:$0xff] 0.0
    %27 = vst [vmem:[#allocation2 + $0x48] sm:$0xff] 0.0
    %28 = vst [vmem:[#allocation2 + $0x50] sm:$0xff] 0.0
    %29 = vst [vmem:[#allocation2 + $0x58] sm:$0xff] 0.0
    %30 = vst [vmem:[#allocation2 + $0x60] sm:$0xff] 0.0
    %31 = vst [vmem:[#allocation2 + $0x68] sm:$0xff] 0.0
    %32 = vst [vmem:[#allocation2 + $0x70] sm:$0xff] 0.0
    %33 = vst [vmem:[#allocation2 + $0x78] sm:$0xff] 0.0
  $region17: #{skyreels_block_forward.40} parent=0 // pred_fallthru
    _
  %v34 = vld [vmem:[#allocation2] sm:$0xff]
  %v35 = vld [vmem:[#allocation2 + $0x8] sm:$0xff]
  %v36 = vld [vmem:[#allocation2 + $0x10] sm:$0xff]
  %v37 = vld [vmem:[#allocation2 + $0x18] sm:$0xff]
  %v38 = vld [vmem:[#allocation2 + $0x20] sm:$0xff]
  %v39 = vld [vmem:[#allocation2 + $0x28] sm:$0xff]
  %v40 = vld [vmem:[#allocation2 + $0x30] sm:$0xff]
  %v41 = vld [vmem:[#allocation2 + $0x38] sm:$0xff]
  %v42 = vld [vmem:[#allocation2 + $0x40] sm:$0xff]
  %v43 = vld [vmem:[#allocation2 + $0x48] sm:$0xff]
  %v44 = vld [vmem:[#allocation2 + $0x50] sm:$0xff]
  %v45 = vld [vmem:[#allocation2 + $0x58] sm:$0xff]
  %v46 = vld [vmem:[#allocation2 + $0x60] sm:$0xff]
  %v47 = vld [vmem:[#allocation2 + $0x68] sm:$0xff]
  %v48 = vld [vmem:[#allocation2 + $0x70] sm:$0xff]
  %v49 = vld [vmem:[#allocation2 + $0x78] sm:$0xff]
  %v50 = vld [vmem:[%s0] sm:$0xff]
  %v51 = vld [vmem:[%s0 + $0x8] sm:$0xff]
  %v52 = vld [vmem:[%s0 + $0x10] sm:$0xff]
  %v53 = vld [vmem:[%s0 + $0x18] sm:$0xff]
  %v54 = vld [vmem:[%s0 + $0x20] sm:$0xff]
  %v55 = vld [vmem:[%s0 + $0x28] sm:$0xff]
  %v56 = vld [vmem:[%s0 + $0x30] sm:$0xff]
  %v57 = vld [vmem:[%s0 + $0x38] sm:$0xff]
  %v58 = vld [vmem:[%s0 + $0x40] sm:$0xff]
  %v59 = vld [vmem:[%s0 + $0x48] sm:$0xff]
  %v60 = vld [vmem:[%s0 + $0x50] sm:$0xff]
  %v61 = vld [vmem:[%s0 + $0x58] sm:$0xff]
  %v62 = vld [vmem:[%s0 + $0x60] sm:$0xff]
  %v63 = vld [vmem:[%s0 + $0x68] sm:$0xff]
  %v64 = vld [vmem:[%s0 + $0x70] sm:$0xff]
  %v65 = vld [vmem:[%s0 + $0x78] sm:$0xff]
  %v66 = vld [vmem:[%s1] sm:$0xff]
  %v67 = vld [vmem:[%s1 + $0x8] sm:$0xff]
  %v68 = vld [vmem:[%s1 + $0x10] sm:$0xff]
  %v69 = vld [vmem:[%s1 + $0x18] sm:$0xff]
  %v70 = vld [vmem:[%s1 + $0x20] sm:$0xff]
  %v71 = vld [vmem:[%s1 + $0x28] sm:$0xff]
  %v72 = vld [vmem:[%s1 + $0x30] sm:$0xff]
  %v73 = vld [vmem:[%s1 + $0x38] sm:$0xff]
  %v74 = vld [vmem:[%s1 + $0x40] sm:$0xff]
  %v75 = vld [vmem:[%s1 + $0x48] sm:$0xff]
  %v76 = vld [vmem:[%s1 + $0x50] sm:$0xff]
  %v77 = vld [vmem:[%s1 + $0x58] sm:$0xff]
  %v78 = vld [vmem:[%s1 + $0x60] sm:$0xff]
  %v79 = vld [vmem:[%s1 + $0x68] sm:$0xff]
  %v80 = vld [vmem:[%s1 + $0x70] sm:$0xff]
  %v81 = vld [vmem:[%s1 + $0x78] sm:$0xff]
  %v82 = vld [vmem:[%s1 + $0x80] sm:$0xff]
  %v83 = vld [vmem:[%s1 + $0x88] sm:$0xff]
  %v84 = vld [vmem:[%s1 + $0x90] sm:$0xff]
  %v85 = vld [vmem:[%s1 + $0x98] sm:$0xff]
  %v86 = vld [vmem:[%s1 + $0xa0] sm:$0xff]
  %v87 = vld [vmem:[%s1 + $0xa8] sm:$0xff]
  %v88 = vld [vmem:[%s1 + $0xb0] sm:$0xff]
  %v89 = vld [vmem:[%s1 + $0xb8] sm:$0xff]
  %v90 = vld [vmem:[%s1 + $0xc0] sm:$0xff]
  %v91 = vld [vmem:[%s1 + $0xc8] sm:$0xff]
  %v92 = vld [vmem:[%s1 + $0xd0] sm:$0xff]
  %v93 = vld [vmem:[%s1 + $0xd8] sm:$0xff]
  %v94 = vld [vmem:[%s1 + $0xe0] sm:$0xff]
  %v95 = vld [vmem:[%s1 + $0xe8] sm:$0xff]
  %v96 = vld [vmem:[%s1 + $0xf0] sm:$0xff]
  %v97 = vld [vmem:[%s1 + $0xf8] sm:$0xff]
  %v98 = vld [vmem:[%s1 + $0x100] sm:$0xff]
  %v99 = vld [vmem:[%s1 + $0x108] sm:$0xff]
  %v100 = vld [vmem:[%s1 + $0x110] sm:$0xff]
  %v101 = vld [vmem:[%s1 + $0x118] sm:$0xff]
  %v102 = vld [vmem:[%s1 + $0x120] sm:$0xff]
  %v103 = vld [vmem:[%s1 + $0x128] sm:$0xff]
  %v104 = vld [vmem:[%s1 + $0x130] sm:$0xff]
  %v105 = vld [vmem:[%s1 + $0x138] sm:$0xff]
  %v106 = vld [vmem:[%s1 + $0x140] sm:$0xff]
  %v107 = vld [vmem:[%s1 + $0x148] sm:$0xff]
  %v108 = vld [vmem:[%s1 + $0x150] sm:$0xff]
  %v109 = vld [vmem:[%s1 + $0x158] sm:$0xff]
  %v110 = vld [vmem:[%s1 + $0x160] sm:$0xff]
  %v111 = vld [vmem:[%s1 + $0x168] sm:$0xff]
  %v112 = vld [vmem:[%s1 + $0x170] sm:$0xff]
  %v113 = vld [vmem:[%s1 + $0x178] sm:$0xff]
  %v114 = vld [vmem:[%s1 + $0x180] sm:$0xff]
  %v115 = vld [vmem:[%s1 + $0x188] sm:$0xff]
  %v116 = vld [vmem:[%s1 + $0x190] sm:$0xff]
  %v117 = vld [vmem:[%s1 + $0x198] sm:$0xff]
  %v118 = vld [vmem:[%s1 + $0x1a0] sm:$0xff]
  %v119 = vld [vmem:[%s1 + $0x1a8] sm:$0xff]
  %v120 = vld [vmem:[%s1 + $0x1b0] sm:$0xff]
  %v121 = vld [vmem:[%s1 + $0x1b8] sm:$0xff]
  %v122 = vld [vmem:[%s1 + $0x1c0] sm:$0xff]
  %v123 = vld [vmem:[%s1 + $0x1c8] sm:$0xff]
  %v124 = vld [vmem:[%s1 + $0x1d0] sm:$0xff]
  %v125 = vld [vmem:[%s1 + $0x1d8] sm:$0xff]
  %v126 = vld [vmem:[%s1 + $0x1e0] sm:$0xff]
  %v127 = vld [vmem:[%s1 + $0x1e8] sm:$0xff]
  %v128 = vld [vmem:[%s1 + $0x1f0] sm:$0xff]
  %v129 = vld [vmem:[%s1 + $0x1f8] sm:$0xff]
  %v146 = vunpack.c.l.b16 %v50
  %v147 = vunpack.c.h.b16 %v50
  %v148 = vunpack.c.l.b16 %v51
  %v149 = vunpack.c.h.b16 %v51
  %v150 = vunpack.c.l.b16 %v52
  %v151 = vunpack.c.h.b16 %v52
  %v152 = vunpack.c.l.b16 %v53
  %v153 = vunpack.c.h.b16 %v53
  %v154 = vunpack.c.l.b16 %v54
  %v155 = vunpack.c.h.b16 %v54
  %v156 = vunpack.c.l.b16 %v55
  %v157 = vunpack.c.h.b16 %v55
  %v158 = vunpack.c.l.b16 %v56
  %v159 = vunpack.c.h.b16 %v56
  %v160 = vunpack.c.l.b16 %v57
  %v161 = vunpack.c.h.b16 %v57
  %v162 = vunpack.c.l.b16 %v58
  %v163 = vunpack.c.h.b16 %v58
  %v164 = vunpack.c.l.b16 %v59
  %v165 = vunpack.c.h.b16 %v59
  %v166 = vunpack.c.l.b16 %v60
  %v167 = vunpack.c.h.b16 %v60
  %v168 = vunpack.c.l.b16 %v61
  %v169 = vunpack.c.h.b16 %v61
  %v170 = vunpack.c.l.b16 %v62
  %v171 = vunpack.c.h.b16 %v62
  %v172 = vunpack.c.l.b16 %v63
  %v173 = vunpack.c.h.b16 %v63
  %v174 = vunpack.c.l.b16 %v64
  %v175 = vunpack.c.h.b16 %v64
  %v176 = vunpack.c.l.b16 %v65
  %v177 = vunpack.c.h.b16 %v65
  %v178 = vpack.c.b16 %v150, %v146
  %v179 = vpack.c.b16 %v151, %v147
  %v180 = vpack.c.b16 %v152, %v148
  %v181 = vpack.c.b16 %v153, %v149
  %v182 = vpack.c.b16 %v158, %v154
  %v183 = vpack.c.b16 %v159, %v155
  %v184 = vpack.c.b16 %v160, %v156
  %v185 = vpack.c.b16 %v161, %v157
  %v186 = vpack.c.b16 %v166, %v162
  %v187 = vpack.c.b16 %v167, %v163
  %v188 = vpack.c.b16 %v168, %v164
  %v189 = vpack.c.b16 %v169, %v165
  %v190 = vpack.c.b16 %v174, %v170
  %v191 = vpack.c.b16 %v175, %v171
  %v192 = vpack.c.b16 %v176, %v172
  %v193 = vpack.c.b16 %v177, %v173
  %v274 = vunpack.c.l.b16 %v66
  %v275 = vunpack.c.h.b16 %v66
  %v276 = vunpack.c.l.b16 %v67
  %v277 = vunpack.c.h.b16 %v67
  %v278 = vunpack.c.l.b16 %v68
  %v279 = vunpack.c.h.b16 %v68
  %v280 = vunpack.c.l.b16 %v69
  %v281 = vunpack.c.h.b16 %v69
  %v282 = vunpack.c.l.b16 %v70
  %v283 = vunpack.c.h.b16 %v70
  %v284 = vunpack.c.l.b16 %v71
  %v285 = vunpack.c.h.b16 %v71
  %v286 = vunpack.c.l.b16 %v72
  %v287 = vunpack.c.h.b16 %v72
  %v288 = vunpack.c.l.b16 %v73
  %v289 = vunpack.c.h.b16 %v73
  %v290 = vunpack.c.l.b16 %v74
  %v291 = vunpack.c.h.b16 %v74
  %v292 = vunpack.c.l.b16 %v75
  %v293 = vunpack.c.h.b16 %v75
  %v294 = vunpack.c.l.b16 %v76
  %v295 = vunpack.c.h.b16 %v76
  %v296 = vunpack.c.l.b16 %v77
  %v297 = vunpack.c.h.b16 %v77
  %v298 = vunpack.c.l.b16 %v78
  %v299 = vunpack.c.h.b16 %v78
  %v300 = vunpack.c.l.b16 %v79
  %v301 = vunpack.c.h.b16 %v79
  %v302 = vunpack.c.l.b16 %v80
  %v303 = vunpack.c.h.b16 %v80
  %v304 = vunpack.c.l.b16 %v81
  %v305 = vunpack.c.h.b16 %v81
  %v306 = vunpack.c.l.b16 %v82
  %v307 = vunpack.c.h.b16 %v82
  %v308 = vunpack.c.l.b16 %v83
  %v309 = vunpack.c.h.b16 %v83
  %v310 = vunpack.c.l.b16 %v84
  %v311 = vunpack.c.h.b16 %v84
  %v312 = vunpack.c.l.b16 %v85
  %v313 = vunpack.c.h.b16 %v85
  %v314 = vunpack.c.l.b16 %v86
  %v315 = vunpack.c.h.b16 %v86
  %v316 = vunpack.c.l.b16 %v87
  %v317 = vunpack.c.h.b16 %v87
  %v318 = vunpack.c.l.b16 %v88
  %v319 = vunpack.c.h.b16 %v88
  %v320 = vunpack.c.l.b16 %v89
  %v321 = vunpack.c.h.b16 %v89
  %v322 = vunpack.c.l.b16 %v90
  %v323 = vunpack.c.h.b16 %v90
  %v324 = vunpack.c.l.b16 %v91
  %v325 = vunpack.c.h.b16 %v91
  %v326 = vunpack.c.l.b16 %v92
  %v327 = vunpack.c.h.b16 %v92
  %v328 = vunpack.c.l.b16 %v93
  %v329 = vunpack.c.h.b16 %v93
  %v330 = vunpack.c.l.b16 %v94
  %v331 = vunpack.c.h.b16 %v94
  %v332 = vunpack.c.l.b16 %v95
  %v333 = vunpack.c.h.b16 %v95
  %v334 = vunpack.c.l.b16 %v96
  %v335 = vunpack.c.h.b16 %v96
  %v336 = vunpack.c.l.b16 %v97
  %v337 = vunpack.c.h.b16 %v97
  %v338 = vunpack.c.l.b16 %v98
  %v339 = vunpack.c.h.b16 %v98
  %v340 = vunpack.c.l.b16 %v99
  %v341 = vunpack.c.h.b16 %v99
  %v342 = vunpack.c.l.b16 %v100
  %v343 = vunpack.c.h.b16 %v100
  %v344 = vunpack.c.l.b16 %v101
  %v345 = vunpack.c.h.b16 %v101
  %v346 = vunpack.c.l.b16 %v102
  %v347 = vunpack.c.h.b16 %v102
  %v348 = vunpack.c.l.b16 %v103
  %v349 = vunpack.c.h.b16 %v103
  %v350 = vunpack.c.l.b16 %v104
  %v351 = vunpack.c.h.b16 %v104
  %v352 = vunpack.c.l.b16 %v105
  %v353 = vunpack.c.h.b16 %v105
  %v354 = vunpack.c.l.b16 %v106
  %v355 = vunpack.c.h.b16 %v106
  %v356 = vunpack.c.l.b16 %v107
  %v357 = vunpack.c.h.b16 %v107
  %v358 = vunpack.c.l.b16 %v108
  %v359 = vunpack.c.h.b16 %v108
  %v360 = vunpack.c.l.b16 %v109
  %v361 = vunpack.c.h.b16 %v109
  %v362 = vunpack.c.l.b16 %v110
  %v363 = vunpack.c.h.b16 %v110
  %v364 = vunpack.c.l.b16 %v111
  %v365 = vunpack.c.h.b16 %v111
  %v366 = vunpack.c.l.b16 %v112
  %v367 = vunpack.c.h.b16 %v112
  %v368 = vunpack.c.l.b16 %v113
  %v369 = vunpack.c.h.b16 %v113
  %v370 = vunpack.c.l.b16 %v114
  %v371 = vunpack.c.h.b16 %v114
  %v372 = vunpack.c.l.b16 %v115
  %v373 = vunpack.c.h.b16 %v115
  %v374 = vunpack.c.l.b16 %v116
  %v375 = vunpack.c.h.b16 %v116
  %v376 = vunpack.c.l.b16 %v117
  %v377 = vunpack.c.h.b16 %v117
  %v378 = vunpack.c.l.b16 %v118
  %v379 = vunpack.c.h.b16 %v118
  %v380 = vunpack.c.l.b16 %v119
  %v381 = vunpack.c.h.b16 %v119
  %v382 = vunpack.c.l.b16 %v120
  %v383 = vunpack.c.h.b16 %v120
  %v384 = vunpack.c.l.b16 %v121
  %v385 = vunpack.c.h.b16 %v121
  %v386 = vunpack.c.l.b16 %v122
  %v387 = vunpack.c.h.b16 %v122
  %v388 = vunpack.c.l.b16 %v123
  %v389 = vunpack.c.h.b16 %v123
  %v390 = vunpack.c.l.b16 %v124
  %v391 = vunpack.c.h.b16 %v124
  %v392 = vunpack.c.l.b16 %v125
  %v393 = vunpack.c.h.b16 %v125
  %v394 = vunpack.c.l.b16 %v126
  %v395 = vunpack.c.h.b16 %v126
  %v396 = vunpack.c.l.b16 %v127
  %v397 = vunpack.c.h.b16 %v127
  %v398 = vunpack.c.l.b16 %v128
  %v399 = vunpack.c.h.b16 %v128
  %v400 = vunpack.c.l.b16 %v129
  %v401 = vunpack.c.h.b16 %v129
  %v402 = vpack.c.b16 %v276, %v274
  %v403 = vpack.c.b16 %v277, %v275
  %v404 = vpack.c.b16 %v280, %v278
  %v405 = vpack.c.b16 %v281, %v279
  %v406 = vpack.c.b16 %v284, %v282
  %v407 = vpack.c.b16 %v285, %v283
  %v408 = vpack.c.b16 %v288, %v286
  %v409 = vpack.c.b16 %v289, %v287
  %v410 = vpack.c.b16 %v292, %v290
  %v411 = vpack.c.b16 %v293, %v291
  %v412 = vpack.c.b16 %v296, %v294
  %v413 = vpack.c.b16 %v297, %v295
  %v414 = vpack.c.b16 %v300, %v298
  %v415 = vpack.c.b16 %v301, %v299
  %v416 = vpack.c.b16 %v304, %v302
  %v417 = vpack.c.b16 %v305, %v303
  %v418 = vpack.c.b16 %v308, %v306
  %v419 = vpack.c.b16 %v309, %v307
  %v420 = vpack.c.b16 %v312, %v310
  %v421 = vpack.c.b16 %v313, %v311
  %v422 = vpack.c.b16 %v316, %v314
  %v423 = vpack.c.b16 %v317, %v315
  %v424 = vpack.c.b16 %v320, %v318
  %v425 = vpack.c.b16 %v321, %v319
  %v426 = vpack.c.b16 %v324, %v322
  %v427 = vpack.c.b16 %v325, %v323
  %v428 = vpack.c.b16 %v328, %v326
  %v429 = vpack.c.b16 %v329, %v327
  %v430 = vpack.c.b16 %v332, %v330
  %v431 = vpack.c.b16 %v333, %v331
  %v432 = vpack.c.b16 %v336, %v334
  %v433 = vpack.c.b16 %v337, %v335
  %v434 = vpack.c.b16 %v340, %v338
  %v435 = vpack.c.b16 %v341, %v339
  %v436 = vpack.c.b16 %v344, %v342
  %v437 = vpack.c.b16 %v345, %v343
  %v438 = vpack.c.b16 %v348, %v346
  %v439 = vpack.c.b16 %v349, %v347
  %v440 = vpack.c.b16 %v352, %v350
  %v441 = vpack.c.b16 %v353, %v351
  %v442 = vpack.c.b16 %v356, %v354
  %v443 = vpack.c.b16 %v357, %v355
  %v444 = vpack.c.b16 %v360, %v358
  %v445 = vpack.c.b16 %v361, %v359
  %v446 = vpack.c.b16 %v364, %v362
  %v447 = vpack.c.b16 %v365, %v363
  %v448 = vpack.c.b16 %v368, %v366
  %v449 = vpack.c.b16 %v369, %v367
  %v450 = vpack.c.b16 %v372, %v370
  %v451 = vpack.c.b16 %v373, %v371
  %v452 = vpack.c.b16 %v376, %v374
  %v453 = vpack.c.b16 %v377, %v375
  %v454 = vpack.c.b16 %v380, %v378
  %v455 = vpack.c.b16 %v381, %v379
  %v456 = vpack.c.b16 %v384, %v382
  %v457 = vpack.c.b16 %v385, %v383
  %v458 = vpack.c.b16 %v388, %v386
  %v459 = vpack.c.b16 %v389, %v387
  %v460 = vpack.c.b16 %v392, %v390
  %v461 = vpack.c.b16 %v393, %v391
  %v462 = vpack.c.b16 %v396, %v394
  %v463 = vpack.c.b16 %v397, %v395
  %v464 = vpack.c.b16 %v400, %v398
  %v465 = vpack.c.b16 %v401, %v399
  %530 = vmatprep.subr.bf16.mxu0 %v417
  %531 = vmatpush1.bf16.msra.mxu0 %v416
  %532 = vmatprep.subr.bf16.mxu0 %v415
  %533 = vmatpush1.bf16.msra.mxu0 %v414
  %534 = vmatprep.subr.bf16.mxu0 %v413
  %535 = vmatpush1.bf16.msra.mxu0 %v412
  %536 = vmatprep.subr.bf16.mxu0 %v411
  %537 = vmatpush1.bf16.msra.mxu0 %v410
  %538 = vmatprep.subr.bf16.mxu0 %v409
  %539 = vmatpush1.bf16.msra.mxu0 %v408
  %540 = vmatprep.subr.bf16.mxu0 %v407
  %541 = vmatpush1.bf16.msra.mxu0 %v406
  %542 = vmatprep.subr.bf16.mxu0 %v405
  %543 = vmatpush1.bf16.msra.mxu0 %v404
  %544 = vmatprep.subr.bf16.mxu0 %v403
  %545 = vmatpush1.bf16.msra.mxu0 %v402
  %546 = vmatprep.subr.bf16.mxu0 %v433
  %547 = vmatpush2.bf16.msra.mxu0 %v432
  %548 = vmatprep.subr.bf16.mxu0 %v431
  %549 = vmatpush2.bf16.msra.mxu0 %v430
  %550 = vmatprep.subr.bf16.mxu0 %v429
  %551 = vmatpush2.bf16.msra.mxu0 %v428
  %552 = vmatprep.subr.bf16.mxu0 %v427
  %553 = vmatpush2.bf16.msra.mxu0 %v426
  %554 = vmatprep.subr.bf16.mxu0 %v425
  %555 = vmatpush2.bf16.msra.mxu0 %v424
  %556 = vmatprep.subr.bf16.mxu0 %v423
  %557 = vmatpush2.bf16.msra.mxu0 %v422
  %558 = vmatprep.subr.bf16.mxu0 %v421
  %559 = vmatpush2.bf16.msra.mxu0 %v420
  %560 = vmatprep.subr.bf16.mxu0 %v419
  %561 = vmatpush2.bf16.msra.mxu0 %v418
  %562 = vmatprep.mubr.bf16.mxu0 %v179
  %563 = vmatmul.mubr.bf16.gmra.mxu0 %v178
  %v564 = vpop.f32.mrf.mxu0
  %v565 = vadd.f32 0.0, %v564
  %v566 = vpop.f32.mrf.mxu0
  %v567 = vadd.f32 0.0, %v566
  %v568 = vpop.f32.mrf.mxu0
  %v569 = vadd.f32 0.0, %v568
  %v570 = vpop.f32.mrf.mxu0
  %v571 = vadd.f32 0.0, %v570
  %572 = vmatprep.mubr.bf16.mxu0 %v183
  %573 = vmatmul.mubr.bf16.gmra.mxu0 %v182
  %v574 = vpop.f32.mrf.mxu0
  %v575 = vadd.f32 0.0, %v574
  %v576 = vpop.f32.mrf.mxu0
  %v577 = vadd.f32 0.0, %v576
  %v578 = vpop.f32.mrf.mxu0
  %v579 = vadd.f32 0.0, %v578
  %v580 = vpop.f32.mrf.mxu0
  %v581 = vadd.f32 0.0, %v580
  %582 = vmatprep.mubr.bf16.mxu0 %v187
  %583 = vmatmul.mubr.bf16.gmra.mxu0 %v186
  %v584 = vpop.f32.mrf.mxu0
  %v585 = vadd.f32 0.0, %v584
  %v586 = vpop.f32.mrf.mxu0
  %v587 = vadd.f32 0.0, %v586
  %v588 = vpop.f32.mrf.mxu0
  %v589 = vadd.f32 0.0, %v588
  %v590 = vpop.f32.mrf.mxu0
  %v591 = vadd.f32 0.0, %v590
  %592 = vmatprep.mubr.bf16.mxu0 %v191
  %593 = vmatmul.mubr.bf16.gmra.mxu0 %v190
  %v594 = vpop.f32.mrf.mxu0
  %v595 = vadd.f32 0.0, %v594
  %v596 = vpop.f32.mrf.mxu0
  %v597 = vadd.f32 0.0, %v596
  %v598 = vpop.f32.mrf.mxu0
  %v599 = vadd.f32 0.0, %v598
  %v600 = vpop.f32.mrf.mxu0
  %v601 = vadd.f32 0.0, %v600
  %602 = vdwg.mxu0
  %603 = vmatprep.subr.bf16.mxu0 %v449
  %604 = vmatpush1.bf16.msra.mxu0 %v448
  %605 = vmatprep.subr.bf16.mxu0 %v447
  %606 = vmatpush1.bf16.msra.mxu0 %v446
  %607 = vmatprep.subr.bf16.mxu0 %v445
  %608 = vmatpush1.bf16.msra.mxu0 %v444
  %609 = vmatprep.subr.bf16.mxu0 %v443
  %610 = vmatpush1.bf16.msra.mxu0 %v442
  %611 = vmatprep.subr.bf16.mxu0 %v441
  %612 = vmatpush1.bf16.msra.mxu0 %v440
  %613 = vmatprep.subr.bf16.mxu0 %v439
  %614 = vmatpush1.bf16.msra.mxu0 %v438
  %615 = vmatprep.subr.bf16.mxu0 %v437
  %616 = vmatpush1.bf16.msra.mxu0 %v436
  %617 = vmatprep.subr.bf16.mxu0 %v435
  %618 = vmatpush1.bf16.msra.mxu0 %v434
  %619 = vmatprep.subr.bf16.mxu0 %v465
  %620 = vmatpush2.bf16.msra.mxu0 %v464
  %621 = vmatprep.subr.bf16.mxu0 %v463
  %622 = vmatpush2.bf16.msra.mxu0 %v462
  %623 = vmatprep.subr.bf16.mxu0 %v461
  %624 = vmatpush2.bf16.msra.mxu0 %v460
  %625 = vmatprep.subr.bf16.mxu0 %v459
  %626 = vmatpush2.bf16.msra.mxu0 %v458
  %627 = vmatprep.subr.bf16.mxu0 %v457
  %628 = vmatpush2.bf16.msra.mxu0 %v456
  %629 = vmatprep.subr.bf16.mxu0 %v455
  %630 = vmatpush2.bf16.msra.mxu0 %v454
  %631 = vmatprep.subr.bf16.mxu0 %v453
  %632 = vmatpush2.bf16.msra.mxu0 %v452
  %633 = vmatprep.subr.bf16.mxu0 %v451
  %634 = vmatpush2.bf16.msra.mxu0 %v450
  %635 = vmatprep.mubr.bf16.mxu0 %v181
  %636 = vmatmul.mubr.bf16.gmra.mxu0 %v180
  %v637 = vpop.f32.mrf.mxu0
  %v638 = vadd.f32 %v565, %v637
  %v639 = vpop.f32.mrf.mxu0
  %v640 = vadd.f32 %v567, %v639
  %v641 = vpop.f32.mrf.mxu0
  %v642 = vadd.f32 %v569, %v641
  %v643 = vpop.f32.mrf.mxu0
  %v644 = vadd.f32 %v571, %v643
  %645 = vmatprep.mubr.bf16.mxu0 %v185
  %646 = vmatmul.mubr.bf16.gmra.mxu0 %v184
  %v647 = vpop.f32.mrf.mxu0
  %v648 = vadd.f32 %v575, %v647
  %v649 = vpop.f32.mrf.mxu0
  %v650 = vadd.f32 %v577, %v649
  %v651 = vpop.f32.mrf.mxu0
  %v652 = vadd.f32 %v579, %v651
  %v653 = vpop.f32.mrf.mxu0
  %v654 = vadd.f32 %v581, %v653
  %655 = vmatprep.mubr.bf16.mxu0 %v189
  %656 = vmatmul.mubr.bf16.gmra.mxu0 %v188
  %v657 = vpop.f32.mrf.mxu0
  %v658 = vadd.f32 %v585, %v657
  %v659 = vpop.f32.mrf.mxu0
  %v660 = vadd.f32 %v587, %v659
  %v661 = vpop.f32.mrf.mxu0
  %v662 = vadd.f32 %v589, %v661
  %v663 = vpop.f32.mrf.mxu0
  %v664 = vadd.f32 %v591, %v663
  %665 = vmatprep.mubr.bf16.mxu0 %v193
  %666 = vmatmul.mubr.bf16.gmra.mxu0 %v192
  %v667 = vpop.f32.mrf.mxu0
  %v668 = vadd.f32 %v595, %v667
  %v669 = vpop.f32.mrf.mxu0
  %v670 = vadd.f32 %v597, %v669
  %v671 = vpop.f32.mrf.mxu0
  %v672 = vadd.f32 %v599, %v671
  %v673 = vpop.f32.mrf.mxu0
  %v674 = vadd.f32 %v601, %v673
  %675 = vdwg.mxu0
  %v676 = vadd.f32 %v34, %v638
  %v677 = vadd.f32 %v35, %v640
  %v678 = vadd.f32 %v36, %v642
  %v679 = vadd.f32 %v37, %v644
  %v680 = vadd.f32 %v38, %v648
  %v681 = vadd.f32 %v39, %v650
  %v682 = vadd.f32 %v40, %v652
  %v683 = vadd.f32 %v41, %v654
  %v684 = vadd.f32 %v42, %v658
  %v685 = vadd.f32 %v43, %v660
  %v686 = vadd.f32 %v44, %v662
  %v687 = vadd.f32 %v45, %v664
  %v688 = vadd.f32 %v46, %v668
  %v689 = vadd.f32 %v47, %v670
  %v690 = vadd.f32 %v48, %v672
  %v691 = vadd.f32 %v49, %v674
  %692 = vst [vmem:[#allocation2] sm:$0xff] %v676
  %693 = vst [vmem:[#allocation2 + $0x8] sm:$0xff] %v677
  %694 = vst [vmem:[#allocation2 + $0x10] sm:$0xff] %v678
  %695 = vst [vmem:[#allocation2 + $0x18] sm:$0xff] %v679
  %696 = vst [vmem:[#allocation2 + $0x20] sm:$0xff] %v680
  %697 = vst [vmem:[#allocation2 + $0x28] sm:$0xff] %v681
  %698 = vst [vmem:[#allocation2 + $0x30] sm:$0xff] %v682
  %699 = vst [vmem:[#allocation2 + $0x38] sm:$0xff] %v683
  %700 = vst [vmem:[#allocation2 + $0x40] sm:$0xff] %v684
  %701 = vst [vmem:[#allocation2 + $0x48] sm:$0xff] %v685
  %702 = vst [vmem:[#allocation2 + $0x50] sm:$0xff] %v686
  %703 = vst [vmem:[#allocation2 + $0x58] sm:$0xff] %v687
  %704 = vst [vmem:[#allocation2 + $0x60] sm:$0xff] %v688
  %705 = vst [vmem:[#allocation2 + $0x68] sm:$0xff] %v689
  %706 = vst [vmem:[#allocation2 + $0x70] sm:$0xff] %v690
  %707 = vst [vmem:[#allocation2 + $0x78] sm:$0xff] %v691
  // Predicated region
  $region18: #{skyreels_block_forward.40} parent=0 // pred_check
    %p708 = pneg %p14
  $region19: #{skyreels_block_forward.40} parent=0 // pred_check_branch
    %710 = sbr.rel (%p708) target = $region21
  $region20: #{skyreels_block_forward.40} parent=0 // pred_region
    %v711 = vld [vmem:[#allocation2] sm:$0xff]
    %v712 = vld [vmem:[#allocation2 + $0x8] sm:$0xff]
    %v713 = vld [vmem:[#allocation2 + $0x10] sm:$0xff]
    %v714 = vld [vmem:[#allocation2 + $0x18] sm:$0xff]
    %v715 = vld [vmem:[#allocation2 + $0x20] sm:$0xff]
    %v716 = vld [vmem:[#allocation2 + $0x28] sm:$0xff]
    %v717 = vld [vmem:[#allocation2 + $0x30] sm:$0xff]
    %v718 = vld [vmem:[#allocation2 + $0x38] sm:$0xff]
    %v719 = vld [vmem:[#allocation2 + $0x40] sm:$0xff]
    %v720 = vld [vmem:[#allocation2 + $0x48] sm:$0xff]
    %v721 = vld [vmem:[#allocation2 + $0x50] sm:$0xff]
    %v722 = vld [vmem:[#allocation2 + $0x58] sm:$0xff]
    %v723 = vld [vmem:[#allocation2 + $0x60] sm:$0xff]
    %v724 = vld [vmem:[#allocation2 + $0x68] sm:$0xff]
    %v725 = vld [vmem:[#allocation2 + $0x70] sm:$0xff]
    %v726 = vld [vmem:[#allocation2 + $0x78] sm:$0xff]
    %v727 = vld [vmem:[%s2] sm:$0x3]
    %v729 = vlaneseq
    %v730 = vshrl.u32 %v729, 7
    %v731 = vsub.s32 0, %v730
    %v732 = vrot.slane %v727, %v731
    %v733 = vlaneseq
    %v734 = vshrl.u32 %v733, 7
    %v735 = vsub.s32 1, %v734
    %v736 = vrot.slane %v727, %v735
    %v739 = vadd.f32 %v711, %v732
    %v740 = vadd.f32 %v712, %v736
    %v741 = vadd.f32 %v713, %v732
    %v742 = vadd.f32 %v714, %v736
    %v743 = vadd.f32 %v715, %v732
    %v744 = vadd.f32 %v716, %v736
    %v745 = vadd.f32 %v717, %v732
    %v746 = vadd.f32 %v718, %v736
    %v747 = vadd.f32 %v719, %v732
    %v748 = vadd.f32 %v720, %v736
    %v749 = vadd.f32 %v721, %v732
    %v750 = vadd.f32 %v722, %v736
    %v751 = vadd.f32 %v723, %v732
    %v752 = vadd.f32 %v724, %v736
    %v753 = vadd.f32 %v725, %v732
    %v754 = vadd.f32 %v726, %v736
    %755 = vst [vmem:[%s3] sm:$0xff] %v739
    %756 = vst [vmem:[%s3 + $0x8] sm:$0xff] %v740
    %757 = vst [vmem:[%s3 + $0x10] sm:$0xff] %v741
    %758 = vst [vmem:[%s3 + $0x18] sm:$0xff] %v742
    %759 = vst [vmem:[%s3 + $0x20] sm:$0xff] %v743
    %760 = vst [vmem:[%s3 + $0x28] sm:$0xff] %v744
    %761 = vst [vmem:[%s3 + $0x30] sm:$0xff] %v745
    %762 = vst [vmem:[%s3 + $0x38] sm:$0xff] %v746
    %763 = vst [vmem:[%s3 + $0x40] sm:$0xff] %v747
    %764 = vst [vmem:[%s3 + $0x48] sm:$0xff] %v748
    %765 = vst [vmem:[%s3 + $0x50] sm:$0xff] %v749
    %766 = vst [vmem:[%s3 + $0x58] sm:$0xff] %v750
    %767 = vst [vmem:[%s3 + $0x60] sm:$0xff] %v751
    %768 = vst [vmem:[%s3 + $0x68] sm:$0xff] %v752
    %769 = vst [vmem:[%s3 + $0x70] sm:$0xff] %v753
    %770 = vst [vmem:[%s3 + $0x78] sm:$0xff] %v754
  $region21: #{skyreels_block_forward.40} parent=0 // pred_fallthru
    _
  // Predicated region
  $region22: #{skyreels_block_forward.40} parent=0 // pred_check
    _
  $region23: #{skyreels_block_forward.40} parent=0 // pred_check_branch
    %772 = sbr.rel (0) target = $region25
  $region24: #{skyreels_block_forward.40} parent=0 // pred_region
    _
  $region25: #{skyreels_block_forward.40} parent=0 // pred_fallthru
    _
  // Predicated region
  $region26: #{skyreels_block_forward.40} parent=0 // pred_check
    _
  $region27: #{skyreels_block_forward.40} parent=0 // pred_check_branch
    %774 = sbr.rel (0) target = $region29
  $region28: #{skyreels_block_forward.40} parent=0 // pred_region
    _
  $region29: #{skyreels_block_forward.40} parent=0 // pred_fallthru
    _

// kernel: skyreels_block_forward.41
$region0: #{skyreels_block_forward.41}
  #allocation0 [shape = 'u32[]', space=smem, size = 0x4, offset = 0x4, fixed_abs, tag = 'smem constant byte address 0x4 - core index']
  #allocation1 [shape = 'u32[144,128]{1,0:T(1,128)}', space=vmem, size = 0x12000, scoped, tag = 'internal scratch']
  %s0 = inlined_call_operand.hbm [shape: f32[2,32,256], index: 0, kind: input, shape index: {}, may-alias: {0,3}]
  %s1 = inlined_call_operand.vmem [shape: f32[2,32,256], index: 1, kind: input, shape index: {}]
  %s2 = inlined_call_operand.vmem [shape: f32[2,1,256], index: 2, kind: input, shape index: {}]
  %s3 = inlined_call_operand.hbm [shape: f32[2,32,256], index: 3, kind: output, shape index: {}, may-alias: {0,3}]
  %s4 = sld [smem:[#allocation0]]
  $region49: #{skyreels_block_forward.41} parent=0
    _
  %s6 = ssub.s32 1, %s4
  %s7 = scalar_select 0, %s6, %s4
  $region1: #{skyreels_block_forward.41} parent=0
    #allocation2 [shape = 'u8[65536]{0}', space=vmem, size = 0x10000, scoped, tag = 'input window, operand 0']
    #allocation3 [shape = 's32[2]{0}', space=sflag, size = 0x8, scoped, tag = 'scoped memory for skyreels_block_forward.41']
    #allocation4 [shape = 's32[2]{0}', space=sflag, size = 0x8, scoped, tag = 'scoped memory for skyreels_block_forward.41']
    #allocation5 [shape = 'u8[65536]{0}', space=vmem, size = 0x10000, scoped, tag = 'output window, operand 0']
    %8 = vsyncpa [#allocation3], 0
    %s9 = scalar_lea.sflag [#allocation3], 1
    %10 = vsyncpa %s9, 0
    %11 = vsyncpa [#allocation4], 0
    %s12 = scalar_lea.sflag [#allocation4], 1
    %13 = vsyncpa %s12, 0
    loop: start=0, step=1, limit=4
    $region2: #{skyreels_block_forward.41} parent=1 // loop_pre_header
      _
    $region3: #{skyreels_block_forward.41} parent=1 // loop_header
      %s15 = sphi 0, %s19
      %p16 = scmp.ge.s32.totalorder %s15, 4
      %s22 = sphi 0, %s34
      %s23 = sphi 0, %s30
      %s24 = sphi 0, %s22
      %s25 = sphi 0, %s23
      %s26 = sphi 0, %s24
      %s27 = sphi 0, %s25
      %s39 = sphi 0, %s41
      %s42 = sphi 0, %s39
      %s43 = sphi 0, %s42
      %s59 = sphi 0, %s43
      %s67 = sphi 0, %s69
      %s70 = sphi 0, %s67
      %s71 = sphi 0, %s70
      %s87 = sphi 0, %s71
      %s93 = sphi 0, %s95
      %s96 = sphi 0, %s93
      %s97 = sphi 0, %s96
      %s113 = sphi 0, %s97
      %s121 = sphi 0, %s123
      %s124 = sphi 0, %s121
      %s125 = sphi 0, %s124
      %s141 = sphi 0, %s125
    $region4: #{skyreels_block_forward.41} parent=1 // loop_header_branch
      %18 = sbr.rel (%p16) target = $region8
    $region5: #{skyreels_block_forward.41} parent=1 // loop_body
      %s20 = ssub.s32 %s15, 1
      %s21 = ssub.s32 %s15, 2
      %s28 = sadd.s32 1, %s23
      %p29 = scmp.ge.s32.totalorder %s28, 1
      %s30 = scalar_select %p29, 0, %s28
      %s31 = sadd.s32 1, %s22
      %s32 = scalar_select %p29, %s31, %s22
      %p33 = scmp.ge.s32.totalorder %s32, 2
      %s34 = scalar_select %p33, 0, %s32
      %s35 = ssub.s32 %s22, %s34
      %s36 = ssub.s32 %s23, %s30
      %s37 = sor.u32 %s35, %s36
      %p38 = scmp.eq.s32.totalorder %s37, 0
      %s40 = sadd.s32 %s39, 1
      %s41 = scalar_select %p38, %s39, %s40
      %p44 = pneg %p38
      %p45 = scmp.eq.s32.totalorder %s15, 1
      %p46 = por %p44, %p45
      %p47 = scmp.ne.s32.totalorder %s39, %s42
      %p48 = scmp.eq.s32.totalorder %s15, 0
      %p49 = por %p47, %p48
      %p50 = scmp.ne.s32.totalorder %s39, %s42
      %p51 = scmp.eq.s32.totalorder %s20, 1
      %p52 = por %p50, %p51
      %p53 = scmp.ne.s32.totalorder %s42, %s43
      %p54 = scmp.eq.s32.totalorder %s20, 0
      %p55 = por %p53, %p54
      %p56 = scmp.ne.s32.totalorder %s42, %s43
      %p57 = scmp.eq.s32.totalorder %s21, 1
      %p58 = por %p56, %p57
      %p60 = scmp.ne.s32.totalorder %s43, %s59
      %p61 = scmp.eq.s32.totalorder %s21, 0
      %p62 = por %p60, %p61
      %s63 = ssub.s32 %s22, %s34
      %s64 = ssub.s32 %s23, %s30
      %s65 = sor.u32 %s63, %s64
      %p66 = scmp.eq.s32.totalorder %s65, 0
      %s68 = sadd.s32 %s67, 1
      %s69 = scalar_select %p66, %s67, %s68
      %p72 = pneg %p66
      %p73 = scmp.eq.s32.totalorder %s15, 1
      %p74 = por %p72, %p73
      %p75 = scmp.ne.s32.totalorder %s67, %s70
      %p76 = scmp.eq.s32.totalorder %s15, 0
      %p77 = por %p75, %p76
      %p78 = scmp.ne.s32.totalorder %s67, %s70
      %p79 = scmp.eq.s32.totalorder %s20, 1
      %p80 = por %p78, %p79
      %p81 = scmp.ne.s32.totalorder %s70, %s71
      %p82 = scmp.eq.s32.totalorder %s20, 0
      %p83 = por %p81, %p82
      %p84 = scmp.ne.s32.totalorder %s70, %s71
      %p85 = scmp.eq.s32.totalorder %s21, 1
      %p86 = por %p84, %p85
      %p88 = scmp.ne.s32.totalorder %s71, %s87
      %p89 = scmp.eq.s32.totalorder %s21, 0
      %p90 = por %p88, %p89
      %s91 = ssub.s32 %s22, %s34
      %p92 = scmp.eq.s32.totalorder %s91, 0
      %s94 = sadd.s32 %s93, 1
      %s95 = scalar_select %p92, %s93, %s94
      %p98 = pneg %p92
      %p99 = scmp.eq.s32.totalorder %s15, 1
      %p100 = por %p98, %p99
      %p101 = scmp.ne.s32.totalorder %s93, %s96
      %p102 = scmp.eq.s32.totalorder %s15, 0
      %p103 = por %p101, %p102
      %p104 = scmp.ne.s32.totalorder %s93, %s96
      %p105 = scmp.eq.s32.totalorder %s20, 1
      %p106 = por %p104, %p105
      %p107 = scmp.ne.s32.totalorder %s96, %s97
      %p108 = scmp.eq.s32.totalorder %s20, 0
      %p109 = por %p107, %p108
      %p110 = scmp.ne.s32.totalorder %s96, %s97
      %p111 = scmp.eq.s32.totalorder %s21, 1
      %p112 = por %p110, %p111
      %p114 = scmp.ne.s32.totalorder %s97, %s113
      %p115 = scmp.eq.s32.totalorder %s21, 0
      %p116 = por %p114, %p115
      %s117 = ssub.s32 %s22, %s34
      %s118 = ssub.s32 %s23, %s30
      %s119 = sor.u32 %s117, %s118
      %p120 = scmp.eq.s32.totalorder %s119, 0
      %s122 = sadd.s32 %s121, 1
      %s123 = scalar_select %p120, %s121, %s122
      %p126 = pneg %p120
      %p127 = scmp.eq.s32.totalorder %s15, 1
      %p128 = por %p126, %p127
      %p129 = scmp.ne.s32.totalorder %s121, %s124
      %p130 = scmp.eq.s32.totalorder %s15, 0
      %p131 = por %p129, %p130
      %p132 = scmp.ne.s32.totalorder %s121, %s124
      %p133 = scmp.eq.s32.totalorder %s20, 1
      %p134 = por %p132, %p133
      %p135 = scmp.ne.s32.totalorder %s124, %s125
      %p136 = scmp.eq.s32.totalorder %s20, 0
      %p137 = por %p135, %p136
      %p138 = scmp.ne.s32.totalorder %s124, %s125
      %p139 = scmp.eq.s32.totalorder %s21, 1
      %p140 = por %p138, %p139
      %p142 = scmp.ne.s32.totalorder %s125, %s141
      %p143 = scmp.eq.s32.totalorder %s21, 0
      %p144 = por %p142, %p143
      %p145 = scmp.le.s32.totalorder 1, %s15
      %p146 = scmp.lt.s32.totalorder %s15, 3
      %p147 = pnand %p145, %p146
      %p148 = pneg %p147
      // Predicated region
      $region9: #{skyreels_block_forward.41} parent=5 // pred_check
        _
      $region10: #{skyreels_block_forward.41} parent=5 // pred_check_branch
        %150 = sbr.rel (%p147) target = $region12
      $region11: #{skyreels_block_forward.41} parent=5 // pred_region
        %s151 = ssub.s32 %s15, 1
      $region12: #{skyreels_block_forward.41} parent=5 // pred_fallthru
        _
      %p152 = scmp.lt.s32.totalorder %s15, 2
      // Predicated region
      $region13: #{skyreels_block_forward.41} parent=5 // pred_check
        %p153 = pneg %p152
      $region14: #{skyreels_block_forward.41} parent=5 // pred_check_branch
        %155 = sbr.rel (%p153) target = $region16
      $region15: #{skyreels_block_forward.41} parent=5 // pred_region
        // Predicated region
        $region17: #{skyreels_block_forward.41} parent=15 // pred_check
          %p156 = pneg %p49
        $region18: #{skyreels_block_forward.41} parent=15 // pred_check_branch
          %158 = sbr.rel (%p156) target = $region20
        $region19: #{skyreels_block_forward.41} parent=15 // pred_region
          %s159 = sand.u32 %s39, 1
          %s160 = scalar_lea.sflag [#allocation3], %s159
          %s161 = sand.u32 %s39, 1
          %s162 = smul.addr %s161, 64
          %s163 = scalar_lea.vmem [#allocation2], %s162
          %s164 = smul.u32 4, %s23
          %s166 = ssub.s32 1024, 1024
          %167 = vsyncadd %s160, %s166
          %s168 = smul.addr %s164, 2
          %s169 = smul.addr %s22, 8
          %s170 = sadd.s32 %s168, %s169
          %s171 = smul.addr %s170, 128
          %s172 = scalar_lea.hbm %s0, %s171
          %s173 = sshll.u32 %s163, 4
          %s174 = int_to_ptr.vmem [resolvable:$true] %s173
          %179 = dma.hbm_to_vmem [thread:$0]  %s172, 1024, %s174, %s160, 256, 256, 16
        $region20: #{skyreels_block_forward.41} parent=15 // pred_fallthru
          _
        // Predicated region
        $region21: #{skyreels_block_forward.41} parent=15 // pred_check
          %p180 = pneg %p77
        $region22: #{skyreels_block_forward.41} parent=15 // pred_check_branch
          %182 = sbr.rel (%p180) target = $region24
        $region23: #{skyreels_block_forward.41} parent=15 // pred_region
          %s183 = smul.u32 4, %s23
          %p184 = scmp.lt.s32.totalorder %s22, 1
          %s185 = scalar_select %p184, %s22, 1
          %p186 = scmp.lt.s32.totalorder %s183, 3
          %s187 = scalar_select %p186, %s183, 3
          %s188 = smul.addr %s187, 2
          %s189 = smul.addr %s185, 8
          %s190 = sadd.s32 %s188, %s189
          %s191 = smul.addr %s190, 8
          %s192 = scalar_lea.vmem %s1, %s191
          %s193 = smul.u32 4, %s23
        $region24: #{skyreels_block_forward.41} parent=15 // pred_fallthru
          _
        // Predicated region
        $region25: #{skyreels_block_forward.41} parent=15 // pred_check
          %p194 = pneg %p103
        $region26: #{skyreels_block_forward.41} parent=15 // pred_check_branch
          %196 = sbr.rel (%p194) target = $region28
        $region27: #{skyreels_block_forward.41} parent=15 // pred_region
          %p197 = scmp.lt.s32.totalorder %s22, 1
          %s198 = scalar_select %p197, %s22, 1
          %s199 = smul.addr %s198, 2
          %s200 = scalar_lea.vmem %s2, %s199
        $region28: #{skyreels_block_forward.41} parent=15 // pred_fallthru
          _
      $region16: #{skyreels_block_forward.41} parent=5 // pred_fallthru
        _
      %p201 = scmp.le.s32.totalorder 1, %s15
      %p202 = scmp.lt.s32.totalorder %s15, 3
      %p203 = pnand %p201, %p202
      %p204 = pneg %p203
      // Predicated region
      $region29: #{skyreels_block_forward.41} parent=5 // pred_check
        _
      $region30: #{skyreels_block_forward.41} parent=5 // pred_check_branch
        %206 = sbr.rel (%p203) target = $region32
      $region31: #{skyreels_block_forward.41} parent=5 // pred_region
        %s207 = ssub.s32 %s15, 1
        %s208 = sand.u32 %s42, 1
        %s209 = scalar_lea.sflag [#allocation3], %s208
        %s210 = sand.u32 %s42, 1
        %s211 = smul.addr %s210, 64
        %s212 = scalar_lea.vmem [#allocation2], %s211
        // Predicated region
        $region33: #{skyreels_block_forward.41} parent=31 // pred_check
          %p213 = pneg %p55
        $region34: #{skyreels_block_forward.41} parent=31 // pred_check_branch
          %215 = sbr.rel (%p213) target = $region36
        $region35: #{skyreels_block_forward.41} parent=31 // pred_region
          %216 = dma.done %s209, 1024
        $region36: #{skyreels_block_forward.41} parent=31 // pred_fallthru
          _
        %s217 = sand.u32 %s42, 1
        %s218 = scalar_lea.sflag [#allocation3], %s217
        %s219 = sand.u32 %s42, 1
        %s220 = smul.addr %s219, 64
        %s221 = scalar_lea.vmem [#allocation2], %s220
        %p222 = pneg %p55
        %p223 = pneg %p52
        %s224 = smul.u32 4, %s25
        %p225 = scmp.lt.s32.totalorder %s24, 1
        %s226 = scalar_select %p225, %s24, 1
        %p227 = scmp.lt.s32.totalorder %s224, 3
        %s228 = scalar_select %p227, %s224, 3
        %s229 = smul.addr %s228, 2
        %s230 = smul.addr %s226, 8
        %s231 = sadd.s32 %s229, %s230
        %s232 = smul.addr %s231, 8
        %s233 = scalar_lea.vmem %s1, %s232
        %p234 = pneg %p83
        %p235 = pneg %p80
        %p236 = scmp.lt.s32.totalorder %s24, 1
        %s237 = scalar_select %p236, %s24, 1
        %s238 = smul.addr %s237, 2
        %s239 = scalar_lea.vmem %s2, %s238
        %p240 = pneg %p109
        %p241 = pneg %p106
        %p242 = pneg %p137
        %p243 = pneg %p134
        %s244 = sand.u32 %s124, 1
        %s245 = scalar_lea.sflag [#allocation4], %s244
        %s246 = sand.u32 %s124, 1
        %s247 = smul.addr %s246, 64
        %s248 = scalar_lea.vmem [#allocation5], %s247
        %s249 = smul.u32 4, %s25
        %s250 = smul.u32 4, %s25
        %p251 = scmp.lt.s32.totalorder %s24, 1
        %s252 = scalar_select %p251, %s24, 1
        %p253 = scmp.lt.s32.totalorder %s250, 3
        %s254 = scalar_select %p253, %s250, 3
        %s255 = smul.addr %s254, 2
        %s256 = smul.addr %s252, 8
        %s257 = sadd.s32 %s255, %s256
        %s258 = smul.addr %s257, 8
        %s259 = scalar_lea.vmem %s1, %s258
        %s260 = smul.u32 4, %s25
        %p261 = scmp.lt.s32.totalorder %s24, 1
        %s262 = scalar_select %p261, %s24, 1
        %s263 = smul.addr %s262, 2
        %s264 = scalar_lea.vmem %s2, %s263
        %s265 = smul.u32 4, %s25
        %v266 = vld [vmem:[%s212] sm:$0xff]
        %v267 = vld [vmem:[%s212 + $0x8] sm:$0xff]
        %v268 = vld [vmem:[%s212 + $0x10] sm:$0xff]
        %v269 = vld [vmem:[%s212 + $0x18] sm:$0xff]
        %v270 = vld [vmem:[%s212 + $0x20] sm:$0xff]
        %v271 = vld [vmem:[%s212 + $0x28] sm:$0xff]
        %v272 = vld [vmem:[%s212 + $0x30] sm:$0xff]
        %v273 = vld [vmem:[%s212 + $0x38] sm:$0xff]
        %v274 = vld [vmem:[%s259] sm:$0xff]
        %v275 = vld [vmem:[%s259 + $0x8] sm:$0xff]
        %v276 = vld [vmem:[%s259 + $0x10] sm:$0xff]
        %v277 = vld [vmem:[%s259 + $0x18] sm:$0xff]
        %v278 = vld [vmem:[%s259 + $0x20] sm:$0xff]
        %v279 = vld [vmem:[%s259 + $0x28] sm:$0xff]
        %v280 = vld [vmem:[%s259 + $0x30] sm:$0xff]
        %v281 = vld [vmem:[%s259 + $0x38] sm:$0xff]
        %v282 = vld [vmem:[%s264] sm:$0x3]
        %v284 = vlaneseq
        %v285 = vshrl.u32 %v284, 7
        %v286 = vsub.s32 0, %v285
        %v287 = vrot.slane %v282, %v286
        %v288 = vlaneseq
        %v289 = vshrl.u32 %v288, 7
        %v290 = vsub.s32 1, %v289
        %v291 = vrot.slane %v282, %v290
        %v294 = vmul.f32 %v274, %v287
        %v295 = vmul.f32 %v275, %v291
        %v296 = vmul.f32 %v276, %v287
        %v297 = vmul.f32 %v277, %v291
        %v298 = vmul.f32 %v278, %v287
        %v299 = vmul.f32 %v279, %v291
        %v300 = vmul.f32 %v280, %v287
        %v301 = vmul.f32 %v281, %v291
        %v302 = vadd.f32 %v266, %v294
        %v303 = vadd.f32 %v267, %v295
        %v304 = vadd.f32 %v268, %v296
        %v305 = vadd.f32 %v269, %v297
        %v306 = vadd.f32 %v270, %v298
        %v307 = vadd.f32 %v271, %v299
        %v308 = vadd.f32 %v272, %v300
        %v309 = vadd.f32 %v273, %v301
        %310 = vst [vmem:[%s248] sm:$0xff] %v302
        %311 = vst [vmem:[%s248 + $0x8] sm:$0xff] %v303
        %312 = vst [vmem:[%s248 + $0x10] sm:$0xff] %v304
        %313 = vst [vmem:[%s248 + $0x18] sm:$0xff] %v305
        %314 = vst [vmem:[%s248 + $0x20] sm:$0xff] %v306
        %315 = vst [vmem:[%s248 + $0x28] sm:$0xff] %v307
        %316 = vst [vmem:[%s248 + $0x30] sm:$0xff] %v308
        %317 = vst [vmem:[%s248 + $0x38] sm:$0xff] %v309
        %s318 = sand.u32 %s124, 1
        %s319 = scalar_lea.sflag [#allocation4], %s318
        %s320 = sand.u32 %s124, 1
        %s321 = smul.addr %s320, 64
        %s322 = scalar_lea.vmem [#allocation5], %s321
        // Predicated region
        $region37: #{skyreels_block_forward.41} parent=31 // pred_check
          %p323 = pneg %p134
        $region38: #{skyreels_block_forward.41} parent=31 // pred_check_branch
          %325 = sbr.rel (%p323) target = $region40
        $region39: #{skyreels_block_forward.41} parent=31 // pred_region
          %s326 = smul.u32 4, %s25
          %s328 = ssub.s32 1024, 1024
          %329 = vsyncadd %s319, %s328
          %s330 = smul.addr %s326, 2
          %s331 = smul.addr %s24, 8
          %s332 = sadd.s32 %s330, %s331
          %s333 = smul.addr %s332, 128
          %s334 = scalar_lea.hbm %s3, %s333
          %s335 = sshll.u32 %s322, 4
          %s336 = int_to_ptr.vmem [resolvable:$true] %s335
          %341 = dma.vmem_to_hbm [thread:$0]  %s336, 1024, %s334, %s319, 256, 256, 16
        $region40: #{skyreels_block_forward.41} parent=31 // pred_fallthru
          _
      $region32: #{skyreels_block_forward.41} parent=5 // pred_fallthru
        _
      %p342 = scmp.le.s32.totalorder 2, %s15
      // Predicated region
      $region41: #{skyreels_block_forward.41} parent=5 // pred_check
        %p343 = pneg %p342
      $region42: #{skyreels_block_forward.41} parent=5 // pred_check_branch
        %345 = sbr.rel (%p343) target = $region44
      $region43: #{skyreels_block_forward.41} parent=5 // pred_region
        %s346 = ssub.s32 %s15, 2
        // Predicated region
        $region45: #{skyreels_block_forward.41} parent=43 // pred_check
          %p347 = pneg %p140
        $region46: #{skyreels_block_forward.41} parent=43 // pred_check_branch
          %349 = sbr.rel (%p347) target = $region48
        $region47: #{skyreels_block_forward.41} parent=43 // pred_region
          %s350 = sand.u32 %s125, 1
          %s351 = scalar_lea.sflag [#allocation4], %s350
          %s352 = sand.u32 %s125, 1
          %s353 = smul.addr %s352, 64
          %s354 = scalar_lea.vmem [#allocation5], %s353
          %355 = dma.done %s351, 1024
        $region48: #{skyreels_block_forward.41} parent=43 // pred_fallthru
          _
      $region44: #{skyreels_block_forward.41} parent=5 // pred_fallthru
        _
    $region6: #{skyreels_block_forward.41} parent=1 // loop_footer
      %s19 = sadd.s32 1, %s15
    $region7: #{skyreels_block_forward.41} parent=1 // loop_footer_branch
      %14 = sbr.rel target = $region3
    $region8: #{skyreels_block_forward.41} parent=1 // loop_exit
      _
    %356 = vsyncpa [#allocation3], 1
    %s357 = scalar_lea.sflag [#allocation3], 1
    %358 = vsyncpa %s357, 1
    %359 = vsyncpa [#allocation4], 1
    %s360 = scalar_lea.sflag [#allocation4], 1
    %361 = vsyncpa %s360, 1

</llo_original>
